<compile_context>
chip_gen: v5e
topology: v5e:2x2
jax: 0.10.0
libtpu: 0.0.40
codegen_flags: <defaults>
</compile_context>

<pallas_src>
import functools

import jax
import jax.numpy as jnp
from jax.experimental import pallas as pl
from jax.experimental.pallas import tpu as pltpu

TM_MAX = 512      # max M tile rows (full-M block when M fits)
TN_MAX = 256      # N tile when padded N is a multiple of 256, else 128


def _round_up(x, m):
    return (x + m - 1) // m * m


def _pad_to(x, shape):
    pads = [(0, s - d) for s, d in zip(shape, x.shape)]
    if all(p == (0, 0) for p in pads):
        return x
    return jnp.pad(x, pads)


def _tiles_m(M):
    """Pad M and pick an M tile: full-M if <= TM_MAX, else TM_MAX-wide tiles."""
    Mp = _round_up(M, 16)          # bf16 sublane packing => multiples of 16
    if Mp <= TM_MAX:
        return Mp, Mp
    Mp = _round_up(M, TM_MAX)
    return Mp, TM_MAX


def _tiles_n(N):
    Np = _round_up(N, 128)
    if Np >= TN_MAX and Np % TN_MAX == 0:
        return Np, TN_MAX
    return Np, 128


# ---------------------------------------------------------------------------
# Pallas kernels
# ---------------------------------------------------------------------------
def _mm_kernel(a_ref, b_ref, bias_ref, o_ref, *, relu):
    """out = (optionally ReLU)(A @ B + bias). Full-K, no accumulator."""
    out = jnp.dot(a_ref[...], b_ref[...], preferred_element_type=jnp.float32)
    out = out + bias_ref[...]
    if relu:
        out = jnp.maximum(out, 0.0)
    o_ref[...] = out.astype(o_ref.dtype)


def _mm_res_kernel(a_ref, b_ref, bias_ref, res_ref, o_ref, *, relu):
    """out = (optionally ReLU)(A @ B + bias + residual). Full-K."""
    out = jnp.dot(a_ref[...], b_ref[...], preferred_element_type=jnp.float32)
    out = out + bias_ref[...] + res_ref[...]
    if relu:
        out = jnp.maximum(out, 0.0)
    o_ref[...] = out.astype(o_ref.dtype)


def pallas_matmul_bias(a, b, bias, residual=None, relu=False):
    """(M,K) @ (K,N) + bias[N] (+ residual[M,N]) with optional ReLU.

    A/B are fed to the MXU as bf16; accumulation and epilogue are f32.
    """
    M, K = a.shape
    _, N = b.shape
    Mp, TMt = _tiles_m(M)
    Np, TNt = _tiles_n(N)
    Kp = _round_up(K, 128)

    a_p = _pad_to(a, (Mp, Kp)).astype(jnp.bfloat16)
    b_p = _pad_to(b, (Kp, Np)).astype(jnp.bfloat16)
    bias_p = _pad_to(bias.reshape(1, N).astype(jnp.float32), (1, Np))

    in_arrays = [a_p, b_p, bias_p]
    in_specs = [
        pl.BlockSpec((TMt, Kp), lambda i, j: (i, 0)),
        pl.BlockSpec((Kp, TNt), lambda i, j: (0, j)),
        pl.BlockSpec((1, TNt), lambda i, j: (0, j)),
    ]
    if residual is not None:
        res_p = _pad_to(residual.astype(jnp.float32), (Mp, Np))
        in_arrays.append(res_p)
        in_specs.append(pl.BlockSpec((TMt, TNt), lambda i, j: (i, j)))
        kernel = functools.partial(_mm_res_kernel, relu=relu)
    else:
        kernel = functools.partial(_mm_kernel, relu=relu)

    out = pl.pallas_call(
        kernel,
        out_shape=jax.ShapeDtypeStruct((Mp, Np), jnp.float32),
        grid_spec=pltpu.PrefetchScalarGridSpec(
            num_scalar_prefetch=0,
            grid=(Mp // TMt, Np // TNt),
            in_specs=in_specs,
            out_specs=pl.BlockSpec((TMt, TNt), lambda i, j: (i, j)),
        ),
        compiler_params=pltpu.CompilerParams(
            dimension_semantics=("parallel", "parallel")),
    )(*in_arrays)
    return out[:M, :N]


def _maxpool_kernel(x_ref, o_ref):
    m = x_ref[0]
    for t in range(1, x_ref.shape[0]):
        m = jnp.maximum(m, x_ref[t])
    o_ref[...] = m


def pallas_maxpool3x3_s2(x):
    """MaxPool2d(kernel=3, stride=2, padding=1) on an NHWC tensor."""
    N, H, W, C = x.shape
    oh = (H + 2 - 3) // 2 + 1
    ow = (W + 2 - 3) // 2 + 1
    xp = jnp.pad(x, ((0, 0), (1, 1), (1, 1), (0, 0)),
                 constant_values=-jnp.inf)
    shifts = []
    for i in range(3):
        for j in range(3):
            sl = xp[:, i:i + (oh - 1) * 2 + 1:2,
                       j:j + (ow - 1) * 2 + 1:2, :]
            shifts.append(sl.reshape(N * oh * ow, C))
    stacked = jnp.stack(shifts, axis=0)  # (9, M, C)
    M = N * oh * ow

    TMP_MAX = 1024
    Mp = _round_up(M, 8)
    if Mp <= TMP_MAX:
        TMp = Mp
    else:
        Mp = _round_up(M, TMP_MAX)
        TMp = TMP_MAX
    stacked_p = _pad_to(stacked, (9, Mp, C))

    out = pl.pallas_call(
        _maxpool_kernel,
        out_shape=jax.ShapeDtypeStruct((Mp, C), jnp.float32),
        grid_spec=pltpu.PrefetchScalarGridSpec(
            num_scalar_prefetch=0,
            grid=(Mp // TMp,),
            in_specs=[pl.BlockSpec((9, TMp, C), lambda i: (0, i, 0))],
            out_specs=pl.BlockSpec((TMp, C), lambda i: (i, 0)),
        ),
        compiler_params=pltpu.CompilerParams(
            dimension_semantics=("parallel",)),
    )(stacked_p)
    return out[:M].reshape(N, oh, ow, C)


# ---------------------------------------------------------------------------
# Conv helpers (im2col is plain-JAX glue; the matmul is the Pallas hot path)
# ---------------------------------------------------------------------------
def _im2col(x, kh, kw, stride, padding, dilation):
    N, H, W, C = x.shape
    xp = jnp.pad(x, ((0, 0), (padding, padding), (padding, padding), (0, 0)))
    Hp, Wp = H + 2 * padding, W + 2 * padding
    oh = (Hp - (dilation * (kh - 1) + 1)) // stride + 1
    ow = (Wp - (dilation * (kw - 1) + 1)) // stride + 1
    cols = []
    for i in range(kh):
        for j in range(kw):
            cols.append(xp[:, i * dilation:i * dilation + (oh - 1) * stride + 1:stride,
                              j * dilation:j * dilation + (ow - 1) * stride + 1:stride, :])
    patches = jnp.concatenate(cols, axis=-1)  # (N, oh, ow, kh*kw*C)
    return patches.reshape(N * oh * ow, kh * kw * C), (N, oh, ow)


def conv2d(x, w_hwio, bias, *, stride=1, padding=0, dilation=1,
           relu=False, residual=None):
    kh, kw, cin, cout = w_hwio.shape
    patches, (N, oh, ow) = _im2col(x, kh, kw, stride, padding, dilation)
    wmat = w_hwio.reshape(kh * kw * cin, cout)
    res = None if residual is None else residual.reshape(N * oh * ow, cout)
    out = pallas_matmul_bias(patches, wmat, bias, residual=res, relu=relu)
    return out.reshape(N, oh, ow, cout)


def fold_bn(w_hwio, bn, conv_bias=None, eps=1e-5):
    gamma, beta, mean, var = bn
    scale = gamma / jnp.sqrt(var + eps)
    w = w_hwio * scale  # broadcast over out-channel (last) dim
    b = beta - mean * scale
    if conv_bias is not None:
        b = b + conv_bias * scale
    return w, b


def conv_transpose_16s(x, wt):
    """ConvTranspose2d(C, C, kernel=32, stride=16, bias=False), NHWC input.

    Uses the sub-pixel decomposition: output 16x16 block (Y, X) is the sum of
    4 shifted-input x (16x16xCout) sub-kernel matmuls; all matmuls fused into
    one Pallas call by stacking along K.
    """
    N, H, W, C = x.shape
    Cout = wt.shape[1]
    xp = jnp.pad(x, ((0, 0), (1, 1), (1, 1), (0, 0)))
    a_parts, b_parts = [], []
    for a in (0, 1):
        for b in (0, 1):
            a_parts.append(xp[:, 1 - a:1 - a + H + 1, 1 - b:1 - b + W + 1, :])
            sub = wt[:, :, 16 * a:16 * a + 16, 16 * b:16 * b + 16]  # (Cin,Cout,16,16)
            b_parts.append(jnp.transpose(sub, (0, 2, 3, 1)).reshape(C, 16 * 16 * Cout))
    A = jnp.concatenate(a_parts, axis=-1).reshape(N * (H + 1) * (W + 1), 4 * C)
    B = jnp.concatenate(b_parts, axis=0)  # (4C, 256*Cout)
    out = pallas_matmul_bias(A, B, jnp.zeros((16 * 16 * Cout,), jnp.float32))
    out = out.reshape(N, H + 1, W + 1, 16, 16, Cout)
    out = jnp.transpose(out, (0, 1, 3, 2, 4, 5))
    return out.reshape(N, 16 * (H + 1), 16 * (W + 1), Cout)


# ---------------------------------------------------------------------------
# Synthetic FCN model (deterministic parameter init)
# ---------------------------------------------------------------------------
NUM_CLASSES = 4
FEAT_NUM = 64  # layer4 output channels; layer3 = FEAT_NUM // 2


def init_params(key):
    keys = iter(jax.random.split(key, 80))

    def conv_w(kh, kw, cin, cout):
        return 0.1 * jax.random.normal(next(keys), (kh, kw, cin, cout), jnp.float32)

    def bn_p(c):
        return (1.0 + 0.1 * jax.random.normal(next(keys), (c,), jnp.float32),   # gamma
                0.1 * jax.random.normal(next(keys), (c,), jnp.float32),          # beta
                0.1 * jax.random.normal(next(keys), (c,), jnp.float32),          # running mean
                1.0 + 0.1 * jnp.abs(jax.random.normal(next(keys), (c,), jnp.float32)))  # running var

    p = {}
    # layer0: conv7x7/s2 (3 -> 8) + BN + ReLU + maxpool
    p['l0_w'] = conv_w(7, 7, 3, 8)
    p['l0_bn'] = bn_p(8)

    def block_params(prefix, cin, cout, has_down):
        p[prefix + '_w1'] = conv_w(3, 3, cin, cout)
        p[prefix + '_bn1'] = bn_p(cout)
        p[prefix + '_w2'] = conv_w(3, 3, cout, cout)
        p[prefix + '_bn2'] = bn_p(cout)
        if has_down:
            p[prefix + '_wd'] = conv_w(1, 1, cin, cout)
            p[prefix + '_bnd'] = bn_p(cout)

    block_params('l1', 8, 8, False)
    block_params('l2', 8, 16, True)
    block_params('l3', 16, FEAT_NUM // 2, True)   # 32
    block_params('l4', FEAT_NUM // 2, FEAT_NUM, True)  # 64 (dilated block)

    # classification head
    p['c1_w'] = conv_w(3, 3, FEAT_NUM, 256)
    p['c1_bn'] = bn_p(256)
    p['c2_w'] = conv_w(3, 3, 256, 256)
    p['c2_bn'] = bn_p(256)
    p['c3_w'] = conv_w(1, 1, 256, NUM_CLASSES)
    p['c3_b'] = 0.1 * jax.random.normal(next(keys), (NUM_CLASSES,), jnp.float32)

    # score_pool4
    p['sp_w'] = conv_w(1, 1, FEAT_NUM // 2, NUM_CLASSES)
    p['sp_b'] = 0.1 * jax.random.normal(next(keys), (NUM_CLASSES,), jnp.float32)

    # upsample16: ConvTranspose2d weight (in, out, 32, 32)
    p['up_w'] = 0.1 * jax.random.normal(
        next(keys), (NUM_CLASSES, NUM_CLASSES, 32, 32), jnp.float32)
    return p


def basic_block(x, p, prefix, stride, dilation, has_down):
    w1, b1 = fold_bn(p[prefix + '_w1'], p[prefix + '_bn1'])
    h = conv2d(x, w1, b1, stride=1, padding=1, dilation=1, relu=True)
    if has_down:
        wd, bd = fold_bn(p[prefix + '_wd'], p[prefix + '_bnd'])
        identity = conv2d(x, wd, bd, stride=stride, padding=0, relu=False)
    else:
        identity = x
    w2, b2 = fold_bn(p[prefix + '_w2'], p[prefix + '_bn2'])
    # conv2 carries the stride/dilation (as patched by FCNModel for layer4);
    # residual add + ReLU are fused into the Pallas matmul epilogue.
    return conv2d(h, w2, b2, stride=stride, padding=dilation, dilation=dilation,
                  relu=True, residual=identity)


def fcn_forward(params, x_nchw):
    x = jnp.transpose(x_nchw, (0, 2, 3, 1))  # NCHW -> NHWC

    # layer0
    w0, b0 = fold_bn(params['l0_w'], params['l0_bn'])
    h = conv2d(x, w0, b0, stride=2, padding=3, relu=True)
    h = pallas_maxpool3x3_s2(h)

    h = basic_block(h, params, 'l1', stride=1, dilation=1, has_down=False)
    h = basic_block(h, params, 'l2', stride=2, dilation=1, has_down=True)
    x16 = basic_block(h, params, 'l3', stride=2, dilation=1, has_down=True)
    x32 = basic_block(x16, params, 'l4', stride=1, dilation=2, has_down=True)

    # classification head
    w, b = fold_bn(params['c1_w'], params['c1_bn'])
    c = conv2d(x32, w, b, stride=1, padding=6, dilation=6, relu=True)
    w, b = fold_bn(params['c2_w'], params['c2_bn'])
    c = conv2d(c, w, b, stride=1, padding=6, dilation=6, relu=True)

    # score_pool4 (1x1) then final 1x1 classification conv with fused add
    score = conv2d(x16, params['sp_w'], params['sp_b'], relu=False)
    fused = conv2d(c, params['c3_w'], params['c3_b'], relu=False, residual=score)

    # upsample 16x (ConvTranspose2d k=32 s=16) and center-crop to input size
    # TODO(synk): validate sub-pixel transposed-conv numerically against
    # PyTorch ConvTranspose2d(k=32, s=16) kernel-offset convention.
    pred = conv_transpose_16s(fused, params['up_w'])
    Hi, Wi = x.shape[1], x.shape[2]
    cy = (pred.shape[1] - Hi) // 2
    cx = (pred.shape[2] - Wi) // 2
    pred = pred[:, cy:cy + Hi, cx:cx + Wi, :]
    return jnp.transpose(pred, (0, 3, 1, 2))  # NHWC -> NCHW


if __name__ == "__main__":
    key = jax.random.PRNGKey(0)
    pkey, xkey = jax.random.split(key)
    params = init_params(pkey)
    x = jax.random.normal(xkey, (2, 3, 32, 32), jnp.float32)  # NCHW input

    fwd = jax.jit(fcn_forward)
    out = fwd(params, x)
    jax.block_until_ready(out)
    assert out.shape == (2, NUM_CLASSES, 32, 32), out.shape
    assert bool(jnp.all(jnp.isfinite(out)))
    print("KERNEL_OK")
</pallas_src>

<mosaic_0001>
module attributes {stable_mosaic.version = 11 : i64} {
  func.func @_mm_kernel(%arg0: i32, %arg1: i32, %arg2: memref<512x256xbf16, #tpu.memory_space<vmem>>, %arg3: memref<256x128xbf16, #tpu.memory_space<vmem>>, %arg4: memref<1x128xf32, #tpu.memory_space<vmem>>, %arg5: memref<512x128xf32, #tpu.memory_space<vmem>>) attributes {dimension_semantics = [#tpu.dimension_semantics<parallel>, #tpu.dimension_semantics<parallel>], iteration_bounds = array<i64: 1, 1>, scalar_prefetch = 0 : i64, scratch_operands = 0 : i64, tpu.core_type = #tpu.core_type<tc>, window_params = [{transform_indices = @transform_0, window_bounds = array<i64: 512, 256>}, {transform_indices = @transform_1, window_bounds = array<i64: 256, 128>}, {transform_indices = @transform_2, window_bounds = array<i64: 1, 128>}, {transform_indices = @transform_3, window_bounds = array<i64: 512, 128>}]} {
    %c0 = arith.constant 0 : index
    %c0_0 = arith.constant 0 : index
    %0 = vector.load %arg2[%c0, %c0_0] : memref<512x256xbf16, #tpu.memory_space<vmem>>, vector<512x256xbf16>
    %c0_1 = arith.constant 0 : index
    %c0_2 = arith.constant 0 : index
    %1 = vector.load %arg3[%c0_1, %c0_2] : memref<256x128xbf16, #tpu.memory_space<vmem>>, vector<256x128xbf16>
    %cst = arith.constant dense<0.000000e+00> : vector<512x128xf32>
    %2 = tpu.matmul %0, %1, %cst {dimension_numbers = #tpu.dot_dimension_numbers<[1], [0], [0], [1], [0, 0, 1, 1], [], []>} : vector<512x256xbf16>, vector<256x128xbf16>, vector<512x128xf32> -> vector<512x128xf32>
    %c0_3 = arith.constant 0 : index
    %c0_4 = arith.constant 0 : index
    %3 = vector.load %arg4[%c0_3, %c0_4] : memref<1x128xf32, #tpu.memory_space<vmem>>, vector<1x128xf32>
    %4 = vector.broadcast %3 : vector<1x128xf32> to vector<512x128xf32>
    %5 = arith.addf %2, %4 : vector<512x128xf32>
    %cst_5 = arith.constant 0.000000e+00 : f32
    %6 = vector.broadcast %cst_5 : f32 to vector<512x128xf32>
    %7 = arith.maximumf %5, %6 : vector<512x128xf32>
    %c0_6 = arith.constant 0 : index
    %c0_7 = arith.constant 0 : index
    %8 = vector.load %arg5[%c0_6, %c0_7] : memref<512x128xf32, #tpu.memory_space<vmem>>, vector<512x128xf32>
    tpu.vector_store %arg5[%c0_6, %c0_7], %7 {strides = array<i32>} : memref<512x128xf32, #tpu.memory_space<vmem>>, vector<512x128xf32>,
    return
  }
  func.func @transform_0(%arg0: i32, %arg1: i32) -> (i32, i32) {
    %c0_i32 = arith.constant 0 : i32
    %c0_i32_0 = arith.constant 0 : i32
    return %arg0, %c0_i32 : i32, i32
  }
  func.func @transform_1(%arg0: i32, %arg1: i32) -> (i32, i32) {
    %c0_i32 = arith.constant 0 : i32
    %c0_i32_0 = arith.constant 0 : i32
    return %c0_i32, %arg1 : i32, i32
  }
  func.func @transform_2(%arg0: i32, %arg1: i32) -> (i32, i32) {
    %c0_i32 = arith.constant 0 : i32
    %c0_i32_0 = arith.constant 0 : i32
    return %c0_i32, %arg1 : i32, i32
  }
  func.func @transform_3(%arg0: i32, %arg1: i32) -> (i32, i32) {
    %c0_i32 = arith.constant 0 : i32
    return %arg0, %arg1 : i32, i32
  }
}

module attributes {stable_mosaic.version = 11 : i64} {
  func.func @_maxpool_kernel(%arg0: i32, %arg1: memref<9x128x8xf32, #tpu.memory_space<vmem>>, %arg2: memref<128x8xf32, #tpu.memory_space<vmem>>) attributes {dimension_semantics = [#tpu.dimension_semantics<parallel>], iteration_bounds = array<i64: 1>, scalar_prefetch = 0 : i64, scratch_operands = 0 : i64, tpu.core_type = #tpu.core_type<tc>, window_params = [{transform_indices = @transform_0, window_bounds = array<i64: 9, 128, 8>}, {transform_indices = @transform_1, window_bounds = array<i64: 128, 8>}]} {
    %c0 = arith.constant 0 : index
    %c0_0 = arith.constant 0 : index
    %c0_1 = arith.constant 0 : index
    %0 = vector.load %arg1[%c0, %c0_0, %c0_1] : memref<9x128x8xf32, #tpu.memory_space<vmem>>, vector<1x128x8xf32>
    %1 = vector.shape_cast %0 : vector<1x128x8xf32> to vector<128x8xf32>
    %c1 = arith.constant 1 : index
    %c0_2 = arith.constant 0 : index
    %c0_3 = arith.constant 0 : index
    %2 = vector.load %arg1[%c1, %c0_2, %c0_3] : memref<9x128x8xf32, #tpu.memory_space<vmem>>, vector<1x128x8xf32>
    %3 = vector.shape_cast %2 : vector<1x128x8xf32> to vector<128x8xf32>
    %4 = arith.maximumf %1, %3 : vector<128x8xf32>
    %c2 = arith.constant 2 : index
    %c0_4 = arith.constant 0 : index
    %c0_5 = arith.constant 0 : index
    %5 = vector.load %arg1[%c2, %c0_4, %c0_5] : memref<9x128x8xf32, #tpu.memory_space<vmem>>, vector<1x128x8xf32>
    %6 = vector.shape_cast %5 : vector<1x128x8xf32> to vector<128x8xf32>
    %7 = arith.maximumf %4, %6 : vector<128x8xf32>
    %c3 = arith.constant 3 : index
    %c0_6 = arith.constant 0 : index
    %c0_7 = arith.constant 0 : index
    %8 = vector.load %arg1[%c3, %c0_6, %c0_7] : memref<9x128x8xf32, #tpu.memory_space<vmem>>, vector<1x128x8xf32>
    %9 = vector.shape_cast %8 : vector<1x128x8xf32> to vector<128x8xf32>
    %10 = arith.maximumf %7, %9 : vector<128x8xf32>
    %c4 = arith.constant 4 : index
    %c0_8 = arith.constant 0 : index
    %c0_9 = arith.constant 0 : index
    %11 = vector.load %arg1[%c4, %c0_8, %c0_9] : memref<9x128x8xf32, #tpu.memory_space<vmem>>, vector<1x128x8xf32>
    %12 = vector.shape_cast %11 : vector<1x128x8xf32> to vector<128x8xf32>
    %13 = arith.maximumf %10, %12 : vector<128x8xf32>
    %c5 = arith.constant 5 : index
    %c0_10 = arith.constant 0 : index
    %c0_11 = arith.constant 0 : index
    %14 = vector.load %arg1[%c5, %c0_10, %c0_11] : memref<9x128x8xf32, #tpu.memory_space<vmem>>, vector<1x128x8xf32>
    %15 = vector.shape_cast %14 : vector<1x128x8xf32> to vector<128x8xf32>
    %16 = arith.maximumf %13, %15 : vector<128x8xf32>
    %c6 = arith.constant 6 : index
    %c0_12 = arith.constant 0 : index
    %c0_13 = arith.constant 0 : index
    %17 = vector.load %arg1[%c6, %c0_12, %c0_13] : memref<9x128x8xf32, #tpu.memory_space<vmem>>, vector<1x128x8xf32>
    %18 = vector.shape_cast %17 : vector<1x128x8xf32> to vector<128x8xf32>
    %19 = arith.maximumf %16, %18 : vector<128x8xf32>
    %c7 = arith.constant 7 : index
    %c0_14 = arith.constant 0 : index
    %c0_15 = arith.constant 0 : index
    %20 = vector.load %arg1[%c7, %c0_14, %c0_15] : memref<9x128x8xf32, #tpu.memory_space<vmem>>, vector<1x128x8xf32>
    %21 = vector.shape_cast %20 : vector<1x128x8xf32> to vector<128x8xf32>
    %22 = arith.maximumf %19, %21 : vector<128x8xf32>
    %c8 = arith.constant 8 : index
    %c0_16 = arith.constant 0 : index
    %c0_17 = arith.constant 0 : index
    %23 = vector.load %arg1[%c8, %c0_16, %c0_17] : memref<9x128x8xf32, #tpu.memory_space<vmem>>, vector<1x128x8xf32>
    %24 = vector.shape_cast %23 : vector<1x128x8xf32> to vector<128x8xf32>
    %25 = arith.maximumf %22, %24 : vector<128x8xf32>
    %c0_18 = arith.constant 0 : index
    %c0_19 = arith.constant 0 : index
    %26 = vector.load %arg2[%c0_18, %c0_19] : memref<128x8xf32, #tpu.memory_space<vmem>>, vector<128x8xf32>
    tpu.vector_store %arg2[%c0_18, %c0_19], %25 {strides = array<i32>} : memref<128x8xf32, #tpu.memory_space<vmem>>, vector<128x8xf32>,
    return
  }
  func.func @transform_0(%arg0: i32) -> (i32, i32, i32) {
    %c0_i32 = arith.constant 0 : i32
    %c0_i32_0 = arith.constant 0 : i32
    %c0_i32_1 = arith.constant 0 : i32
    return %c0_i32, %arg0, %c0_i32_0 : i32, i32, i32
  }
  func.func @transform_1(%arg0: i32) -> (i32, i32) {
    %c0_i32 = arith.constant 0 : i32
    %c0_i32_0 = arith.constant 0 : i32
    return %arg0, %c0_i32 : i32, i32
  }
}

module attributes {stable_mosaic.version = 11 : i64} {
  func.func @_mm_kernel(%arg0: i32, %arg1: i32, %arg2: memref<128x128xbf16, #tpu.memory_space<vmem>>, %arg3: memref<128x128xbf16, #tpu.memory_space<vmem>>, %arg4: memref<1x128xf32, #tpu.memory_space<vmem>>, %arg5: memref<128x128xf32, #tpu.memory_space<vmem>>) attributes {dimension_semantics = [#tpu.dimension_semantics<parallel>, #tpu.dimension_semantics<parallel>], iteration_bounds = array<i64: 1, 1>, scalar_prefetch = 0 : i64, scratch_operands = 0 : i64, tpu.core_type = #tpu.core_type<tc>, window_params = [{transform_indices = @transform_0, window_bounds = array<i64: 128, 128>}, {transform_indices = @transform_1, window_bounds = array<i64: 128, 128>}, {transform_indices = @transform_2, window_bounds = array<i64: 1, 128>}, {transform_indices = @transform_3, window_bounds = array<i64: 128, 128>}]} {
    %c0 = arith.constant 0 : index
    %c0_0 = arith.constant 0 : index
    %0 = vector.load %arg2[%c0, %c0_0] : memref<128x128xbf16, #tpu.memory_space<vmem>>, vector<128x128xbf16>
    %c0_1 = arith.constant 0 : index
    %c0_2 = arith.constant 0 : index
    %1 = vector.load %arg3[%c0_1, %c0_2] : memref<128x128xbf16, #tpu.memory_space<vmem>>, vector<128x128xbf16>
    %cst = arith.constant dense<0.000000e+00> : vector<128x128xf32>
    %2 = tpu.matmul %0, %1, %cst {dimension_numbers = #tpu.dot_dimension_numbers<[1], [0], [0], [1], [0, 0, 1, 1], [], []>} : vector<128x128xbf16>, vector<128x128xbf16>, vector<128x128xf32> -> vector<128x128xf32>
    %c0_3 = arith.constant 0 : index
    %c0_4 = arith.constant 0 : index
    %3 = vector.load %arg4[%c0_3, %c0_4] : memref<1x128xf32, #tpu.memory_space<vmem>>, vector<1x128xf32>
    %4 = vector.broadcast %3 : vector<1x128xf32> to vector<128x128xf32>
    %5 = arith.addf %2, %4 : vector<128x128xf32>
    %cst_5 = arith.constant 0.000000e+00 : f32
    %6 = vector.broadcast %cst_5 : f32 to vector<128x128xf32>
    %7 = arith.maximumf %5, %6 : vector<128x128xf32>
    %c0_6 = arith.constant 0 : index
    %c0_7 = arith.constant 0 : index
    %8 = vector.load %arg5[%c0_6, %c0_7] : memref<128x128xf32, #tpu.memory_space<vmem>>, vector<128x128xf32>
    tpu.vector_store %arg5[%c0_6, %c0_7], %7 {strides = array<i32>} : memref<128x128xf32, #tpu.memory_space<vmem>>, vector<128x128xf32>,
    return
  }
  func.func @transform_0(%arg0: i32, %arg1: i32) -> (i32, i32) {
    %c0_i32 = arith.constant 0 : i32
    %c0_i32_0 = arith.constant 0 : i32
    return %arg0, %c0_i32 : i32, i32
  }
  func.func @transform_1(%arg0: i32, %arg1: i32) -> (i32, i32) {
    %c0_i32 = arith.constant 0 : i32
    %c0_i32_0 = arith.constant 0 : i32
    return %c0_i32, %arg1 : i32, i32
  }
  func.func @transform_2(%arg0: i32, %arg1: i32) -> (i32, i32) {
    %c0_i32 = arith.constant 0 : i32
    %c0_i32_0 = arith.constant 0 : i32
    return %c0_i32, %arg1 : i32, i32
  }
  func.func @transform_3(%arg0: i32, %arg1: i32) -> (i32, i32) {
    %c0_i32 = arith.constant 0 : i32
    return %arg0, %arg1 : i32, i32
  }
}

module attributes {stable_mosaic.version = 11 : i64} {
  func.func @_mm_res_kernel(%arg0: i32, %arg1: i32, %arg2: memref<128x128xbf16, #tpu.memory_space<vmem>>, %arg3: memref<128x128xbf16, #tpu.memory_space<vmem>>, %arg4: memref<1x128xf32, #tpu.memory_space<vmem>>, %arg5: memref<128x128xf32, #tpu.memory_space<vmem>>, %arg6: memref<128x128xf32, #tpu.memory_space<vmem>>) attributes {dimension_semantics = [#tpu.dimension_semantics<parallel>, #tpu.dimension_semantics<parallel>], iteration_bounds = array<i64: 1, 1>, scalar_prefetch = 0 : i64, scratch_operands = 0 : i64, tpu.core_type = #tpu.core_type<tc>, window_params = [{transform_indices = @transform_0, window_bounds = array<i64: 128, 128>}, {transform_indices = @transform_1, window_bounds = array<i64: 128, 128>}, {transform_indices = @transform_2, window_bounds = array<i64: 1, 128>}, {transform_indices = @transform_3, window_bounds = array<i64: 128, 128>}, {transform_indices = @transform_4, window_bounds = array<i64: 128, 128>}]} {
    %c0 = arith.constant 0 : index
    %c0_0 = arith.constant 0 : index
    %0 = vector.load %arg2[%c0, %c0_0] : memref<128x128xbf16, #tpu.memory_space<vmem>>, vector<128x128xbf16>
    %c0_1 = arith.constant 0 : index
    %c0_2 = arith.constant 0 : index
    %1 = vector.load %arg3[%c0_1, %c0_2] : memref<128x128xbf16, #tpu.memory_space<vmem>>, vector<128x128xbf16>
    %cst = arith.constant dense<0.000000e+00> : vector<128x128xf32>
    %2 = tpu.matmul %0, %1, %cst {dimension_numbers = #tpu.dot_dimension_numbers<[1], [0], [0], [1], [0, 0, 1, 1], [], []>} : vector<128x128xbf16>, vector<128x128xbf16>, vector<128x128xf32> -> vector<128x128xf32>
    %c0_3 = arith.constant 0 : index
    %c0_4 = arith.constant 0 : index
    %3 = vector.load %arg4[%c0_3, %c0_4] : memref<1x128xf32, #tpu.memory_space<vmem>>, vector<1x128xf32>
    %4 = vector.broadcast %3 : vector<1x128xf32> to vector<128x128xf32>
    %5 = arith.addf %2, %4 : vector<128x128xf32>
    %c0_5 = arith.constant 0 : index
    %c0_6 = arith.constant 0 : index
    %6 = vector.load %arg5[%c0_5, %c0_6] : memref<128x128xf32, #tpu.memory_space<vmem>>, vector<128x128xf32>
    %7 = arith.addf %5, %6 : vector<128x128xf32>
    %cst_7 = arith.constant 0.000000e+00 : f32
    %8 = vector.broadcast %cst_7 : f32 to vector<128x128xf32>
    %9 = arith.maximumf %7, %8 : vector<128x128xf32>
    %c0_8 = arith.constant 0 : index
    %c0_9 = arith.constant 0 : index
    %10 = vector.load %arg6[%c0_8, %c0_9] : memref<128x128xf32, #tpu.memory_space<vmem>>, vector<128x128xf32>
    tpu.vector_store %arg6[%c0_8, %c0_9], %9 {strides = array<i32>} : memref<128x128xf32, #tpu.memory_space<vmem>>, vector<128x128xf32>,
    return
  }
  func.func @transform_0(%arg0: i32, %arg1: i32) -> (i32, i32) {
    %c0_i32 = arith.constant 0 : i32
    %c0_i32_0 = arith.constant 0 : i32
    return %arg0, %c0_i32 : i32, i32
  }
  func.func @transform_1(%arg0: i32, %arg1: i32) -> (i32, i32) {
    %c0_i32 = arith.constant 0 : i32
    %c0_i32_0 = arith.constant 0 : i32
    return %c0_i32, %arg1 : i32, i32
  }
  func.func @transform_2(%arg0: i32, %arg1: i32) -> (i32, i32) {
    %c0_i32 = arith.constant 0 : i32
    %c0_i32_0 = arith.constant 0 : i32
    return %c0_i32, %arg1 : i32, i32
  }
  func.func @transform_3(%arg0: i32, %arg1: i32) -> (i32, i32) {
    %c0_i32 = arith.constant 0 : i32
    return %arg0, %arg1 : i32, i32
  }
  func.func @transform_4(%arg0: i32, %arg1: i32) -> (i32, i32) {
    %c0_i32 = arith.constant 0 : i32
    return %arg0, %arg1 : i32, i32
  }
}

module attributes {stable_mosaic.version = 11 : i64} {
  func.func @_mm_kernel(%arg0: i32, %arg1: i32, %arg2: memref<32x128xbf16, #tpu.memory_space<vmem>>, %arg3: memref<128x128xbf16, #tpu.memory_space<vmem>>, %arg4: memref<1x128xf32, #tpu.memory_space<vmem>>, %arg5: memref<32x128xf32, #tpu.memory_space<vmem>>) attributes {dimension_semantics = [#tpu.dimension_semantics<parallel>, #tpu.dimension_semantics<parallel>], iteration_bounds = array<i64: 1, 1>, scalar_prefetch = 0 : i64, scratch_operands = 0 : i64, tpu.core_type = #tpu.core_type<tc>, window_params = [{transform_indices = @transform_0, window_bounds = array<i64: 32, 128>}, {transform_indices = @transform_1, window_bounds = array<i64: 128, 128>}, {transform_indices = @transform_2, window_bounds = array<i64: 1, 128>}, {transform_indices = @transform_3, window_bounds = array<i64: 32, 128>}]} {
    %c0 = arith.constant 0 : index
    %c0_0 = arith.constant 0 : index
    %0 = vector.load %arg2[%c0, %c0_0] : memref<32x128xbf16, #tpu.memory_space<vmem>>, vector<32x128xbf16>
    %c0_1 = arith.constant 0 : index
    %c0_2 = arith.constant 0 : index
    %1 = vector.load %arg3[%c0_1, %c0_2] : memref<128x128xbf16, #tpu.memory_space<vmem>>, vector<128x128xbf16>
    %cst = arith.constant dense<0.000000e+00> : vector<32x128xf32>
    %2 = tpu.matmul %0, %1, %cst {dimension_numbers = #tpu.dot_dimension_numbers<[1], [0], [0], [1], [0, 0, 1, 1], [], []>} : vector<32x128xbf16>, vector<128x128xbf16>, vector<32x128xf32> -> vector<32x128xf32>
    %c0_3 = arith.constant 0 : index
    %c0_4 = arith.constant 0 : index
    %3 = vector.load %arg4[%c0_3, %c0_4] : memref<1x128xf32, #tpu.memory_space<vmem>>, vector<1x128xf32>
    %4 = vector.broadcast %3 : vector<1x128xf32> to vector<32x128xf32>
    %5 = arith.addf %2, %4 : vector<32x128xf32>
    %c0_5 = arith.constant 0 : index
    %c0_6 = arith.constant 0 : index
    %6 = vector.load %arg5[%c0_5, %c0_6] : memref<32x128xf32, #tpu.memory_space<vmem>>, vector<32x128xf32>
    tpu.vector_store %arg5[%c0_5, %c0_6], %5 {strides = array<i32>} : memref<32x128xf32, #tpu.memory_space<vmem>>, vector<32x128xf32>,
    return
  }
  func.func @transform_0(%arg0: i32, %arg1: i32) -> (i32, i32) {
    %c0_i32 = arith.constant 0 : i32
    %c0_i32_0 = arith.constant 0 : i32
    return %arg0, %c0_i32 : i32, i32
  }
  func.func @transform_1(%arg0: i32, %arg1: i32) -> (i32, i32) {
    %c0_i32 = arith.constant 0 : i32
    %c0_i32_0 = arith.constant 0 : i32
    return %c0_i32, %arg1 : i32, i32
  }
  func.func @transform_2(%arg0: i32, %arg1: i32) -> (i32, i32) {
    %c0_i32 = arith.constant 0 : i32
    %c0_i32_0 = arith.constant 0 : i32
    return %c0_i32, %arg1 : i32, i32
  }
  func.func @transform_3(%arg0: i32, %arg1: i32) -> (i32, i32) {
    %c0_i32 = arith.constant 0 : i32
    return %arg0, %arg1 : i32, i32
  }
}

module attributes {stable_mosaic.version = 11 : i64} {
  func.func @_mm_res_kernel(%arg0: i32, %arg1: i32, %arg2: memref<32x256xbf16, #tpu.memory_space<vmem>>, %arg3: memref<256x128xbf16, #tpu.memory_space<vmem>>, %arg4: memref<1x128xf32, #tpu.memory_space<vmem>>, %arg5: memref<32x128xf32, #tpu.memory_space<vmem>>, %arg6: memref<32x128xf32, #tpu.memory_space<vmem>>) attributes {dimension_semantics = [#tpu.dimension_semantics<parallel>, #tpu.dimension_semantics<parallel>], iteration_bounds = array<i64: 1, 1>, scalar_prefetch = 0 : i64, scratch_operands = 0 : i64, tpu.core_type = #tpu.core_type<tc>, window_params = [{transform_indices = @transform_0, window_bounds = array<i64: 32, 256>}, {transform_indices = @transform_1, window_bounds = array<i64: 256, 128>}, {transform_indices = @transform_2, window_bounds = array<i64: 1, 128>}, {transform_indices = @transform_3, window_bounds = array<i64: 32, 128>}, {transform_indices = @transform_4, window_bounds = array<i64: 32, 128>}]} {
    %c0 = arith.constant 0 : index
    %c0_0 = arith.constant 0 : index
    %0 = vector.load %arg2[%c0, %c0_0] : memref<32x256xbf16, #tpu.memory_space<vmem>>, vector<32x256xbf16>
    %c0_1 = arith.constant 0 : index
    %c0_2 = arith.constant 0 : index
    %1 = vector.load %arg3[%c0_1, %c0_2] : memref<256x128xbf16, #tpu.memory_space<vmem>>, vector<256x128xbf16>
    %cst = arith.constant dense<0.000000e+00> : vector<32x128xf32>
    %2 = tpu.matmul %0, %1, %cst {dimension_numbers = #tpu.dot_dimension_numbers<[1], [0], [0], [1], [0, 0, 1, 1], [], []>} : vector<32x256xbf16>, vector<256x128xbf16>, vector<32x128xf32> -> vector<32x128xf32>
    %c0_3 = arith.constant 0 : index
    %c0_4 = arith.constant 0 : index
    %3 = vector.load %arg4[%c0_3, %c0_4] : memref<1x128xf32, #tpu.memory_space<vmem>>, vector<1x128xf32>
    %4 = vector.broadcast %3 : vector<1x128xf32> to vector<32x128xf32>
    %5 = arith.addf %2, %4 : vector<32x128xf32>
    %c0_5 = arith.constant 0 : index
    %c0_6 = arith.constant 0 : index
    %6 = vector.load %arg5[%c0_5, %c0_6] : memref<32x128xf32, #tpu.memory_space<vmem>>, vector<32x128xf32>
    %7 = arith.addf %5, %6 : vector<32x128xf32>
    %cst_7 = arith.constant 0.000000e+00 : f32
    %8 = vector.broadcast %cst_7 : f32 to vector<32x128xf32>
    %9 = arith.maximumf %7, %8 : vector<32x128xf32>
    %c0_8 = arith.constant 0 : index
    %c0_9 = arith.constant 0 : index
    %10 = vector.load %arg6[%c0_8, %c0_9] : memref<32x128xf32, #tpu.memory_space<vmem>>, vector<32x128xf32>
    tpu.vector_store %arg6[%c0_8, %c0_9], %9 {strides = array<i32>} : memref<32x128xf32, #tpu.memory_space<vmem>>, vector<32x128xf32>,
    return
  }
  func.func @transform_0(%arg0: i32, %arg1: i32) -> (i32, i32) {
    %c0_i32 = arith.constant 0 : i32
    %c0_i32_0 = arith.constant 0 : i32
    return %arg0, %c0_i32 : i32, i32
  }
  func.func @transform_1(%arg0: i32, %arg1: i32) -> (i32, i32) {
    %c0_i32 = arith.constant 0 : i32
    %c0_i32_0 = arith.constant 0 : i32
    return %c0_i32, %arg1 : i32, i32
  }
  func.func @transform_2(%arg0: i32, %arg1: i32) -> (i32, i32) {
    %c0_i32 = arith.constant 0 : i32
    %c0_i32_0 = arith.constant 0 : i32
    return %c0_i32, %arg1 : i32, i32
  }
  func.func @transform_3(%arg0: i32, %arg1: i32) -> (i32, i32) {
    %c0_i32 = arith.constant 0 : i32
    return %arg0, %arg1 : i32, i32
  }
  func.func @transform_4(%arg0: i32, %arg1: i32) -> (i32, i32) {
    %c0_i32 = arith.constant 0 : i32
    return %arg0, %arg1 : i32, i32
  }
}

module attributes {stable_mosaic.version = 11 : i64} {
  func.func @_mm_kernel(%arg0: i32, %arg1: i32, %arg2: memref<32x256xbf16, #tpu.memory_space<vmem>>, %arg3: memref<256x128xbf16, #tpu.memory_space<vmem>>, %arg4: memref<1x128xf32, #tpu.memory_space<vmem>>, %arg5: memref<32x128xf32, #tpu.memory_space<vmem>>) attributes {dimension_semantics = [#tpu.dimension_semantics<parallel>, #tpu.dimension_semantics<parallel>], iteration_bounds = array<i64: 1, 1>, scalar_prefetch = 0 : i64, scratch_operands = 0 : i64, tpu.core_type = #tpu.core_type<tc>, window_params = [{transform_indices = @transform_0, window_bounds = array<i64: 32, 256>}, {transform_indices = @transform_1, window_bounds = array<i64: 256, 128>}, {transform_indices = @transform_2, window_bounds = array<i64: 1, 128>}, {transform_indices = @transform_3, window_bounds = array<i64: 32, 128>}]} {
    %c0 = arith.constant 0 : index
    %c0_0 = arith.constant 0 : index
    %0 = vector.load %arg2[%c0, %c0_0] : memref<32x256xbf16, #tpu.memory_space<vmem>>, vector<32x256xbf16>
    %c0_1 = arith.constant 0 : index
    %c0_2 = arith.constant 0 : index
    %1 = vector.load %arg3[%c0_1, %c0_2] : memref<256x128xbf16, #tpu.memory_space<vmem>>, vector<256x128xbf16>
    %cst = arith.constant dense<0.000000e+00> : vector<32x128xf32>
    %2 = tpu.matmul %0, %1, %cst {dimension_numbers = #tpu.dot_dimension_numbers<[1], [0], [0], [1], [0, 0, 1, 1], [], []>} : vector<32x256xbf16>, vector<256x128xbf16>, vector<32x128xf32> -> vector<32x128xf32>
    %c0_3 = arith.constant 0 : index
    %c0_4 = arith.constant 0 : index
    %3 = vector.load %arg4[%c0_3, %c0_4] : memref<1x128xf32, #tpu.memory_space<vmem>>, vector<1x128xf32>
    %4 = vector.broadcast %3 : vector<1x128xf32> to vector<32x128xf32>
    %5 = arith.addf %2, %4 : vector<32x128xf32>
    %cst_5 = arith.constant 0.000000e+00 : f32
    %6 = vector.broadcast %cst_5 : f32 to vector<32x128xf32>
    %7 = arith.maximumf %5, %6 : vector<32x128xf32>
    %c0_6 = arith.constant 0 : index
    %c0_7 = arith.constant 0 : index
    %8 = vector.load %arg5[%c0_6, %c0_7] : memref<32x128xf32, #tpu.memory_space<vmem>>, vector<32x128xf32>
    tpu.vector_store %arg5[%c0_6, %c0_7], %7 {strides = array<i32>} : memref<32x128xf32, #tpu.memory_space<vmem>>, vector<32x128xf32>,
    return
  }
  func.func @transform_0(%arg0: i32, %arg1: i32) -> (i32, i32) {
    %c0_i32 = arith.constant 0 : i32
    %c0_i32_0 = arith.constant 0 : i32
    return %arg0, %c0_i32 : i32, i32
  }
  func.func @transform_1(%arg0: i32, %arg1: i32) -> (i32, i32) {
    %c0_i32 = arith.constant 0 : i32
    %c0_i32_0 = arith.constant 0 : i32
    return %c0_i32, %arg1 : i32, i32
  }
  func.func @transform_2(%arg0: i32, %arg1: i32) -> (i32, i32) {
    %c0_i32 = arith.constant 0 : i32
    %c0_i32_0 = arith.constant 0 : i32
    return %c0_i32, %arg1 : i32, i32
  }
  func.func @transform_3(%arg0: i32, %arg1: i32) -> (i32, i32) {
    %c0_i32 = arith.constant 0 : i32
    return %arg0, %arg1 : i32, i32
  }
}

module attributes {stable_mosaic.version = 11 : i64} {
  func.func @_mm_res_kernel(%arg0: i32, %arg1: i32, %arg2: memref<16x384xbf16, #tpu.memory_space<vmem>>, %arg3: memref<384x128xbf16, #tpu.memory_space<vmem>>, %arg4: memref<1x128xf32, #tpu.memory_space<vmem>>, %arg5: memref<16x128xf32, #tpu.memory_space<vmem>>, %arg6: memref<16x128xf32, #tpu.memory_space<vmem>>) attributes {dimension_semantics = [#tpu.dimension_semantics<parallel>, #tpu.dimension_semantics<parallel>], iteration_bounds = array<i64: 1, 1>, scalar_prefetch = 0 : i64, scratch_operands = 0 : i64, tpu.core_type = #tpu.core_type<tc>, window_params = [{transform_indices = @transform_0, window_bounds = array<i64: 16, 384>}, {transform_indices = @transform_1, window_bounds = array<i64: 384, 128>}, {transform_indices = @transform_2, window_bounds = array<i64: 1, 128>}, {transform_indices = @transform_3, window_bounds = array<i64: 16, 128>}, {transform_indices = @transform_4, window_bounds = array<i64: 16, 128>}]} {
    %c0 = arith.constant 0 : index
    %c0_0 = arith.constant 0 : index
    %0 = vector.load %arg2[%c0, %c0_0] : memref<16x384xbf16, #tpu.memory_space<vmem>>, vector<16x384xbf16>
    %c0_1 = arith.constant 0 : index
    %c0_2 = arith.constant 0 : index
    %1 = vector.load %arg3[%c0_1, %c0_2] : memref<384x128xbf16, #tpu.memory_space<vmem>>, vector<384x128xbf16>
    %cst = arith.constant dense<0.000000e+00> : vector<16x128xf32>
    %2 = tpu.matmul %0, %1, %cst {dimension_numbers = #tpu.dot_dimension_numbers<[1], [0], [0], [1], [0, 0, 1, 1], [], []>} : vector<16x384xbf16>, vector<384x128xbf16>, vector<16x128xf32> -> vector<16x128xf32>
    %c0_3 = arith.constant 0 : index
    %c0_4 = arith.constant 0 : index
    %3 = vector.load %arg4[%c0_3, %c0_4] : memref<1x128xf32, #tpu.memory_space<vmem>>, vector<1x128xf32>
    %4 = vector.broadcast %3 : vector<1x128xf32> to vector<16x128xf32>
    %5 = arith.addf %2, %4 : vector<16x128xf32>
    %c0_5 = arith.constant 0 : index
    %c0_6 = arith.constant 0 : index
    %6 = vector.load %arg5[%c0_5, %c0_6] : memref<16x128xf32, #tpu.memory_space<vmem>>, vector<16x128xf32>
    %7 = arith.addf %5, %6 : vector<16x128xf32>
    %cst_7 = arith.constant 0.000000e+00 : f32
    %8 = vector.broadcast %cst_7 : f32 to vector<16x128xf32>
    %9 = arith.maximumf %7, %8 : vector<16x128xf32>
    %c0_8 = arith.constant 0 : index
    %c0_9 = arith.constant 0 : index
    %10 = vector.load %arg6[%c0_8, %c0_9] : memref<16x128xf32, #tpu.memory_space<vmem>>, vector<16x128xf32>
    tpu.vector_store %arg6[%c0_8, %c0_9], %9 {strides = array<i32>} : memref<16x128xf32, #tpu.memory_space<vmem>>, vector<16x128xf32>,
    return
  }
  func.func @transform_0(%arg0: i32, %arg1: i32) -> (i32, i32) {
    %c0_i32 = arith.constant 0 : i32
    %c0_i32_0 = arith.constant 0 : i32
    return %arg0, %c0_i32 : i32, i32
  }
  func.func @transform_1(%arg0: i32, %arg1: i32) -> (i32, i32) {
    %c0_i32 = arith.constant 0 : i32
    %c0_i32_0 = arith.constant 0 : i32
    return %c0_i32, %arg1 : i32, i32
  }
  func.func @transform_2(%arg0: i32, %arg1: i32) -> (i32, i32) {
    %c0_i32 = arith.constant 0 : i32
    %c0_i32_0 = arith.constant 0 : i32
    return %c0_i32, %arg1 : i32, i32
  }
  func.func @transform_3(%arg0: i32, %arg1: i32) -> (i32, i32) {
    %c0_i32 = arith.constant 0 : i32
    return %arg0, %arg1 : i32, i32
  }
  func.func @transform_4(%arg0: i32, %arg1: i32) -> (i32, i32) {
    %c0_i32 = arith.constant 0 : i32
    return %arg0, %arg1 : i32, i32
  }
}

module attributes {stable_mosaic.version = 11 : i64} {
  func.func @_mm_kernel(%arg0: i32, %arg1: i32, %arg2: memref<16x128xbf16, #tpu.memory_space<vmem>>, %arg3: memref<128x128xbf16, #tpu.memory_space<vmem>>, %arg4: memref<1x128xf32, #tpu.memory_space<vmem>>, %arg5: memref<16x128xf32, #tpu.memory_space<vmem>>) attributes {dimension_semantics = [#tpu.dimension_semantics<parallel>, #tpu.dimension_semantics<parallel>], iteration_bounds = array<i64: 1, 1>, scalar_prefetch = 0 : i64, scratch_operands = 0 : i64, tpu.core_type = #tpu.core_type<tc>, window_params = [{transform_indices = @transform_0, window_bounds = array<i64: 16, 128>}, {transform_indices = @transform_1, window_bounds = array<i64: 128, 128>}, {transform_indices = @transform_2, window_bounds = array<i64: 1, 128>}, {transform_indices = @transform_3, window_bounds = array<i64: 16, 128>}]} {
    %c0 = arith.constant 0 : index
    %c0_0 = arith.constant 0 : index
    %0 = vector.load %arg2[%c0, %c0_0] : memref<16x128xbf16, #tpu.memory_space<vmem>>, vector<16x128xbf16>
    %c0_1 = arith.constant 0 : index
    %c0_2 = arith.constant 0 : index
    %1 = vector.load %arg3[%c0_1, %c0_2] : memref<128x128xbf16, #tpu.memory_space<vmem>>, vector<128x128xbf16>
    %cst = arith.constant dense<0.000000e+00> : vector<16x128xf32>
    %2 = tpu.matmul %0, %1, %cst {dimension_numbers = #tpu.dot_dimension_numbers<[1], [0], [0], [1], [0, 0, 1, 1], [], []>} : vector<16x128xbf16>, vector<128x128xbf16>, vector<16x128xf32> -> vector<16x128xf32>
    %c0_3 = arith.constant 0 : index
    %c0_4 = arith.constant 0 : index
    %3 = vector.load %arg4[%c0_3, %c0_4] : memref<1x128xf32, #tpu.memory_space<vmem>>, vector<1x128xf32>
    %4 = vector.broadcast %3 : vector<1x128xf32> to vector<16x128xf32>
    %5 = arith.addf %2, %4 : vector<16x128xf32>
    %c0_5 = arith.constant 0 : index
    %c0_6 = arith.constant 0 : index
    %6 = vector.load %arg5[%c0_5, %c0_6] : memref<16x128xf32, #tpu.memory_space<vmem>>, vector<16x128xf32>
    tpu.vector_store %arg5[%c0_5, %c0_6], %5 {strides = array<i32>} : memref<16x128xf32, #tpu.memory_space<vmem>>, vector<16x128xf32>,
    return
  }
  func.func @transform_0(%arg0: i32, %arg1: i32) -> (i32, i32) {
    %c0_i32 = arith.constant 0 : i32
    %c0_i32_0 = arith.constant 0 : i32
    return %arg0, %c0_i32 : i32, i32
  }
  func.func @transform_1(%arg0: i32, %arg1: i32) -> (i32, i32) {
    %c0_i32 = arith.constant 0 : i32
    %c0_i32_0 = arith.constant 0 : i32
    return %c0_i32, %arg1 : i32, i32
  }
  func.func @transform_2(%arg0: i32, %arg1: i32) -> (i32, i32) {
    %c0_i32 = arith.constant 0 : i32
    %c0_i32_0 = arith.constant 0 : i32
    return %c0_i32, %arg1 : i32, i32
  }
  func.func @transform_3(%arg0: i32, %arg1: i32) -> (i32, i32) {
    %c0_i32 = arith.constant 0 : i32
    return %arg0, %arg1 : i32, i32
  }
}

module attributes {stable_mosaic.version = 11 : i64} {
  func.func @_mm_kernel(%arg0: i32, %arg1: i32, %arg2: memref<16x384xbf16, #tpu.memory_space<vmem>>, %arg3: memref<384x128xbf16, #tpu.memory_space<vmem>>, %arg4: memref<1x128xf32, #tpu.memory_space<vmem>>, %arg5: memref<16x128xf32, #tpu.memory_space<vmem>>) attributes {dimension_semantics = [#tpu.dimension_semantics<parallel>, #tpu.dimension_semantics<parallel>], iteration_bounds = array<i64: 1, 1>, scalar_prefetch = 0 : i64, scratch_operands = 0 : i64, tpu.core_type = #tpu.core_type<tc>, window_params = [{transform_indices = @transform_0, window_bounds = array<i64: 16, 384>}, {transform_indices = @transform_1, window_bounds = array<i64: 384, 128>}, {transform_indices = @transform_2, window_bounds = array<i64: 1, 128>}, {transform_indices = @transform_3, window_bounds = array<i64: 16, 128>}]} {
    %c0 = arith.constant 0 : index
    %c0_0 = arith.constant 0 : index
    %0 = vector.load %arg2[%c0, %c0_0] : memref<16x384xbf16, #tpu.memory_space<vmem>>, vector<16x384xbf16>
    %c0_1 = arith.constant 0 : index
    %c0_2 = arith.constant 0 : index
    %1 = vector.load %arg3[%c0_1, %c0_2] : memref<384x128xbf16, #tpu.memory_space<vmem>>, vector<384x128xbf16>
    %cst = arith.constant dense<0.000000e+00> : vector<16x128xf32>
    %2 = tpu.matmul %0, %1, %cst {dimension_numbers = #tpu.dot_dimension_numbers<[1], [0], [0], [1], [0, 0, 1, 1], [], []>} : vector<16x384xbf16>, vector<384x128xbf16>, vector<16x128xf32> -> vector<16x128xf32>
    %c0_3 = arith.constant 0 : index
    %c0_4 = arith.constant 0 : index
    %3 = vector.load %arg4[%c0_3, %c0_4] : memref<1x128xf32, #tpu.memory_space<vmem>>, vector<1x128xf32>
    %4 = vector.broadcast %3 : vector<1x128xf32> to vector<16x128xf32>
    %5 = arith.addf %2, %4 : vector<16x128xf32>
    %cst_5 = arith.constant 0.000000e+00 : f32
    %6 = vector.broadcast %cst_5 : f32 to vector<16x128xf32>
    %7 = arith.maximumf %5, %6 : vector<16x128xf32>
    %c0_6 = arith.constant 0 : index
    %c0_7 = arith.constant 0 : index
    %8 = vector.load %arg5[%c0_6, %c0_7] : memref<16x128xf32, #tpu.memory_space<vmem>>, vector<16x128xf32>
    tpu.vector_store %arg5[%c0_6, %c0_7], %7 {strides = array<i32>} : memref<16x128xf32, #tpu.memory_space<vmem>>, vector<16x128xf32>,
    return
  }
  func.func @transform_0(%arg0: i32, %arg1: i32) -> (i32, i32) {
    %c0_i32 = arith.constant 0 : i32
    %c0_i32_0 = arith.constant 0 : i32
    return %arg0, %c0_i32 : i32, i32
  }
  func.func @transform_1(%arg0: i32, %arg1: i32) -> (i32, i32) {
    %c0_i32 = arith.constant 0 : i32
    %c0_i32_0 = arith.constant 0 : i32
    return %c0_i32, %arg1 : i32, i32
  }
  func.func @transform_2(%arg0: i32, %arg1: i32) -> (i32, i32) {
    %c0_i32 = arith.constant 0 : i32
    %c0_i32_0 = arith.constant 0 : i32
    return %c0_i32, %arg1 : i32, i32
  }
  func.func @transform_3(%arg0: i32, %arg1: i32) -> (i32, i32) {
    %c0_i32 = arith.constant 0 : i32
    return %arg0, %arg1 : i32, i32
  }
}

module attributes {stable_mosaic.version = 11 : i64} {
  func.func @_mm_res_kernel(%arg0: i32, %arg1: i32, %arg2: memref<16x640xbf16, #tpu.memory_space<vmem>>, %arg3: memref<640x128xbf16, #tpu.memory_space<vmem>>, %arg4: memref<1x128xf32, #tpu.memory_space<vmem>>, %arg5: memref<16x128xf32, #tpu.memory_space<vmem>>, %arg6: memref<16x128xf32, #tpu.memory_space<vmem>>) attributes {dimension_semantics = [#tpu.dimension_semantics<parallel>, #tpu.dimension_semantics<parallel>], iteration_bounds = array<i64: 1, 1>, scalar_prefetch = 0 : i64, scratch_operands = 0 : i64, tpu.core_type = #tpu.core_type<tc>, window_params = [{transform_indices = @transform_0, window_bounds = array<i64: 16, 640>}, {transform_indices = @transform_1, window_bounds = array<i64: 640, 128>}, {transform_indices = @transform_2, window_bounds = array<i64: 1, 128>}, {transform_indices = @transform_3, window_bounds = array<i64: 16, 128>}, {transform_indices = @transform_4, window_bounds = array<i64: 16, 128>}]} {
    %c0 = arith.constant 0 : index
    %c0_0 = arith.constant 0 : index
    %0 = vector.load %arg2[%c0, %c0_0] : memref<16x640xbf16, #tpu.memory_space<vmem>>, vector<16x640xbf16>
    %c0_1 = arith.constant 0 : index
    %c0_2 = arith.constant 0 : index
    %1 = vector.load %arg3[%c0_1, %c0_2] : memref<640x128xbf16, #tpu.memory_space<vmem>>, vector<640x128xbf16>
    %cst = arith.constant dense<0.000000e+00> : vector<16x128xf32>
    %2 = tpu.matmul %0, %1, %cst {dimension_numbers = #tpu.dot_dimension_numbers<[1], [0], [0], [1], [0, 0, 1, 1], [], []>} : vector<16x640xbf16>, vector<640x128xbf16>, vector<16x128xf32> -> vector<16x128xf32>
    %c0_3 = arith.constant 0 : index
    %c0_4 = arith.constant 0 : index
    %3 = vector.load %arg4[%c0_3, %c0_4] : memref<1x128xf32, #tpu.memory_space<vmem>>, vector<1x128xf32>
    %4 = vector.broadcast %3 : vector<1x128xf32> to vector<16x128xf32>
    %5 = arith.addf %2, %4 : vector<16x128xf32>
    %c0_5 = arith.constant 0 : index
    %c0_6 = arith.constant 0 : index
    %6 = vector.load %arg5[%c0_5, %c0_6] : memref<16x128xf32, #tpu.memory_space<vmem>>, vector<16x128xf32>
    %7 = arith.addf %5, %6 : vector<16x128xf32>
    %cst_7 = arith.constant 0.000000e+00 : f32
    %8 = vector.broadcast %cst_7 : f32 to vector<16x128xf32>
    %9 = arith.maximumf %7, %8 : vector<16x128xf32>
    %c0_8 = arith.constant 0 : index
    %c0_9 = arith.constant 0 : index
    %10 = vector.load %arg6[%c0_8, %c0_9] : memref<16x128xf32, #tpu.memory_space<vmem>>, vector<16x128xf32>
    tpu.vector_store %arg6[%c0_8, %c0_9], %9 {strides = array<i32>} : memref<16x128xf32, #tpu.memory_space<vmem>>, vector<16x128xf32>,
    return
  }
  func.func @transform_0(%arg0: i32, %arg1: i32) -> (i32, i32) {
    %c0_i32 = arith.constant 0 : i32
    %c0_i32_0 = arith.constant 0 : i32
    return %arg0, %c0_i32 : i32, i32
  }
  func.func @transform_1(%arg0: i32, %arg1: i32) -> (i32, i32) {
    %c0_i32 = arith.constant 0 : i32
    %c0_i32_0 = arith.constant 0 : i32
    return %c0_i32, %arg1 : i32, i32
  }
  func.func @transform_2(%arg0: i32, %arg1: i32) -> (i32, i32) {
    %c0_i32 = arith.constant 0 : i32
    %c0_i32_0 = arith.constant 0 : i32
    return %c0_i32, %arg1 : i32, i32
  }
  func.func @transform_3(%arg0: i32, %arg1: i32) -> (i32, i32) {
    %c0_i32 = arith.constant 0 : i32
    return %arg0, %arg1 : i32, i32
  }
  func.func @transform_4(%arg0: i32, %arg1: i32) -> (i32, i32) {
    %c0_i32 = arith.constant 0 : i32
    return %arg0, %arg1 : i32, i32
  }
}

module attributes {stable_mosaic.version = 11 : i64} {
  func.func @_mm_kernel(%arg0: i32, %arg1: i32, %arg2: memref<16x640xbf16, #tpu.memory_space<vmem>>, %arg3: memref<640x256xbf16, #tpu.memory_space<vmem>>, %arg4: memref<1x256xf32, #tpu.memory_space<vmem>>, %arg5: memref<16x256xf32, #tpu.memory_space<vmem>>) attributes {dimension_semantics = [#tpu.dimension_semantics<parallel>, #tpu.dimension_semantics<parallel>], iteration_bounds = array<i64: 1, 1>, scalar_prefetch = 0 : i64, scratch_operands = 0 : i64, tpu.core_type = #tpu.core_type<tc>, window_params = [{transform_indices = @transform_0, window_bounds = array<i64: 16, 640>}, {transform_indices = @transform_1, window_bounds = array<i64: 640, 256>}, {transform_indices = @transform_2, window_bounds = array<i64: 1, 256>}, {transform_indices = @transform_3, window_bounds = array<i64: 16, 256>}]} {
    %c0 = arith.constant 0 : index
    %c0_0 = arith.constant 0 : index
    %0 = vector.load %arg2[%c0, %c0_0] : memref<16x640xbf16, #tpu.memory_space<vmem>>, vector<16x640xbf16>
    %c0_1 = arith.constant 0 : index
    %c0_2 = arith.constant 0 : index
    %1 = vector.load %arg3[%c0_1, %c0_2] : memref<640x256xbf16, #tpu.memory_space<vmem>>, vector<640x256xbf16>
    %cst = arith.constant dense<0.000000e+00> : vector<16x256xf32>
    %2 = tpu.matmul %0, %1, %cst {dimension_numbers = #tpu.dot_dimension_numbers<[1], [0], [0], [1], [0, 0, 1, 1], [], []>} : vector<16x640xbf16>, vector<640x256xbf16>, vector<16x256xf32> -> vector<16x256xf32>
    %c0_3 = arith.constant 0 : index
    %c0_4 = arith.constant 0 : index
    %3 = vector.load %arg4[%c0_3, %c0_4] : memref<1x256xf32, #tpu.memory_space<vmem>>, vector<1x256xf32>
    %4 = vector.broadcast %3 : vector<1x256xf32> to vector<16x256xf32>
    %5 = arith.addf %2, %4 : vector<16x256xf32>
    %cst_5 = arith.constant 0.000000e+00 : f32
    %6 = vector.broadcast %cst_5 : f32 to vector<16x256xf32>
    %7 = arith.maximumf %5, %6 : vector<16x256xf32>
    %c0_6 = arith.constant 0 : index
    %c0_7 = arith.constant 0 : index
    %8 = vector.load %arg5[%c0_6, %c0_7] : memref<16x256xf32, #tpu.memory_space<vmem>>, vector<16x256xf32>
    tpu.vector_store %arg5[%c0_6, %c0_7], %7 {strides = array<i32>} : memref<16x256xf32, #tpu.memory_space<vmem>>, vector<16x256xf32>,
    return
  }
  func.func @transform_0(%arg0: i32, %arg1: i32) -> (i32, i32) {
    %c0_i32 = arith.constant 0 : i32
    %c0_i32_0 = arith.constant 0 : i32
    return %arg0, %c0_i32 : i32, i32
  }
  func.func @transform_1(%arg0: i32, %arg1: i32) -> (i32, i32) {
    %c0_i32 = arith.constant 0 : i32
    %c0_i32_0 = arith.constant 0 : i32
    return %c0_i32, %arg1 : i32, i32
  }
  func.func @transform_2(%arg0: i32, %arg1: i32) -> (i32, i32) {
    %c0_i32 = arith.constant 0 : i32
    %c0_i32_0 = arith.constant 0 : i32
    return %c0_i32, %arg1 : i32, i32
  }
  func.func @transform_3(%arg0: i32, %arg1: i32) -> (i32, i32) {
    %c0_i32 = arith.constant 0 : i32
    return %arg0, %arg1 : i32, i32
  }
}

module attributes {stable_mosaic.version = 11 : i64} {
  func.func @_mm_kernel(%arg0: i32, %arg1: i32, %arg2: memref<16x2304xbf16, #tpu.memory_space<vmem>>, %arg3: memref<2304x256xbf16, #tpu.memory_space<vmem>>, %arg4: memref<1x256xf32, #tpu.memory_space<vmem>>, %arg5: memref<16x256xf32, #tpu.memory_space<vmem>>) attributes {dimension_semantics = [#tpu.dimension_semantics<parallel>, #tpu.dimension_semantics<parallel>], iteration_bounds = array<i64: 1, 1>, scalar_prefetch = 0 : i64, scratch_operands = 0 : i64, tpu.core_type = #tpu.core_type<tc>, window_params = [{transform_indices = @transform_0, window_bounds = array<i64: 16, 2304>}, {transform_indices = @transform_1, window_bounds = array<i64: 2304, 256>}, {transform_indices = @transform_2, window_bounds = array<i64: 1, 256>}, {transform_indices = @transform_3, window_bounds = array<i64: 16, 256>}]} {
    %c0 = arith.constant 0 : index
    %c0_0 = arith.constant 0 : index
    %0 = vector.load %arg2[%c0, %c0_0] : memref<16x2304xbf16, #tpu.memory_space<vmem>>, vector<16x2304xbf16>
    %c0_1 = arith.constant 0 : index
    %c0_2 = arith.constant 0 : index
    %1 = vector.load %arg3[%c0_1, %c0_2] : memref<2304x256xbf16, #tpu.memory_space<vmem>>, vector<2304x256xbf16>
    %cst = arith.constant dense<0.000000e+00> : vector<16x256xf32>
    %2 = tpu.matmul %0, %1, %cst {dimension_numbers = #tpu.dot_dimension_numbers<[1], [0], [0], [1], [0, 0, 1, 1], [], []>} : vector<16x2304xbf16>, vector<2304x256xbf16>, vector<16x256xf32> -> vector<16x256xf32>
    %c0_3 = arith.constant 0 : index
    %c0_4 = arith.constant 0 : index
    %3 = vector.load %arg4[%c0_3, %c0_4] : memref<1x256xf32, #tpu.memory_space<vmem>>, vector<1x256xf32>
    %4 = vector.broadcast %3 : vector<1x256xf32> to vector<16x256xf32>
    %5 = arith.addf %2, %4 : vector<16x256xf32>
    %cst_5 = arith.constant 0.000000e+00 : f32
    %6 = vector.broadcast %cst_5 : f32 to vector<16x256xf32>
    %7 = arith.maximumf %5, %6 : vector<16x256xf32>
    %c0_6 = arith.constant 0 : index
    %c0_7 = arith.constant 0 : index
    %8 = vector.load %arg5[%c0_6, %c0_7] : memref<16x256xf32, #tpu.memory_space<vmem>>, vector<16x256xf32>
    tpu.vector_store %arg5[%c0_6, %c0_7], %7 {strides = array<i32>} : memref<16x256xf32, #tpu.memory_space<vmem>>, vector<16x256xf32>,
    return
  }
  func.func @transform_0(%arg0: i32, %arg1: i32) -> (i32, i32) {
    %c0_i32 = arith.constant 0 : i32
    %c0_i32_0 = arith.constant 0 : i32
    return %arg0, %c0_i32 : i32, i32
  }
  func.func @transform_1(%arg0: i32, %arg1: i32) -> (i32, i32) {
    %c0_i32 = arith.constant 0 : i32
    %c0_i32_0 = arith.constant 0 : i32
    return %c0_i32, %arg1 : i32, i32
  }
  func.func @transform_2(%arg0: i32, %arg1: i32) -> (i32, i32) {
    %c0_i32 = arith.constant 0 : i32
    %c0_i32_0 = arith.constant 0 : i32
    return %c0_i32, %arg1 : i32, i32
  }
  func.func @transform_3(%arg0: i32, %arg1: i32) -> (i32, i32) {
    %c0_i32 = arith.constant 0 : i32
    return %arg0, %arg1 : i32, i32
  }
}

module attributes {stable_mosaic.version = 11 : i64} {
  func.func @_mm_res_kernel(%arg0: i32, %arg1: i32, %arg2: memref<16x256xbf16, #tpu.memory_space<vmem>>, %arg3: memref<256x128xbf16, #tpu.memory_space<vmem>>, %arg4: memref<1x128xf32, #tpu.memory_space<vmem>>, %arg5: memref<16x128xf32, #tpu.memory_space<vmem>>, %arg6: memref<16x128xf32, #tpu.memory_space<vmem>>) attributes {dimension_semantics = [#tpu.dimension_semantics<parallel>, #tpu.dimension_semantics<parallel>], iteration_bounds = array<i64: 1, 1>, scalar_prefetch = 0 : i64, scratch_operands = 0 : i64, tpu.core_type = #tpu.core_type<tc>, window_params = [{transform_indices = @transform_0, window_bounds = array<i64: 16, 256>}, {transform_indices = @transform_1, window_bounds = array<i64: 256, 128>}, {transform_indices = @transform_2, window_bounds = array<i64: 1, 128>}, {transform_indices = @transform_3, window_bounds = array<i64: 16, 128>}, {transform_indices = @transform_4, window_bounds = array<i64: 16, 128>}]} {
    %c0 = arith.constant 0 : index
    %c0_0 = arith.constant 0 : index
    %0 = vector.load %arg2[%c0, %c0_0] : memref<16x256xbf16, #tpu.memory_space<vmem>>, vector<16x256xbf16>
    %c0_1 = arith.constant 0 : index
    %c0_2 = arith.constant 0 : index
    %1 = vector.load %arg3[%c0_1, %c0_2] : memref<256x128xbf16, #tpu.memory_space<vmem>>, vector<256x128xbf16>
    %cst = arith.constant dense<0.000000e+00> : vector<16x128xf32>
    %2 = tpu.matmul %0, %1, %cst {dimension_numbers = #tpu.dot_dimension_numbers<[1], [0], [0], [1], [0, 0, 1, 1], [], []>} : vector<16x256xbf16>, vector<256x128xbf16>, vector<16x128xf32> -> vector<16x128xf32>
    %c0_3 = arith.constant 0 : index
    %c0_4 = arith.constant 0 : index
    %3 = vector.load %arg4[%c0_3, %c0_4] : memref<1x128xf32, #tpu.memory_space<vmem>>, vector<1x128xf32>
    %4 = vector.broadcast %3 : vector<1x128xf32> to vector<16x128xf32>
    %5 = arith.addf %2, %4 : vector<16x128xf32>
    %c0_5 = arith.constant 0 : index
    %c0_6 = arith.constant 0 : index
    %6 = vector.load %arg5[%c0_5, %c0_6] : memref<16x128xf32, #tpu.memory_space<vmem>>, vector<16x128xf32>
    %7 = arith.addf %5, %6 : vector<16x128xf32>
    %c0_7 = arith.constant 0 : index
    %c0_8 = arith.constant 0 : index
    %8 = vector.load %arg6[%c0_7, %c0_8] : memref<16x128xf32, #tpu.memory_space<vmem>>, vector<16x128xf32>
    tpu.vector_store %arg6[%c0_7, %c0_8], %7 {strides = array<i32>} : memref<16x128xf32, #tpu.memory_space<vmem>>, vector<16x128xf32>,
    return
  }
  func.func @transform_0(%arg0: i32, %arg1: i32) -> (i32, i32) {
    %c0_i32 = arith.constant 0 : i32
    %c0_i32_0 = arith.constant 0 : i32
    return %arg0, %c0_i32 : i32, i32
  }
  func.func @transform_1(%arg0: i32, %arg1: i32) -> (i32, i32) {
    %c0_i32 = arith.constant 0 : i32
    %c0_i32_0 = arith.constant 0 : i32
    return %c0_i32, %arg1 : i32, i32
  }
  func.func @transform_2(%arg0: i32, %arg1: i32) -> (i32, i32) {
    %c0_i32 = arith.constant 0 : i32
    %c0_i32_0 = arith.constant 0 : i32
    return %c0_i32, %arg1 : i32, i32
  }
  func.func @transform_3(%arg0: i32, %arg1: i32) -> (i32, i32) {
    %c0_i32 = arith.constant 0 : i32
    return %arg0, %arg1 : i32, i32
  }
  func.func @transform_4(%arg0: i32, %arg1: i32) -> (i32, i32) {
    %c0_i32 = arith.constant 0 : i32
    return %arg0, %arg1 : i32, i32
  }
}

module attributes {stable_mosaic.version = 11 : i64} {
  func.func @_mm_kernel(%arg0: i32, %arg1: i32, %arg2: memref<32x128xbf16, #tpu.memory_space<vmem>>, %arg3: memref<128x256xbf16, #tpu.memory_space<vmem>>, %arg4: memref<1x256xf32, #tpu.memory_space<vmem>>, %arg5: memref<32x256xf32, #tpu.memory_space<vmem>>) attributes {dimension_semantics = [#tpu.dimension_semantics<parallel>, #tpu.dimension_semantics<parallel>], iteration_bounds = array<i64: 1, 4>, scalar_prefetch = 0 : i64, scratch_operands = 0 : i64, tpu.core_type = #tpu.core_type<tc>, window_params = [{transform_indices = @transform_0, window_bounds = array<i64: 32, 128>}, {transform_indices = @transform_1, window_bounds = array<i64: 128, 256>}, {transform_indices = @transform_2, window_bounds = array<i64: 1, 256>}, {transform_indices = @transform_3, window_bounds = array<i64: 32, 256>}]} {
    %c0 = arith.constant 0 : index
    %c0_0 = arith.constant 0 : index
    %0 = vector.load %arg2[%c0, %c0_0] : memref<32x128xbf16, #tpu.memory_space<vmem>>, vector<32x128xbf16>
    %c0_1 = arith.constant 0 : index
    %c0_2 = arith.constant 0 : index
    %1 = vector.load %arg3[%c0_1, %c0_2] : memref<128x256xbf16, #tpu.memory_space<vmem>>, vector<128x256xbf16>
    %cst = arith.constant dense<0.000000e+00> : vector<32x256xf32>
    %2 = tpu.matmul %0, %1, %cst {dimension_numbers = #tpu.dot_dimension_numbers<[1], [0], [0], [1], [0, 0, 1, 1], [], []>} : vector<32x128xbf16>, vector<128x256xbf16>, vector<32x256xf32> -> vector<32x256xf32>
    %c0_3 = arith.constant 0 : index
    %c0_4 = arith.constant 0 : index
    %3 = vector.load %arg4[%c0_3, %c0_4] : memref<1x256xf32, #tpu.memory_space<vmem>>, vector<1x256xf32>
    %4 = vector.broadcast %3 : vector<1x256xf32> to vector<32x256xf32>
    %5 = arith.addf %2, %4 : vector<32x256xf32>
    %c0_5 = arith.constant 0 : index
    %c0_6 = arith.constant 0 : index
    %6 = vector.load %arg5[%c0_5, %c0_6] : memref<32x256xf32, #tpu.memory_space<vmem>>, vector<32x256xf32>
    tpu.vector_store %arg5[%c0_5, %c0_6], %5 {strides = array<i32>} : memref<32x256xf32, #tpu.memory_space<vmem>>, vector<32x256xf32>,
    return
  }
  func.func @transform_0(%arg0: i32, %arg1: i32) -> (i32, i32) {
    %c0_i32 = arith.constant 0 : i32
    %c0_i32_0 = arith.constant 0 : i32
    return %arg0, %c0_i32 : i32, i32
  }
  func.func @transform_1(%arg0: i32, %arg1: i32) -> (i32, i32) {
    %c0_i32 = arith.constant 0 : i32
    %c0_i32_0 = arith.constant 0 : i32
    return %c0_i32, %arg1 : i32, i32
  }
  func.func @transform_2(%arg0: i32, %arg1: i32) -> (i32, i32) {
    %c0_i32 = arith.constant 0 : i32
    %c0_i32_0 = arith.constant 0 : i32
    return %c0_i32, %arg1 : i32, i32
  }
  func.func @transform_3(%arg0: i32, %arg1: i32) -> (i32, i32) {
    %c0_i32 = arith.constant 0 : i32
    return %arg0, %arg1 : i32, i32
  }
}

</mosaic_0001>

<llo_original>
// kernel: fcn_forward.18
$region0: #{fcn_forward.18}
  #allocation0 [shape = 'u32[]', space=smem, size = 0x4, offset = 0x4, fixed_abs, tag = 'smem constant byte address 0x4 - core index']
  #allocation1 [shape = 'u32[72,128]{1,0:T(1,128)}', space=vmem, size = 0x9000, scoped, tag = 'internal scratch']
  %s0 = inlined_call_operand.vmem [shape: bf16[512,256], index: 0, kind: input, shape index: {}]
  %s1 = inlined_call_operand.vmem [shape: bf16[256,128], index: 1, kind: input, shape index: {}]
  %s2 = inlined_call_operand.vmem [shape: f32[1,128], index: 2, kind: input, shape index: {}]
  %s3 = inlined_call_operand.vmem [shape: f32[512,128], index: 3, kind: output, shape index: {}]
  %s4 = sld [smem:[#allocation0]]
  $region22: #{fcn_forward.18} parent=0
    _
  %s6 = ssub.s32 1, %s4
  %s7 = scalar_select 0, %s6, %s4
  // Predicated region
  $region2: #{fcn_forward.18} parent=0 // pred_check
    _
  $region3: #{fcn_forward.18} parent=0 // pred_check_branch
    %9 = sbr.rel (0) target = $region5
  $region4: #{fcn_forward.18} parent=0 // pred_region
    _
  $region5: #{fcn_forward.18} parent=0 // pred_fallthru
    _
  // Predicated region
  $region6: #{fcn_forward.18} parent=0 // pred_check
    _
  $region7: #{fcn_forward.18} parent=0 // pred_check_branch
    %11 = sbr.rel (0) target = $region9
  $region8: #{fcn_forward.18} parent=0 // pred_region
    _
  $region9: #{fcn_forward.18} parent=0 // pred_fallthru
    _
  // Predicated region
  $region10: #{fcn_forward.18} parent=0 // pred_check
    _
  $region11: #{fcn_forward.18} parent=0 // pred_check_branch
    %13 = sbr.rel (0) target = $region13
  $region12: #{fcn_forward.18} parent=0 // pred_region
    _
  $region13: #{fcn_forward.18} parent=0 // pred_fallthru
    _
  %v14 = vld [vmem:[%s0] sm:$0xff]
  %v15 = vld [vmem:[%s0 + $0x8] sm:$0xff]
  %v16 = vld [vmem:[%s0 + $0x10] sm:$0xff]
  %v17 = vld [vmem:[%s0 + $0x18] sm:$0xff]
  %v18 = vld [vmem:[%s0 + $0x20] sm:$0xff]
  %v19 = vld [vmem:[%s0 + $0x28] sm:$0xff]
  %v20 = vld [vmem:[%s0 + $0x30] sm:$0xff]
  %v21 = vld [vmem:[%s0 + $0x38] sm:$0xff]
  %v22 = vld [vmem:[%s0 + $0x40] sm:$0xff]
  %v23 = vld [vmem:[%s0 + $0x48] sm:$0xff]
  %v24 = vld [vmem:[%s0 + $0x50] sm:$0xff]
  %v25 = vld [vmem:[%s0 + $0x58] sm:$0xff]
  %v26 = vld [vmem:[%s0 + $0x60] sm:$0xff]
  %v27 = vld [vmem:[%s0 + $0x68] sm:$0xff]
  %v28 = vld [vmem:[%s0 + $0x70] sm:$0xff]
  %v29 = vld [vmem:[%s0 + $0x78] sm:$0xff]
  %v30 = vld [vmem:[%s0 + $0x80] sm:$0xff]
  %v31 = vld [vmem:[%s0 + $0x88] sm:$0xff]
  %v32 = vld [vmem:[%s0 + $0x90] sm:$0xff]
  %v33 = vld [vmem:[%s0 + $0x98] sm:$0xff]
  %v34 = vld [vmem:[%s0 + $0xa0] sm:$0xff]
  %v35 = vld [vmem:[%s0 + $0xa8] sm:$0xff]
  %v36 = vld [vmem:[%s0 + $0xb0] sm:$0xff]
  %v37 = vld [vmem:[%s0 + $0xb8] sm:$0xff]
  %v38 = vld [vmem:[%s0 + $0xc0] sm:$0xff]
  %v39 = vld [vmem:[%s0 + $0xc8] sm:$0xff]
  %v40 = vld [vmem:[%s0 + $0xd0] sm:$0xff]
  %v41 = vld [vmem:[%s0 + $0xd8] sm:$0xff]
  %v42 = vld [vmem:[%s0 + $0xe0] sm:$0xff]
  %v43 = vld [vmem:[%s0 + $0xe8] sm:$0xff]
  %v44 = vld [vmem:[%s0 + $0xf0] sm:$0xff]
  %v45 = vld [vmem:[%s0 + $0xf8] sm:$0xff]
  %v46 = vld [vmem:[%s0 + $0x100] sm:$0xff]
  %v47 = vld [vmem:[%s0 + $0x108] sm:$0xff]
  %v48 = vld [vmem:[%s0 + $0x110] sm:$0xff]
  %v49 = vld [vmem:[%s0 + $0x118] sm:$0xff]
  %v50 = vld [vmem:[%s0 + $0x120] sm:$0xff]
  %v51 = vld [vmem:[%s0 + $0x128] sm:$0xff]
  %v52 = vld [vmem:[%s0 + $0x130] sm:$0xff]
  %v53 = vld [vmem:[%s0 + $0x138] sm:$0xff]
  %v54 = vld [vmem:[%s0 + $0x140] sm:$0xff]
  %v55 = vld [vmem:[%s0 + $0x148] sm:$0xff]
  %v56 = vld [vmem:[%s0 + $0x150] sm:$0xff]
  %v57 = vld [vmem:[%s0 + $0x158] sm:$0xff]
  %v58 = vld [vmem:[%s0 + $0x160] sm:$0xff]
  %v59 = vld [vmem:[%s0 + $0x168] sm:$0xff]
  %v60 = vld [vmem:[%s0 + $0x170] sm:$0xff]
  %v61 = vld [vmem:[%s0 + $0x178] sm:$0xff]
  %v62 = vld [vmem:[%s0 + $0x180] sm:$0xff]
  %v63 = vld [vmem:[%s0 + $0x188] sm:$0xff]
  %v64 = vld [vmem:[%s0 + $0x190] sm:$0xff]
  %v65 = vld [vmem:[%s0 + $0x198] sm:$0xff]
  %v66 = vld [vmem:[%s0 + $0x1a0] sm:$0xff]
  %v67 = vld [vmem:[%s0 + $0x1a8] sm:$0xff]
  %v68 = vld [vmem:[%s0 + $0x1b0] sm:$0xff]
  %v69 = vld [vmem:[%s0 + $0x1b8] sm:$0xff]
  %v70 = vld [vmem:[%s0 + $0x1c0] sm:$0xff]
  %v71 = vld [vmem:[%s0 + $0x1c8] sm:$0xff]
  %v72 = vld [vmem:[%s0 + $0x1d0] sm:$0xff]
  %v73 = vld [vmem:[%s0 + $0x1d8] sm:$0xff]
  %v74 = vld [vmem:[%s0 + $0x1e0] sm:$0xff]
  %v75 = vld [vmem:[%s0 + $0x1e8] sm:$0xff]
  %v76 = vld [vmem:[%s0 + $0x1f0] sm:$0xff]
  %v77 = vld [vmem:[%s0 + $0x1f8] sm:$0xff]
  %v78 = vld [vmem:[%s1] sm:$0xf]
  %v79 = vld [vmem:[%s1 + $0x4] sm:$0xf]
  %v80 = vld [vmem:[%s1 + $0x8] sm:$0xf]
  %v81 = vld [vmem:[%s1 + $0xc] sm:$0xf]
  %v82 = vld [vmem:[%s1 + $0x10] sm:$0xf]
  %v83 = vld [vmem:[%s1 + $0x14] sm:$0xf]
  %v84 = vld [vmem:[%s1 + $0x18] sm:$0xf]
  %v85 = vld [vmem:[%s1 + $0x1c] sm:$0xf]
  %v86 = vld [vmem:[%s1 + $0x20] sm:$0xf]
  %v87 = vld [vmem:[%s1 + $0x24] sm:$0xf]
  %v88 = vld [vmem:[%s1 + $0x28] sm:$0xf]
  %v89 = vld [vmem:[%s1 + $0x2c] sm:$0xf]
  %v90 = vld [vmem:[%s1 + $0x30] sm:$0xf]
  %v91 = vld [vmem:[%s1 + $0x34] sm:$0xf]
  %v92 = vld [vmem:[%s1 + $0x38] sm:$0xf]
  %v93 = vld [vmem:[%s1 + $0x3c] sm:$0xf]
  %v94 = vld [vmem:[%s1 + $0x40] sm:$0xf]
  %v95 = vld [vmem:[%s1 + $0x44] sm:$0xf]
  %v96 = vld [vmem:[%s1 + $0x48] sm:$0xf]
  %v97 = vld [vmem:[%s1 + $0x4c] sm:$0xf]
  %v98 = vld [vmem:[%s1 + $0x50] sm:$0xf]
  %v99 = vld [vmem:[%s1 + $0x54] sm:$0xf]
  %v100 = vld [vmem:[%s1 + $0x58] sm:$0xf]
  %v101 = vld [vmem:[%s1 + $0x5c] sm:$0xf]
  %v102 = vld [vmem:[%s1 + $0x60] sm:$0xf]
  %v103 = vld [vmem:[%s1 + $0x64] sm:$0xf]
  %v104 = vld [vmem:[%s1 + $0x68] sm:$0xf]
  %v105 = vld [vmem:[%s1 + $0x6c] sm:$0xf]
  %v106 = vld [vmem:[%s1 + $0x70] sm:$0xf]
  %v107 = vld [vmem:[%s1 + $0x74] sm:$0xf]
  %v108 = vld [vmem:[%s1 + $0x78] sm:$0xf]
  %v109 = vld [vmem:[%s1 + $0x7c] sm:$0xf]
  %v110 = vld [vmem:[%s2] sm:$0x1]
  %v112 = vperm.slane %v110, 0
  %v178 = vunpack.c.l.b16 %v14
  %v179 = vunpack.c.h.b16 %v14
  %v180 = vunpack.c.l.b16 %v15
  %v181 = vunpack.c.h.b16 %v15
  %v182 = vunpack.c.l.b16 %v16
  %v183 = vunpack.c.h.b16 %v16
  %v184 = vunpack.c.l.b16 %v17
  %v185 = vunpack.c.h.b16 %v17
  %v186 = vunpack.c.l.b16 %v18
  %v187 = vunpack.c.h.b16 %v18
  %v188 = vunpack.c.l.b16 %v19
  %v189 = vunpack.c.h.b16 %v19
  %v190 = vunpack.c.l.b16 %v20
  %v191 = vunpack.c.h.b16 %v20
  %v192 = vunpack.c.l.b16 %v21
  %v193 = vunpack.c.h.b16 %v21
  %v194 = vunpack.c.l.b16 %v22
  %v195 = vunpack.c.h.b16 %v22
  %v196 = vunpack.c.l.b16 %v23
  %v197 = vunpack.c.h.b16 %v23
  %v198 = vunpack.c.l.b16 %v24
  %v199 = vunpack.c.h.b16 %v24
  %v200 = vunpack.c.l.b16 %v25
  %v201 = vunpack.c.h.b16 %v25
  %v202 = vunpack.c.l.b16 %v26
  %v203 = vunpack.c.h.b16 %v26
  %v204 = vunpack.c.l.b16 %v27
  %v205 = vunpack.c.h.b16 %v27
  %v206 = vunpack.c.l.b16 %v28
  %v207 = vunpack.c.h.b16 %v28
  %v208 = vunpack.c.l.b16 %v29
  %v209 = vunpack.c.h.b16 %v29
  %v210 = vunpack.c.l.b16 %v30
  %v211 = vunpack.c.h.b16 %v30
  %v212 = vunpack.c.l.b16 %v31
  %v213 = vunpack.c.h.b16 %v31
  %v214 = vunpack.c.l.b16 %v32
  %v215 = vunpack.c.h.b16 %v32
  %v216 = vunpack.c.l.b16 %v33
  %v217 = vunpack.c.h.b16 %v33
  %v218 = vunpack.c.l.b16 %v34
  %v219 = vunpack.c.h.b16 %v34
  %v220 = vunpack.c.l.b16 %v35
  %v221 = vunpack.c.h.b16 %v35
  %v222 = vunpack.c.l.b16 %v36
  %v223 = vunpack.c.h.b16 %v36
  %v224 = vunpack.c.l.b16 %v37
  %v225 = vunpack.c.h.b16 %v37
  %v226 = vunpack.c.l.b16 %v38
  %v227 = vunpack.c.h.b16 %v38
  %v228 = vunpack.c.l.b16 %v39
  %v229 = vunpack.c.h.b16 %v39
  %v230 = vunpack.c.l.b16 %v40
  %v231 = vunpack.c.h.b16 %v40
  %v232 = vunpack.c.l.b16 %v41
  %v233 = vunpack.c.h.b16 %v41
  %v234 = vunpack.c.l.b16 %v42
  %v235 = vunpack.c.h.b16 %v42
  %v236 = vunpack.c.l.b16 %v43
  %v237 = vunpack.c.h.b16 %v43
  %v238 = vunpack.c.l.b16 %v44
  %v239 = vunpack.c.h.b16 %v44
  %v240 = vunpack.c.l.b16 %v45
  %v241 = vunpack.c.h.b16 %v45
  %v242 = vunpack.c.l.b16 %v46
  %v243 = vunpack.c.h.b16 %v46
  %v244 = vunpack.c.l.b16 %v47
  %v245 = vunpack.c.h.b16 %v47
  %v246 = vunpack.c.l.b16 %v48
  %v247 = vunpack.c.h.b16 %v48
  %v248 = vunpack.c.l.b16 %v49
  %v249 = vunpack.c.h.b16 %v49
  %v250 = vunpack.c.l.b16 %v50
  %v251 = vunpack.c.h.b16 %v50
  %v252 = vunpack.c.l.b16 %v51
  %v253 = vunpack.c.h.b16 %v51
  %v254 = vunpack.c.l.b16 %v52
  %v255 = vunpack.c.h.b16 %v52
  %v256 = vunpack.c.l.b16 %v53
  %v257 = vunpack.c.h.b16 %v53
  %v258 = vunpack.c.l.b16 %v54
  %v259 = vunpack.c.h.b16 %v54
  %v260 = vunpack.c.l.b16 %v55
  %v261 = vunpack.c.h.b16 %v55
  %v262 = vunpack.c.l.b16 %v56
  %v263 = vunpack.c.h.b16 %v56
  %v264 = vunpack.c.l.b16 %v57
  %v265 = vunpack.c.h.b16 %v57
  %v266 = vunpack.c.l.b16 %v58
  %v267 = vunpack.c.h.b16 %v58
  %v268 = vunpack.c.l.b16 %v59
  %v269 = vunpack.c.h.b16 %v59
  %v270 = vunpack.c.l.b16 %v60
  %v271 = vunpack.c.h.b16 %v60
  %v272 = vunpack.c.l.b16 %v61
  %v273 = vunpack.c.h.b16 %v61
  %v274 = vunpack.c.l.b16 %v62
  %v275 = vunpack.c.h.b16 %v62
  %v276 = vunpack.c.l.b16 %v63
  %v277 = vunpack.c.h.b16 %v63
  %v278 = vunpack.c.l.b16 %v64
  %v279 = vunpack.c.h.b16 %v64
  %v280 = vunpack.c.l.b16 %v65
  %v281 = vunpack.c.h.b16 %v65
  %v282 = vunpack.c.l.b16 %v66
  %v283 = vunpack.c.h.b16 %v66
  %v284 = vunpack.c.l.b16 %v67
  %v285 = vunpack.c.h.b16 %v67
  %v286 = vunpack.c.l.b16 %v68
  %v287 = vunpack.c.h.b16 %v68
  %v288 = vunpack.c.l.b16 %v69
  %v289 = vunpack.c.h.b16 %v69
  %v290 = vunpack.c.l.b16 %v70
  %v291 = vunpack.c.h.b16 %v70
  %v292 = vunpack.c.l.b16 %v71
  %v293 = vunpack.c.h.b16 %v71
  %v294 = vunpack.c.l.b16 %v72
  %v295 = vunpack.c.h.b16 %v72
  %v296 = vunpack.c.l.b16 %v73
  %v297 = vunpack.c.h.b16 %v73
  %v298 = vunpack.c.l.b16 %v74
  %v299 = vunpack.c.h.b16 %v74
  %v300 = vunpack.c.l.b16 %v75
  %v301 = vunpack.c.h.b16 %v75
  %v302 = vunpack.c.l.b16 %v76
  %v303 = vunpack.c.h.b16 %v76
  %v304 = vunpack.c.l.b16 %v77
  %v305 = vunpack.c.h.b16 %v77
  %v306 = vpack.c.b16 %v180, %v178
  %v307 = vpack.c.b16 %v181, %v179
  %v308 = vpack.c.b16 %v184, %v182
  %v309 = vpack.c.b16 %v185, %v183
  %v310 = vpack.c.b16 %v188, %v186
  %v311 = vpack.c.b16 %v189, %v187
  %v312 = vpack.c.b16 %v192, %v190
  %v313 = vpack.c.b16 %v193, %v191
  %v314 = vpack.c.b16 %v196, %v194
  %v315 = vpack.c.b16 %v197, %v195
  %v316 = vpack.c.b16 %v200, %v198
  %v317 = vpack.c.b16 %v201, %v199
  %v318 = vpack.c.b16 %v204, %v202
  %v319 = vpack.c.b16 %v205, %v203
  %v320 = vpack.c.b16 %v208, %v206
  %v321 = vpack.c.b16 %v209, %v207
  %v322 = vpack.c.b16 %v212, %v210
  %v323 = vpack.c.b16 %v213, %v211
  %v324 = vpack.c.b16 %v216, %v214
  %v325 = vpack.c.b16 %v217, %v215
  %v326 = vpack.c.b16 %v220, %v218
  %v327 = vpack.c.b16 %v221, %v219
  %v328 = vpack.c.b16 %v224, %v222
  %v329 = vpack.c.b16 %v225, %v223
  %v330 = vpack.c.b16 %v228, %v226
  %v331 = vpack.c.b16 %v229, %v227
  %v332 = vpack.c.b16 %v232, %v230
  %v333 = vpack.c.b16 %v233, %v231
  %v334 = vpack.c.b16 %v236, %v234
  %v335 = vpack.c.b16 %v237, %v235
  %v336 = vpack.c.b16 %v240, %v238
  %v337 = vpack.c.b16 %v241, %v239
  %v338 = vpack.c.b16 %v244, %v242
  %v339 = vpack.c.b16 %v245, %v243
  %v340 = vpack.c.b16 %v248, %v246
  %v341 = vpack.c.b16 %v249, %v247
  %v342 = vpack.c.b16 %v252, %v250
  %v343 = vpack.c.b16 %v253, %v251
  %v344 = vpack.c.b16 %v256, %v254
  %v345 = vpack.c.b16 %v257, %v255
  %v346 = vpack.c.b16 %v260, %v258
  %v347 = vpack.c.b16 %v261, %v259
  %v348 = vpack.c.b16 %v264, %v262
  %v349 = vpack.c.b16 %v265, %v263
  %v350 = vpack.c.b16 %v268, %v266
  %v351 = vpack.c.b16 %v269, %v267
  %v352 = vpack.c.b16 %v272, %v270
  %v353 = vpack.c.b16 %v273, %v271
  %v354 = vpack.c.b16 %v276, %v274
  %v355 = vpack.c.b16 %v277, %v275
  %v356 = vpack.c.b16 %v280, %v278
  %v357 = vpack.c.b16 %v281, %v279
  %v358 = vpack.c.b16 %v284, %v282
  %v359 = vpack.c.b16 %v285, %v283
  %v360 = vpack.c.b16 %v288, %v286
  %v361 = vpack.c.b16 %v289, %v287
  %v362 = vpack.c.b16 %v292, %v290
  %v363 = vpack.c.b16 %v293, %v291
  %v364 = vpack.c.b16 %v296, %v294
  %v365 = vpack.c.b16 %v297, %v295
  %v366 = vpack.c.b16 %v300, %v298
  %v367 = vpack.c.b16 %v301, %v299
  %v368 = vpack.c.b16 %v304, %v302
  %v369 = vpack.c.b16 %v305, %v303
  %v466 = vunpack.c.l.b16 %v78
  %v467 = vunpack.c.l.b16 %v79
  %v468 = vunpack.c.l.b16 %v80
  %v469 = vunpack.c.l.b16 %v81
  %v470 = vunpack.c.l.b16 %v82
  %v471 = vunpack.c.l.b16 %v83
  %v472 = vunpack.c.l.b16 %v84
  %v473 = vunpack.c.l.b16 %v85
  %v474 = vunpack.c.l.b16 %v86
  %v475 = vunpack.c.l.b16 %v87
  %v476 = vunpack.c.l.b16 %v88
  %v477 = vunpack.c.l.b16 %v89
  %v478 = vunpack.c.l.b16 %v90
  %v479 = vunpack.c.l.b16 %v91
  %v480 = vunpack.c.l.b16 %v92
  %v481 = vunpack.c.l.b16 %v93
  %v482 = vunpack.c.l.b16 %v94
  %v483 = vunpack.c.l.b16 %v95
  %v484 = vunpack.c.l.b16 %v96
  %v485 = vunpack.c.l.b16 %v97
  %v486 = vunpack.c.l.b16 %v98
  %v487 = vunpack.c.l.b16 %v99
  %v488 = vunpack.c.l.b16 %v100
  %v489 = vunpack.c.l.b16 %v101
  %v490 = vunpack.c.l.b16 %v102
  %v491 = vunpack.c.l.b16 %v103
  %v492 = vunpack.c.l.b16 %v104
  %v493 = vunpack.c.l.b16 %v105
  %v494 = vunpack.c.l.b16 %v106
  %v495 = vunpack.c.l.b16 %v107
  %v496 = vunpack.c.l.b16 %v108
  %v497 = vunpack.c.l.b16 %v109
  %v498 = vpack.c.b16 %v467, %v466
  %v499 = vpack.c.b16 %v469, %v468
  %v500 = vpack.c.b16 %v471, %v470
  %v501 = vpack.c.b16 %v473, %v472
  %v502 = vpack.c.b16 %v475, %v474
  %v503 = vpack.c.b16 %v477, %v476
  %v504 = vpack.c.b16 %v479, %v478
  %v505 = vpack.c.b16 %v481, %v480
  %v506 = vpack.c.b16 %v483, %v482
  %v507 = vpack.c.b16 %v485, %v484
  %v508 = vpack.c.b16 %v487, %v486
  %v509 = vpack.c.b16 %v489, %v488
  %v510 = vpack.c.b16 %v491, %v490
  %v511 = vpack.c.b16 %v493, %v492
  %v512 = vpack.c.b16 %v495, %v494
  %v513 = vpack.c.b16 %v497, %v496
  %530 = vmatpush.bf16.msra.mxu0 %v505
  %531 = vmatpush.bf16.msra.mxu0 %v504
  %532 = vmatpush.bf16.msra.mxu0 %v503
  %533 = vmatpush.bf16.msra.mxu0 %v502
  %534 = vmatpush.bf16.msra.mxu0 %v501
  %535 = vmatpush.bf16.msra.mxu0 %v500
  %536 = vmatpush.bf16.msra.mxu0 %v499
  %537 = vmatpush.bf16.msra.mxu0 %v498
  %538 = vmatmul.bf16.gmra.mxu0 %v306
  %v539 = vpop.f32.mrf.mxu0
  %v540 = vadd.f32 %v112, %v539
  %v541 = vpop.f32.mrf.mxu0
  %v542 = vadd.f32 %v112, %v541
  %543 = vmatmul.bf16.gmra.mxu0 %v308
  %v544 = vpop.f32.mrf.mxu0
  %v545 = vadd.f32 %v112, %v544
  %v546 = vpop.f32.mrf.mxu0
  %v547 = vadd.f32 %v112, %v546
  %548 = vmatmul.bf16.gmra.mxu0 %v310
  %v549 = vpop.f32.mrf.mxu0
  %v550 = vadd.f32 %v112, %v549
  %v551 = vpop.f32.mrf.mxu0
  %v552 = vadd.f32 %v112, %v551
  %553 = vmatmul.bf16.gmra.mxu0 %v312
  %v554 = vpop.f32.mrf.mxu0
  %v555 = vadd.f32 %v112, %v554
  %v556 = vpop.f32.mrf.mxu0
  %v557 = vadd.f32 %v112, %v556
  %558 = vmatmul.bf16.gmra.mxu0 %v314
  %v559 = vpop.f32.mrf.mxu0
  %v560 = vadd.f32 %v112, %v559
  %v561 = vpop.f32.mrf.mxu0
  %v562 = vadd.f32 %v112, %v561
  %563 = vmatmul.bf16.gmra.mxu0 %v316
  %v564 = vpop.f32.mrf.mxu0
  %v565 = vadd.f32 %v112, %v564
  %v566 = vpop.f32.mrf.mxu0
  %v567 = vadd.f32 %v112, %v566
  %568 = vmatmul.bf16.gmra.mxu0 %v318
  %v569 = vpop.f32.mrf.mxu0
  %v570 = vadd.f32 %v112, %v569
  %v571 = vpop.f32.mrf.mxu0
  %v572 = vadd.f32 %v112, %v571
  %573 = vmatmul.bf16.gmra.mxu0 %v320
  %v574 = vpop.f32.mrf.mxu0
  %v575 = vadd.f32 %v112, %v574
  %v576 = vpop.f32.mrf.mxu0
  %v577 = vadd.f32 %v112, %v576
  %578 = vmatmul.bf16.gmra.mxu0 %v322
  %v579 = vpop.f32.mrf.mxu0
  %v580 = vadd.f32 %v112, %v579
  %v581 = vpop.f32.mrf.mxu0
  %v582 = vadd.f32 %v112, %v581
  %583 = vmatmul.bf16.gmra.mxu0 %v324
  %v584 = vpop.f32.mrf.mxu0
  %v585 = vadd.f32 %v112, %v584
  %v586 = vpop.f32.mrf.mxu0
  %v587 = vadd.f32 %v112, %v586
  %588 = vmatmul.bf16.gmra.mxu0 %v326
  %v589 = vpop.f32.mrf.mxu0
  %v590 = vadd.f32 %v112, %v589
  %v591 = vpop.f32.mrf.mxu0
  %v592 = vadd.f32 %v112, %v591
  %593 = vmatmul.bf16.gmra.mxu0 %v328
  %v594 = vpop.f32.mrf.mxu0
  %v595 = vadd.f32 %v112, %v594
  %v596 = vpop.f32.mrf.mxu0
  %v597 = vadd.f32 %v112, %v596
  %598 = vmatmul.bf16.gmra.mxu0 %v330
  %v599 = vpop.f32.mrf.mxu0
  %v600 = vadd.f32 %v112, %v599
  %v601 = vpop.f32.mrf.mxu0
  %v602 = vadd.f32 %v112, %v601
  %603 = vmatmul.bf16.gmra.mxu0 %v332
  %v604 = vpop.f32.mrf.mxu0
  %v605 = vadd.f32 %v112, %v604
  %v606 = vpop.f32.mrf.mxu0
  %v607 = vadd.f32 %v112, %v606
  %608 = vmatmul.bf16.gmra.mxu0 %v334
  %v609 = vpop.f32.mrf.mxu0
  %v610 = vadd.f32 %v112, %v609
  %v611 = vpop.f32.mrf.mxu0
  %v612 = vadd.f32 %v112, %v611
  %613 = vmatmul.bf16.gmra.mxu0 %v336
  %v614 = vpop.f32.mrf.mxu0
  %v615 = vadd.f32 %v112, %v614
  %v616 = vpop.f32.mrf.mxu0
  %v617 = vadd.f32 %v112, %v616
  %618 = vmatmul.bf16.gmra.mxu0 %v338
  %v619 = vpop.f32.mrf.mxu0
  %v620 = vadd.f32 %v112, %v619
  %v621 = vpop.f32.mrf.mxu0
  %v622 = vadd.f32 %v112, %v621
  %623 = vmatmul.bf16.gmra.mxu0 %v340
  %v624 = vpop.f32.mrf.mxu0
  %v625 = vadd.f32 %v112, %v624
  %v626 = vpop.f32.mrf.mxu0
  %v627 = vadd.f32 %v112, %v626
  %628 = vmatmul.bf16.gmra.mxu0 %v342
  %v629 = vpop.f32.mrf.mxu0
  %v630 = vadd.f32 %v112, %v629
  %v631 = vpop.f32.mrf.mxu0
  %v632 = vadd.f32 %v112, %v631
  %633 = vmatmul.bf16.gmra.mxu0 %v344
  %v634 = vpop.f32.mrf.mxu0
  %v635 = vadd.f32 %v112, %v634
  %v636 = vpop.f32.mrf.mxu0
  %v637 = vadd.f32 %v112, %v636
  %638 = vmatmul.bf16.gmra.mxu0 %v346
  %v639 = vpop.f32.mrf.mxu0
  %v640 = vadd.f32 %v112, %v639
  %v641 = vpop.f32.mrf.mxu0
  %v642 = vadd.f32 %v112, %v641
  %643 = vmatmul.bf16.gmra.mxu0 %v348
  %v644 = vpop.f32.mrf.mxu0
  %v645 = vadd.f32 %v112, %v644
  %v646 = vpop.f32.mrf.mxu0
  %v647 = vadd.f32 %v112, %v646
  %648 = vmatmul.bf16.gmra.mxu0 %v350
  %v649 = vpop.f32.mrf.mxu0
  %v650 = vadd.f32 %v112, %v649
  %v651 = vpop.f32.mrf.mxu0
  %v652 = vadd.f32 %v112, %v651
  %653 = vmatmul.bf16.gmra.mxu0 %v352
  %v654 = vpop.f32.mrf.mxu0
  %v655 = vadd.f32 %v112, %v654
  %v656 = vpop.f32.mrf.mxu0
  %v657 = vadd.f32 %v112, %v656
  %658 = vmatmul.bf16.gmra.mxu0 %v354
  %v659 = vpop.f32.mrf.mxu0
  %v660 = vadd.f32 %v112, %v659
  %v661 = vpop.f32.mrf.mxu0
  %v662 = vadd.f32 %v112, %v661
  %663 = vmatmul.bf16.gmra.mxu0 %v356
  %v664 = vpop.f32.mrf.mxu0
  %v665 = vadd.f32 %v112, %v664
  %v666 = vpop.f32.mrf.mxu0
  %v667 = vadd.f32 %v112, %v666
  %668 = vmatmul.bf16.gmra.mxu0 %v358
  %v669 = vpop.f32.mrf.mxu0
  %v670 = vadd.f32 %v112, %v669
  %v671 = vpop.f32.mrf.mxu0
  %v672 = vadd.f32 %v112, %v671
  %673 = vmatmul.bf16.gmra.mxu0 %v360
  %v674 = vpop.f32.mrf.mxu0
  %v675 = vadd.f32 %v112, %v674
  %v676 = vpop.f32.mrf.mxu0
  %v677 = vadd.f32 %v112, %v676
  %678 = vmatmul.bf16.gmra.mxu0 %v362
  %v679 = vpop.f32.mrf.mxu0
  %v680 = vadd.f32 %v112, %v679
  %v681 = vpop.f32.mrf.mxu0
  %v682 = vadd.f32 %v112, %v681
  %683 = vmatmul.bf16.gmra.mxu0 %v364
  %v684 = vpop.f32.mrf.mxu0
  %v685 = vadd.f32 %v112, %v684
  %v686 = vpop.f32.mrf.mxu0
  %v687 = vadd.f32 %v112, %v686
  %688 = vmatmul.bf16.gmra.mxu0 %v366
  %v689 = vpop.f32.mrf.mxu0
  %v690 = vadd.f32 %v112, %v689
  %v691 = vpop.f32.mrf.mxu0
  %v692 = vadd.f32 %v112, %v691
  %693 = vmatmul.bf16.gmra.mxu0 %v368
  %v694 = vpop.f32.mrf.mxu0
  %v695 = vadd.f32 %v112, %v694
  %v696 = vpop.f32.mrf.mxu0
  %v697 = vadd.f32 %v112, %v696
  %698 = vdwg.mxu0
  %699 = vmatpush.bf16.msra.mxu0 %v513
  %700 = vmatpush.bf16.msra.mxu0 %v512
  %701 = vmatpush.bf16.msra.mxu0 %v511
  %702 = vmatpush.bf16.msra.mxu0 %v510
  %703 = vmatpush.bf16.msra.mxu0 %v509
  %704 = vmatpush.bf16.msra.mxu0 %v508
  %705 = vmatpush.bf16.msra.mxu0 %v507
  %706 = vmatpush.bf16.msra.mxu0 %v506
  %707 = vmatmul.bf16.gmra.mxu0 %v307
  %v708 = vpop.f32.mrf.mxu0
  %v709 = vadd.f32 %v540, %v708
  %v710 = vpop.f32.mrf.mxu0
  %v711 = vadd.f32 %v542, %v710
  %712 = vmatmul.bf16.gmra.mxu0 %v309
  %v713 = vpop.f32.mrf.mxu0
  %v714 = vadd.f32 %v545, %v713
  %v715 = vpop.f32.mrf.mxu0
  %v716 = vadd.f32 %v547, %v715
  %717 = vmatmul.bf16.gmra.mxu0 %v311
  %v718 = vpop.f32.mrf.mxu0
  %v719 = vadd.f32 %v550, %v718
  %v720 = vpop.f32.mrf.mxu0
  %v721 = vadd.f32 %v552, %v720
  %722 = vmatmul.bf16.gmra.mxu0 %v313
  %v723 = vpop.f32.mrf.mxu0
  %v724 = vadd.f32 %v555, %v723
  %v725 = vpop.f32.mrf.mxu0
  %v726 = vadd.f32 %v557, %v725
  %727 = vmatmul.bf16.gmra.mxu0 %v315
  %v728 = vpop.f32.mrf.mxu0
  %v729 = vadd.f32 %v560, %v728
  %v730 = vpop.f32.mrf.mxu0
  %v731 = vadd.f32 %v562, %v730
  %732 = vmatmul.bf16.gmra.mxu0 %v317
  %v733 = vpop.f32.mrf.mxu0
  %v734 = vadd.f32 %v565, %v733
  %v735 = vpop.f32.mrf.mxu0
  %v736 = vadd.f32 %v567, %v735
  %737 = vmatmul.bf16.gmra.mxu0 %v319
  %v738 = vpop.f32.mrf.mxu0
  %v739 = vadd.f32 %v570, %v738
  %v740 = vpop.f32.mrf.mxu0
  %v741 = vadd.f32 %v572, %v740
  %742 = vmatmul.bf16.gmra.mxu0 %v321
  %v743 = vpop.f32.mrf.mxu0
  %v744 = vadd.f32 %v575, %v743
  %v745 = vpop.f32.mrf.mxu0
  %v746 = vadd.f32 %v577, %v745
  %747 = vmatmul.bf16.gmra.mxu0 %v323
  %v748 = vpop.f32.mrf.mxu0
  %v749 = vadd.f32 %v580, %v748
  %v750 = vpop.f32.mrf.mxu0
  %v751 = vadd.f32 %v582, %v750
  %752 = vmatmul.bf16.gmra.mxu0 %v325
  %v753 = vpop.f32.mrf.mxu0
  %v754 = vadd.f32 %v585, %v753
  %v755 = vpop.f32.mrf.mxu0
  %v756 = vadd.f32 %v587, %v755
  %757 = vmatmul.bf16.gmra.mxu0 %v327
  %v758 = vpop.f32.mrf.mxu0
  %v759 = vadd.f32 %v590, %v758
  %v760 = vpop.f32.mrf.mxu0
  %v761 = vadd.f32 %v592, %v760
  %762 = vmatmul.bf16.gmra.mxu0 %v329
  %v763 = vpop.f32.mrf.mxu0
  %v764 = vadd.f32 %v595, %v763
  %v765 = vpop.f32.mrf.mxu0
  %v766 = vadd.f32 %v597, %v765
  %767 = vmatmul.bf16.gmra.mxu0 %v331
  %v768 = vpop.f32.mrf.mxu0
  %v769 = vadd.f32 %v600, %v768
  %v770 = vpop.f32.mrf.mxu0
  %v771 = vadd.f32 %v602, %v770
  %772 = vmatmul.bf16.gmra.mxu0 %v333
  %v773 = vpop.f32.mrf.mxu0
  %v774 = vadd.f32 %v605, %v773
  %v775 = vpop.f32.mrf.mxu0
  %v776 = vadd.f32 %v607, %v775
  %777 = vmatmul.bf16.gmra.mxu0 %v335
  %v778 = vpop.f32.mrf.mxu0
  %v779 = vadd.f32 %v610, %v778
  %v780 = vpop.f32.mrf.mxu0
  %v781 = vadd.f32 %v612, %v780
  %782 = vmatmul.bf16.gmra.mxu0 %v337
  %v783 = vpop.f32.mrf.mxu0
  %v784 = vadd.f32 %v615, %v783
  %v785 = vpop.f32.mrf.mxu0
  %v786 = vadd.f32 %v617, %v785
  %787 = vmatmul.bf16.gmra.mxu0 %v339
  %v788 = vpop.f32.mrf.mxu0
  %v789 = vadd.f32 %v620, %v788
  %v790 = vpop.f32.mrf.mxu0
  %v791 = vadd.f32 %v622, %v790
  %792 = vmatmul.bf16.gmra.mxu0 %v341
  %v793 = vpop.f32.mrf.mxu0
  %v794 = vadd.f32 %v625, %v793
  %v795 = vpop.f32.mrf.mxu0
  %v796 = vadd.f32 %v627, %v795
  %797 = vmatmul.bf16.gmra.mxu0 %v343
  %v798 = vpop.f32.mrf.mxu0
  %v799 = vadd.f32 %v630, %v798
  %v800 = vpop.f32.mrf.mxu0
  %v801 = vadd.f32 %v632, %v800
  %802 = vmatmul.bf16.gmra.mxu0 %v345
  %v803 = vpop.f32.mrf.mxu0
  %v804 = vadd.f32 %v635, %v803
  %v805 = vpop.f32.mrf.mxu0
  %v806 = vadd.f32 %v637, %v805
  %807 = vmatmul.bf16.gmra.mxu0 %v347
  %v808 = vpop.f32.mrf.mxu0
  %v809 = vadd.f32 %v640, %v808
  %v810 = vpop.f32.mrf.mxu0
  %v811 = vadd.f32 %v642, %v810
  %812 = vmatmul.bf16.gmra.mxu0 %v349
  %v813 = vpop.f32.mrf.mxu0
  %v814 = vadd.f32 %v645, %v813
  %v815 = vpop.f32.mrf.mxu0
  %v816 = vadd.f32 %v647, %v815
  %817 = vmatmul.bf16.gmra.mxu0 %v351
  %v818 = vpop.f32.mrf.mxu0
  %v819 = vadd.f32 %v650, %v818
  %v820 = vpop.f32.mrf.mxu0
  %v821 = vadd.f32 %v652, %v820
  %822 = vmatmul.bf16.gmra.mxu0 %v353
  %v823 = vpop.f32.mrf.mxu0
  %v824 = vadd.f32 %v655, %v823
  %v825 = vpop.f32.mrf.mxu0
  %v826 = vadd.f32 %v657, %v825
  %827 = vmatmul.bf16.gmra.mxu0 %v355
  %v828 = vpop.f32.mrf.mxu0
  %v829 = vadd.f32 %v660, %v828
  %v830 = vpop.f32.mrf.mxu0
  %v831 = vadd.f32 %v662, %v830
  %832 = vmatmul.bf16.gmra.mxu0 %v357
  %v833 = vpop.f32.mrf.mxu0
  %v834 = vadd.f32 %v665, %v833
  %v835 = vpop.f32.mrf.mxu0
  %v836 = vadd.f32 %v667, %v835
  %837 = vmatmul.bf16.gmra.mxu0 %v359
  %v838 = vpop.f32.mrf.mxu0
  %v839 = vadd.f32 %v670, %v838
  %v840 = vpop.f32.mrf.mxu0
  %v841 = vadd.f32 %v672, %v840
  %842 = vmatmul.bf16.gmra.mxu0 %v361
  %v843 = vpop.f32.mrf.mxu0
  %v844 = vadd.f32 %v675, %v843
  %v845 = vpop.f32.mrf.mxu0
  %v846 = vadd.f32 %v677, %v845
  %847 = vmatmul.bf16.gmra.mxu0 %v363
  %v848 = vpop.f32.mrf.mxu0
  %v849 = vadd.f32 %v680, %v848
  %v850 = vpop.f32.mrf.mxu0
  %v851 = vadd.f32 %v682, %v850
  %852 = vmatmul.bf16.gmra.mxu0 %v365
  %v853 = vpop.f32.mrf.mxu0
  %v854 = vadd.f32 %v685, %v853
  %v855 = vpop.f32.mrf.mxu0
  %v856 = vadd.f32 %v687, %v855
  %857 = vmatmul.bf16.gmra.mxu0 %v367
  %v858 = vpop.f32.mrf.mxu0
  %v859 = vadd.f32 %v690, %v858
  %v860 = vpop.f32.mrf.mxu0
  %v861 = vadd.f32 %v692, %v860
  %862 = vmatmul.bf16.gmra.mxu0 %v369
  %v863 = vpop.f32.mrf.mxu0
  %v864 = vadd.f32 %v695, %v863
  %v865 = vpop.f32.mrf.mxu0
  %v866 = vadd.f32 %v697, %v865
  %867 = vdwg.mxu0
  %v868 = vmax.f32 %v709, 0.0
  %v869 = vmax.f32 %v711, 0.0
  %v870 = vmax.f32 %v714, 0.0
  %v871 = vmax.f32 %v716, 0.0
  %v872 = vmax.f32 %v719, 0.0
  %v873 = vmax.f32 %v721, 0.0
  %v874 = vmax.f32 %v724, 0.0
  %v875 = vmax.f32 %v726, 0.0
  %v876 = vmax.f32 %v729, 0.0
  %v877 = vmax.f32 %v731, 0.0
  %v878 = vmax.f32 %v734, 0.0
  %v879 = vmax.f32 %v736, 0.0
  %v880 = vmax.f32 %v739, 0.0
  %v881 = vmax.f32 %v741, 0.0
  %v882 = vmax.f32 %v744, 0.0
  %v883 = vmax.f32 %v746, 0.0
  %v884 = vmax.f32 %v749, 0.0
  %v885 = vmax.f32 %v751, 0.0
  %v886 = vmax.f32 %v754, 0.0
  %v887 = vmax.f32 %v756, 0.0
  %v888 = vmax.f32 %v759, 0.0
  %v889 = vmax.f32 %v761, 0.0
  %v890 = vmax.f32 %v764, 0.0
  %v891 = vmax.f32 %v766, 0.0
  %v892 = vmax.f32 %v769, 0.0
  %v893 = vmax.f32 %v771, 0.0
  %v894 = vmax.f32 %v774, 0.0
  %v895 = vmax.f32 %v776, 0.0
  %v896 = vmax.f32 %v779, 0.0
  %v897 = vmax.f32 %v781, 0.0
  %v898 = vmax.f32 %v784, 0.0
  %v899 = vmax.f32 %v786, 0.0
  %v900 = vmax.f32 %v789, 0.0
  %v901 = vmax.f32 %v791, 0.0
  %v902 = vmax.f32 %v794, 0.0
  %v903 = vmax.f32 %v796, 0.0
  %v904 = vmax.f32 %v799, 0.0
  %v905 = vmax.f32 %v801, 0.0
  %v906 = vmax.f32 %v804, 0.0
  %v907 = vmax.f32 %v806, 0.0
  %v908 = vmax.f32 %v809, 0.0
  %v909 = vmax.f32 %v811, 0.0
  %v910 = vmax.f32 %v814, 0.0
  %v911 = vmax.f32 %v816, 0.0
  %v912 = vmax.f32 %v819, 0.0
  %v913 = vmax.f32 %v821, 0.0
  %v914 = vmax.f32 %v824, 0.0
  %v915 = vmax.f32 %v826, 0.0
  %v916 = vmax.f32 %v829, 0.0
  %v917 = vmax.f32 %v831, 0.0
  %v918 = vmax.f32 %v834, 0.0
  %v919 = vmax.f32 %v836, 0.0
  %v920 = vmax.f32 %v839, 0.0
  %v921 = vmax.f32 %v841, 0.0
  %v922 = vmax.f32 %v844, 0.0
  %v923 = vmax.f32 %v846, 0.0
  %v924 = vmax.f32 %v849, 0.0
  %v925 = vmax.f32 %v851, 0.0
  %v926 = vmax.f32 %v854, 0.0
  %v927 = vmax.f32 %v856, 0.0
  %v928 = vmax.f32 %v859, 0.0
  %v929 = vmax.f32 %v861, 0.0
  %v930 = vmax.f32 %v864, 0.0
  %v931 = vmax.f32 %v866, 0.0
  %932 = vst [vmem:[%s3] sm:$0xff] %v868
  %933 = vst [vmem:[%s3 + $0x8] sm:$0xff] %v869
  %934 = vst [vmem:[%s3 + $0x10] sm:$0xff] %v870
  %935 = vst [vmem:[%s3 + $0x18] sm:$0xff] %v871
  %936 = vst [vmem:[%s3 + $0x20] sm:$0xff] %v872
  %937 = vst [vmem:[%s3 + $0x28] sm:$0xff] %v873
  %938 = vst [vmem:[%s3 + $0x30] sm:$0xff] %v874
  %939 = vst [vmem:[%s3 + $0x38] sm:$0xff] %v875
  %940 = vst [vmem:[%s3 + $0x40] sm:$0xff] %v876
  %941 = vst [vmem:[%s3 + $0x48] sm:$0xff] %v877
  %942 = vst [vmem:[%s3 + $0x50] sm:$0xff] %v878
  %943 = vst [vmem:[%s3 + $0x58] sm:$0xff] %v879
  %944 = vst [vmem:[%s3 + $0x60] sm:$0xff] %v880
  %945 = vst [vmem:[%s3 + $0x68] sm:$0xff] %v881
  %946 = vst [vmem:[%s3 + $0x70] sm:$0xff] %v882
  %947 = vst [vmem:[%s3 + $0x78] sm:$0xff] %v883
  %948 = vst [vmem:[%s3 + $0x80] sm:$0xff] %v884
  %949 = vst [vmem:[%s3 + $0x88] sm:$0xff] %v885
  %950 = vst [vmem:[%s3 + $0x90] sm:$0xff] %v886
  %951 = vst [vmem:[%s3 + $0x98] sm:$0xff] %v887
  %952 = vst [vmem:[%s3 + $0xa0] sm:$0xff] %v888
  %953 = vst [vmem:[%s3 + $0xa8] sm:$0xff] %v889
  %954 = vst [vmem:[%s3 + $0xb0] sm:$0xff] %v890
  %955 = vst [vmem:[%s3 + $0xb8] sm:$0xff] %v891
  %956 = vst [vmem:[%s3 + $0xc0] sm:$0xff] %v892
  %957 = vst [vmem:[%s3 + $0xc8] sm:$0xff] %v893
  %958 = vst [vmem:[%s3 + $0xd0] sm:$0xff] %v894
  %959 = vst [vmem:[%s3 + $0xd8] sm:$0xff] %v895
  %960 = vst [vmem:[%s3 + $0xe0] sm:$0xff] %v896
  %961 = vst [vmem:[%s3 + $0xe8] sm:$0xff] %v897
  %962 = vst [vmem:[%s3 + $0xf0] sm:$0xff] %v898
  %963 = vst [vmem:[%s3 + $0xf8] sm:$0xff] %v899
  %964 = vst [vmem:[%s3 + $0x100] sm:$0xff] %v900
  %965 = vst [vmem:[%s3 + $0x108] sm:$0xff] %v901
  %966 = vst [vmem:[%s3 + $0x110] sm:$0xff] %v902
  %967 = vst [vmem:[%s3 + $0x118] sm:$0xff] %v903
  %968 = vst [vmem:[%s3 + $0x120] sm:$0xff] %v904
  %969 = vst [vmem:[%s3 + $0x128] sm:$0xff] %v905
  %970 = vst [vmem:[%s3 + $0x130] sm:$0xff] %v906
  %971 = vst [vmem:[%s3 + $0x138] sm:$0xff] %v907
  %972 = vst [vmem:[%s3 + $0x140] sm:$0xff] %v908
  %973 = vst [vmem:[%s3 + $0x148] sm:$0xff] %v909
  %974 = vst [vmem:[%s3 + $0x150] sm:$0xff] %v910
  %975 = vst [vmem:[%s3 + $0x158] sm:$0xff] %v911
  %976 = vst [vmem:[%s3 + $0x160] sm:$0xff] %v912
  %977 = vst [vmem:[%s3 + $0x168] sm:$0xff] %v913
  %978 = vst [vmem:[%s3 + $0x170] sm:$0xff] %v914
  %979 = vst [vmem:[%s3 + $0x178] sm:$0xff] %v915
  %980 = vst [vmem:[%s3 + $0x180] sm:$0xff] %v916
  %981 = vst [vmem:[%s3 + $0x188] sm:$0xff] %v917
  %982 = vst [vmem:[%s3 + $0x190] sm:$0xff] %v918
  %983 = vst [vmem:[%s3 + $0x198] sm:$0xff] %v919
  %984 = vst [vmem:[%s3 + $0x1a0] sm:$0xff] %v920
  %985 = vst [vmem:[%s3 + $0x1a8] sm:$0xff] %v921
  %986 = vst [vmem:[%s3 + $0x1b0] sm:$0xff] %v922
  %987 = vst [vmem:[%s3 + $0x1b8] sm:$0xff] %v923
  %988 = vst [vmem:[%s3 + $0x1c0] sm:$0xff] %v924
  %989 = vst [vmem:[%s3 + $0x1c8] sm:$0xff] %v925
  %990 = vst [vmem:[%s3 + $0x1d0] sm:$0xff] %v926
  %991 = vst [vmem:[%s3 + $0x1d8] sm:$0xff] %v927
  %992 = vst [vmem:[%s3 + $0x1e0] sm:$0xff] %v928
  %993 = vst [vmem:[%s3 + $0x1e8] sm:$0xff] %v929
  %994 = vst [vmem:[%s3 + $0x1f0] sm:$0xff] %v930
  %995 = vst [vmem:[%s3 + $0x1f8] sm:$0xff] %v931
  // Predicated region
  $region14: #{fcn_forward.18} parent=0 // pred_check
    _
  $region15: #{fcn_forward.18} parent=0 // pred_check_branch
    %997 = sbr.rel (0) target = $region17
  $region16: #{fcn_forward.18} parent=0 // pred_region
    _
  $region17: #{fcn_forward.18} parent=0 // pred_fallthru
    _
  // Predicated region
  $region18: #{fcn_forward.18} parent=0 // pred_check
    _
  $region19: #{fcn_forward.18} parent=0 // pred_check_branch
    %999 = sbr.rel (0) target = $region21
  $region20: #{fcn_forward.18} parent=0 // pred_region
    _
  $region21: #{fcn_forward.18} parent=0 // pred_fallthru
    _

// kernel: fcn_forward.19
$region0: #{fcn_forward.19}
  #allocation0 [shape = 'u32[]', space=smem, size = 0x4, offset = 0x4, fixed_abs, tag = 'smem constant byte address 0x4 - core index']
  #allocation1 [shape = 'u32[72,128]{1,0:T(1,128)}', space=vmem, size = 0x9000, scoped, tag = 'internal scratch']
  %s0 = inlined_call_operand.vmem [shape: f32[9,128,8], index: 0, kind: input, shape index: {}]
  %s1 = inlined_call_operand.vmem [shape: f32[128,8], index: 1, kind: output, shape index: {}]
  %s2 = sld [smem:[#allocation0]]
  $region14: #{fcn_forward.19} parent=0
    _
  %s4 = ssub.s32 1, %s2
  %s5 = scalar_select 0, %s4, %s2
  // Predicated region
  $region2: #{fcn_forward.19} parent=0 // pred_check
    _
  $region3: #{fcn_forward.19} parent=0 // pred_check_branch
    %7 = sbr.rel (0) target = $region5
  $region4: #{fcn_forward.19} parent=0 // pred_region
    _
  $region5: #{fcn_forward.19} parent=0 // pred_fallthru
    _
  %v8 = vld [vmem:[%s0] sm:$0xff]
  %v9 = vld [vmem:[%s0 + $0x8] sm:$0xff]
  %v10 = vld [vmem:[%s0 + $0x10] sm:$0xff]
  %v11 = vld [vmem:[%s0 + $0x18] sm:$0xff]
  %v12 = vld [vmem:[%s0 + $0x20] sm:$0xff]
  %v13 = vld [vmem:[%s0 + $0x28] sm:$0xff]
  %v14 = vld [vmem:[%s0 + $0x30] sm:$0xff]
  %v15 = vld [vmem:[%s0 + $0x38] sm:$0xff]
  %v16 = vld [vmem:[%s0 + $0x40] sm:$0xff]
  %v17 = vld [vmem:[%s0 + $0x48] sm:$0xff]
  %v18 = vld [vmem:[%s0 + $0x50] sm:$0xff]
  %v19 = vld [vmem:[%s0 + $0x58] sm:$0xff]
  %v20 = vld [vmem:[%s0 + $0x60] sm:$0xff]
  %v21 = vld [vmem:[%s0 + $0x68] sm:$0xff]
  %v22 = vld [vmem:[%s0 + $0x70] sm:$0xff]
  %v23 = vld [vmem:[%s0 + $0x78] sm:$0xff]
  %s24 = scalar_lea.vmem %s0, 128
  %v25 = vld [vmem:[%s24] sm:$0xff]
  %v26 = vld [vmem:[%s24 + $0x8] sm:$0xff]
  %v27 = vld [vmem:[%s24 + $0x10] sm:$0xff]
  %v28 = vld [vmem:[%s24 + $0x18] sm:$0xff]
  %v29 = vld [vmem:[%s24 + $0x20] sm:$0xff]
  %v30 = vld [vmem:[%s24 + $0x28] sm:$0xff]
  %v31 = vld [vmem:[%s24 + $0x30] sm:$0xff]
  %v32 = vld [vmem:[%s24 + $0x38] sm:$0xff]
  %v33 = vld [vmem:[%s24 + $0x40] sm:$0xff]
  %v34 = vld [vmem:[%s24 + $0x48] sm:$0xff]
  %v35 = vld [vmem:[%s24 + $0x50] sm:$0xff]
  %v36 = vld [vmem:[%s24 + $0x58] sm:$0xff]
  %v37 = vld [vmem:[%s24 + $0x60] sm:$0xff]
  %v38 = vld [vmem:[%s24 + $0x68] sm:$0xff]
  %v39 = vld [vmem:[%s24 + $0x70] sm:$0xff]
  %v40 = vld [vmem:[%s24 + $0x78] sm:$0xff]
  %v41 = vmax.f32 %v8, %v25
  %v42 = vmax.f32 %v9, %v26
  %v43 = vmax.f32 %v10, %v27
  %v44 = vmax.f32 %v11, %v28
  %v45 = vmax.f32 %v12, %v29
  %v46 = vmax.f32 %v13, %v30
  %v47 = vmax.f32 %v14, %v31
  %v48 = vmax.f32 %v15, %v32
  %v49 = vmax.f32 %v16, %v33
  %v50 = vmax.f32 %v17, %v34
  %v51 = vmax.f32 %v18, %v35
  %v52 = vmax.f32 %v19, %v36
  %v53 = vmax.f32 %v20, %v37
  %v54 = vmax.f32 %v21, %v38
  %v55 = vmax.f32 %v22, %v39
  %v56 = vmax.f32 %v23, %v40
  %s57 = scalar_lea.vmem %s0, 256
  %v58 = vld [vmem:[%s57] sm:$0xff]
  %v59 = vld [vmem:[%s57 + $0x8] sm:$0xff]
  %v60 = vld [vmem:[%s57 + $0x10] sm:$0xff]
  %v61 = vld [vmem:[%s57 + $0x18] sm:$0xff]
  %v62 = vld [vmem:[%s57 + $0x20] sm:$0xff]
  %v63 = vld [vmem:[%s57 + $0x28] sm:$0xff]
  %v64 = vld [vmem:[%s57 + $0x30] sm:$0xff]
  %v65 = vld [vmem:[%s57 + $0x38] sm:$0xff]
  %v66 = vld [vmem:[%s57 + $0x40] sm:$0xff]
  %v67 = vld [vmem:[%s57 + $0x48] sm:$0xff]
  %v68 = vld [vmem:[%s57 + $0x50] sm:$0xff]
  %v69 = vld [vmem:[%s57 + $0x58] sm:$0xff]
  %v70 = vld [vmem:[%s57 + $0x60] sm:$0xff]
  %v71 = vld [vmem:[%s57 + $0x68] sm:$0xff]
  %v72 = vld [vmem:[%s57 + $0x70] sm:$0xff]
  %v73 = vld [vmem:[%s57 + $0x78] sm:$0xff]
  %v74 = vmax.f32 %v41, %v58
  %v75 = vmax.f32 %v42, %v59
  %v76 = vmax.f32 %v43, %v60
  %v77 = vmax.f32 %v44, %v61
  %v78 = vmax.f32 %v45, %v62
  %v79 = vmax.f32 %v46, %v63
  %v80 = vmax.f32 %v47, %v64
  %v81 = vmax.f32 %v48, %v65
  %v82 = vmax.f32 %v49, %v66
  %v83 = vmax.f32 %v50, %v67
  %v84 = vmax.f32 %v51, %v68
  %v85 = vmax.f32 %v52, %v69
  %v86 = vmax.f32 %v53, %v70
  %v87 = vmax.f32 %v54, %v71
  %v88 = vmax.f32 %v55, %v72
  %v89 = vmax.f32 %v56, %v73
  %s90 = scalar_lea.vmem %s0, 384
  %v91 = vld [vmem:[%s90] sm:$0xff]
  %v92 = vld [vmem:[%s90 + $0x8] sm:$0xff]
  %v93 = vld [vmem:[%s90 + $0x10] sm:$0xff]
  %v94 = vld [vmem:[%s90 + $0x18] sm:$0xff]
  %v95 = vld [vmem:[%s90 + $0x20] sm:$0xff]
  %v96 = vld [vmem:[%s90 + $0x28] sm:$0xff]
  %v97 = vld [vmem:[%s90 + $0x30] sm:$0xff]
  %v98 = vld [vmem:[%s90 + $0x38] sm:$0xff]
  %v99 = vld [vmem:[%s90 + $0x40] sm:$0xff]
  %v100 = vld [vmem:[%s90 + $0x48] sm:$0xff]
  %v101 = vld [vmem:[%s90 + $0x50] sm:$0xff]
  %v102 = vld [vmem:[%s90 + $0x58] sm:$0xff]
  %v103 = vld [vmem:[%s90 + $0x60] sm:$0xff]
  %v104 = vld [vmem:[%s90 + $0x68] sm:$0xff]
  %v105 = vld [vmem:[%s90 + $0x70] sm:$0xff]
  %v106 = vld [vmem:[%s90 + $0x78] sm:$0xff]
  %v107 = vmax.f32 %v74, %v91
  %v108 = vmax.f32 %v75, %v92
  %v109 = vmax.f32 %v76, %v93
  %v110 = vmax.f32 %v77, %v94
  %v111 = vmax.f32 %v78, %v95
  %v112 = vmax.f32 %v79, %v96
  %v113 = vmax.f32 %v80, %v97
  %v114 = vmax.f32 %v81, %v98
  %v115 = vmax.f32 %v82, %v99
  %v116 = vmax.f32 %v83, %v100
  %v117 = vmax.f32 %v84, %v101
  %v118 = vmax.f32 %v85, %v102
  %v119 = vmax.f32 %v86, %v103
  %v120 = vmax.f32 %v87, %v104
  %v121 = vmax.f32 %v88, %v105
  %v122 = vmax.f32 %v89, %v106
  %s123 = scalar_lea.vmem %s0, 512
  %v124 = vld [vmem:[%s123] sm:$0xff]
  %v125 = vld [vmem:[%s123 + $0x8] sm:$0xff]
  %v126 = vld [vmem:[%s123 + $0x10] sm:$0xff]
  %v127 = vld [vmem:[%s123 + $0x18] sm:$0xff]
  %v128 = vld [vmem:[%s123 + $0x20] sm:$0xff]
  %v129 = vld [vmem:[%s123 + $0x28] sm:$0xff]
  %v130 = vld [vmem:[%s123 + $0x30] sm:$0xff]
  %v131 = vld [vmem:[%s123 + $0x38] sm:$0xff]
  %v132 = vld [vmem:[%s123 + $0x40] sm:$0xff]
  %v133 = vld [vmem:[%s123 + $0x48] sm:$0xff]
  %v134 = vld [vmem:[%s123 + $0x50] sm:$0xff]
  %v135 = vld [vmem:[%s123 + $0x58] sm:$0xff]
  %v136 = vld [vmem:[%s123 + $0x60] sm:$0xff]
  %v137 = vld [vmem:[%s123 + $0x68] sm:$0xff]
  %v138 = vld [vmem:[%s123 + $0x70] sm:$0xff]
  %v139 = vld [vmem:[%s123 + $0x78] sm:$0xff]
  %v140 = vmax.f32 %v107, %v124
  %v141 = vmax.f32 %v108, %v125
  %v142 = vmax.f32 %v109, %v126
  %v143 = vmax.f32 %v110, %v127
  %v144 = vmax.f32 %v111, %v128
  %v145 = vmax.f32 %v112, %v129
  %v146 = vmax.f32 %v113, %v130
  %v147 = vmax.f32 %v114, %v131
  %v148 = vmax.f32 %v115, %v132
  %v149 = vmax.f32 %v116, %v133
  %v150 = vmax.f32 %v117, %v134
  %v151 = vmax.f32 %v118, %v135
  %v152 = vmax.f32 %v119, %v136
  %v153 = vmax.f32 %v120, %v137
  %v154 = vmax.f32 %v121, %v138
  %v155 = vmax.f32 %v122, %v139
  %s156 = scalar_lea.vmem %s0, 640
  %v157 = vld [vmem:[%s156] sm:$0xff]
  %v158 = vld [vmem:[%s156 + $0x8] sm:$0xff]
  %v159 = vld [vmem:[%s156 + $0x10] sm:$0xff]
  %v160 = vld [vmem:[%s156 + $0x18] sm:$0xff]
  %v161 = vld [vmem:[%s156 + $0x20] sm:$0xff]
  %v162 = vld [vmem:[%s156 + $0x28] sm:$0xff]
  %v163 = vld [vmem:[%s156 + $0x30] sm:$0xff]
  %v164 = vld [vmem:[%s156 + $0x38] sm:$0xff]
  %v165 = vld [vmem:[%s156 + $0x40] sm:$0xff]
  %v166 = vld [vmem:[%s156 + $0x48] sm:$0xff]
  %v167 = vld [vmem:[%s156 + $0x50] sm:$0xff]
  %v168 = vld [vmem:[%s156 + $0x58] sm:$0xff]
  %v169 = vld [vmem:[%s156 + $0x60] sm:$0xff]
  %v170 = vld [vmem:[%s156 + $0x68] sm:$0xff]
  %v171 = vld [vmem:[%s156 + $0x70] sm:$0xff]
  %v172 = vld [vmem:[%s156 + $0x78] sm:$0xff]
  %v173 = vmax.f32 %v140, %v157
  %v174 = vmax.f32 %v141, %v158
  %v175 = vmax.f32 %v142, %v159
  %v176 = vmax.f32 %v143, %v160
  %v177 = vmax.f32 %v144, %v161
  %v178 = vmax.f32 %v145, %v162
  %v179 = vmax.f32 %v146, %v163
  %v180 = vmax.f32 %v147, %v164
  %v181 = vmax.f32 %v148, %v165
  %v182 = vmax.f32 %v149, %v166
  %v183 = vmax.f32 %v150, %v167
  %v184 = vmax.f32 %v151, %v168
  %v185 = vmax.f32 %v152, %v169
  %v186 = vmax.f32 %v153, %v170
  %v187 = vmax.f32 %v154, %v171
  %v188 = vmax.f32 %v155, %v172
  %s189 = scalar_lea.vmem %s0, 768
  %v190 = vld [vmem:[%s189] sm:$0xff]
  %v191 = vld [vmem:[%s189 + $0x8] sm:$0xff]
  %v192 = vld [vmem:[%s189 + $0x10] sm:$0xff]
  %v193 = vld [vmem:[%s189 + $0x18] sm:$0xff]
  %v194 = vld [vmem:[%s189 + $0x20] sm:$0xff]
  %v195 = vld [vmem:[%s189 + $0x28] sm:$0xff]
  %v196 = vld [vmem:[%s189 + $0x30] sm:$0xff]
  %v197 = vld [vmem:[%s189 + $0x38] sm:$0xff]
  %v198 = vld [vmem:[%s189 + $0x40] sm:$0xff]
  %v199 = vld [vmem:[%s189 + $0x48] sm:$0xff]
  %v200 = vld [vmem:[%s189 + $0x50] sm:$0xff]
  %v201 = vld [vmem:[%s189 + $0x58] sm:$0xff]
  %v202 = vld [vmem:[%s189 + $0x60] sm:$0xff]
  %v203 = vld [vmem:[%s189 + $0x68] sm:$0xff]
  %v204 = vld [vmem:[%s189 + $0x70] sm:$0xff]
  %v205 = vld [vmem:[%s189 + $0x78] sm:$0xff]
  %v206 = vmax.f32 %v173, %v190
  %v207 = vmax.f32 %v174, %v191
  %v208 = vmax.f32 %v175, %v192
  %v209 = vmax.f32 %v176, %v193
  %v210 = vmax.f32 %v177, %v194
  %v211 = vmax.f32 %v178, %v195
  %v212 = vmax.f32 %v179, %v196
  %v213 = vmax.f32 %v180, %v197
  %v214 = vmax.f32 %v181, %v198
  %v215 = vmax.f32 %v182, %v199
  %v216 = vmax.f32 %v183, %v200
  %v217 = vmax.f32 %v184, %v201
  %v218 = vmax.f32 %v185, %v202
  %v219 = vmax.f32 %v186, %v203
  %v220 = vmax.f32 %v187, %v204
  %v221 = vmax.f32 %v188, %v205
  %s222 = scalar_lea.vmem %s0, 896
  %v223 = vld [vmem:[%s222] sm:$0xff]
  %v224 = vld [vmem:[%s222 + $0x8] sm:$0xff]
  %v225 = vld [vmem:[%s222 + $0x10] sm:$0xff]
  %v226 = vld [vmem:[%s222 + $0x18] sm:$0xff]
  %v227 = vld [vmem:[%s222 + $0x20] sm:$0xff]
  %v228 = vld [vmem:[%s222 + $0x28] sm:$0xff]
  %v229 = vld [vmem:[%s222 + $0x30] sm:$0xff]
  %v230 = vld [vmem:[%s222 + $0x38] sm:$0xff]
  %v231 = vld [vmem:[%s222 + $0x40] sm:$0xff]
  %v232 = vld [vmem:[%s222 + $0x48] sm:$0xff]
  %v233 = vld [vmem:[%s222 + $0x50] sm:$0xff]
  %v234 = vld [vmem:[%s222 + $0x58] sm:$0xff]
  %v235 = vld [vmem:[%s222 + $0x60] sm:$0xff]
  %v236 = vld [vmem:[%s222 + $0x68] sm:$0xff]
  %v237 = vld [vmem:[%s222 + $0x70] sm:$0xff]
  %v238 = vld [vmem:[%s222 + $0x78] sm:$0xff]
  %v239 = vmax.f32 %v206, %v223
  %v240 = vmax.f32 %v207, %v224
  %v241 = vmax.f32 %v208, %v225
  %v242 = vmax.f32 %v209, %v226
  %v243 = vmax.f32 %v210, %v227
  %v244 = vmax.f32 %v211, %v228
  %v245 = vmax.f32 %v212, %v229
  %v246 = vmax.f32 %v213, %v230
  %v247 = vmax.f32 %v214, %v231
  %v248 = vmax.f32 %v215, %v232
  %v249 = vmax.f32 %v216, %v233
  %v250 = vmax.f32 %v217, %v234
  %v251 = vmax.f32 %v218, %v235
  %v252 = vmax.f32 %v219, %v236
  %v253 = vmax.f32 %v220, %v237
  %v254 = vmax.f32 %v221, %v238
  %s255 = scalar_lea.vmem %s0, 1024
  %v256 = vld [vmem:[%s255] sm:$0xff]
  %v257 = vld [vmem:[%s255 + $0x8] sm:$0xff]
  %v258 = vld [vmem:[%s255 + $0x10] sm:$0xff]
  %v259 = vld [vmem:[%s255 + $0x18] sm:$0xff]
  %v260 = vld [vmem:[%s255 + $0x20] sm:$0xff]
  %v261 = vld [vmem:[%s255 + $0x28] sm:$0xff]
  %v262 = vld [vmem:[%s255 + $0x30] sm:$0xff]
  %v263 = vld [vmem:[%s255 + $0x38] sm:$0xff]
  %v264 = vld [vmem:[%s255 + $0x40] sm:$0xff]
  %v265 = vld [vmem:[%s255 + $0x48] sm:$0xff]
  %v266 = vld [vmem:[%s255 + $0x50] sm:$0xff]
  %v267 = vld [vmem:[%s255 + $0x58] sm:$0xff]
  %v268 = vld [vmem:[%s255 + $0x60] sm:$0xff]
  %v269 = vld [vmem:[%s255 + $0x68] sm:$0xff]
  %v270 = vld [vmem:[%s255 + $0x70] sm:$0xff]
  %v271 = vld [vmem:[%s255 + $0x78] sm:$0xff]
  %v272 = vmax.f32 %v239, %v256
  %v273 = vmax.f32 %v240, %v257
  %v274 = vmax.f32 %v241, %v258
  %v275 = vmax.f32 %v242, %v259
  %v276 = vmax.f32 %v243, %v260
  %v277 = vmax.f32 %v244, %v261
  %v278 = vmax.f32 %v245, %v262
  %v279 = vmax.f32 %v246, %v263
  %v280 = vmax.f32 %v247, %v264
  %v281 = vmax.f32 %v248, %v265
  %v282 = vmax.f32 %v249, %v266
  %v283 = vmax.f32 %v250, %v267
  %v284 = vmax.f32 %v251, %v268
  %v285 = vmax.f32 %v252, %v269
  %v286 = vmax.f32 %v253, %v270
  %v287 = vmax.f32 %v254, %v271
  %vm288 = vcmask 64512
  %289 = vst.msk [vmem:[%s1] sm:$0xff] %vm288, %v272
  %290 = vst.msk [vmem:[%s1 + $0x8] sm:$0xff] %vm288, %v273
  %291 = vst.msk [vmem:[%s1 + $0x10] sm:$0xff] %vm288, %v274
  %292 = vst.msk [vmem:[%s1 + $0x18] sm:$0xff] %vm288, %v275
  %293 = vst.msk [vmem:[%s1 + $0x20] sm:$0xff] %vm288, %v276
  %294 = vst.msk [vmem:[%s1 + $0x28] sm:$0xff] %vm288, %v277
  %295 = vst.msk [vmem:[%s1 + $0x30] sm:$0xff] %vm288, %v278
  %296 = vst.msk [vmem:[%s1 + $0x38] sm:$0xff] %vm288, %v279
  %297 = vst.msk [vmem:[%s1 + $0x40] sm:$0xff] %vm288, %v280
  %298 = vst.msk [vmem:[%s1 + $0x48] sm:$0xff] %vm288, %v281
  %299 = vst.msk [vmem:[%s1 + $0x50] sm:$0xff] %vm288, %v282
  %300 = vst.msk [vmem:[%s1 + $0x58] sm:$0xff] %vm288, %v283
  %301 = vst.msk [vmem:[%s1 + $0x60] sm:$0xff] %vm288, %v284
  %302 = vst.msk [vmem:[%s1 + $0x68] sm:$0xff] %vm288, %v285
  %303 = vst.msk [vmem:[%s1 + $0x70] sm:$0xff] %vm288, %v286
  %304 = vst.msk [vmem:[%s1 + $0x78] sm:$0xff] %vm288, %v287
  // Predicated region
  $region6: #{fcn_forward.19} parent=0 // pred_check
    _
  $region7: #{fcn_forward.19} parent=0 // pred_check_branch
    %306 = sbr.rel (0) target = $region9
  $region8: #{fcn_forward.19} parent=0 // pred_region
    _
  $region9: #{fcn_forward.19} parent=0 // pred_fallthru
    _
  // Predicated region
  $region10: #{fcn_forward.19} parent=0 // pred_check
    _
  $region11: #{fcn_forward.19} parent=0 // pred_check_branch
    %308 = sbr.rel (0) target = $region13
  $region12: #{fcn_forward.19} parent=0 // pred_region
    _
  $region13: #{fcn_forward.19} parent=0 // pred_fallthru
    _

// kernel: fcn_forward.20
$region0: #{fcn_forward.20}
  #allocation0 [shape = 'u32[]', space=smem, size = 0x4, offset = 0x4, fixed_abs, tag = 'smem constant byte address 0x4 - core index']
  #allocation1 [shape = 'u32[72,128]{1,0:T(1,128)}', space=vmem, size = 0x9000, scoped, tag = 'internal scratch']
  %s0 = inlined_call_operand.vmem [shape: bf16[128,128], index: 0, kind: input, shape index: {}]
  %s1 = inlined_call_operand.vmem [shape: bf16[128,128], index: 1, kind: input, shape index: {}]
  %s2 = inlined_call_operand.vmem [shape: f32[1,128], index: 2, kind: input, shape index: {}]
  %s3 = inlined_call_operand.vmem [shape: f32[128,128], index: 3, kind: output, shape index: {}]
  %s4 = sld [smem:[#allocation0]]
  $region22: #{fcn_forward.20} parent=0
    _
  %s6 = ssub.s32 1, %s4
  %s7 = scalar_select 0, %s6, %s4
  // Predicated region
  $region2: #{fcn_forward.20} parent=0 // pred_check
    _
  $region3: #{fcn_forward.20} parent=0 // pred_check_branch
    %9 = sbr.rel (0) target = $region5
  $region4: #{fcn_forward.20} parent=0 // pred_region
    _
  $region5: #{fcn_forward.20} parent=0 // pred_fallthru
    _
  // Predicated region
  $region6: #{fcn_forward.20} parent=0 // pred_check
    _
  $region7: #{fcn_forward.20} parent=0 // pred_check_branch
    %11 = sbr.rel (0) target = $region9
  $region8: #{fcn_forward.20} parent=0 // pred_region
    _
  $region9: #{fcn_forward.20} parent=0 // pred_fallthru
    _
  // Predicated region
  $region10: #{fcn_forward.20} parent=0 // pred_check
    _
  $region11: #{fcn_forward.20} parent=0 // pred_check_branch
    %13 = sbr.rel (0) target = $region13
  $region12: #{fcn_forward.20} parent=0 // pred_region
    _
  $region13: #{fcn_forward.20} parent=0 // pred_fallthru
    _
  %v14 = vld [vmem:[%s0] sm:$0xf]
  %v15 = vld [vmem:[%s0 + $0x4] sm:$0xf]
  %v16 = vld [vmem:[%s0 + $0x8] sm:$0xf]
  %v17 = vld [vmem:[%s0 + $0xc] sm:$0xf]
  %v18 = vld [vmem:[%s0 + $0x10] sm:$0xf]
  %v19 = vld [vmem:[%s0 + $0x14] sm:$0xf]
  %v20 = vld [vmem:[%s0 + $0x18] sm:$0xf]
  %v21 = vld [vmem:[%s0 + $0x1c] sm:$0xf]
  %v22 = vld [vmem:[%s0 + $0x20] sm:$0xf]
  %v23 = vld [vmem:[%s0 + $0x24] sm:$0xf]
  %v24 = vld [vmem:[%s0 + $0x28] sm:$0xf]
  %v25 = vld [vmem:[%s0 + $0x2c] sm:$0xf]
  %v26 = vld [vmem:[%s0 + $0x30] sm:$0xf]
  %v27 = vld [vmem:[%s0 + $0x34] sm:$0xf]
  %v28 = vld [vmem:[%s0 + $0x38] sm:$0xf]
  %v29 = vld [vmem:[%s0 + $0x3c] sm:$0xf]
  %v30 = vld [vmem:[%s1] sm:$0xf]
  %v31 = vld [vmem:[%s1 + $0x4] sm:$0xf]
  %v32 = vld [vmem:[%s1 + $0x8] sm:$0xf]
  %v33 = vld [vmem:[%s1 + $0xc] sm:$0xf]
  %v34 = vld [vmem:[%s1 + $0x10] sm:$0xf]
  %v35 = vld [vmem:[%s1 + $0x14] sm:$0xf]
  %v36 = vld [vmem:[%s1 + $0x18] sm:$0xf]
  %v37 = vld [vmem:[%s1 + $0x1c] sm:$0xf]
  %v38 = vld [vmem:[%s1 + $0x20] sm:$0xf]
  %v39 = vld [vmem:[%s1 + $0x24] sm:$0xf]
  %v40 = vld [vmem:[%s1 + $0x28] sm:$0xf]
  %v41 = vld [vmem:[%s1 + $0x2c] sm:$0xf]
  %v42 = vld [vmem:[%s1 + $0x30] sm:$0xf]
  %v43 = vld [vmem:[%s1 + $0x34] sm:$0xf]
  %v44 = vld [vmem:[%s1 + $0x38] sm:$0xf]
  %v45 = vld [vmem:[%s1 + $0x3c] sm:$0xf]
  %v46 = vld [vmem:[%s2] sm:$0x1]
  %v48 = vperm.slane %v46, 0
  %v66 = vunpack.c.l.b16 %v14
  %v67 = vunpack.c.l.b16 %v15
  %v68 = vunpack.c.l.b16 %v16
  %v69 = vunpack.c.l.b16 %v17
  %v70 = vunpack.c.l.b16 %v18
  %v71 = vunpack.c.l.b16 %v19
  %v72 = vunpack.c.l.b16 %v20
  %v73 = vunpack.c.l.b16 %v21
  %v74 = vunpack.c.l.b16 %v22
  %v75 = vunpack.c.l.b16 %v23
  %v76 = vunpack.c.l.b16 %v24
  %v77 = vunpack.c.l.b16 %v25
  %v78 = vunpack.c.l.b16 %v26
  %v79 = vunpack.c.l.b16 %v27
  %v80 = vunpack.c.l.b16 %v28
  %v81 = vunpack.c.l.b16 %v29
  %v82 = vpack.c.b16 %v67, %v66
  %v83 = vpack.c.b16 %v69, %v68
  %v84 = vpack.c.b16 %v71, %v70
  %v85 = vpack.c.b16 %v73, %v72
  %v86 = vpack.c.b16 %v75, %v74
  %v87 = vpack.c.b16 %v77, %v76
  %v88 = vpack.c.b16 %v79, %v78
  %v89 = vpack.c.b16 %v81, %v80
  %v114 = vunpack.c.l.b16 %v30
  %v115 = vunpack.c.l.b16 %v31
  %v116 = vunpack.c.l.b16 %v32
  %v117 = vunpack.c.l.b16 %v33
  %v118 = vunpack.c.l.b16 %v34
  %v119 = vunpack.c.l.b16 %v35
  %v120 = vunpack.c.l.b16 %v36
  %v121 = vunpack.c.l.b16 %v37
  %v122 = vunpack.c.l.b16 %v38
  %v123 = vunpack.c.l.b16 %v39
  %v124 = vunpack.c.l.b16 %v40
  %v125 = vunpack.c.l.b16 %v41
  %v126 = vunpack.c.l.b16 %v42
  %v127 = vunpack.c.l.b16 %v43
  %v128 = vunpack.c.l.b16 %v44
  %v129 = vunpack.c.l.b16 %v45
  %v130 = vpack.c.b16 %v115, %v114
  %v131 = vpack.c.b16 %v117, %v116
  %v132 = vpack.c.b16 %v119, %v118
  %v133 = vpack.c.b16 %v121, %v120
  %v134 = vpack.c.b16 %v123, %v122
  %v135 = vpack.c.b16 %v125, %v124
  %v136 = vpack.c.b16 %v127, %v126
  %v137 = vpack.c.b16 %v129, %v128
  %146 = vmatpush.bf16.msra.mxu0 %v137
  %147 = vmatpush.bf16.msra.mxu0 %v136
  %148 = vmatpush.bf16.msra.mxu0 %v135
  %149 = vmatpush.bf16.msra.mxu0 %v134
  %150 = vmatpush.bf16.msra.mxu0 %v133
  %151 = vmatpush.bf16.msra.mxu0 %v132
  %152 = vmatpush.bf16.msra.mxu0 %v131
  %153 = vmatpush.bf16.msra.mxu0 %v130
  %154 = vmatmul.bf16.gmra.mxu0 %v82
  %v155 = vpop.f32.mrf.mxu0
  %v156 = vadd.f32 %v48, %v155
  %v157 = vpop.f32.mrf.mxu0
  %v158 = vadd.f32 %v48, %v157
  %159 = vmatmul.bf16.gmra.mxu0 %v83
  %v160 = vpop.f32.mrf.mxu0
  %v161 = vadd.f32 %v48, %v160
  %v162 = vpop.f32.mrf.mxu0
  %v163 = vadd.f32 %v48, %v162
  %164 = vmatmul.bf16.gmra.mxu0 %v84
  %v165 = vpop.f32.mrf.mxu0
  %v166 = vadd.f32 %v48, %v165
  %v167 = vpop.f32.mrf.mxu0
  %v168 = vadd.f32 %v48, %v167
  %169 = vmatmul.bf16.gmra.mxu0 %v85
  %v170 = vpop.f32.mrf.mxu0
  %v171 = vadd.f32 %v48, %v170
  %v172 = vpop.f32.mrf.mxu0
  %v173 = vadd.f32 %v48, %v172
  %174 = vmatmul.bf16.gmra.mxu0 %v86
  %v175 = vpop.f32.mrf.mxu0
  %v176 = vadd.f32 %v48, %v175
  %v177 = vpop.f32.mrf.mxu0
  %v178 = vadd.f32 %v48, %v177
  %179 = vmatmul.bf16.gmra.mxu0 %v87
  %v180 = vpop.f32.mrf.mxu0
  %v181 = vadd.f32 %v48, %v180
  %v182 = vpop.f32.mrf.mxu0
  %v183 = vadd.f32 %v48, %v182
  %184 = vmatmul.bf16.gmra.mxu0 %v88
  %v185 = vpop.f32.mrf.mxu0
  %v186 = vadd.f32 %v48, %v185
  %v187 = vpop.f32.mrf.mxu0
  %v188 = vadd.f32 %v48, %v187
  %189 = vmatmul.bf16.gmra.mxu0 %v89
  %v190 = vpop.f32.mrf.mxu0
  %v191 = vadd.f32 %v48, %v190
  %v192 = vpop.f32.mrf.mxu0
  %v193 = vadd.f32 %v48, %v192
  %194 = vdwg.mxu0
  %v195 = vmax.f32 %v156, 0.0
  %v196 = vmax.f32 %v158, 0.0
  %v197 = vmax.f32 %v161, 0.0
  %v198 = vmax.f32 %v163, 0.0
  %v199 = vmax.f32 %v166, 0.0
  %v200 = vmax.f32 %v168, 0.0
  %v201 = vmax.f32 %v171, 0.0
  %v202 = vmax.f32 %v173, 0.0
  %v203 = vmax.f32 %v176, 0.0
  %v204 = vmax.f32 %v178, 0.0
  %v205 = vmax.f32 %v181, 0.0
  %v206 = vmax.f32 %v183, 0.0
  %v207 = vmax.f32 %v186, 0.0
  %v208 = vmax.f32 %v188, 0.0
  %v209 = vmax.f32 %v191, 0.0
  %v210 = vmax.f32 %v193, 0.0
  %211 = vst [vmem:[%s3] sm:$0xff] %v195
  %212 = vst [vmem:[%s3 + $0x8] sm:$0xff] %v196
  %213 = vst [vmem:[%s3 + $0x10] sm:$0xff] %v197
  %214 = vst [vmem:[%s3 + $0x18] sm:$0xff] %v198
  %215 = vst [vmem:[%s3 + $0x20] sm:$0xff] %v199
  %216 = vst [vmem:[%s3 + $0x28] sm:$0xff] %v200
  %217 = vst [vmem:[%s3 + $0x30] sm:$0xff] %v201
  %218 = vst [vmem:[%s3 + $0x38] sm:$0xff] %v202
  %219 = vst [vmem:[%s3 + $0x40] sm:$0xff] %v203
  %220 = vst [vmem:[%s3 + $0x48] sm:$0xff] %v204
  %221 = vst [vmem:[%s3 + $0x50] sm:$0xff] %v205
  %222 = vst [vmem:[%s3 + $0x58] sm:$0xff] %v206
  %223 = vst [vmem:[%s3 + $0x60] sm:$0xff] %v207
  %224 = vst [vmem:[%s3 + $0x68] sm:$0xff] %v208
  %225 = vst [vmem:[%s3 + $0x70] sm:$0xff] %v209
  %226 = vst [vmem:[%s3 + $0x78] sm:$0xff] %v210
  // Predicated region
  $region14: #{fcn_forward.20} parent=0 // pred_check
    _
  $region15: #{fcn_forward.20} parent=0 // pred_check_branch
    %228 = sbr.rel (0) target = $region17
  $region16: #{fcn_forward.20} parent=0 // pred_region
    _
  $region17: #{fcn_forward.20} parent=0 // pred_fallthru
    _
  // Predicated region
  $region18: #{fcn_forward.20} parent=0 // pred_check
    _
  $region19: #{fcn_forward.20} parent=0 // pred_check_branch
    %230 = sbr.rel (0) target = $region21
  $region20: #{fcn_forward.20} parent=0 // pred_region
    _
  $region21: #{fcn_forward.20} parent=0 // pred_fallthru
    _

// kernel: fcn_forward.21
$region0: #{fcn_forward.21}
  #allocation0 [shape = 'u32[]', space=smem, size = 0x4, offset = 0x4, fixed_abs, tag = 'smem constant byte address 0x4 - core index']
  #allocation1 [shape = 'u32[72,128]{1,0:T(1,128)}', space=vmem, size = 0x9000, scoped, tag = 'internal scratch']
  %s0 = inlined_call_operand.vmem [shape: bf16[128,128], index: 0, kind: input, shape index: {}]
  %s1 = inlined_call_operand.vmem [shape: bf16[128,128], index: 1, kind: input, shape index: {}]
  %s2 = inlined_call_operand.vmem [shape: f32[1,128], index: 2, kind: input, shape index: {}]
  %s3 = inlined_call_operand.vmem [shape: f32[128,128], index: 3, kind: input, shape index: {}]
  %s4 = inlined_call_operand.vmem [shape: f32[128,128], index: 4, kind: output, shape index: {}]
  %s5 = sld [smem:[#allocation0]]
  $region26: #{fcn_forward.21} parent=0
    _
  %s7 = ssub.s32 1, %s5
  %s8 = scalar_select 0, %s7, %s5
  // Predicated region
  $region2: #{fcn_forward.21} parent=0 // pred_check
    _
  $region3: #{fcn_forward.21} parent=0 // pred_check_branch
    %10 = sbr.rel (0) target = $region5
  $region4: #{fcn_forward.21} parent=0 // pred_region
    _
  $region5: #{fcn_forward.21} parent=0 // pred_fallthru
    _
  // Predicated region
  $region6: #{fcn_forward.21} parent=0 // pred_check
    _
  $region7: #{fcn_forward.21} parent=0 // pred_check_branch
    %12 = sbr.rel (0) target = $region9
  $region8: #{fcn_forward.21} parent=0 // pred_region
    _
  $region9: #{fcn_forward.21} parent=0 // pred_fallthru
    _
  // Predicated region
  $region10: #{fcn_forward.21} parent=0 // pred_check
    _
  $region11: #{fcn_forward.21} parent=0 // pred_check_branch
    %14 = sbr.rel (0) target = $region13
  $region12: #{fcn_forward.21} parent=0 // pred_region
    _
  $region13: #{fcn_forward.21} parent=0 // pred_fallthru
    _
  // Predicated region
  $region14: #{fcn_forward.21} parent=0 // pred_check
    _
  $region15: #{fcn_forward.21} parent=0 // pred_check_branch
    %16 = sbr.rel (0) target = $region17
  $region16: #{fcn_forward.21} parent=0 // pred_region
    _
  $region17: #{fcn_forward.21} parent=0 // pred_fallthru
    _
  %v17 = vld [vmem:[%s0] sm:$0xf]
  %v18 = vld [vmem:[%s0 + $0x4] sm:$0xf]
  %v19 = vld [vmem:[%s0 + $0x8] sm:$0xf]
  %v20 = vld [vmem:[%s0 + $0xc] sm:$0xf]
  %v21 = vld [vmem:[%s0 + $0x10] sm:$0xf]
  %v22 = vld [vmem:[%s0 + $0x14] sm:$0xf]
  %v23 = vld [vmem:[%s0 + $0x18] sm:$0xf]
  %v24 = vld [vmem:[%s0 + $0x1c] sm:$0xf]
  %v25 = vld [vmem:[%s0 + $0x20] sm:$0xf]
  %v26 = vld [vmem:[%s0 + $0x24] sm:$0xf]
  %v27 = vld [vmem:[%s0 + $0x28] sm:$0xf]
  %v28 = vld [vmem:[%s0 + $0x2c] sm:$0xf]
  %v29 = vld [vmem:[%s0 + $0x30] sm:$0xf]
  %v30 = vld [vmem:[%s0 + $0x34] sm:$0xf]
  %v31 = vld [vmem:[%s0 + $0x38] sm:$0xf]
  %v32 = vld [vmem:[%s0 + $0x3c] sm:$0xf]
  %v33 = vld [vmem:[%s1] sm:$0xf]
  %v34 = vld [vmem:[%s1 + $0x4] sm:$0xf]
  %v35 = vld [vmem:[%s1 + $0x8] sm:$0xf]
  %v36 = vld [vmem:[%s1 + $0xc] sm:$0xf]
  %v37 = vld [vmem:[%s1 + $0x10] sm:$0xf]
  %v38 = vld [vmem:[%s1 + $0x14] sm:$0xf]
  %v39 = vld [vmem:[%s1 + $0x18] sm:$0xf]
  %v40 = vld [vmem:[%s1 + $0x1c] sm:$0xf]
  %v41 = vld [vmem:[%s1 + $0x20] sm:$0xf]
  %v42 = vld [vmem:[%s1 + $0x24] sm:$0xf]
  %v43 = vld [vmem:[%s1 + $0x28] sm:$0xf]
  %v44 = vld [vmem:[%s1 + $0x2c] sm:$0xf]
  %v45 = vld [vmem:[%s1 + $0x30] sm:$0xf]
  %v46 = vld [vmem:[%s1 + $0x34] sm:$0xf]
  %v47 = vld [vmem:[%s1 + $0x38] sm:$0xf]
  %v48 = vld [vmem:[%s1 + $0x3c] sm:$0xf]
  %v49 = vld [vmem:[%s2] sm:$0x1]
  %v51 = vperm.slane %v49, 0
  %v69 = vunpack.c.l.b16 %v17
  %v70 = vunpack.c.l.b16 %v18
  %v71 = vunpack.c.l.b16 %v19
  %v72 = vunpack.c.l.b16 %v20
  %v73 = vunpack.c.l.b16 %v21
  %v74 = vunpack.c.l.b16 %v22
  %v75 = vunpack.c.l.b16 %v23
  %v76 = vunpack.c.l.b16 %v24
  %v77 = vunpack.c.l.b16 %v25
  %v78 = vunpack.c.l.b16 %v26
  %v79 = vunpack.c.l.b16 %v27
  %v80 = vunpack.c.l.b16 %v28
  %v81 = vunpack.c.l.b16 %v29
  %v82 = vunpack.c.l.b16 %v30
  %v83 = vunpack.c.l.b16 %v31
  %v84 = vunpack.c.l.b16 %v32
  %v85 = vpack.c.b16 %v70, %v69
  %v86 = vpack.c.b16 %v72, %v71
  %v87 = vpack.c.b16 %v74, %v73
  %v88 = vpack.c.b16 %v76, %v75
  %v89 = vpack.c.b16 %v78, %v77
  %v90 = vpack.c.b16 %v80, %v79
  %v91 = vpack.c.b16 %v82, %v81
  %v92 = vpack.c.b16 %v84, %v83
  %v117 = vunpack.c.l.b16 %v33
  %v118 = vunpack.c.l.b16 %v34
  %v119 = vunpack.c.l.b16 %v35
  %v120 = vunpack.c.l.b16 %v36
  %v121 = vunpack.c.l.b16 %v37
  %v122 = vunpack.c.l.b16 %v38
  %v123 = vunpack.c.l.b16 %v39
  %v124 = vunpack.c.l.b16 %v40
  %v125 = vunpack.c.l.b16 %v41
  %v126 = vunpack.c.l.b16 %v42
  %v127 = vunpack.c.l.b16 %v43
  %v128 = vunpack.c.l.b16 %v44
  %v129 = vunpack.c.l.b16 %v45
  %v130 = vunpack.c.l.b16 %v46
  %v131 = vunpack.c.l.b16 %v47
  %v132 = vunpack.c.l.b16 %v48
  %v133 = vpack.c.b16 %v118, %v117
  %v134 = vpack.c.b16 %v120, %v119
  %v135 = vpack.c.b16 %v122, %v121
  %v136 = vpack.c.b16 %v124, %v123
  %v137 = vpack.c.b16 %v126, %v125
  %v138 = vpack.c.b16 %v128, %v127
  %v139 = vpack.c.b16 %v130, %v129
  %v140 = vpack.c.b16 %v132, %v131
  %149 = vmatpush.bf16.msra.mxu0 %v140
  %150 = vmatpush.bf16.msra.mxu0 %v139
  %151 = vmatpush.bf16.msra.mxu0 %v138
  %152 = vmatpush.bf16.msra.mxu0 %v137
  %153 = vmatpush.bf16.msra.mxu0 %v136
  %154 = vmatpush.bf16.msra.mxu0 %v135
  %155 = vmatpush.bf16.msra.mxu0 %v134
  %156 = vmatpush.bf16.msra.mxu0 %v133
  %157 = vmatmul.bf16.gmra.mxu0 %v85
  %v158 = vpop.f32.mrf.mxu0
  %v159 = vadd.f32 %v51, %v158
  %v160 = vpop.f32.mrf.mxu0
  %v161 = vadd.f32 %v51, %v160
  %162 = vmatmul.bf16.gmra.mxu0 %v86
  %v163 = vpop.f32.mrf.mxu0
  %v164 = vadd.f32 %v51, %v163
  %v165 = vpop.f32.mrf.mxu0
  %v166 = vadd.f32 %v51, %v165
  %167 = vmatmul.bf16.gmra.mxu0 %v87
  %v168 = vpop.f32.mrf.mxu0
  %v169 = vadd.f32 %v51, %v168
  %v170 = vpop.f32.mrf.mxu0
  %v171 = vadd.f32 %v51, %v170
  %172 = vmatmul.bf16.gmra.mxu0 %v88
  %v173 = vpop.f32.mrf.mxu0
  %v174 = vadd.f32 %v51, %v173
  %v175 = vpop.f32.mrf.mxu0
  %v176 = vadd.f32 %v51, %v175
  %177 = vmatmul.bf16.gmra.mxu0 %v89
  %v178 = vpop.f32.mrf.mxu0
  %v179 = vadd.f32 %v51, %v178
  %v180 = vpop.f32.mrf.mxu0
  %v181 = vadd.f32 %v51, %v180
  %182 = vmatmul.bf16.gmra.mxu0 %v90
  %v183 = vpop.f32.mrf.mxu0
  %v184 = vadd.f32 %v51, %v183
  %v185 = vpop.f32.mrf.mxu0
  %v186 = vadd.f32 %v51, %v185
  %187 = vmatmul.bf16.gmra.mxu0 %v91
  %v188 = vpop.f32.mrf.mxu0
  %v189 = vadd.f32 %v51, %v188
  %v190 = vpop.f32.mrf.mxu0
  %v191 = vadd.f32 %v51, %v190
  %192 = vmatmul.bf16.gmra.mxu0 %v92
  %v193 = vpop.f32.mrf.mxu0
  %v194 = vadd.f32 %v51, %v193
  %v195 = vpop.f32.mrf.mxu0
  %v196 = vadd.f32 %v51, %v195
  %197 = vdwg.mxu0
  %v198 = vld [vmem:[%s3] sm:$0xff]
  %v199 = vld [vmem:[%s3 + $0x8] sm:$0xff]
  %v200 = vld [vmem:[%s3 + $0x10] sm:$0xff]
  %v201 = vld [vmem:[%s3 + $0x18] sm:$0xff]
  %v202 = vld [vmem:[%s3 + $0x20] sm:$0xff]
  %v203 = vld [vmem:[%s3 + $0x28] sm:$0xff]
  %v204 = vld [vmem:[%s3 + $0x30] sm:$0xff]
  %v205 = vld [vmem:[%s3 + $0x38] sm:$0xff]
  %v206 = vld [vmem:[%s3 + $0x40] sm:$0xff]
  %v207 = vld [vmem:[%s3 + $0x48] sm:$0xff]
  %v208 = vld [vmem:[%s3 + $0x50] sm:$0xff]
  %v209 = vld [vmem:[%s3 + $0x58] sm:$0xff]
  %v210 = vld [vmem:[%s3 + $0x60] sm:$0xff]
  %v211 = vld [vmem:[%s3 + $0x68] sm:$0xff]
  %v212 = vld [vmem:[%s3 + $0x70] sm:$0xff]
  %v213 = vld [vmem:[%s3 + $0x78] sm:$0xff]
  %v214 = vadd.f32 %v159, %v198
  %v215 = vadd.f32 %v161, %v199
  %v216 = vadd.f32 %v164, %v200
  %v217 = vadd.f32 %v166, %v201
  %v218 = vadd.f32 %v169, %v202
  %v219 = vadd.f32 %v171, %v203
  %v220 = vadd.f32 %v174, %v204
  %v221 = vadd.f32 %v176, %v205
  %v222 = vadd.f32 %v179, %v206
  %v223 = vadd.f32 %v181, %v207
  %v224 = vadd.f32 %v184, %v208
  %v225 = vadd.f32 %v186, %v209
  %v226 = vadd.f32 %v189, %v210
  %v227 = vadd.f32 %v191, %v211
  %v228 = vadd.f32 %v194, %v212
  %v229 = vadd.f32 %v196, %v213
  %v230 = vmax.f32 %v214, 0.0
  %v231 = vmax.f32 %v215, 0.0
  %v232 = vmax.f32 %v216, 0.0
  %v233 = vmax.f32 %v217, 0.0
  %v234 = vmax.f32 %v218, 0.0
  %v235 = vmax.f32 %v219, 0.0
  %v236 = vmax.f32 %v220, 0.0
  %v237 = vmax.f32 %v221, 0.0
  %v238 = vmax.f32 %v222, 0.0
  %v239 = vmax.f32 %v223, 0.0
  %v240 = vmax.f32 %v224, 0.0
  %v241 = vmax.f32 %v225, 0.0
  %v242 = vmax.f32 %v226, 0.0
  %v243 = vmax.f32 %v227, 0.0
  %v244 = vmax.f32 %v228, 0.0
  %v245 = vmax.f32 %v229, 0.0
  %246 = vst [vmem:[%s4] sm:$0xff] %v230
  %247 = vst [vmem:[%s4 + $0x8] sm:$0xff] %v231
  %248 = vst [vmem:[%s4 + $0x10] sm:$0xff] %v232
  %249 = vst [vmem:[%s4 + $0x18] sm:$0xff] %v233
  %250 = vst [vmem:[%s4 + $0x20] sm:$0xff] %v234
  %251 = vst [vmem:[%s4 + $0x28] sm:$0xff] %v235
  %252 = vst [vmem:[%s4 + $0x30] sm:$0xff] %v236
  %253 = vst [vmem:[%s4 + $0x38] sm:$0xff] %v237
  %254 = vst [vmem:[%s4 + $0x40] sm:$0xff] %v238
  %255 = vst [vmem:[%s4 + $0x48] sm:$0xff] %v239
  %256 = vst [vmem:[%s4 + $0x50] sm:$0xff] %v240
  %257 = vst [vmem:[%s4 + $0x58] sm:$0xff] %v241
  %258 = vst [vmem:[%s4 + $0x60] sm:$0xff] %v242
  %259 = vst [vmem:[%s4 + $0x68] sm:$0xff] %v243
  %260 = vst [vmem:[%s4 + $0x70] sm:$0xff] %v244
  %261 = vst [vmem:[%s4 + $0x78] sm:$0xff] %v245
  // Predicated region
  $region18: #{fcn_forward.21} parent=0 // pred_check
    _
  $region19: #{fcn_forward.21} parent=0 // pred_check_branch
    %263 = sbr.rel (0) target = $region21
  $region20: #{fcn_forward.21} parent=0 // pred_region
    _
  $region21: #{fcn_forward.21} parent=0 // pred_fallthru
    _
  // Predicated region
  $region22: #{fcn_forward.21} parent=0 // pred_check
    _
  $region23: #{fcn_forward.21} parent=0 // pred_check_branch
    %265 = sbr.rel (0) target = $region25
  $region24: #{fcn_forward.21} parent=0 // pred_region
    _
  $region25: #{fcn_forward.21} parent=0 // pred_fallthru
    _

// kernel: fcn_forward.23
$region0: #{fcn_forward.23}
  #allocation0 [shape = 'u32[]', space=smem, size = 0x4, offset = 0x4, fixed_abs, tag = 'smem constant byte address 0x4 - core index']
  #allocation1 [shape = 'u32[72,128]{1,0:T(1,128)}', space=vmem, size = 0x9000, scoped, tag = 'internal scratch']
  %s0 = inlined_call_operand.vmem [shape: bf16[32,128], index: 0, kind: input, shape index: {}]
  %s1 = inlined_call_operand.vmem [shape: bf16[128,128], index: 1, kind: input, shape index: {}]
  %s2 = inlined_call_operand.vmem [shape: f32[1,128], index: 2, kind: input, shape index: {}]
  %s3 = inlined_call_operand.vmem [shape: f32[32,128], index: 3, kind: output, shape index: {}]
  %s4 = sld [smem:[#allocation0]]
  $region22: #{fcn_forward.23} parent=0
    _
  %s6 = ssub.s32 1, %s4
  %s7 = scalar_select 0, %s6, %s4
  // Predicated region
  $region2: #{fcn_forward.23} parent=0 // pred_check
    _
  $region3: #{fcn_forward.23} parent=0 // pred_check_branch
    %9 = sbr.rel (0) target = $region5
  $region4: #{fcn_forward.23} parent=0 // pred_region
    _
  $region5: #{fcn_forward.23} parent=0 // pred_fallthru
    _
  // Predicated region
  $region6: #{fcn_forward.23} parent=0 // pred_check
    _
  $region7: #{fcn_forward.23} parent=0 // pred_check_branch
    %11 = sbr.rel (0) target = $region9
  $region8: #{fcn_forward.23} parent=0 // pred_region
    _
  $region9: #{fcn_forward.23} parent=0 // pred_fallthru
    _
  // Predicated region
  $region10: #{fcn_forward.23} parent=0 // pred_check
    _
  $region11: #{fcn_forward.23} parent=0 // pred_check_branch
    %13 = sbr.rel (0) target = $region13
  $region12: #{fcn_forward.23} parent=0 // pred_region
    _
  $region13: #{fcn_forward.23} parent=0 // pred_fallthru
    _
  %v14 = vld [vmem:[%s0] sm:$0xf]
  %v15 = vld [vmem:[%s0 + $0x4] sm:$0xf]
  %v16 = vld [vmem:[%s0 + $0x8] sm:$0xf]
  %v17 = vld [vmem:[%s0 + $0xc] sm:$0xf]
  %v18 = vld [vmem:[%s1] sm:$0xf]
  %v19 = vld [vmem:[%s1 + $0x4] sm:$0xf]
  %v20 = vld [vmem:[%s1 + $0x8] sm:$0xf]
  %v21 = vld [vmem:[%s1 + $0xc] sm:$0xf]
  %v22 = vld [vmem:[%s1 + $0x10] sm:$0xf]
  %v23 = vld [vmem:[%s1 + $0x14] sm:$0xf]
  %v24 = vld [vmem:[%s1 + $0x18] sm:$0xf]
  %v25 = vld [vmem:[%s1 + $0x1c] sm:$0xf]
  %v26 = vld [vmem:[%s1 + $0x20] sm:$0xf]
  %v27 = vld [vmem:[%s1 + $0x24] sm:$0xf]
  %v28 = vld [vmem:[%s1 + $0x28] sm:$0xf]
  %v29 = vld [vmem:[%s1 + $0x2c] sm:$0xf]
  %v30 = vld [vmem:[%s1 + $0x30] sm:$0xf]
  %v31 = vld [vmem:[%s1 + $0x34] sm:$0xf]
  %v32 = vld [vmem:[%s1 + $0x38] sm:$0xf]
  %v33 = vld [vmem:[%s1 + $0x3c] sm:$0xf]
  %v34 = vld [vmem:[%s2] sm:$0x1]
  %v36 = vperm.slane %v34, 0
  %v42 = vunpack.c.l.b16 %v14
  %v43 = vunpack.c.l.b16 %v15
  %v44 = vunpack.c.l.b16 %v16
  %v45 = vunpack.c.l.b16 %v17
  %v46 = vpack.c.b16 %v43, %v42
  %v47 = vpack.c.b16 %v45, %v44
  %v66 = vunpack.c.l.b16 %v18
  %v67 = vunpack.c.l.b16 %v19
  %v68 = vunpack.c.l.b16 %v20
  %v69 = vunpack.c.l.b16 %v21
  %v70 = vunpack.c.l.b16 %v22
  %v71 = vunpack.c.l.b16 %v23
  %v72 = vunpack.c.l.b16 %v24
  %v73 = vunpack.c.l.b16 %v25
  %v74 = vunpack.c.l.b16 %v26
  %v75 = vunpack.c.l.b16 %v27
  %v76 = vunpack.c.l.b16 %v28
  %v77 = vunpack.c.l.b16 %v29
  %v78 = vunpack.c.l.b16 %v30
  %v79 = vunpack.c.l.b16 %v31
  %v80 = vunpack.c.l.b16 %v32
  %v81 = vunpack.c.l.b16 %v33
  %v82 = vpack.c.b16 %v67, %v66
  %v83 = vpack.c.b16 %v69, %v68
  %v84 = vpack.c.b16 %v71, %v70
  %v85 = vpack.c.b16 %v73, %v72
  %v86 = vpack.c.b16 %v75, %v74
  %v87 = vpack.c.b16 %v77, %v76
  %v88 = vpack.c.b16 %v79, %v78
  %v89 = vpack.c.b16 %v81, %v80
  %98 = vmatpush.bf16.msra.mxu0 %v89
  %99 = vmatpush.bf16.msra.mxu0 %v88
  %100 = vmatpush.bf16.msra.mxu0 %v87
  %101 = vmatpush.bf16.msra.mxu0 %v86
  %102 = vmatpush.bf16.msra.mxu0 %v85
  %103 = vmatpush.bf16.msra.mxu0 %v84
  %104 = vmatpush.bf16.msra.mxu0 %v83
  %105 = vmatpush.bf16.msra.mxu0 %v82
  %106 = vmatmul.bf16.gmra.mxu0 %v46
  %v107 = vpop.f32.mrf.mxu0
  %v108 = vadd.f32 %v36, %v107
  %v109 = vpop.f32.mrf.mxu0
  %v110 = vadd.f32 %v36, %v109
  %111 = vmatmul.bf16.gmra.mxu0 %v47
  %v112 = vpop.f32.mrf.mxu0
  %v113 = vadd.f32 %v36, %v112
  %v114 = vpop.f32.mrf.mxu0
  %v115 = vadd.f32 %v36, %v114
  %116 = vdwg.mxu0
  %117 = vst [vmem:[%s3] sm:$0xff] %v108
  %118 = vst [vmem:[%s3 + $0x8] sm:$0xff] %v110
  %119 = vst [vmem:[%s3 + $0x10] sm:$0xff] %v113
  %120 = vst [vmem:[%s3 + $0x18] sm:$0xff] %v115
  // Predicated region
  $region14: #{fcn_forward.23} parent=0 // pred_check
    _
  $region15: #{fcn_forward.23} parent=0 // pred_check_branch
    %122 = sbr.rel (0) target = $region17
  $region16: #{fcn_forward.23} parent=0 // pred_region
    _
  $region17: #{fcn_forward.23} parent=0 // pred_fallthru
    _
  // Predicated region
  $region18: #{fcn_forward.23} parent=0 // pred_check
    _
  $region19: #{fcn_forward.23} parent=0 // pred_check_branch
    %124 = sbr.rel (0) target = $region21
  $region20: #{fcn_forward.23} parent=0 // pred_region
    _
  $region21: #{fcn_forward.23} parent=0 // pred_fallthru
    _

// kernel: fcn_forward.25
$region0: #{fcn_forward.25}
  #allocation0 [shape = 'u32[]', space=smem, size = 0x4, offset = 0x4, fixed_abs, tag = 'smem constant byte address 0x4 - core index']
  #allocation1 [shape = 'u32[72,128]{1,0:T(1,128)}', space=vmem, size = 0x9000, scoped, tag = 'internal scratch']
  %s0 = inlined_call_operand.vmem [shape: bf16[32,256], index: 0, kind: input, shape index: {}]
  %s1 = inlined_call_operand.vmem [shape: bf16[256,128], index: 1, kind: input, shape index: {}]
  %s2 = inlined_call_operand.vmem [shape: f32[1,128], index: 2, kind: input, shape index: {}]
  %s3 = inlined_call_operand.vmem [shape: f32[32,128], index: 3, kind: output, shape index: {}]
  %s4 = sld [smem:[#allocation0]]
  $region22: #{fcn_forward.25} parent=0
    _
  %s6 = ssub.s32 1, %s4
  %s7 = scalar_select 0, %s6, %s4
  // Predicated region
  $region2: #{fcn_forward.25} parent=0 // pred_check
    _
  $region3: #{fcn_forward.25} parent=0 // pred_check_branch
    %9 = sbr.rel (0) target = $region5
  $region4: #{fcn_forward.25} parent=0 // pred_region
    _
  $region5: #{fcn_forward.25} parent=0 // pred_fallthru
    _
  // Predicated region
  $region6: #{fcn_forward.25} parent=0 // pred_check
    _
  $region7: #{fcn_forward.25} parent=0 // pred_check_branch
    %11 = sbr.rel (0) target = $region9
  $region8: #{fcn_forward.25} parent=0 // pred_region
    _
  $region9: #{fcn_forward.25} parent=0 // pred_fallthru
    _
  // Predicated region
  $region10: #{fcn_forward.25} parent=0 // pred_check
    _
  $region11: #{fcn_forward.25} parent=0 // pred_check_branch
    %13 = sbr.rel (0) target = $region13
  $region12: #{fcn_forward.25} parent=0 // pred_region
    _
  $region13: #{fcn_forward.25} parent=0 // pred_fallthru
    _
  %v14 = vld [vmem:[%s0] sm:$0xff]
  %v15 = vld [vmem:[%s0 + $0x8] sm:$0xff]
  %v16 = vld [vmem:[%s0 + $0x10] sm:$0xff]
  %v17 = vld [vmem:[%s0 + $0x18] sm:$0xff]
  %v18 = vld [vmem:[%s1] sm:$0xf]
  %v19 = vld [vmem:[%s1 + $0x4] sm:$0xf]
  %v20 = vld [vmem:[%s1 + $0x8] sm:$0xf]
  %v21 = vld [vmem:[%s1 + $0xc] sm:$0xf]
  %v22 = vld [vmem:[%s1 + $0x10] sm:$0xf]
  %v23 = vld [vmem:[%s1 + $0x14] sm:$0xf]
  %v24 = vld [vmem:[%s1 + $0x18] sm:$0xf]
  %v25 = vld [vmem:[%s1 + $0x1c] sm:$0xf]
  %v26 = vld [vmem:[%s1 + $0x20] sm:$0xf]
  %v27 = vld [vmem:[%s1 + $0x24] sm:$0xf]
  %v28 = vld [vmem:[%s1 + $0x28] sm:$0xf]
  %v29 = vld [vmem:[%s1 + $0x2c] sm:$0xf]
  %v30 = vld [vmem:[%s1 + $0x30] sm:$0xf]
  %v31 = vld [vmem:[%s1 + $0x34] sm:$0xf]
  %v32 = vld [vmem:[%s1 + $0x38] sm:$0xf]
  %v33 = vld [vmem:[%s1 + $0x3c] sm:$0xf]
  %v34 = vld [vmem:[%s1 + $0x40] sm:$0xf]
  %v35 = vld [vmem:[%s1 + $0x44] sm:$0xf]
  %v36 = vld [vmem:[%s1 + $0x48] sm:$0xf]
  %v37 = vld [vmem:[%s1 + $0x4c] sm:$0xf]
  %v38 = vld [vmem:[%s1 + $0x50] sm:$0xf]
  %v39 = vld [vmem:[%s1 + $0x54] sm:$0xf]
  %v40 = vld [vmem:[%s1 + $0x58] sm:$0xf]
  %v41 = vld [vmem:[%s1 + $0x5c] sm:$0xf]
  %v42 = vld [vmem:[%s1 + $0x60] sm:$0xf]
  %v43 = vld [vmem:[%s1 + $0x64] sm:$0xf]
  %v44 = vld [vmem:[%s1 + $0x68] sm:$0xf]
  %v45 = vld [vmem:[%s1 + $0x6c] sm:$0xf]
  %v46 = vld [vmem:[%s1 + $0x70] sm:$0xf]
  %v47 = vld [vmem:[%s1 + $0x74] sm:$0xf]
  %v48 = vld [vmem:[%s1 + $0x78] sm:$0xf]
  %v49 = vld [vmem:[%s1 + $0x7c] sm:$0xf]
  %v50 = vld [vmem:[%s2] sm:$0x1]
  %v52 = vperm.slane %v50, 0
  %v58 = vunpack.c.l.b16 %v14
  %v59 = vunpack.c.h.b16 %v14
  %v60 = vunpack.c.l.b16 %v15
  %v61 = vunpack.c.h.b16 %v15
  %v62 = vunpack.c.l.b16 %v16
  %v63 = vunpack.c.h.b16 %v16
  %v64 = vunpack.c.l.b16 %v17
  %v65 = vunpack.c.h.b16 %v17
  %v66 = vpack.c.b16 %v60, %v58
  %v67 = vpack.c.b16 %v61, %v59
  %v68 = vpack.c.b16 %v64, %v62
  %v69 = vpack.c.b16 %v65, %v63
  %v106 = vunpack.c.l.b16 %v18
  %v107 = vunpack.c.l.b16 %v19
  %v108 = vunpack.c.l.b16 %v20
  %v109 = vunpack.c.l.b16 %v21
  %v110 = vunpack.c.l.b16 %v22
  %v111 = vunpack.c.l.b16 %v23
  %v112 = vunpack.c.l.b16 %v24
  %v113 = vunpack.c.l.b16 %v25
  %v114 = vunpack.c.l.b16 %v26
  %v115 = vunpack.c.l.b16 %v27
  %v116 = vunpack.c.l.b16 %v28
  %v117 = vunpack.c.l.b16 %v29
  %v118 = vunpack.c.l.b16 %v30
  %v119 = vunpack.c.l.b16 %v31
  %v120 = vunpack.c.l.b16 %v32
  %v121 = vunpack.c.l.b16 %v33
  %v122 = vunpack.c.l.b16 %v34
  %v123 = vunpack.c.l.b16 %v35
  %v124 = vunpack.c.l.b16 %v36
  %v125 = vunpack.c.l.b16 %v37
  %v126 = vunpack.c.l.b16 %v38
  %v127 = vunpack.c.l.b16 %v39
  %v128 = vunpack.c.l.b16 %v40
  %v129 = vunpack.c.l.b16 %v41
  %v130 = vunpack.c.l.b16 %v42
  %v131 = vunpack.c.l.b16 %v43
  %v132 = vunpack.c.l.b16 %v44
  %v133 = vunpack.c.l.b16 %v45
  %v134 = vunpack.c.l.b16 %v46
  %v135 = vunpack.c.l.b16 %v47
  %v136 = vunpack.c.l.b16 %v48
  %v137 = vunpack.c.l.b16 %v49
  %v138 = vpack.c.b16 %v107, %v106
  %v139 = vpack.c.b16 %v109, %v108
  %v140 = vpack.c.b16 %v111, %v110
  %v141 = vpack.c.b16 %v113, %v112
  %v142 = vpack.c.b16 %v115, %v114
  %v143 = vpack.c.b16 %v117, %v116
  %v144 = vpack.c.b16 %v119, %v118
  %v145 = vpack.c.b16 %v121, %v120
  %v146 = vpack.c.b16 %v123, %v122
  %v147 = vpack.c.b16 %v125, %v124
  %v148 = vpack.c.b16 %v127, %v126
  %v149 = vpack.c.b16 %v129, %v128
  %v150 = vpack.c.b16 %v131, %v130
  %v151 = vpack.c.b16 %v133, %v132
  %v152 = vpack.c.b16 %v135, %v134
  %v153 = vpack.c.b16 %v137, %v136
  %170 = vmatpush.bf16.msra.mxu0 %v145
  %171 = vmatpush.bf16.msra.mxu0 %v144
  %172 = vmatpush.bf16.msra.mxu0 %v143
  %173 = vmatpush.bf16.msra.mxu0 %v142
  %174 = vmatpush.bf16.msra.mxu0 %v141
  %175 = vmatpush.bf16.msra.mxu0 %v140
  %176 = vmatpush.bf16.msra.mxu0 %v139
  %177 = vmatpush.bf16.msra.mxu0 %v138
  %178 = vmatmul.bf16.gmra.mxu0 %v66
  %v179 = vpop.f32.mrf.mxu0
  %v180 = vadd.f32 %v52, %v179
  %v181 = vpop.f32.mrf.mxu0
  %v182 = vadd.f32 %v52, %v181
  %183 = vmatmul.bf16.gmra.mxu0 %v68
  %v184 = vpop.f32.mrf.mxu0
  %v185 = vadd.f32 %v52, %v184
  %v186 = vpop.f32.mrf.mxu0
  %v187 = vadd.f32 %v52, %v186
  %188 = vdwg.mxu0
  %189 = vmatpush.bf16.msra.mxu0 %v153
  %190 = vmatpush.bf16.msra.mxu0 %v152
  %191 = vmatpush.bf16.msra.mxu0 %v151
  %192 = vmatpush.bf16.msra.mxu0 %v150
  %193 = vmatpush.bf16.msra.mxu0 %v149
  %194 = vmatpush.bf16.msra.mxu0 %v148
  %195 = vmatpush.bf16.msra.mxu0 %v147
  %196 = vmatpush.bf16.msra.mxu0 %v146
  %197 = vmatmul.bf16.gmra.mxu0 %v67
  %v198 = vpop.f32.mrf.mxu0
  %v199 = vadd.f32 %v180, %v198
  %v200 = vpop.f32.mrf.mxu0
  %v201 = vadd.f32 %v182, %v200
  %202 = vmatmul.bf16.gmra.mxu0 %v69
  %v203 = vpop.f32.mrf.mxu0
  %v204 = vadd.f32 %v185, %v203
  %v205 = vpop.f32.mrf.mxu0
  %v206 = vadd.f32 %v187, %v205
  %207 = vdwg.mxu0
  %v208 = vmax.f32 %v199, 0.0
  %v209 = vmax.f32 %v201, 0.0
  %v210 = vmax.f32 %v204, 0.0
  %v211 = vmax.f32 %v206, 0.0
  %212 = vst [vmem:[%s3] sm:$0xff] %v208
  %213 = vst [vmem:[%s3 + $0x8] sm:$0xff] %v209
  %214 = vst [vmem:[%s3 + $0x10] sm:$0xff] %v210
  %215 = vst [vmem:[%s3 + $0x18] sm:$0xff] %v211
  // Predicated region
  $region14: #{fcn_forward.25} parent=0 // pred_check
    _
  $region15: #{fcn_forward.25} parent=0 // pred_check_branch
    %217 = sbr.rel (0) target = $region17
  $region16: #{fcn_forward.25} parent=0 // pred_region
    _
  $region17: #{fcn_forward.25} parent=0 // pred_fallthru
    _
  // Predicated region
  $region18: #{fcn_forward.25} parent=0 // pred_check
    _
  $region19: #{fcn_forward.25} parent=0 // pred_check_branch
    %219 = sbr.rel (0) target = $region21
  $region20: #{fcn_forward.25} parent=0 // pred_region
    _
  $region21: #{fcn_forward.25} parent=0 // pred_fallthru
    _

// kernel: fcn_forward.24
$region0: #{fcn_forward.24}
  #allocation0 [shape = 'u32[]', space=smem, size = 0x4, offset = 0x4, fixed_abs, tag = 'smem constant byte address 0x4 - core index']
  #allocation1 [shape = 'u32[72,128]{1,0:T(1,128)}', space=vmem, size = 0x9000, scoped, tag = 'internal scratch']
  %s0 = inlined_call_operand.vmem [shape: bf16[32,256], index: 0, kind: input, shape index: {}]
  %s1 = inlined_call_operand.vmem [shape: bf16[256,128], index: 1, kind: input, shape index: {}]
  %s2 = inlined_call_operand.vmem [shape: f32[1,128], index: 2, kind: input, shape index: {}]
  %s3 = inlined_call_operand.vmem [shape: f32[32,128], index: 3, kind: input, shape index: {}]
  %s4 = inlined_call_operand.vmem [shape: f32[32,128], index: 4, kind: output, shape index: {}]
  %s5 = sld [smem:[#allocation0]]
  $region26: #{fcn_forward.24} parent=0
    _
  %s7 = ssub.s32 1, %s5
  %s8 = scalar_select 0, %s7, %s5
  // Predicated region
  $region2: #{fcn_forward.24} parent=0 // pred_check
    _
  $region3: #{fcn_forward.24} parent=0 // pred_check_branch
    %10 = sbr.rel (0) target = $region5
  $region4: #{fcn_forward.24} parent=0 // pred_region
    _
  $region5: #{fcn_forward.24} parent=0 // pred_fallthru
    _
  // Predicated region
  $region6: #{fcn_forward.24} parent=0 // pred_check
    _
  $region7: #{fcn_forward.24} parent=0 // pred_check_branch
    %12 = sbr.rel (0) target = $region9
  $region8: #{fcn_forward.24} parent=0 // pred_region
    _
  $region9: #{fcn_forward.24} parent=0 // pred_fallthru
    _
  // Predicated region
  $region10: #{fcn_forward.24} parent=0 // pred_check
    _
  $region11: #{fcn_forward.24} parent=0 // pred_check_branch
    %14 = sbr.rel (0) target = $region13
  $region12: #{fcn_forward.24} parent=0 // pred_region
    _
  $region13: #{fcn_forward.24} parent=0 // pred_fallthru
    _
  // Predicated region
  $region14: #{fcn_forward.24} parent=0 // pred_check
    _
  $region15: #{fcn_forward.24} parent=0 // pred_check_branch
    %16 = sbr.rel (0) target = $region17
  $region16: #{fcn_forward.24} parent=0 // pred_region
    _
  $region17: #{fcn_forward.24} parent=0 // pred_fallthru
    _
  %v17 = vld [vmem:[%s0] sm:$0xff]
  %v18 = vld [vmem:[%s0 + $0x8] sm:$0xff]
  %v19 = vld [vmem:[%s0 + $0x10] sm:$0xff]
  %v20 = vld [vmem:[%s0 + $0x18] sm:$0xff]
  %v21 = vld [vmem:[%s1] sm:$0xf]
  %v22 = vld [vmem:[%s1 + $0x4] sm:$0xf]
  %v23 = vld [vmem:[%s1 + $0x8] sm:$0xf]
  %v24 = vld [vmem:[%s1 + $0xc] sm:$0xf]
  %v25 = vld [vmem:[%s1 + $0x10] sm:$0xf]
  %v26 = vld [vmem:[%s1 + $0x14] sm:$0xf]
  %v27 = vld [vmem:[%s1 + $0x18] sm:$0xf]
  %v28 = vld [vmem:[%s1 + $0x1c] sm:$0xf]
  %v29 = vld [vmem:[%s1 + $0x20] sm:$0xf]
  %v30 = vld [vmem:[%s1 + $0x24] sm:$0xf]
  %v31 = vld [vmem:[%s1 + $0x28] sm:$0xf]
  %v32 = vld [vmem:[%s1 + $0x2c] sm:$0xf]
  %v33 = vld [vmem:[%s1 + $0x30] sm:$0xf]
  %v34 = vld [vmem:[%s1 + $0x34] sm:$0xf]
  %v35 = vld [vmem:[%s1 + $0x38] sm:$0xf]
  %v36 = vld [vmem:[%s1 + $0x3c] sm:$0xf]
  %v37 = vld [vmem:[%s1 + $0x40] sm:$0xf]
  %v38 = vld [vmem:[%s1 + $0x44] sm:$0xf]
  %v39 = vld [vmem:[%s1 + $0x48] sm:$0xf]
  %v40 = vld [vmem:[%s1 + $0x4c] sm:$0xf]
  %v41 = vld [vmem:[%s1 + $0x50] sm:$0xf]
  %v42 = vld [vmem:[%s1 + $0x54] sm:$0xf]
  %v43 = vld [vmem:[%s1 + $0x58] sm:$0xf]
  %v44 = vld [vmem:[%s1 + $0x5c] sm:$0xf]
  %v45 = vld [vmem:[%s1 + $0x60] sm:$0xf]
  %v46 = vld [vmem:[%s1 + $0x64] sm:$0xf]
  %v47 = vld [vmem:[%s1 + $0x68] sm:$0xf]
  %v48 = vld [vmem:[%s1 + $0x6c] sm:$0xf]
  %v49 = vld [vmem:[%s1 + $0x70] sm:$0xf]
  %v50 = vld [vmem:[%s1 + $0x74] sm:$0xf]
  %v51 = vld [vmem:[%s1 + $0x78] sm:$0xf]
  %v52 = vld [vmem:[%s1 + $0x7c] sm:$0xf]
  %v53 = vld [vmem:[%s2] sm:$0x1]
  %v55 = vperm.slane %v53, 0
  %v61 = vunpack.c.l.b16 %v17
  %v62 = vunpack.c.h.b16 %v17
  %v63 = vunpack.c.l.b16 %v18
  %v64 = vunpack.c.h.b16 %v18
  %v65 = vunpack.c.l.b16 %v19
  %v66 = vunpack.c.h.b16 %v19
  %v67 = vunpack.c.l.b16 %v20
  %v68 = vunpack.c.h.b16 %v20
  %v69 = vpack.c.b16 %v63, %v61
  %v70 = vpack.c.b16 %v64, %v62
  %v71 = vpack.c.b16 %v67, %v65
  %v72 = vpack.c.b16 %v68, %v66
  %v109 = vunpack.c.l.b16 %v21
  %v110 = vunpack.c.l.b16 %v22
  %v111 = vunpack.c.l.b16 %v23
  %v112 = vunpack.c.l.b16 %v24
  %v113 = vunpack.c.l.b16 %v25
  %v114 = vunpack.c.l.b16 %v26
  %v115 = vunpack.c.l.b16 %v27
  %v116 = vunpack.c.l.b16 %v28
  %v117 = vunpack.c.l.b16 %v29
  %v118 = vunpack.c.l.b16 %v30
  %v119 = vunpack.c.l.b16 %v31
  %v120 = vunpack.c.l.b16 %v32
  %v121 = vunpack.c.l.b16 %v33
  %v122 = vunpack.c.l.b16 %v34
  %v123 = vunpack.c.l.b16 %v35
  %v124 = vunpack.c.l.b16 %v36
  %v125 = vunpack.c.l.b16 %v37
  %v126 = vunpack.c.l.b16 %v38
  %v127 = vunpack.c.l.b16 %v39
  %v128 = vunpack.c.l.b16 %v40
  %v129 = vunpack.c.l.b16 %v41
  %v130 = vunpack.c.l.b16 %v42
  %v131 = vunpack.c.l.b16 %v43
  %v132 = vunpack.c.l.b16 %v44
  %v133 = vunpack.c.l.b16 %v45
  %v134 = vunpack.c.l.b16 %v46
  %v135 = vunpack.c.l.b16 %v47
  %v136 = vunpack.c.l.b16 %v48
  %v137 = vunpack.c.l.b16 %v49
  %v138 = vunpack.c.l.b16 %v50
  %v139 = vunpack.c.l.b16 %v51
  %v140 = vunpack.c.l.b16 %v52
  %v141 = vpack.c.b16 %v110, %v109
  %v142 = vpack.c.b16 %v112, %v111
  %v143 = vpack.c.b16 %v114, %v113
  %v144 = vpack.c.b16 %v116, %v115
  %v145 = vpack.c.b16 %v118, %v117
  %v146 = vpack.c.b16 %v120, %v119
  %v147 = vpack.c.b16 %v122, %v121
  %v148 = vpack.c.b16 %v124, %v123
  %v149 = vpack.c.b16 %v126, %v125
  %v150 = vpack.c.b16 %v128, %v127
  %v151 = vpack.c.b16 %v130, %v129
  %v152 = vpack.c.b16 %v132, %v131
  %v153 = vpack.c.b16 %v134, %v133
  %v154 = vpack.c.b16 %v136, %v135
  %v155 = vpack.c.b16 %v138, %v137
  %v156 = vpack.c.b16 %v140, %v139
  %173 = vmatpush.bf16.msra.mxu0 %v148
  %174 = vmatpush.bf16.msra.mxu0 %v147
  %175 = vmatpush.bf16.msra.mxu0 %v146
  %176 = vmatpush.bf16.msra.mxu0 %v145
  %177 = vmatpush.bf16.msra.mxu0 %v144
  %178 = vmatpush.bf16.msra.mxu0 %v143
  %179 = vmatpush.bf16.msra.mxu0 %v142
  %180 = vmatpush.bf16.msra.mxu0 %v141
  %181 = vmatmul.bf16.gmra.mxu0 %v69
  %v182 = vpop.f32.mrf.mxu0
  %v183 = vadd.f32 %v55, %v182
  %v184 = vpop.f32.mrf.mxu0
  %v185 = vadd.f32 %v55, %v184
  %186 = vmatmul.bf16.gmra.mxu0 %v71
  %v187 = vpop.f32.mrf.mxu0
  %v188 = vadd.f32 %v55, %v187
  %v189 = vpop.f32.mrf.mxu0
  %v190 = vadd.f32 %v55, %v189
  %191 = vdwg.mxu0
  %192 = vmatpush.bf16.msra.mxu0 %v156
  %193 = vmatpush.bf16.msra.mxu0 %v155
  %194 = vmatpush.bf16.msra.mxu0 %v154
  %195 = vmatpush.bf16.msra.mxu0 %v153
  %196 = vmatpush.bf16.msra.mxu0 %v152
  %197 = vmatpush.bf16.msra.mxu0 %v151
  %198 = vmatpush.bf16.msra.mxu0 %v150
  %199 = vmatpush.bf16.msra.mxu0 %v149
  %200 = vmatmul.bf16.gmra.mxu0 %v70
  %v201 = vpop.f32.mrf.mxu0
  %v202 = vadd.f32 %v183, %v201
  %v203 = vpop.f32.mrf.mxu0
  %v204 = vadd.f32 %v185, %v203
  %205 = vmatmul.bf16.gmra.mxu0 %v72
  %v206 = vpop.f32.mrf.mxu0
  %v207 = vadd.f32 %v188, %v206
  %v208 = vpop.f32.mrf.mxu0
  %v209 = vadd.f32 %v190, %v208
  %210 = vdwg.mxu0
  %v211 = vld [vmem:[%s3] sm:$0xff]
  %v212 = vld [vmem:[%s3 + $0x8] sm:$0xff]
  %v213 = vld [vmem:[%s3 + $0x10] sm:$0xff]
  %v214 = vld [vmem:[%s3 + $0x18] sm:$0xff]
  %v215 = vadd.f32 %v202, %v211
  %v216 = vadd.f32 %v204, %v212
  %v217 = vadd.f32 %v207, %v213
  %v218 = vadd.f32 %v209, %v214
  %v219 = vmax.f32 %v215, 0.0
  %v220 = vmax.f32 %v216, 0.0
  %v221 = vmax.f32 %v217, 0.0
  %v222 = vmax.f32 %v218, 0.0
  %223 = vst [vmem:[%s4] sm:$0xff] %v219
  %224 = vst [vmem:[%s4 + $0x8] sm:$0xff] %v220
  %225 = vst [vmem:[%s4 + $0x10] sm:$0xff] %v221
  %226 = vst [vmem:[%s4 + $0x18] sm:$0xff] %v222
  // Predicated region
  $region18: #{fcn_forward.24} parent=0 // pred_check
    _
  $region19: #{fcn_forward.24} parent=0 // pred_check_branch
    %228 = sbr.rel (0) target = $region21
  $region20: #{fcn_forward.24} parent=0 // pred_region
    _
  $region21: #{fcn_forward.24} parent=0 // pred_fallthru
    _
  // Predicated region
  $region22: #{fcn_forward.24} parent=0 // pred_check
    _
  $region23: #{fcn_forward.24} parent=0 // pred_check_branch
    %230 = sbr.rel (0) target = $region25
  $region24: #{fcn_forward.24} parent=0 // pred_region
    _
  $region25: #{fcn_forward.24} parent=0 // pred_fallthru
    _

// kernel: fcn_forward.26
$region0: #{fcn_forward.26}
  #allocation0 [shape = 'u32[]', space=smem, size = 0x4, offset = 0x4, fixed_abs, tag = 'smem constant byte address 0x4 - core index']
  #allocation1 [shape = 'u32[72,128]{1,0:T(1,128)}', space=vmem, size = 0x9000, scoped, tag = 'internal scratch']
  %s0 = inlined_call_operand.vmem [shape: bf16[16,128], index: 0, kind: input, shape index: {}]
  %s1 = inlined_call_operand.vmem [shape: bf16[128,128], index: 1, kind: input, shape index: {}]
  %s2 = inlined_call_operand.vmem [shape: f32[1,128], index: 2, kind: input, shape index: {}]
  %s3 = inlined_call_operand.vmem [shape: f32[16,128], index: 3, kind: output, shape index: {}]
  %s4 = sld [smem:[#allocation0]]
  $region22: #{fcn_forward.26} parent=0
    _
  %s6 = ssub.s32 1, %s4
  %s7 = scalar_select 0, %s6, %s4
  // Predicated region
  $region2: #{fcn_forward.26} parent=0 // pred_check
    _
  $region3: #{fcn_forward.26} parent=0 // pred_check_branch
    %9 = sbr.rel (0) target = $region5
  $region4: #{fcn_forward.26} parent=0 // pred_region
    _
  $region5: #{fcn_forward.26} parent=0 // pred_fallthru
    _
  // Predicated region
  $region6: #{fcn_forward.26} parent=0 // pred_check
    _
  $region7: #{fcn_forward.26} parent=0 // pred_check_branch
    %11 = sbr.rel (0) target = $region9
  $region8: #{fcn_forward.26} parent=0 // pred_region
    _
  $region9: #{fcn_forward.26} parent=0 // pred_fallthru
    _
  // Predicated region
  $region10: #{fcn_forward.26} parent=0 // pred_check
    _
  $region11: #{fcn_forward.26} parent=0 // pred_check_branch
    %13 = sbr.rel (0) target = $region13
  $region12: #{fcn_forward.26} parent=0 // pred_region
    _
  $region13: #{fcn_forward.26} parent=0 // pred_fallthru
    _
  %v14 = vld [vmem:[%s0] sm:$0xf]
  %v15 = vld [vmem:[%s0 + $0x4] sm:$0xf]
  %v16 = vld [vmem:[%s1] sm:$0xf]
  %v17 = vld [vmem:[%s1 + $0x4] sm:$0xf]
  %v18 = vld [vmem:[%s1 + $0x8] sm:$0xf]
  %v19 = vld [vmem:[%s1 + $0xc] sm:$0xf]
  %v20 = vld [vmem:[%s1 + $0x10] sm:$0xf]
  %v21 = vld [vmem:[%s1 + $0x14] sm:$0xf]
  %v22 = vld [vmem:[%s1 + $0x18] sm:$0xf]
  %v23 = vld [vmem:[%s1 + $0x1c] sm:$0xf]
  %v24 = vld [vmem:[%s1 + $0x20] sm:$0xf]
  %v25 = vld [vmem:[%s1 + $0x24] sm:$0xf]
  %v26 = vld [vmem:[%s1 + $0x28] sm:$0xf]
  %v27 = vld [vmem:[%s1 + $0x2c] sm:$0xf]
  %v28 = vld [vmem:[%s1 + $0x30] sm:$0xf]
  %v29 = vld [vmem:[%s1 + $0x34] sm:$0xf]
  %v30 = vld [vmem:[%s1 + $0x38] sm:$0xf]
  %v31 = vld [vmem:[%s1 + $0x3c] sm:$0xf]
  %v32 = vld [vmem:[%s2] sm:$0x1]
  %v34 = vperm.slane %v32, 0
  %v38 = vunpack.c.l.b16 %v14
  %v39 = vunpack.c.l.b16 %v15
  %v40 = vpack.c.b16 %v39, %v38
  %v58 = vunpack.c.l.b16 %v16
  %v59 = vunpack.c.l.b16 %v17
  %v60 = vunpack.c.l.b16 %v18
  %v61 = vunpack.c.l.b16 %v19
  %v62 = vunpack.c.l.b16 %v20
  %v63 = vunpack.c.l.b16 %v21
  %v64 = vunpack.c.l.b16 %v22
  %v65 = vunpack.c.l.b16 %v23
  %v66 = vunpack.c.l.b16 %v24
  %v67 = vunpack.c.l.b16 %v25
  %v68 = vunpack.c.l.b16 %v26
  %v69 = vunpack.c.l.b16 %v27
  %v70 = vunpack.c.l.b16 %v28
  %v71 = vunpack.c.l.b16 %v29
  %v72 = vunpack.c.l.b16 %v30
  %v73 = vunpack.c.l.b16 %v31
  %v74 = vpack.c.b16 %v59, %v58
  %v75 = vpack.c.b16 %v61, %v60
  %v76 = vpack.c.b16 %v63, %v62
  %v77 = vpack.c.b16 %v65, %v64
  %v78 = vpack.c.b16 %v67, %v66
  %v79 = vpack.c.b16 %v69, %v68
  %v80 = vpack.c.b16 %v71, %v70
  %v81 = vpack.c.b16 %v73, %v72
  %90 = vmatpush.bf16.msra.mxu0 %v81
  %91 = vmatpush.bf16.msra.mxu0 %v80
  %92 = vmatpush.bf16.msra.mxu0 %v79
  %93 = vmatpush.bf16.msra.mxu0 %v78
  %94 = vmatpush.bf16.msra.mxu0 %v77
  %95 = vmatpush.bf16.msra.mxu0 %v76
  %96 = vmatpush.bf16.msra.mxu0 %v75
  %97 = vmatpush.bf16.msra.mxu0 %v74
  %98 = vmatmul.bf16.gmra.mxu0 %v40
  %v99 = vpop.f32.mrf.mxu0
  %v100 = vadd.f32 %v34, %v99
  %v101 = vpop.f32.mrf.mxu0
  %v102 = vadd.f32 %v34, %v101
  %103 = vdwg.mxu0
  %104 = vst [vmem:[%s3] sm:$0xff] %v100
  %105 = vst [vmem:[%s3 + $0x8] sm:$0xff] %v102
  // Predicated region
  $region14: #{fcn_forward.26} parent=0 // pred_check
    _
  $region15: #{fcn_forward.26} parent=0 // pred_check_branch
    %107 = sbr.rel (0) target = $region17
  $region16: #{fcn_forward.26} parent=0 // pred_region
    _
  $region17: #{fcn_forward.26} parent=0 // pred_fallthru
    _
  // Predicated region
  $region18: #{fcn_forward.26} parent=0 // pred_check
    _
  $region19: #{fcn_forward.26} parent=0 // pred_check_branch
    %109 = sbr.rel (0) target = $region21
  $region20: #{fcn_forward.26} parent=0 // pred_region
    _
  $region21: #{fcn_forward.26} parent=0 // pred_fallthru
    _

// kernel: fcn_forward.27
$region0: #{fcn_forward.27}
  #allocation0 [shape = 'u32[]', space=smem, size = 0x4, offset = 0x4, fixed_abs, tag = 'smem constant byte address 0x4 - core index']
  #allocation1 [shape = 'u32[72,128]{1,0:T(1,128)}', space=vmem, size = 0x9000, scoped, tag = 'internal scratch']
  %s0 = inlined_call_operand.vmem [shape: bf16[16,384], index: 0, kind: input, shape index: {}]
  %s1 = inlined_call_operand.vmem [shape: bf16[384,128], index: 1, kind: input, shape index: {}]
  %s2 = inlined_call_operand.vmem [shape: f32[1,128], index: 2, kind: input, shape index: {}]
  %s3 = inlined_call_operand.vmem [shape: f32[16,128], index: 3, kind: input, shape index: {}]
  %s4 = inlined_call_operand.vmem [shape: f32[16,128], index: 4, kind: output, shape index: {}]
  %s5 = sld [smem:[#allocation0]]
  $region26: #{fcn_forward.27} parent=0
    _
  %s7 = ssub.s32 1, %s5
  %s8 = scalar_select 0, %s7, %s5
  // Predicated region
  $region2: #{fcn_forward.27} parent=0 // pred_check
    _
  $region3: #{fcn_forward.27} parent=0 // pred_check_branch
    %10 = sbr.rel (0) target = $region5
  $region4: #{fcn_forward.27} parent=0 // pred_region
    _
  $region5: #{fcn_forward.27} parent=0 // pred_fallthru
    _
  // Predicated region
  $region6: #{fcn_forward.27} parent=0 // pred_check
    _
  $region7: #{fcn_forward.27} parent=0 // pred_check_branch
    %12 = sbr.rel (0) target = $region9
  $region8: #{fcn_forward.27} parent=0 // pred_region
    _
  $region9: #{fcn_forward.27} parent=0 // pred_fallthru
    _
  // Predicated region
  $region10: #{fcn_forward.27} parent=0 // pred_check
    _
  $region11: #{fcn_forward.27} parent=0 // pred_check_branch
    %14 = sbr.rel (0) target = $region13
  $region12: #{fcn_forward.27} parent=0 // pred_region
    _
  $region13: #{fcn_forward.27} parent=0 // pred_fallthru
    _
  // Predicated region
  $region14: #{fcn_forward.27} parent=0 // pred_check
    _
  $region15: #{fcn_forward.27} parent=0 // pred_check_branch
    %16 = sbr.rel (0) target = $region17
  $region16: #{fcn_forward.27} parent=0 // pred_region
    _
  $region17: #{fcn_forward.27} parent=0 // pred_fallthru
    _
  %v17 = vld [vmem:[%s0] sm:$0xff]
  %v18 = vld [vmem:[%s0 + $0x8] sm:$0xf]
  %v19 = vld [vmem:[%s0 + $0xc] sm:$0xff]
  %v20 = vld [vmem:[%s0 + $0x14] sm:$0xf]
  %v21 = vld [vmem:[%s1] sm:$0xf]
  %v22 = vld [vmem:[%s1 + $0x4] sm:$0xf]
  %v23 = vld [vmem:[%s1 + $0x8] sm:$0xf]
  %v24 = vld [vmem:[%s1 + $0xc] sm:$0xf]
  %v25 = vld [vmem:[%s1 + $0x10] sm:$0xf]
  %v26 = vld [vmem:[%s1 + $0x14] sm:$0xf]
  %v27 = vld [vmem:[%s1 + $0x18] sm:$0xf]
  %v28 = vld [vmem:[%s1 + $0x1c] sm:$0xf]
  %v29 = vld [vmem:[%s1 + $0x20] sm:$0xf]
  %v30 = vld [vmem:[%s1 + $0x24] sm:$0xf]
  %v31 = vld [vmem:[%s1 + $0x28] sm:$0xf]
  %v32 = vld [vmem:[%s1 + $0x2c] sm:$0xf]
  %v33 = vld [vmem:[%s1 + $0x30] sm:$0xf]
  %v34 = vld [vmem:[%s1 + $0x34] sm:$0xf]
  %v35 = vld [vmem:[%s1 + $0x38] sm:$0xf]
  %v36 = vld [vmem:[%s1 + $0x3c] sm:$0xf]
  %v37 = vld [vmem:[%s1 + $0x40] sm:$0xf]
  %v38 = vld [vmem:[%s1 + $0x44] sm:$0xf]
  %v39 = vld [vmem:[%s1 + $0x48] sm:$0xf]
  %v40 = vld [vmem:[%s1 + $0x4c] sm:$0xf]
  %v41 = vld [vmem:[%s1 + $0x50] sm:$0xf]
  %v42 = vld [vmem:[%s1 + $0x54] sm:$0xf]
  %v43 = vld [vmem:[%s1 + $0x58] sm:$0xf]
  %v44 = vld [vmem:[%s1 + $0x5c] sm:$0xf]
  %v45 = vld [vmem:[%s1 + $0x60] sm:$0xf]
  %v46 = vld [vmem:[%s1 + $0x64] sm:$0xf]
  %v47 = vld [vmem:[%s1 + $0x68] sm:$0xf]
  %v48 = vld [vmem:[%s1 + $0x6c] sm:$0xf]
  %v49 = vld [vmem:[%s1 + $0x70] sm:$0xf]
  %v50 = vld [vmem:[%s1 + $0x74] sm:$0xf]
  %v51 = vld [vmem:[%s1 + $0x78] sm:$0xf]
  %v52 = vld [vmem:[%s1 + $0x7c] sm:$0xf]
  %v53 = vld [vmem:[%s1 + $0x80] sm:$0xf]
  %v54 = vld [vmem:[%s1 + $0x84] sm:$0xf]
  %v55 = vld [vmem:[%s1 + $0x88] sm:$0xf]
  %v56 = vld [vmem:[%s1 + $0x8c] sm:$0xf]
  %v57 = vld [vmem:[%s1 + $0x90] sm:$0xf]
  %v58 = vld [vmem:[%s1 + $0x94] sm:$0xf]
  %v59 = vld [vmem:[%s1 + $0x98] sm:$0xf]
  %v60 = vld [vmem:[%s1 + $0x9c] sm:$0xf]
  %v61 = vld [vmem:[%s1 + $0xa0] sm:$0xf]
  %v62 = vld [vmem:[%s1 + $0xa4] sm:$0xf]
  %v63 = vld [vmem:[%s1 + $0xa8] sm:$0xf]
  %v64 = vld [vmem:[%s1 + $0xac] sm:$0xf]
  %v65 = vld [vmem:[%s1 + $0xb0] sm:$0xf]
  %v66 = vld [vmem:[%s1 + $0xb4] sm:$0xf]
  %v67 = vld [vmem:[%s1 + $0xb8] sm:$0xf]
  %v68 = vld [vmem:[%s1 + $0xbc] sm:$0xf]
  %v69 = vld [vmem:[%s2] sm:$0x1]
  %v71 = vperm.slane %v69, 0
  %v77 = vunpack.c.l.b16 %v17
  %v78 = vunpack.c.h.b16 %v17
  %v79 = vunpack.c.l.b16 %v18
  %v80 = vunpack.c.l.b16 %v19
  %v81 = vunpack.c.h.b16 %v19
  %v82 = vunpack.c.l.b16 %v20
  %v83 = vpack.c.b16 %v80, %v77
  %v84 = vpack.c.b16 %v81, %v78
  %v85 = vpack.c.b16 %v82, %v79
  %v137 = vunpack.c.l.b16 %v21
  %v138 = vunpack.c.l.b16 %v22
  %v139 = vunpack.c.l.b16 %v23
  %v140 = vunpack.c.l.b16 %v24
  %v141 = vunpack.c.l.b16 %v25
  %v142 = vunpack.c.l.b16 %v26
  %v143 = vunpack.c.l.b16 %v27
  %v144 = vunpack.c.l.b16 %v28
  %v145 = vunpack.c.l.b16 %v29
  %v146 = vunpack.c.l.b16 %v30
  %v147 = vunpack.c.l.b16 %v31
  %v148 = vunpack.c.l.b16 %v32
  %v149 = vunpack.c.l.b16 %v33
  %v150 = vunpack.c.l.b16 %v34
  %v151 = vunpack.c.l.b16 %v35
  %v152 = vunpack.c.l.b16 %v36
  %v153 = vunpack.c.l.b16 %v37
  %v154 = vunpack.c.l.b16 %v38
  %v155 = vunpack.c.l.b16 %v39
  %v156 = vunpack.c.l.b16 %v40
  %v157 = vunpack.c.l.b16 %v41
  %v158 = vunpack.c.l.b16 %v42
  %v159 = vunpack.c.l.b16 %v43
  %v160 = vunpack.c.l.b16 %v44
  %v161 = vunpack.c.l.b16 %v45
  %v162 = vunpack.c.l.b16 %v46
  %v163 = vunpack.c.l.b16 %v47
  %v164 = vunpack.c.l.b16 %v48
  %v165 = vunpack.c.l.b16 %v49
  %v166 = vunpack.c.l.b16 %v50
  %v167 = vunpack.c.l.b16 %v51
  %v168 = vunpack.c.l.b16 %v52
  %v169 = vunpack.c.l.b16 %v53
  %v170 = vunpack.c.l.b16 %v54
  %v171 = vunpack.c.l.b16 %v55
  %v172 = vunpack.c.l.b16 %v56
  %v173 = vunpack.c.l.b16 %v57
  %v174 = vunpack.c.l.b16 %v58
  %v175 = vunpack.c.l.b16 %v59
  %v176 = vunpack.c.l.b16 %v60
  %v177 = vunpack.c.l.b16 %v61
  %v178 = vunpack.c.l.b16 %v62
  %v179 = vunpack.c.l.b16 %v63
  %v180 = vunpack.c.l.b16 %v64
  %v181 = vunpack.c.l.b16 %v65
  %v182 = vunpack.c.l.b16 %v66
  %v183 = vunpack.c.l.b16 %v67
  %v184 = vunpack.c.l.b16 %v68
  %v185 = vpack.c.b16 %v138, %v137
  %v186 = vpack.c.b16 %v140, %v139
  %v187 = vpack.c.b16 %v142, %v141
  %v188 = vpack.c.b16 %v144, %v143
  %v189 = vpack.c.b16 %v146, %v145
  %v190 = vpack.c.b16 %v148, %v147
  %v191 = vpack.c.b16 %v150, %v149
  %v192 = vpack.c.b16 %v152, %v151
  %v193 = vpack.c.b16 %v154, %v153
  %v194 = vpack.c.b16 %v156, %v155
  %v195 = vpack.c.b16 %v158, %v157
  %v196 = vpack.c.b16 %v160, %v159
  %v197 = vpack.c.b16 %v162, %v161
  %v198 = vpack.c.b16 %v164, %v163
  %v199 = vpack.c.b16 %v166, %v165
  %v200 = vpack.c.b16 %v168, %v167
  %v201 = vpack.c.b16 %v170, %v169
  %v202 = vpack.c.b16 %v172, %v171
  %v203 = vpack.c.b16 %v174, %v173
  %v204 = vpack.c.b16 %v176, %v175
  %v205 = vpack.c.b16 %v178, %v177
  %v206 = vpack.c.b16 %v180, %v179
  %v207 = vpack.c.b16 %v182, %v181
  %v208 = vpack.c.b16 %v184, %v183
  %233 = vmatpush.bf16.msra.mxu0 %v192
  %234 = vmatpush.bf16.msra.mxu0 %v191
  %235 = vmatpush.bf16.msra.mxu0 %v190
  %236 = vmatpush.bf16.msra.mxu0 %v189
  %237 = vmatpush.bf16.msra.mxu0 %v188
  %238 = vmatpush.bf16.msra.mxu0 %v187
  %239 = vmatpush.bf16.msra.mxu0 %v186
  %240 = vmatpush.bf16.msra.mxu0 %v185
  %241 = vmatmul.bf16.gmra.mxu0 %v83
  %v242 = vpop.f32.mrf.mxu0
  %v243 = vadd.f32 %v71, %v242
  %v244 = vpop.f32.mrf.mxu0
  %v245 = vadd.f32 %v71, %v244
  %246 = vdwg.mxu0
  %247 = vmatpush.bf16.msra.mxu0 %v200
  %248 = vmatpush.bf16.msra.mxu0 %v199
  %249 = vmatpush.bf16.msra.mxu0 %v198
  %250 = vmatpush.bf16.msra.mxu0 %v197
  %251 = vmatpush.bf16.msra.mxu0 %v196
  %252 = vmatpush.bf16.msra.mxu0 %v195
  %253 = vmatpush.bf16.msra.mxu0 %v194
  %254 = vmatpush.bf16.msra.mxu0 %v193
  %255 = vmatmul.bf16.gmra.mxu0 %v84
  %v256 = vpop.f32.mrf.mxu0
  %v257 = vadd.f32 %v243, %v256
  %v258 = vpop.f32.mrf.mxu0
  %v259 = vadd.f32 %v245, %v258
  %260 = vdwg.mxu0
  %261 = vmatpush.bf16.msra.mxu0 %v208
  %262 = vmatpush.bf16.msra.mxu0 %v207
  %263 = vmatpush.bf16.msra.mxu0 %v206
  %264 = vmatpush.bf16.msra.mxu0 %v205
  %265 = vmatpush.bf16.msra.mxu0 %v204
  %266 = vmatpush.bf16.msra.mxu0 %v203
  %267 = vmatpush.bf16.msra.mxu0 %v202
  %268 = vmatpush.bf16.msra.mxu0 %v201
  %269 = vmatmul.bf16.gmra.mxu0 %v85
  %v270 = vpop.f32.mrf.mxu0
  %v271 = vadd.f32 %v257, %v270
  %v272 = vpop.f32.mrf.mxu0
  %v273 = vadd.f32 %v259, %v272
  %274 = vdwg.mxu0
  %v275 = vld [vmem:[%s3] sm:$0xff]
  %v276 = vld [vmem:[%s3 + $0x8] sm:$0xff]
  %v277 = vadd.f32 %v271, %v275
  %v278 = vadd.f32 %v273, %v276
  %v279 = vmax.f32 %v277, 0.0
  %v280 = vmax.f32 %v278, 0.0
  %281 = vst [vmem:[%s4] sm:$0xff] %v279
  %282 = vst [vmem:[%s4 + $0x8] sm:$0xff] %v280
  // Predicated region
  $region18: #{fcn_forward.27} parent=0 // pred_check
    _
  $region19: #{fcn_forward.27} parent=0 // pred_check_branch
    %284 = sbr.rel (0) target = $region21
  $region20: #{fcn_forward.27} parent=0 // pred_region
    _
  $region21: #{fcn_forward.27} parent=0 // pred_fallthru
    _
  // Predicated region
  $region22: #{fcn_forward.27} parent=0 // pred_check
    _
  $region23: #{fcn_forward.27} parent=0 // pred_check_branch
    %286 = sbr.rel (0) target = $region25
  $region24: #{fcn_forward.27} parent=0 // pred_region
    _
  $region25: #{fcn_forward.27} parent=0 // pred_fallthru
    _

// kernel: fcn_forward.28
$region0: #{fcn_forward.28}
  #allocation0 [shape = 'u32[]', space=smem, size = 0x4, offset = 0x4, fixed_abs, tag = 'smem constant byte address 0x4 - core index']
  #allocation1 [shape = 'u32[72,128]{1,0:T(1,128)}', space=vmem, size = 0x9000, scoped, tag = 'internal scratch']
  %s0 = inlined_call_operand.vmem [shape: bf16[16,384], index: 0, kind: input, shape index: {}]
  %s1 = inlined_call_operand.vmem [shape: bf16[384,128], index: 1, kind: input, shape index: {}]
  %s2 = inlined_call_operand.vmem [shape: f32[1,128], index: 2, kind: input, shape index: {}]
  %s3 = inlined_call_operand.vmem [shape: f32[16,128], index: 3, kind: output, shape index: {}]
  %s4 = sld [smem:[#allocation0]]
  $region22: #{fcn_forward.28} parent=0
    _
  %s6 = ssub.s32 1, %s4
  %s7 = scalar_select 0, %s6, %s4
  // Predicated region
  $region2: #{fcn_forward.28} parent=0 // pred_check
    _
  $region3: #{fcn_forward.28} parent=0 // pred_check_branch
    %9 = sbr.rel (0) target = $region5
  $region4: #{fcn_forward.28} parent=0 // pred_region
    _
  $region5: #{fcn_forward.28} parent=0 // pred_fallthru
    _
  // Predicated region
  $region6: #{fcn_forward.28} parent=0 // pred_check
    _
  $region7: #{fcn_forward.28} parent=0 // pred_check_branch
    %11 = sbr.rel (0) target = $region9
  $region8: #{fcn_forward.28} parent=0 // pred_region
    _
  $region9: #{fcn_forward.28} parent=0 // pred_fallthru
    _
  // Predicated region
  $region10: #{fcn_forward.28} parent=0 // pred_check
    _
  $region11: #{fcn_forward.28} parent=0 // pred_check_branch
    %13 = sbr.rel (0) target = $region13
  $region12: #{fcn_forward.28} parent=0 // pred_region
    _
  $region13: #{fcn_forward.28} parent=0 // pred_fallthru
    _
  %v14 = vld [vmem:[%s0] sm:$0xff]
  %v15 = vld [vmem:[%s0 + $0x8] sm:$0xf]
  %v16 = vld [vmem:[%s0 + $0xc] sm:$0xff]
  %v17 = vld [vmem:[%s0 + $0x14] sm:$0xf]
  %v18 = vld [vmem:[%s1] sm:$0xf]
  %v19 = vld [vmem:[%s1 + $0x4] sm:$0xf]
  %v20 = vld [vmem:[%s1 + $0x8] sm:$0xf]
  %v21 = vld [vmem:[%s1 + $0xc] sm:$0xf]
  %v22 = vld [vmem:[%s1 + $0x10] sm:$0xf]
  %v23 = vld [vmem:[%s1 + $0x14] sm:$0xf]
  %v24 = vld [vmem:[%s1 + $0x18] sm:$0xf]
  %v25 = vld [vmem:[%s1 + $0x1c] sm:$0xf]
  %v26 = vld [vmem:[%s1 + $0x20] sm:$0xf]
  %v27 = vld [vmem:[%s1 + $0x24] sm:$0xf]
  %v28 = vld [vmem:[%s1 + $0x28] sm:$0xf]
  %v29 = vld [vmem:[%s1 + $0x2c] sm:$0xf]
  %v30 = vld [vmem:[%s1 + $0x30] sm:$0xf]
  %v31 = vld [vmem:[%s1 + $0x34] sm:$0xf]
  %v32 = vld [vmem:[%s1 + $0x38] sm:$0xf]
  %v33 = vld [vmem:[%s1 + $0x3c] sm:$0xf]
  %v34 = vld [vmem:[%s1 + $0x40] sm:$0xf]
  %v35 = vld [vmem:[%s1 + $0x44] sm:$0xf]
  %v36 = vld [vmem:[%s1 + $0x48] sm:$0xf]
  %v37 = vld [vmem:[%s1 + $0x4c] sm:$0xf]
  %v38 = vld [vmem:[%s1 + $0x50] sm:$0xf]
  %v39 = vld [vmem:[%s1 + $0x54] sm:$0xf]
  %v40 = vld [vmem:[%s1 + $0x58] sm:$0xf]
  %v41 = vld [vmem:[%s1 + $0x5c] sm:$0xf]
  %v42 = vld [vmem:[%s1 + $0x60] sm:$0xf]
  %v43 = vld [vmem:[%s1 + $0x64] sm:$0xf]
  %v44 = vld [vmem:[%s1 + $0x68] sm:$0xf]
  %v45 = vld [vmem:[%s1 + $0x6c] sm:$0xf]
  %v46 = vld [vmem:[%s1 + $0x70] sm:$0xf]
  %v47 = vld [vmem:[%s1 + $0x74] sm:$0xf]
  %v48 = vld [vmem:[%s1 + $0x78] sm:$0xf]
  %v49 = vld [vmem:[%s1 + $0x7c] sm:$0xf]
  %v50 = vld [vmem:[%s1 + $0x80] sm:$0xf]
  %v51 = vld [vmem:[%s1 + $0x84] sm:$0xf]
  %v52 = vld [vmem:[%s1 + $0x88] sm:$0xf]
  %v53 = vld [vmem:[%s1 + $0x8c] sm:$0xf]
  %v54 = vld [vmem:[%s1 + $0x90] sm:$0xf]
  %v55 = vld [vmem:[%s1 + $0x94] sm:$0xf]
  %v56 = vld [vmem:[%s1 + $0x98] sm:$0xf]
  %v57 = vld [vmem:[%s1 + $0x9c] sm:$0xf]
  %v58 = vld [vmem:[%s1 + $0xa0] sm:$0xf]
  %v59 = vld [vmem:[%s1 + $0xa4] sm:$0xf]
  %v60 = vld [vmem:[%s1 + $0xa8] sm:$0xf]
  %v61 = vld [vmem:[%s1 + $0xac] sm:$0xf]
  %v62 = vld [vmem:[%s1 + $0xb0] sm:$0xf]
  %v63 = vld [vmem:[%s1 + $0xb4] sm:$0xf]
  %v64 = vld [vmem:[%s1 + $0xb8] sm:$0xf]
  %v65 = vld [vmem:[%s1 + $0xbc] sm:$0xf]
  %v66 = vld [vmem:[%s2] sm:$0x1]
  %v68 = vperm.slane %v66, 0
  %v74 = vunpack.c.l.b16 %v14
  %v75 = vunpack.c.h.b16 %v14
  %v76 = vunpack.c.l.b16 %v15
  %v77 = vunpack.c.l.b16 %v16
  %v78 = vunpack.c.h.b16 %v16
  %v79 = vunpack.c.l.b16 %v17
  %v80 = vpack.c.b16 %v77, %v74
  %v81 = vpack.c.b16 %v78, %v75
  %v82 = vpack.c.b16 %v79, %v76
  %v134 = vunpack.c.l.b16 %v18
  %v135 = vunpack.c.l.b16 %v19
  %v136 = vunpack.c.l.b16 %v20
  %v137 = vunpack.c.l.b16 %v21
  %v138 = vunpack.c.l.b16 %v22
  %v139 = vunpack.c.l.b16 %v23
  %v140 = vunpack.c.l.b16 %v24
  %v141 = vunpack.c.l.b16 %v25
  %v142 = vunpack.c.l.b16 %v26
  %v143 = vunpack.c.l.b16 %v27
  %v144 = vunpack.c.l.b16 %v28
  %v145 = vunpack.c.l.b16 %v29
  %v146 = vunpack.c.l.b16 %v30
  %v147 = vunpack.c.l.b16 %v31
  %v148 = vunpack.c.l.b16 %v32
  %v149 = vunpack.c.l.b16 %v33
  %v150 = vunpack.c.l.b16 %v34
  %v151 = vunpack.c.l.b16 %v35
  %v152 = vunpack.c.l.b16 %v36
  %v153 = vunpack.c.l.b16 %v37
  %v154 = vunpack.c.l.b16 %v38
  %v155 = vunpack.c.l.b16 %v39
  %v156 = vunpack.c.l.b16 %v40
  %v157 = vunpack.c.l.b16 %v41
  %v158 = vunpack.c.l.b16 %v42
  %v159 = vunpack.c.l.b16 %v43
  %v160 = vunpack.c.l.b16 %v44
  %v161 = vunpack.c.l.b16 %v45
  %v162 = vunpack.c.l.b16 %v46
  %v163 = vunpack.c.l.b16 %v47
  %v164 = vunpack.c.l.b16 %v48
  %v165 = vunpack.c.l.b16 %v49
  %v166 = vunpack.c.l.b16 %v50
  %v167 = vunpack.c.l.b16 %v51
  %v168 = vunpack.c.l.b16 %v52
  %v169 = vunpack.c.l.b16 %v53
  %v170 = vunpack.c.l.b16 %v54
  %v171 = vunpack.c.l.b16 %v55
  %v172 = vunpack.c.l.b16 %v56
  %v173 = vunpack.c.l.b16 %v57
  %v174 = vunpack.c.l.b16 %v58
  %v175 = vunpack.c.l.b16 %v59
  %v176 = vunpack.c.l.b16 %v60
  %v177 = vunpack.c.l.b16 %v61
  %v178 = vunpack.c.l.b16 %v62
  %v179 = vunpack.c.l.b16 %v63
  %v180 = vunpack.c.l.b16 %v64
  %v181 = vunpack.c.l.b16 %v65
  %v182 = vpack.c.b16 %v135, %v134
  %v183 = vpack.c.b16 %v137, %v136
  %v184 = vpack.c.b16 %v139, %v138
  %v185 = vpack.c.b16 %v141, %v140
  %v186 = vpack.c.b16 %v143, %v142
  %v187 = vpack.c.b16 %v145, %v144
  %v188 = vpack.c.b16 %v147, %v146
  %v189 = vpack.c.b16 %v149, %v148
  %v190 = vpack.c.b16 %v151, %v150
  %v191 = vpack.c.b16 %v153, %v152
  %v192 = vpack.c.b16 %v155, %v154
  %v193 = vpack.c.b16 %v157, %v156
  %v194 = vpack.c.b16 %v159, %v158
  %v195 = vpack.c.b16 %v161, %v160
  %v196 = vpack.c.b16 %v163, %v162
  %v197 = vpack.c.b16 %v165, %v164
  %v198 = vpack.c.b16 %v167, %v166
  %v199 = vpack.c.b16 %v169, %v168
  %v200 = vpack.c.b16 %v171, %v170
  %v201 = vpack.c.b16 %v173, %v172
  %v202 = vpack.c.b16 %v175, %v174
  %v203 = vpack.c.b16 %v177, %v176
  %v204 = vpack.c.b16 %v179, %v178
  %v205 = vpack.c.b16 %v181, %v180
  %230 = vmatpush.bf16.msra.mxu0 %v189
  %231 = vmatpush.bf16.msra.mxu0 %v188
  %232 = vmatpush.bf16.msra.mxu0 %v187
  %233 = vmatpush.bf16.msra.mxu0 %v186
  %234 = vmatpush.bf16.msra.mxu0 %v185
  %235 = vmatpush.bf16.msra.mxu0 %v184
  %236 = vmatpush.bf16.msra.mxu0 %v183
  %237 = vmatpush.bf16.msra.mxu0 %v182
  %238 = vmatmul.bf16.gmra.mxu0 %v80
  %v239 = vpop.f32.mrf.mxu0
  %v240 = vadd.f32 %v68, %v239
  %v241 = vpop.f32.mrf.mxu0
  %v242 = vadd.f32 %v68, %v241
  %243 = vdwg.mxu0
  %244 = vmatpush.bf16.msra.mxu0 %v197
  %245 = vmatpush.bf16.msra.mxu0 %v196
  %246 = vmatpush.bf16.msra.mxu0 %v195
  %247 = vmatpush.bf16.msra.mxu0 %v194
  %248 = vmatpush.bf16.msra.mxu0 %v193
  %249 = vmatpush.bf16.msra.mxu0 %v192
  %250 = vmatpush.bf16.msra.mxu0 %v191
  %251 = vmatpush.bf16.msra.mxu0 %v190
  %252 = vmatmul.bf16.gmra.mxu0 %v81
  %v253 = vpop.f32.mrf.mxu0
  %v254 = vadd.f32 %v240, %v253
  %v255 = vpop.f32.mrf.mxu0
  %v256 = vadd.f32 %v242, %v255
  %257 = vdwg.mxu0
  %258 = vmatpush.bf16.msra.mxu0 %v205
  %259 = vmatpush.bf16.msra.mxu0 %v204
  %260 = vmatpush.bf16.msra.mxu0 %v203
  %261 = vmatpush.bf16.msra.mxu0 %v202
  %262 = vmatpush.bf16.msra.mxu0 %v201
  %263 = vmatpush.bf16.msra.mxu0 %v200
  %264 = vmatpush.bf16.msra.mxu0 %v199
  %265 = vmatpush.bf16.msra.mxu0 %v198
  %266 = vmatmul.bf16.gmra.mxu0 %v82
  %v267 = vpop.f32.mrf.mxu0
  %v268 = vadd.f32 %v254, %v267
  %v269 = vpop.f32.mrf.mxu0
  %v270 = vadd.f32 %v256, %v269
  %271 = vdwg.mxu0
  %v272 = vmax.f32 %v268, 0.0
  %v273 = vmax.f32 %v270, 0.0
  %274 = vst [vmem:[%s3] sm:$0xff] %v272
  %275 = vst [vmem:[%s3 + $0x8] sm:$0xff] %v273
  // Predicated region
  $region14: #{fcn_forward.28} parent=0 // pred_check
    _
  $region15: #{fcn_forward.28} parent=0 // pred_check_branch
    %277 = sbr.rel (0) target = $region17
  $region16: #{fcn_forward.28} parent=0 // pred_region
    _
  $region17: #{fcn_forward.28} parent=0 // pred_fallthru
    _
  // Predicated region
  $region18: #{fcn_forward.28} parent=0 // pred_check
    _
  $region19: #{fcn_forward.28} parent=0 // pred_check_branch
    %279 = sbr.rel (0) target = $region21
  $region20: #{fcn_forward.28} parent=0 // pred_region
    _
  $region21: #{fcn_forward.28} parent=0 // pred_fallthru
    _

// kernel: fcn_forward.30
$region0: #{fcn_forward.30}
  #allocation0 [shape = 'u32[]', space=smem, size = 0x4, offset = 0x4, fixed_abs, tag = 'smem constant byte address 0x4 - core index']
  #allocation1 [shape = 'u32[72,128]{1,0:T(1,128)}', space=vmem, size = 0x9000, scoped, tag = 'internal scratch']
  %s0 = inlined_call_operand.vmem [shape: bf16[16,640], index: 0, kind: input, shape index: {}]
  %s1 = inlined_call_operand.vmem [shape: bf16[640,128], index: 1, kind: input, shape index: {}]
  %s2 = inlined_call_operand.vmem [shape: f32[1,128], index: 2, kind: input, shape index: {}]
  %s3 = inlined_call_operand.vmem [shape: f32[16,128], index: 3, kind: input, shape index: {}]
  %s4 = inlined_call_operand.vmem [shape: f32[16,128], index: 4, kind: output, shape index: {}]
  %s5 = sld [smem:[#allocation0]]
  $region26: #{fcn_forward.30} parent=0
    _
  %s7 = ssub.s32 1, %s5
  %s8 = scalar_select 0, %s7, %s5
  // Predicated region
  $region2: #{fcn_forward.30} parent=0 // pred_check
    _
  $region3: #{fcn_forward.30} parent=0 // pred_check_branch
    %10 = sbr.rel (0) target = $region5
  $region4: #{fcn_forward.30} parent=0 // pred_region
    _
  $region5: #{fcn_forward.30} parent=0 // pred_fallthru
    _
  // Predicated region
  $region6: #{fcn_forward.30} parent=0 // pred_check
    _
  $region7: #{fcn_forward.30} parent=0 // pred_check_branch
    %12 = sbr.rel (0) target = $region9
  $region8: #{fcn_forward.30} parent=0 // pred_region
    _
  $region9: #{fcn_forward.30} parent=0 // pred_fallthru
    _
  // Predicated region
  $region10: #{fcn_forward.30} parent=0 // pred_check
    _
  $region11: #{fcn_forward.30} parent=0 // pred_check_branch
    %14 = sbr.rel (0) target = $region13
  $region12: #{fcn_forward.30} parent=0 // pred_region
    _
  $region13: #{fcn_forward.30} parent=0 // pred_fallthru
    _
  // Predicated region
  $region14: #{fcn_forward.30} parent=0 // pred_check
    _
  $region15: #{fcn_forward.30} parent=0 // pred_check_branch
    %16 = sbr.rel (0) target = $region17
  $region16: #{fcn_forward.30} parent=0 // pred_region
    _
  $region17: #{fcn_forward.30} parent=0 // pred_fallthru
    _
  %v17 = vld [vmem:[%s0] sm:$0xff]
  %v18 = vld [vmem:[%s0 + $0x8] sm:$0xff]
  %v19 = vld [vmem:[%s0 + $0x10] sm:$0xf]
  %v20 = vld [vmem:[%s0 + $0x14] sm:$0xff]
  %v21 = vld [vmem:[%s0 + $0x1c] sm:$0xff]
  %v22 = vld [vmem:[%s0 + $0x24] sm:$0xf]
  %v23 = vld [vmem:[%s1] sm:$0xf]
  %v24 = vld [vmem:[%s1 + $0x4] sm:$0xf]
  %v25 = vld [vmem:[%s1 + $0x8] sm:$0xf]
  %v26 = vld [vmem:[%s1 + $0xc] sm:$0xf]
  %v27 = vld [vmem:[%s1 + $0x10] sm:$0xf]
  %v28 = vld [vmem:[%s1 + $0x14] sm:$0xf]
  %v29 = vld [vmem:[%s1 + $0x18] sm:$0xf]
  %v30 = vld [vmem:[%s1 + $0x1c] sm:$0xf]
  %v31 = vld [vmem:[%s1 + $0x20] sm:$0xf]
  %v32 = vld [vmem:[%s1 + $0x24] sm:$0xf]
  %v33 = vld [vmem:[%s1 + $0x28] sm:$0xf]
  %v34 = vld [vmem:[%s1 + $0x2c] sm:$0xf]
  %v35 = vld [vmem:[%s1 + $0x30] sm:$0xf]
  %v36 = vld [vmem:[%s1 + $0x34] sm:$0xf]
  %v37 = vld [vmem:[%s1 + $0x38] sm:$0xf]
  %v38 = vld [vmem:[%s1 + $0x3c] sm:$0xf]
  %v39 = vld [vmem:[%s1 + $0x40] sm:$0xf]
  %v40 = vld [vmem:[%s1 + $0x44] sm:$0xf]
  %v41 = vld [vmem:[%s1 + $0x48] sm:$0xf]
  %v42 = vld [vmem:[%s1 + $0x4c] sm:$0xf]
  %v43 = vld [vmem:[%s1 + $0x50] sm:$0xf]
  %v44 = vld [vmem:[%s1 + $0x54] sm:$0xf]
  %v45 = vld [vmem:[%s1 + $0x58] sm:$0xf]
  %v46 = vld [vmem:[%s1 + $0x5c] sm:$0xf]
  %v47 = vld [vmem:[%s1 + $0x60] sm:$0xf]
  %v48 = vld [vmem:[%s1 + $0x64] sm:$0xf]
  %v49 = vld [vmem:[%s1 + $0x68] sm:$0xf]
  %v50 = vld [vmem:[%s1 + $0x6c] sm:$0xf]
  %v51 = vld [vmem:[%s1 + $0x70] sm:$0xf]
  %v52 = vld [vmem:[%s1 + $0x74] sm:$0xf]
  %v53 = vld [vmem:[%s1 + $0x78] sm:$0xf]
  %v54 = vld [vmem:[%s1 + $0x7c] sm:$0xf]
  %v55 = vld [vmem:[%s1 + $0x80] sm:$0xf]
  %v56 = vld [vmem:[%s1 + $0x84] sm:$0xf]
  %v57 = vld [vmem:[%s1 + $0x88] sm:$0xf]
  %v58 = vld [vmem:[%s1 + $0x8c] sm:$0xf]
  %v59 = vld [vmem:[%s1 + $0x90] sm:$0xf]
  %v60 = vld [vmem:[%s1 + $0x94] sm:$0xf]
  %v61 = vld [vmem:[%s1 + $0x98] sm:$0xf]
  %v62 = vld [vmem:[%s1 + $0x9c] sm:$0xf]
  %v63 = vld [vmem:[%s1 + $0xa0] sm:$0xf]
  %v64 = vld [vmem:[%s1 + $0xa4] sm:$0xf]
  %v65 = vld [vmem:[%s1 + $0xa8] sm:$0xf]
  %v66 = vld [vmem:[%s1 + $0xac] sm:$0xf]
  %v67 = vld [vmem:[%s1 + $0xb0] sm:$0xf]
  %v68 = vld [vmem:[%s1 + $0xb4] sm:$0xf]
  %v69 = vld [vmem:[%s1 + $0xb8] sm:$0xf]
  %v70 = vld [vmem:[%s1 + $0xbc] sm:$0xf]
  %v71 = vld [vmem:[%s1 + $0xc0] sm:$0xf]
  %v72 = vld [vmem:[%s1 + $0xc4] sm:$0xf]
  %v73 = vld [vmem:[%s1 + $0xc8] sm:$0xf]
  %v74 = vld [vmem:[%s1 + $0xcc] sm:$0xf]
  %v75 = vld [vmem:[%s1 + $0xd0] sm:$0xf]
  %v76 = vld [vmem:[%s1 + $0xd4] sm:$0xf]
  %v77 = vld [vmem:[%s1 + $0xd8] sm:$0xf]
  %v78 = vld [vmem:[%s1 + $0xdc] sm:$0xf]
  %v79 = vld [vmem:[%s1 + $0xe0] sm:$0xf]
  %v80 = vld [vmem:[%s1 + $0xe4] sm:$0xf]
  %v81 = vld [vmem:[%s1 + $0xe8] sm:$0xf]
  %v82 = vld [vmem:[%s1 + $0xec] sm:$0xf]
  %v83 = vld [vmem:[%s1 + $0xf0] sm:$0xf]
  %v84 = vld [vmem:[%s1 + $0xf4] sm:$0xf]
  %v85 = vld [vmem:[%s1 + $0xf8] sm:$0xf]
  %v86 = vld [vmem:[%s1 + $0xfc] sm:$0xf]
  %v87 = vld [vmem:[%s1 + $0x100] sm:$0xf]
  %v88 = vld [vmem:[%s1 + $0x104] sm:$0xf]
  %v89 = vld [vmem:[%s1 + $0x108] sm:$0xf]
  %v90 = vld [vmem:[%s1 + $0x10c] sm:$0xf]
  %v91 = vld [vmem:[%s1 + $0x110] sm:$0xf]
  %v92 = vld [vmem:[%s1 + $0x114] sm:$0xf]
  %v93 = vld [vmem:[%s1 + $0x118] sm:$0xf]
  %v94 = vld [vmem:[%s1 + $0x11c] sm:$0xf]
  %v95 = vld [vmem:[%s1 + $0x120] sm:$0xf]
  %v96 = vld [vmem:[%s1 + $0x124] sm:$0xf]
  %v97 = vld [vmem:[%s1 + $0x128] sm:$0xf]
  %v98 = vld [vmem:[%s1 + $0x12c] sm:$0xf]
  %v99 = vld [vmem:[%s1 + $0x130] sm:$0xf]
  %v100 = vld [vmem:[%s1 + $0x134] sm:$0xf]
  %v101 = vld [vmem:[%s1 + $0x138] sm:$0xf]
  %v102 = vld [vmem:[%s1 + $0x13c] sm:$0xf]
  %v103 = vld [vmem:[%s2] sm:$0x1]
  %v105 = vperm.slane %v103, 0
  %v113 = vunpack.c.l.b16 %v17
  %v114 = vunpack.c.h.b16 %v17
  %v115 = vunpack.c.l.b16 %v18
  %v116 = vunpack.c.h.b16 %v18
  %v117 = vunpack.c.l.b16 %v19
  %v118 = vunpack.c.l.b16 %v20
  %v119 = vunpack.c.h.b16 %v20
  %v120 = vunpack.c.l.b16 %v21
  %v121 = vunpack.c.h.b16 %v21
  %v122 = vunpack.c.l.b16 %v22
  %v123 = vpack.c.b16 %v118, %v113
  %v124 = vpack.c.b16 %v119, %v114
  %v125 = vpack.c.b16 %v120, %v115
  %v126 = vpack.c.b16 %v121, %v116
  %v127 = vpack.c.b16 %v122, %v117
  %v213 = vunpack.c.l.b16 %v23
  %v214 = vunpack.c.l.b16 %v24
  %v215 = vunpack.c.l.b16 %v25
  %v216 = vunpack.c.l.b16 %v26
  %v217 = vunpack.c.l.b16 %v27
  %v218 = vunpack.c.l.b16 %v28
  %v219 = vunpack.c.l.b16 %v29
  %v220 = vunpack.c.l.b16 %v30
  %v221 = vunpack.c.l.b16 %v31
  %v222 = vunpack.c.l.b16 %v32
  %v223 = vunpack.c.l.b16 %v33
  %v224 = vunpack.c.l.b16 %v34
  %v225 = vunpack.c.l.b16 %v35
  %v226 = vunpack.c.l.b16 %v36
  %v227 = vunpack.c.l.b16 %v37
  %v228 = vunpack.c.l.b16 %v38
  %v229 = vunpack.c.l.b16 %v39
  %v230 = vunpack.c.l.b16 %v40
  %v231 = vunpack.c.l.b16 %v41
  %v232 = vunpack.c.l.b16 %v42
  %v233 = vunpack.c.l.b16 %v43
  %v234 = vunpack.c.l.b16 %v44
  %v235 = vunpack.c.l.b16 %v45
  %v236 = vunpack.c.l.b16 %v46
  %v237 = vunpack.c.l.b16 %v47
  %v238 = vunpack.c.l.b16 %v48
  %v239 = vunpack.c.l.b16 %v49
  %v240 = vunpack.c.l.b16 %v50
  %v241 = vunpack.c.l.b16 %v51
  %v242 = vunpack.c.l.b16 %v52
  %v243 = vunpack.c.l.b16 %v53
  %v244 = vunpack.c.l.b16 %v54
  %v245 = vunpack.c.l.b16 %v55
  %v246 = vunpack.c.l.b16 %v56
  %v247 = vunpack.c.l.b16 %v57
  %v248 = vunpack.c.l.b16 %v58
  %v249 = vunpack.c.l.b16 %v59
  %v250 = vunpack.c.l.b16 %v60
  %v251 = vunpack.c.l.b16 %v61
  %v252 = vunpack.c.l.b16 %v62
  %v253 = vunpack.c.l.b16 %v63
  %v254 = vunpack.c.l.b16 %v64
  %v255 = vunpack.c.l.b16 %v65
  %v256 = vunpack.c.l.b16 %v66
  %v257 = vunpack.c.l.b16 %v67
  %v258 = vunpack.c.l.b16 %v68
  %v259 = vunpack.c.l.b16 %v69
  %v260 = vunpack.c.l.b16 %v70
  %v261 = vunpack.c.l.b16 %v71
  %v262 = vunpack.c.l.b16 %v72
  %v263 = vunpack.c.l.b16 %v73
  %v264 = vunpack.c.l.b16 %v74
  %v265 = vunpack.c.l.b16 %v75
  %v266 = vunpack.c.l.b16 %v76
  %v267 = vunpack.c.l.b16 %v77
  %v268 = vunpack.c.l.b16 %v78
  %v269 = vunpack.c.l.b16 %v79
  %v270 = vunpack.c.l.b16 %v80
  %v271 = vunpack.c.l.b16 %v81
  %v272 = vunpack.c.l.b16 %v82
  %v273 = vunpack.c.l.b16 %v83
  %v274 = vunpack.c.l.b16 %v84
  %v275 = vunpack.c.l.b16 %v85
  %v276 = vunpack.c.l.b16 %v86
  %v277 = vunpack.c.l.b16 %v87
  %v278 = vunpack.c.l.b16 %v88
  %v279 = vunpack.c.l.b16 %v89
  %v280 = vunpack.c.l.b16 %v90
  %v281 = vunpack.c.l.b16 %v91
  %v282 = vunpack.c.l.b16 %v92
  %v283 = vunpack.c.l.b16 %v93
  %v284 = vunpack.c.l.b16 %v94
  %v285 = vunpack.c.l.b16 %v95
  %v286 = vunpack.c.l.b16 %v96
  %v287 = vunpack.c.l.b16 %v97
  %v288 = vunpack.c.l.b16 %v98
  %v289 = vunpack.c.l.b16 %v99
  %v290 = vunpack.c.l.b16 %v100
  %v291 = vunpack.c.l.b16 %v101
  %v292 = vunpack.c.l.b16 %v102
  %v293 = vpack.c.b16 %v214, %v213
  %v294 = vpack.c.b16 %v216, %v215
  %v295 = vpack.c.b16 %v218, %v217
  %v296 = vpack.c.b16 %v220, %v219
  %v297 = vpack.c.b16 %v222, %v221
  %v298 = vpack.c.b16 %v224, %v223
  %v299 = vpack.c.b16 %v226, %v225
  %v300 = vpack.c.b16 %v228, %v227
  %v301 = vpack.c.b16 %v230, %v229
  %v302 = vpack.c.b16 %v232, %v231
  %v303 = vpack.c.b16 %v234, %v233
  %v304 = vpack.c.b16 %v236, %v235
  %v305 = vpack.c.b16 %v238, %v237
  %v306 = vpack.c.b16 %v240, %v239
  %v307 = vpack.c.b16 %v242, %v241
  %v308 = vpack.c.b16 %v244, %v243
  %v309 = vpack.c.b16 %v246, %v245
  %v310 = vpack.c.b16 %v248, %v247
  %v311 = vpack.c.b16 %v250, %v249
  %v312 = vpack.c.b16 %v252, %v251
  %v313 = vpack.c.b16 %v254, %v253
  %v314 = vpack.c.b16 %v256, %v255
  %v315 = vpack.c.b16 %v258, %v257
  %v316 = vpack.c.b16 %v260, %v259
  %v317 = vpack.c.b16 %v262, %v261
  %v318 = vpack.c.b16 %v264, %v263
  %v319 = vpack.c.b16 %v266, %v265
  %v320 = vpack.c.b16 %v268, %v267
  %v321 = vpack.c.b16 %v270, %v269
  %v322 = vpack.c.b16 %v272, %v271
  %v323 = vpack.c.b16 %v274, %v273
  %v324 = vpack.c.b16 %v276, %v275
  %v325 = vpack.c.b16 %v278, %v277
  %v326 = vpack.c.b16 %v280, %v279
  %v327 = vpack.c.b16 %v282, %v281
  %v328 = vpack.c.b16 %v284, %v283
  %v329 = vpack.c.b16 %v286, %v285
  %v330 = vpack.c.b16 %v288, %v287
  %v331 = vpack.c.b16 %v290, %v289
  %v332 = vpack.c.b16 %v292, %v291
  %373 = vmatpush.bf16.msra.mxu0 %v300
  %374 = vmatpush.bf16.msra.mxu0 %v299
  %375 = vmatpush.bf16.msra.mxu0 %v298
  %376 = vmatpush.bf16.msra.mxu0 %v297
  %377 = vmatpush.bf16.msra.mxu0 %v296
  %378 = vmatpush.bf16.msra.mxu0 %v295
  %379 = vmatpush.bf16.msra.mxu0 %v294
  %380 = vmatpush.bf16.msra.mxu0 %v293
  %381 = vmatmul.bf16.gmra.mxu0 %v123
  %v382 = vpop.f32.mrf.mxu0
  %v383 = vadd.f32 %v105, %v382
  %v384 = vpop.f32.mrf.mxu0
  %v385 = vadd.f32 %v105, %v384
  %386 = vdwg.mxu0
  %387 = vmatpush.bf16.msra.mxu0 %v308
  %388 = vmatpush.bf16.msra.mxu0 %v307
  %389 = vmatpush.bf16.msra.mxu0 %v306
  %390 = vmatpush.bf16.msra.mxu0 %v305
  %391 = vmatpush.bf16.msra.mxu0 %v304
  %392 = vmatpush.bf16.msra.mxu0 %v303
  %393 = vmatpush.bf16.msra.mxu0 %v302
  %394 = vmatpush.bf16.msra.mxu0 %v301
  %395 = vmatmul.bf16.gmra.mxu0 %v124
  %v396 = vpop.f32.mrf.mxu0
  %v397 = vadd.f32 %v383, %v396
  %v398 = vpop.f32.mrf.mxu0
  %v399 = vadd.f32 %v385, %v398
  %400 = vdwg.mxu0
  %401 = vmatpush.bf16.msra.mxu0 %v316
  %402 = vmatpush.bf16.msra.mxu0 %v315
  %403 = vmatpush.bf16.msra.mxu0 %v314
  %404 = vmatpush.bf16.msra.mxu0 %v313
  %405 = vmatpush.bf16.msra.mxu0 %v312
  %406 = vmatpush.bf16.msra.mxu0 %v311
  %407 = vmatpush.bf16.msra.mxu0 %v310
  %408 = vmatpush.bf16.msra.mxu0 %v309
  %409 = vmatmul.bf16.gmra.mxu0 %v125
  %v410 = vpop.f32.mrf.mxu0
  %v411 = vadd.f32 %v397, %v410
  %v412 = vpop.f32.mrf.mxu0
  %v413 = vadd.f32 %v399, %v412
  %414 = vdwg.mxu0
  %415 = vmatpush.bf16.msra.mxu0 %v324
  %416 = vmatpush.bf16.msra.mxu0 %v323
  %417 = vmatpush.bf16.msra.mxu0 %v322
  %418 = vmatpush.bf16.msra.mxu0 %v321
  %419 = vmatpush.bf16.msra.mxu0 %v320
  %420 = vmatpush.bf16.msra.mxu0 %v319
  %421 = vmatpush.bf16.msra.mxu0 %v318
  %422 = vmatpush.bf16.msra.mxu0 %v317
  %423 = vmatmul.bf16.gmra.mxu0 %v126
  %v424 = vpop.f32.mrf.mxu0
  %v425 = vadd.f32 %v411, %v424
  %v426 = vpop.f32.mrf.mxu0
  %v427 = vadd.f32 %v413, %v426
  %428 = vdwg.mxu0
  %429 = vmatpush.bf16.msra.mxu0 %v332
  %430 = vmatpush.bf16.msra.mxu0 %v331
  %431 = vmatpush.bf16.msra.mxu0 %v330
  %432 = vmatpush.bf16.msra.mxu0 %v329
  %433 = vmatpush.bf16.msra.mxu0 %v328
  %434 = vmatpush.bf16.msra.mxu0 %v327
  %435 = vmatpush.bf16.msra.mxu0 %v326
  %436 = vmatpush.bf16.msra.mxu0 %v325
  %437 = vmatmul.bf16.gmra.mxu0 %v127
  %v438 = vpop.f32.mrf.mxu0
  %v439 = vadd.f32 %v425, %v438
  %v440 = vpop.f32.mrf.mxu0
  %v441 = vadd.f32 %v427, %v440
  %442 = vdwg.mxu0
  %v443 = vld [vmem:[%s3] sm:$0xff]
  %v444 = vld [vmem:[%s3 + $0x8] sm:$0xff]
  %v445 = vadd.f32 %v439, %v443
  %v446 = vadd.f32 %v441, %v444
  %v447 = vmax.f32 %v445, 0.0
  %v448 = vmax.f32 %v446, 0.0
  %449 = vst [vmem:[%s4] sm:$0xff] %v447
  %450 = vst [vmem:[%s4 + $0x8] sm:$0xff] %v448
  // Predicated region
  $region18: #{fcn_forward.30} parent=0 // pred_check
    _
  $region19: #{fcn_forward.30} parent=0 // pred_check_branch
    %452 = sbr.rel (0) target = $region21
  $region20: #{fcn_forward.30} parent=0 // pred_region
    _
  $region21: #{fcn_forward.30} parent=0 // pred_fallthru
    _
  // Predicated region
  $region22: #{fcn_forward.30} parent=0 // pred_check
    _
  $region23: #{fcn_forward.30} parent=0 // pred_check_branch
    %454 = sbr.rel (0) target = $region25
  $region24: #{fcn_forward.30} parent=0 // pred_region
    _
  $region25: #{fcn_forward.30} parent=0 // pred_fallthru
    _

// kernel: fcn_forward.31
$region0: #{fcn_forward.31}
  #allocation0 [shape = 'u32[]', space=smem, size = 0x4, offset = 0x4, fixed_abs, tag = 'smem constant byte address 0x4 - core index']
  #allocation1 [shape = 'u32[72,128]{1,0:T(1,128)}', space=vmem, size = 0x9000, scoped, tag = 'internal scratch']
  %s0 = inlined_call_operand.vmem [shape: bf16[16,640], index: 0, kind: input, shape index: {}]
  %s1 = inlined_call_operand.vmem [shape: bf16[640,256], index: 1, kind: input, shape index: {}]
  %s2 = inlined_call_operand.vmem [shape: f32[1,256], index: 2, kind: input, shape index: {}]
  %s3 = inlined_call_operand.vmem [shape: f32[16,256], index: 3, kind: output, shape index: {}]
  %s4 = sld [smem:[#allocation0]]
  $region22: #{fcn_forward.31} parent=0
    _
  %s6 = ssub.s32 1, %s4
  %s7 = scalar_select 0, %s6, %s4
  // Predicated region
  $region2: #{fcn_forward.31} parent=0 // pred_check
    _
  $region3: #{fcn_forward.31} parent=0 // pred_check_branch
    %9 = sbr.rel (0) target = $region5
  $region4: #{fcn_forward.31} parent=0 // pred_region
    _
  $region5: #{fcn_forward.31} parent=0 // pred_fallthru
    _
  // Predicated region
  $region6: #{fcn_forward.31} parent=0 // pred_check
    _
  $region7: #{fcn_forward.31} parent=0 // pred_check_branch
    %11 = sbr.rel (0) target = $region9
  $region8: #{fcn_forward.31} parent=0 // pred_region
    _
  $region9: #{fcn_forward.31} parent=0 // pred_fallthru
    _
  // Predicated region
  $region10: #{fcn_forward.31} parent=0 // pred_check
    _
  $region11: #{fcn_forward.31} parent=0 // pred_check_branch
    %13 = sbr.rel (0) target = $region13
  $region12: #{fcn_forward.31} parent=0 // pred_region
    _
  $region13: #{fcn_forward.31} parent=0 // pred_fallthru
    _
  %v14 = vld [vmem:[%s0] sm:$0xff]
  %v15 = vld [vmem:[%s0 + $0x8] sm:$0xff]
  %v16 = vld [vmem:[%s0 + $0x10] sm:$0xf]
  %v17 = vld [vmem:[%s0 + $0x14] sm:$0xff]
  %v18 = vld [vmem:[%s0 + $0x1c] sm:$0xff]
  %v19 = vld [vmem:[%s0 + $0x24] sm:$0xf]
  %v20 = vld [vmem:[%s1] sm:$0xff]
  %v21 = vld [vmem:[%s1 + $0x8] sm:$0xff]
  %v22 = vld [vmem:[%s1 + $0x10] sm:$0xff]
  %v23 = vld [vmem:[%s1 + $0x18] sm:$0xff]
  %v24 = vld [vmem:[%s1 + $0x20] sm:$0xff]
  %v25 = vld [vmem:[%s1 + $0x28] sm:$0xff]
  %v26 = vld [vmem:[%s1 + $0x30] sm:$0xff]
  %v27 = vld [vmem:[%s1 + $0x38] sm:$0xff]
  %v28 = vld [vmem:[%s1 + $0x40] sm:$0xff]
  %v29 = vld [vmem:[%s1 + $0x48] sm:$0xff]
  %v30 = vld [vmem:[%s1 + $0x50] sm:$0xff]
  %v31 = vld [vmem:[%s1 + $0x58] sm:$0xff]
  %v32 = vld [vmem:[%s1 + $0x60] sm:$0xff]
  %v33 = vld [vmem:[%s1 + $0x68] sm:$0xff]
  %v34 = vld [vmem:[%s1 + $0x70] sm:$0xff]
  %v35 = vld [vmem:[%s1 + $0x78] sm:$0xff]
  %v36 = vld [vmem:[%s1 + $0x80] sm:$0xff]
  %v37 = vld [vmem:[%s1 + $0x88] sm:$0xff]
  %v38 = vld [vmem:[%s1 + $0x90] sm:$0xff]
  %v39 = vld [vmem:[%s1 + $0x98] sm:$0xff]
  %v40 = vld [vmem:[%s1 + $0xa0] sm:$0xff]
  %v41 = vld [vmem:[%s1 + $0xa8] sm:$0xff]
  %v42 = vld [vmem:[%s1 + $0xb0] sm:$0xff]
  %v43 = vld [vmem:[%s1 + $0xb8] sm:$0xff]
  %v44 = vld [vmem:[%s1 + $0xc0] sm:$0xff]
  %v45 = vld [vmem:[%s1 + $0xc8] sm:$0xff]
  %v46 = vld [vmem:[%s1 + $0xd0] sm:$0xff]
  %v47 = vld [vmem:[%s1 + $0xd8] sm:$0xff]
  %v48 = vld [vmem:[%s1 + $0xe0] sm:$0xff]
  %v49 = vld [vmem:[%s1 + $0xe8] sm:$0xff]
  %v50 = vld [vmem:[%s1 + $0xf0] sm:$0xff]
  %v51 = vld [vmem:[%s1 + $0xf8] sm:$0xff]
  %v52 = vld [vmem:[%s1 + $0x100] sm:$0xff]
  %v53 = vld [vmem:[%s1 + $0x108] sm:$0xff]
  %v54 = vld [vmem:[%s1 + $0x110] sm:$0xff]
  %v55 = vld [vmem:[%s1 + $0x118] sm:$0xff]
  %v56 = vld [vmem:[%s1 + $0x120] sm:$0xff]
  %v57 = vld [vmem:[%s1 + $0x128] sm:$0xff]
  %v58 = vld [vmem:[%s1 + $0x130] sm:$0xff]
  %v59 = vld [vmem:[%s1 + $0x138] sm:$0xff]
  %v60 = vld [vmem:[%s1 + $0x140] sm:$0xff]
  %v61 = vld [vmem:[%s1 + $0x148] sm:$0xff]
  %v62 = vld [vmem:[%s1 + $0x150] sm:$0xff]
  %v63 = vld [vmem:[%s1 + $0x158] sm:$0xff]
  %v64 = vld [vmem:[%s1 + $0x160] sm:$0xff]
  %v65 = vld [vmem:[%s1 + $0x168] sm:$0xff]
  %v66 = vld [vmem:[%s1 + $0x170] sm:$0xff]
  %v67 = vld [vmem:[%s1 + $0x178] sm:$0xff]
  %v68 = vld [vmem:[%s1 + $0x180] sm:$0xff]
  %v69 = vld [vmem:[%s1 + $0x188] sm:$0xff]
  %v70 = vld [vmem:[%s1 + $0x190] sm:$0xff]
  %v71 = vld [vmem:[%s1 + $0x198] sm:$0xff]
  %v72 = vld [vmem:[%s1 + $0x1a0] sm:$0xff]
  %v73 = vld [vmem:[%s1 + $0x1a8] sm:$0xff]
  %v74 = vld [vmem:[%s1 + $0x1b0] sm:$0xff]
  %v75 = vld [vmem:[%s1 + $0x1b8] sm:$0xff]
  %v76 = vld [vmem:[%s1 + $0x1c0] sm:$0xff]
  %v77 = vld [vmem:[%s1 + $0x1c8] sm:$0xff]
  %v78 = vld [vmem:[%s1 + $0x1d0] sm:$0xff]
  %v79 = vld [vmem:[%s1 + $0x1d8] sm:$0xff]
  %v80 = vld [vmem:[%s1 + $0x1e0] sm:$0xff]
  %v81 = vld [vmem:[%s1 + $0x1e8] sm:$0xff]
  %v82 = vld [vmem:[%s1 + $0x1f0] sm:$0xff]
  %v83 = vld [vmem:[%s1 + $0x1f8] sm:$0xff]
  %v84 = vld [vmem:[%s1 + $0x200] sm:$0xff]
  %v85 = vld [vmem:[%s1 + $0x208] sm:$0xff]
  %v86 = vld [vmem:[%s1 + $0x210] sm:$0xff]
  %v87 = vld [vmem:[%s1 + $0x218] sm:$0xff]
  %v88 = vld [vmem:[%s1 + $0x220] sm:$0xff]
  %v89 = vld [vmem:[%s1 + $0x228] sm:$0xff]
  %v90 = vld [vmem:[%s1 + $0x230] sm:$0xff]
  %v91 = vld [vmem:[%s1 + $0x238] sm:$0xff]
  %v92 = vld [vmem:[%s1 + $0x240] sm:$0xff]
  %v93 = vld [vmem:[%s1 + $0x248] sm:$0xff]
  %v94 = vld [vmem:[%s1 + $0x250] sm:$0xff]
  %v95 = vld [vmem:[%s1 + $0x258] sm:$0xff]
  %v96 = vld [vmem:[%s1 + $0x260] sm:$0xff]
  %v97 = vld [vmem:[%s1 + $0x268] sm:$0xff]
  %v98 = vld [vmem:[%s1 + $0x270] sm:$0xff]
  %v99 = vld [vmem:[%s1 + $0x278] sm:$0xff]
  %v100 = vld [vmem:[%s2] sm:$0x3]
  %v102 = vperm.slane %v100, 0
  %v103 = vperm.slane %v100, 1
  %v112 = vunpack.c.l.b16 %v14
  %v113 = vunpack.c.h.b16 %v14
  %v114 = vunpack.c.l.b16 %v15
  %v115 = vunpack.c.h.b16 %v15
  %v116 = vunpack.c.l.b16 %v16
  %v117 = vunpack.c.l.b16 %v17
  %v118 = vunpack.c.h.b16 %v17
  %v119 = vunpack.c.l.b16 %v18
  %v120 = vunpack.c.h.b16 %v18
  %v121 = vunpack.c.l.b16 %v19
  %v122 = vpack.c.b16 %v117, %v112
  %v123 = vpack.c.b16 %v118, %v113
  %v124 = vpack.c.b16 %v119, %v114
  %v125 = vpack.c.b16 %v120, %v115
  %v126 = vpack.c.b16 %v121, %v116
  %v212 = vunpack.c.l.b16 %v20
  %v213 = vunpack.c.h.b16 %v20
  %v214 = vunpack.c.l.b16 %v21
  %v215 = vunpack.c.h.b16 %v21
  %v216 = vunpack.c.l.b16 %v22
  %v217 = vunpack.c.h.b16 %v22
  %v218 = vunpack.c.l.b16 %v23
  %v219 = vunpack.c.h.b16 %v23
  %v220 = vunpack.c.l.b16 %v24
  %v221 = vunpack.c.h.b16 %v24
  %v222 = vunpack.c.l.b16 %v25
  %v223 = vunpack.c.h.b16 %v25
  %v224 = vunpack.c.l.b16 %v26
  %v225 = vunpack.c.h.b16 %v26
  %v226 = vunpack.c.l.b16 %v27
  %v227 = vunpack.c.h.b16 %v27
  %v228 = vunpack.c.l.b16 %v28
  %v229 = vunpack.c.h.b16 %v28
  %v230 = vunpack.c.l.b16 %v29
  %v231 = vunpack.c.h.b16 %v29
  %v232 = vunpack.c.l.b16 %v30
  %v233 = vunpack.c.h.b16 %v30
  %v234 = vunpack.c.l.b16 %v31
  %v235 = vunpack.c.h.b16 %v31
  %v236 = vunpack.c.l.b16 %v32
  %v237 = vunpack.c.h.b16 %v32
  %v238 = vunpack.c.l.b16 %v33
  %v239 = vunpack.c.h.b16 %v33
  %v240 = vunpack.c.l.b16 %v34
  %v241 = vunpack.c.h.b16 %v34
  %v242 = vunpack.c.l.b16 %v35
  %v243 = vunpack.c.h.b16 %v35
  %v244 = vunpack.c.l.b16 %v36
  %v245 = vunpack.c.h.b16 %v36
  %v246 = vunpack.c.l.b16 %v37
  %v247 = vunpack.c.h.b16 %v37
  %v248 = vunpack.c.l.b16 %v38
  %v249 = vunpack.c.h.b16 %v38
  %v250 = vunpack.c.l.b16 %v39
  %v251 = vunpack.c.h.b16 %v39
  %v252 = vunpack.c.l.b16 %v40
  %v253 = vunpack.c.h.b16 %v40
  %v254 = vunpack.c.l.b16 %v41
  %v255 = vunpack.c.h.b16 %v41
  %v256 = vunpack.c.l.b16 %v42
  %v257 = vunpack.c.h.b16 %v42
  %v258 = vunpack.c.l.b16 %v43
  %v259 = vunpack.c.h.b16 %v43
  %v260 = vunpack.c.l.b16 %v44
  %v261 = vunpack.c.h.b16 %v44
  %v262 = vunpack.c.l.b16 %v45
  %v263 = vunpack.c.h.b16 %v45
  %v264 = vunpack.c.l.b16 %v46
  %v265 = vunpack.c.h.b16 %v46
  %v266 = vunpack.c.l.b16 %v47
  %v267 = vunpack.c.h.b16 %v47
  %v268 = vunpack.c.l.b16 %v48
  %v269 = vunpack.c.h.b16 %v48
  %v270 = vunpack.c.l.b16 %v49
  %v271 = vunpack.c.h.b16 %v49
  %v272 = vunpack.c.l.b16 %v50
  %v273 = vunpack.c.h.b16 %v50
  %v274 = vunpack.c.l.b16 %v51
  %v275 = vunpack.c.h.b16 %v51
  %v276 = vunpack.c.l.b16 %v52
  %v277 = vunpack.c.h.b16 %v52
  %v278 = vunpack.c.l.b16 %v53
  %v279 = vunpack.c.h.b16 %v53
  %v280 = vunpack.c.l.b16 %v54
  %v281 = vunpack.c.h.b16 %v54
  %v282 = vunpack.c.l.b16 %v55
  %v283 = vunpack.c.h.b16 %v55
  %v284 = vunpack.c.l.b16 %v56
  %v285 = vunpack.c.h.b16 %v56
  %v286 = vunpack.c.l.b16 %v57
  %v287 = vunpack.c.h.b16 %v57
  %v288 = vunpack.c.l.b16 %v58
  %v289 = vunpack.c.h.b16 %v58
  %v290 = vunpack.c.l.b16 %v59
  %v291 = vunpack.c.h.b16 %v59
  %v292 = vunpack.c.l.b16 %v60
  %v293 = vunpack.c.h.b16 %v60
  %v294 = vunpack.c.l.b16 %v61
  %v295 = vunpack.c.h.b16 %v61
  %v296 = vunpack.c.l.b16 %v62
  %v297 = vunpack.c.h.b16 %v62
  %v298 = vunpack.c.l.b16 %v63
  %v299 = vunpack.c.h.b16 %v63
  %v300 = vunpack.c.l.b16 %v64
  %v301 = vunpack.c.h.b16 %v64
  %v302 = vunpack.c.l.b16 %v65
  %v303 = vunpack.c.h.b16 %v65
  %v304 = vunpack.c.l.b16 %v66
  %v305 = vunpack.c.h.b16 %v66
  %v306 = vunpack.c.l.b16 %v67
  %v307 = vunpack.c.h.b16 %v67
  %v308 = vunpack.c.l.b16 %v68
  %v309 = vunpack.c.h.b16 %v68
  %v310 = vunpack.c.l.b16 %v69
  %v311 = vunpack.c.h.b16 %v69
  %v312 = vunpack.c.l.b16 %v70
  %v313 = vunpack.c.h.b16 %v70
  %v314 = vunpack.c.l.b16 %v71
  %v315 = vunpack.c.h.b16 %v71
  %v316 = vunpack.c.l.b16 %v72
  %v317 = vunpack.c.h.b16 %v72
  %v318 = vunpack.c.l.b16 %v73
  %v319 = vunpack.c.h.b16 %v73
  %v320 = vunpack.c.l.b16 %v74
  %v321 = vunpack.c.h.b16 %v74
  %v322 = vunpack.c.l.b16 %v75
  %v323 = vunpack.c.h.b16 %v75
  %v324 = vunpack.c.l.b16 %v76
  %v325 = vunpack.c.h.b16 %v76
  %v326 = vunpack.c.l.b16 %v77
  %v327 = vunpack.c.h.b16 %v77
  %v328 = vunpack.c.l.b16 %v78
  %v329 = vunpack.c.h.b16 %v78
  %v330 = vunpack.c.l.b16 %v79
  %v331 = vunpack.c.h.b16 %v79
  %v332 = vunpack.c.l.b16 %v80
  %v333 = vunpack.c.h.b16 %v80
  %v334 = vunpack.c.l.b16 %v81
  %v335 = vunpack.c.h.b16 %v81
  %v336 = vunpack.c.l.b16 %v82
  %v337 = vunpack.c.h.b16 %v82
  %v338 = vunpack.c.l.b16 %v83
  %v339 = vunpack.c.h.b16 %v83
  %v340 = vunpack.c.l.b16 %v84
  %v341 = vunpack.c.h.b16 %v84
  %v342 = vunpack.c.l.b16 %v85
  %v343 = vunpack.c.h.b16 %v85
  %v344 = vunpack.c.l.b16 %v86
  %v345 = vunpack.c.h.b16 %v86
  %v346 = vunpack.c.l.b16 %v87
  %v347 = vunpack.c.h.b16 %v87
  %v348 = vunpack.c.l.b16 %v88
  %v349 = vunpack.c.h.b16 %v88
  %v350 = vunpack.c.l.b16 %v89
  %v351 = vunpack.c.h.b16 %v89
  %v352 = vunpack.c.l.b16 %v90
  %v353 = vunpack.c.h.b16 %v90
  %v354 = vunpack.c.l.b16 %v91
  %v355 = vunpack.c.h.b16 %v91
  %v356 = vunpack.c.l.b16 %v92
  %v357 = vunpack.c.h.b16 %v92
  %v358 = vunpack.c.l.b16 %v93
  %v359 = vunpack.c.h.b16 %v93
  %v360 = vunpack.c.l.b16 %v94
  %v361 = vunpack.c.h.b16 %v94
  %v362 = vunpack.c.l.b16 %v95
  %v363 = vunpack.c.h.b16 %v95
  %v364 = vunpack.c.l.b16 %v96
  %v365 = vunpack.c.h.b16 %v96
  %v366 = vunpack.c.l.b16 %v97
  %v367 = vunpack.c.h.b16 %v97
  %v368 = vunpack.c.l.b16 %v98
  %v369 = vunpack.c.h.b16 %v98
  %v370 = vunpack.c.l.b16 %v99
  %v371 = vunpack.c.h.b16 %v99
  %v372 = vpack.c.b16 %v214, %v212
  %v373 = vpack.c.b16 %v215, %v213
  %v374 = vpack.c.b16 %v218, %v216
  %v375 = vpack.c.b16 %v219, %v217
  %v376 = vpack.c.b16 %v222, %v220
  %v377 = vpack.c.b16 %v223, %v221
  %v378 = vpack.c.b16 %v226, %v224
  %v379 = vpack.c.b16 %v227, %v225
  %v380 = vpack.c.b16 %v230, %v228
  %v381 = vpack.c.b16 %v231, %v229
  %v382 = vpack.c.b16 %v234, %v232
  %v383 = vpack.c.b16 %v235, %v233
  %v384 = vpack.c.b16 %v238, %v236
  %v385 = vpack.c.b16 %v239, %v237
  %v386 = vpack.c.b16 %v242, %v240
  %v387 = vpack.c.b16 %v243, %v241
  %v388 = vpack.c.b16 %v246, %v244
  %v389 = vpack.c.b16 %v247, %v245
  %v390 = vpack.c.b16 %v250, %v248
  %v391 = vpack.c.b16 %v251, %v249
  %v392 = vpack.c.b16 %v254, %v252
  %v393 = vpack.c.b16 %v255, %v253
  %v394 = vpack.c.b16 %v258, %v256
  %v395 = vpack.c.b16 %v259, %v257
  %v396 = vpack.c.b16 %v262, %v260
  %v397 = vpack.c.b16 %v263, %v261
  %v398 = vpack.c.b16 %v266, %v264
  %v399 = vpack.c.b16 %v267, %v265
  %v400 = vpack.c.b16 %v270, %v268
  %v401 = vpack.c.b16 %v271, %v269
  %v402 = vpack.c.b16 %v274, %v272
  %v403 = vpack.c.b16 %v275, %v273
  %v404 = vpack.c.b16 %v278, %v276
  %v405 = vpack.c.b16 %v279, %v277
  %v406 = vpack.c.b16 %v282, %v280
  %v407 = vpack.c.b16 %v283, %v281
  %v408 = vpack.c.b16 %v286, %v284
  %v409 = vpack.c.b16 %v287, %v285
  %v410 = vpack.c.b16 %v290, %v288
  %v411 = vpack.c.b16 %v291, %v289
  %v412 = vpack.c.b16 %v294, %v292
  %v413 = vpack.c.b16 %v295, %v293
  %v414 = vpack.c.b16 %v298, %v296
  %v415 = vpack.c.b16 %v299, %v297
  %v416 = vpack.c.b16 %v302, %v300
  %v417 = vpack.c.b16 %v303, %v301
  %v418 = vpack.c.b16 %v306, %v304
  %v419 = vpack.c.b16 %v307, %v305
  %v420 = vpack.c.b16 %v310, %v308
  %v421 = vpack.c.b16 %v311, %v309
  %v422 = vpack.c.b16 %v314, %v312
  %v423 = vpack.c.b16 %v315, %v313
  %v424 = vpack.c.b16 %v318, %v316
  %v425 = vpack.c.b16 %v319, %v317
  %v426 = vpack.c.b16 %v322, %v320
  %v427 = vpack.c.b16 %v323, %v321
  %v428 = vpack.c.b16 %v326, %v324
  %v429 = vpack.c.b16 %v327, %v325
  %v430 = vpack.c.b16 %v330, %v328
  %v431 = vpack.c.b16 %v331, %v329
  %v432 = vpack.c.b16 %v334, %v332
  %v433 = vpack.c.b16 %v335, %v333
  %v434 = vpack.c.b16 %v338, %v336
  %v435 = vpack.c.b16 %v339, %v337
  %v436 = vpack.c.b16 %v342, %v340
  %v437 = vpack.c.b16 %v343, %v341
  %v438 = vpack.c.b16 %v346, %v344
  %v439 = vpack.c.b16 %v347, %v345
  %v440 = vpack.c.b16 %v350, %v348
  %v441 = vpack.c.b16 %v351, %v349
  %v442 = vpack.c.b16 %v354, %v352
  %v443 = vpack.c.b16 %v355, %v353
  %v444 = vpack.c.b16 %v358, %v356
  %v445 = vpack.c.b16 %v359, %v357
  %v446 = vpack.c.b16 %v362, %v360
  %v447 = vpack.c.b16 %v363, %v361
  %v448 = vpack.c.b16 %v366, %v364
  %v449 = vpack.c.b16 %v367, %v365
  %v450 = vpack.c.b16 %v370, %v368
  %v451 = vpack.c.b16 %v371, %v369
  %532 = vmatpush.bf16.msra.mxu0 %v386
  %533 = vmatpush.bf16.msra.mxu0 %v384
  %534 = vmatpush.bf16.msra.mxu0 %v382
  %535 = vmatpush.bf16.msra.mxu0 %v380
  %536 = vmatpush.bf16.msra.mxu0 %v378
  %537 = vmatpush.bf16.msra.mxu0 %v376
  %538 = vmatpush.bf16.msra.mxu0 %v374
  %539 = vmatpush.bf16.msra.mxu0 %v372
  %540 = vmatmul.bf16.gmra.mxu0 %v122
  %v541 = vpop.f32.mrf.mxu0
  %v542 = vadd.f32 %v102, %v541
  %v543 = vpop.f32.mrf.mxu0
  %v544 = vadd.f32 %v102, %v543
  %545 = vdwg.mxu0
  %546 = vmatpush.bf16.msra.mxu0 %v402
  %547 = vmatpush.bf16.msra.mxu0 %v400
  %548 = vmatpush.bf16.msra.mxu0 %v398
  %549 = vmatpush.bf16.msra.mxu0 %v396
  %550 = vmatpush.bf16.msra.mxu0 %v394
  %551 = vmatpush.bf16.msra.mxu0 %v392
  %552 = vmatpush.bf16.msra.mxu0 %v390
  %553 = vmatpush.bf16.msra.mxu0 %v388
  %554 = vmatmul.bf16.gmra.mxu0 %v123
  %v555 = vpop.f32.mrf.mxu0
  %v556 = vadd.f32 %v542, %v555
  %v557 = vpop.f32.mrf.mxu0
  %v558 = vadd.f32 %v544, %v557
  %559 = vdwg.mxu0
  %560 = vmatpush.bf16.msra.mxu0 %v418
  %561 = vmatpush.bf16.msra.mxu0 %v416
  %562 = vmatpush.bf16.msra.mxu0 %v414
  %563 = vmatpush.bf16.msra.mxu0 %v412
  %564 = vmatpush.bf16.msra.mxu0 %v410
  %565 = vmatpush.bf16.msra.mxu0 %v408
  %566 = vmatpush.bf16.msra.mxu0 %v406
  %567 = vmatpush.bf16.msra.mxu0 %v404
  %568 = vmatmul.bf16.gmra.mxu0 %v124
  %v569 = vpop.f32.mrf.mxu0
  %v570 = vadd.f32 %v556, %v569
  %v571 = vpop.f32.mrf.mxu0
  %v572 = vadd.f32 %v558, %v571
  %573 = vdwg.mxu0
  %574 = vmatpush.bf16.msra.mxu0 %v434
  %575 = vmatpush.bf16.msra.mxu0 %v432
  %576 = vmatpush.bf16.msra.mxu0 %v430
  %577 = vmatpush.bf16.msra.mxu0 %v428
  %578 = vmatpush.bf16.msra.mxu0 %v426
  %579 = vmatpush.bf16.msra.mxu0 %v424
  %580 = vmatpush.bf16.msra.mxu0 %v422
  %581 = vmatpush.bf16.msra.mxu0 %v420
  %582 = vmatmul.bf16.gmra.mxu0 %v125
  %v583 = vpop.f32.mrf.mxu0
  %v584 = vadd.f32 %v570, %v583
  %v585 = vpop.f32.mrf.mxu0
  %v586 = vadd.f32 %v572, %v585
  %587 = vdwg.mxu0
  %588 = vmatpush.bf16.msra.mxu0 %v450
  %589 = vmatpush.bf16.msra.mxu0 %v448
  %590 = vmatpush.bf16.msra.mxu0 %v446
  %591 = vmatpush.bf16.msra.mxu0 %v444
  %592 = vmatpush.bf16.msra.mxu0 %v442
  %593 = vmatpush.bf16.msra.mxu0 %v440
  %594 = vmatpush.bf16.msra.mxu0 %v438
  %595 = vmatpush.bf16.msra.mxu0 %v436
  %596 = vmatmul.bf16.gmra.mxu0 %v126
  %v597 = vpop.f32.mrf.mxu0
  %v598 = vadd.f32 %v584, %v597
  %v599 = vpop.f32.mrf.mxu0
  %v600 = vadd.f32 %v586, %v599
  %601 = vdwg.mxu0
  %602 = vmatpush.bf16.msra.mxu0 %v387
  %603 = vmatpush.bf16.msra.mxu0 %v385
  %604 = vmatpush.bf16.msra.mxu0 %v383
  %605 = vmatpush.bf16.msra.mxu0 %v381
  %606 = vmatpush.bf16.msra.mxu0 %v379
  %607 = vmatpush.bf16.msra.mxu0 %v377
  %608 = vmatpush.bf16.msra.mxu0 %v375
  %609 = vmatpush.bf16.msra.mxu0 %v373
  %610 = vmatmul.bf16.gmra.mxu0 %v122
  %v611 = vpop.f32.mrf.mxu0
  %v612 = vadd.f32 %v103, %v611
  %v613 = vpop.f32.mrf.mxu0
  %v614 = vadd.f32 %v103, %v613
  %615 = vdwg.mxu0
  %616 = vmatpush.bf16.msra.mxu0 %v403
  %617 = vmatpush.bf16.msra.mxu0 %v401
  %618 = vmatpush.bf16.msra.mxu0 %v399
  %619 = vmatpush.bf16.msra.mxu0 %v397
  %620 = vmatpush.bf16.msra.mxu0 %v395
  %621 = vmatpush.bf16.msra.mxu0 %v393
  %622 = vmatpush.bf16.msra.mxu0 %v391
  %623 = vmatpush.bf16.msra.mxu0 %v389
  %624 = vmatmul.bf16.gmra.mxu0 %v123
  %v625 = vpop.f32.mrf.mxu0
  %v626 = vadd.f32 %v612, %v625
  %v627 = vpop.f32.mrf.mxu0
  %v628 = vadd.f32 %v614, %v627
  %629 = vdwg.mxu0
  %630 = vmatpush.bf16.msra.mxu0 %v419
  %631 = vmatpush.bf16.msra.mxu0 %v417
  %632 = vmatpush.bf16.msra.mxu0 %v415
  %633 = vmatpush.bf16.msra.mxu0 %v413
  %634 = vmatpush.bf16.msra.mxu0 %v411
  %635 = vmatpush.bf16.msra.mxu0 %v409
  %636 = vmatpush.bf16.msra.mxu0 %v407
  %637 = vmatpush.bf16.msra.mxu0 %v405
  %638 = vmatmul.bf16.gmra.mxu0 %v124
  %v639 = vpop.f32.mrf.mxu0
  %v640 = vadd.f32 %v626, %v639
  %v641 = vpop.f32.mrf.mxu0
  %v642 = vadd.f32 %v628, %v641
  %643 = vdwg.mxu0
  %644 = vmatpush.bf16.msra.mxu0 %v435
  %645 = vmatpush.bf16.msra.mxu0 %v433
  %646 = vmatpush.bf16.msra.mxu0 %v431
  %647 = vmatpush.bf16.msra.mxu0 %v429
  %648 = vmatpush.bf16.msra.mxu0 %v427
  %649 = vmatpush.bf16.msra.mxu0 %v425
  %650 = vmatpush.bf16.msra.mxu0 %v423
  %651 = vmatpush.bf16.msra.mxu0 %v421
  %652 = vmatmul.bf16.gmra.mxu0 %v125
  %v653 = vpop.f32.mrf.mxu0
  %v654 = vadd.f32 %v640, %v653
  %v655 = vpop.f32.mrf.mxu0
  %v656 = vadd.f32 %v642, %v655
  %657 = vdwg.mxu0
  %658 = vmatpush.bf16.msra.mxu0 %v451
  %659 = vmatpush.bf16.msra.mxu0 %v449
  %660 = vmatpush.bf16.msra.mxu0 %v447
  %661 = vmatpush.bf16.msra.mxu0 %v445
  %662 = vmatpush.bf16.msra.mxu0 %v443
  %663 = vmatpush.bf16.msra.mxu0 %v441
  %664 = vmatpush.bf16.msra.mxu0 %v439
  %665 = vmatpush.bf16.msra.mxu0 %v437
  %666 = vmatmul.bf16.gmra.mxu0 %v126
  %v667 = vpop.f32.mrf.mxu0
  %v668 = vadd.f32 %v654, %v667
  %v669 = vpop.f32.mrf.mxu0
  %v670 = vadd.f32 %v656, %v669
  %671 = vdwg.mxu0
  %v672 = vmax.f32 %v598, 0.0
  %v673 = vmax.f32 %v668, 0.0
  %v674 = vmax.f32 %v600, 0.0
  %v675 = vmax.f32 %v670, 0.0
  %676 = vst [vmem:[%s3] sm:$0xff] %v672
  %677 = vst [vmem:[%s3 + $0x8] sm:$0xff] %v673
  %678 = vst [vmem:[%s3 + $0x10] sm:$0xff] %v674
  %679 = vst [vmem:[%s3 + $0x18] sm:$0xff] %v675
  // Predicated region
  $region14: #{fcn_forward.31} parent=0 // pred_check
    _
  $region15: #{fcn_forward.31} parent=0 // pred_check_branch
    %681 = sbr.rel (0) target = $region17
  $region16: #{fcn_forward.31} parent=0 // pred_region
    _
  $region17: #{fcn_forward.31} parent=0 // pred_fallthru
    _
  // Predicated region
  $region18: #{fcn_forward.31} parent=0 // pred_check
    _
  $region19: #{fcn_forward.31} parent=0 // pred_check_branch
    %683 = sbr.rel (0) target = $region21
  $region20: #{fcn_forward.31} parent=0 // pred_region
    _
  $region21: #{fcn_forward.31} parent=0 // pred_fallthru
    _

// kernel: fcn_forward.34
$region0: #{fcn_forward.34}
  #allocation0 [shape = 'u32[]', space=smem, size = 0x4, offset = 0x4, fixed_abs, tag = 'smem constant byte address 0x4 - core index']
  #allocation1 [shape = 'u32[72,128]{1,0:T(1,128)}', space=vmem, size = 0x9000, scoped, tag = 'internal scratch']
  %s0 = inlined_call_operand.vmem [shape: bf16[16,256], index: 0, kind: input, shape index: {}]
  %s1 = inlined_call_operand.vmem [shape: bf16[256,128], index: 1, kind: input, shape index: {}]
  %s2 = inlined_call_operand.vmem [shape: f32[1,128], index: 2, kind: input, shape index: {}]
  %s3 = inlined_call_operand.vmem [shape: f32[16,128], index: 3, kind: input, shape index: {}]
  %s4 = inlined_call_operand.vmem [shape: f32[16,128], index: 4, kind: output, shape index: {}]
  %s5 = sld [smem:[#allocation0]]
  $region26: #{fcn_forward.34} parent=0
    _
  %s7 = ssub.s32 1, %s5
  %s8 = scalar_select 0, %s7, %s5
  // Predicated region
  $region2: #{fcn_forward.34} parent=0 // pred_check
    _
  $region3: #{fcn_forward.34} parent=0 // pred_check_branch
    %10 = sbr.rel (0) target = $region5
  $region4: #{fcn_forward.34} parent=0 // pred_region
    _
  $region5: #{fcn_forward.34} parent=0 // pred_fallthru
    _
  // Predicated region
  $region6: #{fcn_forward.34} parent=0 // pred_check
    _
  $region7: #{fcn_forward.34} parent=0 // pred_check_branch
    %12 = sbr.rel (0) target = $region9
  $region8: #{fcn_forward.34} parent=0 // pred_region
    _
  $region9: #{fcn_forward.34} parent=0 // pred_fallthru
    _
  // Predicated region
  $region10: #{fcn_forward.34} parent=0 // pred_check
    _
  $region11: #{fcn_forward.34} parent=0 // pred_check_branch
    %14 = sbr.rel (0) target = $region13
  $region12: #{fcn_forward.34} parent=0 // pred_region
    _
  $region13: #{fcn_forward.34} parent=0 // pred_fallthru
    _
  // Predicated region
  $region14: #{fcn_forward.34} parent=0 // pred_check
    _
  $region15: #{fcn_forward.34} parent=0 // pred_check_branch
    %16 = sbr.rel (0) target = $region17
  $region16: #{fcn_forward.34} parent=0 // pred_region
    _
  $region17: #{fcn_forward.34} parent=0 // pred_fallthru
    _
  %v17 = vld [vmem:[%s0] sm:$0xff]
  %v18 = vld [vmem:[%s0 + $0x8] sm:$0xff]
  %v19 = vld [vmem:[%s1] sm:$0xf]
  %v20 = vld [vmem:[%s1 + $0x4] sm:$0xf]
  %v21 = vld [vmem:[%s1 + $0x8] sm:$0xf]
  %v22 = vld [vmem:[%s1 + $0xc] sm:$0xf]
  %v23 = vld [vmem:[%s1 + $0x10] sm:$0xf]
  %v24 = vld [vmem:[%s1 + $0x14] sm:$0xf]
  %v25 = vld [vmem:[%s1 + $0x18] sm:$0xf]
  %v26 = vld [vmem:[%s1 + $0x1c] sm:$0xf]
  %v27 = vld [vmem:[%s1 + $0x20] sm:$0xf]
  %v28 = vld [vmem:[%s1 + $0x24] sm:$0xf]
  %v29 = vld [vmem:[%s1 + $0x28] sm:$0xf]
  %v30 = vld [vmem:[%s1 + $0x2c] sm:$0xf]
  %v31 = vld [vmem:[%s1 + $0x30] sm:$0xf]
  %v32 = vld [vmem:[%s1 + $0x34] sm:$0xf]
  %v33 = vld [vmem:[%s1 + $0x38] sm:$0xf]
  %v34 = vld [vmem:[%s1 + $0x3c] sm:$0xf]
  %v35 = vld [vmem:[%s1 + $0x40] sm:$0xf]
  %v36 = vld [vmem:[%s1 + $0x44] sm:$0xf]
  %v37 = vld [vmem:[%s1 + $0x48] sm:$0xf]
  %v38 = vld [vmem:[%s1 + $0x4c] sm:$0xf]
  %v39 = vld [vmem:[%s1 + $0x50] sm:$0xf]
  %v40 = vld [vmem:[%s1 + $0x54] sm:$0xf]
  %v41 = vld [vmem:[%s1 + $0x58] sm:$0xf]
  %v42 = vld [vmem:[%s1 + $0x5c] sm:$0xf]
  %v43 = vld [vmem:[%s1 + $0x60] sm:$0xf]
  %v44 = vld [vmem:[%s1 + $0x64] sm:$0xf]
  %v45 = vld [vmem:[%s1 + $0x68] sm:$0xf]
  %v46 = vld [vmem:[%s1 + $0x6c] sm:$0xf]
  %v47 = vld [vmem:[%s1 + $0x70] sm:$0xf]
  %v48 = vld [vmem:[%s1 + $0x74] sm:$0xf]
  %v49 = vld [vmem:[%s1 + $0x78] sm:$0xf]
  %v50 = vld [vmem:[%s1 + $0x7c] sm:$0xf]
  %v51 = vld [vmem:[%s2] sm:$0x1]
  %v53 = vperm.slane %v51, 0
  %v57 = vunpack.c.l.b16 %v17
  %v58 = vunpack.c.h.b16 %v17
  %v59 = vunpack.c.l.b16 %v18
  %v60 = vunpack.c.h.b16 %v18
  %v61 = vpack.c.b16 %v59, %v57
  %v62 = vpack.c.b16 %v60, %v58
  %v97 = vunpack.c.l.b16 %v19
  %v98 = vunpack.c.l.b16 %v20
  %v99 = vunpack.c.l.b16 %v21
  %v100 = vunpack.c.l.b16 %v22
  %v101 = vunpack.c.l.b16 %v23
  %v102 = vunpack.c.l.b16 %v24
  %v103 = vunpack.c.l.b16 %v25
  %v104 = vunpack.c.l.b16 %v26
  %v105 = vunpack.c.l.b16 %v27
  %v106 = vunpack.c.l.b16 %v28
  %v107 = vunpack.c.l.b16 %v29
  %v108 = vunpack.c.l.b16 %v30
  %v109 = vunpack.c.l.b16 %v31
  %v110 = vunpack.c.l.b16 %v32
  %v111 = vunpack.c.l.b16 %v33
  %v112 = vunpack.c.l.b16 %v34
  %v113 = vunpack.c.l.b16 %v35
  %v114 = vunpack.c.l.b16 %v36
  %v115 = vunpack.c.l.b16 %v37
  %v116 = vunpack.c.l.b16 %v38
  %v117 = vunpack.c.l.b16 %v39
  %v118 = vunpack.c.l.b16 %v40
  %v119 = vunpack.c.l.b16 %v41
  %v120 = vunpack.c.l.b16 %v42
  %v121 = vunpack.c.l.b16 %v43
  %v122 = vunpack.c.l.b16 %v44
  %v123 = vunpack.c.l.b16 %v45
  %v124 = vunpack.c.l.b16 %v46
  %v125 = vunpack.c.l.b16 %v47
  %v126 = vunpack.c.l.b16 %v48
  %v127 = vunpack.c.l.b16 %v49
  %v128 = vunpack.c.l.b16 %v50
  %v129 = vpack.c.b16 %v98, %v97
  %v130 = vpack.c.b16 %v100, %v99
  %v131 = vpack.c.b16 %v102, %v101
  %v132 = vpack.c.b16 %v104, %v103
  %v133 = vpack.c.b16 %v106, %v105
  %v134 = vpack.c.b16 %v108, %v107
  %v135 = vpack.c.b16 %v110, %v109
  %v136 = vpack.c.b16 %v112, %v111
  %v137 = vpack.c.b16 %v114, %v113
  %v138 = vpack.c.b16 %v116, %v115
  %v139 = vpack.c.b16 %v118, %v117
  %v140 = vpack.c.b16 %v120, %v119
  %v141 = vpack.c.b16 %v122, %v121
  %v142 = vpack.c.b16 %v124, %v123
  %v143 = vpack.c.b16 %v126, %v125
  %v144 = vpack.c.b16 %v128, %v127
  %161 = vmatpush.bf16.msra.mxu0 %v136
  %162 = vmatpush.bf16.msra.mxu0 %v135
  %163 = vmatpush.bf16.msra.mxu0 %v134
  %164 = vmatpush.bf16.msra.mxu0 %v133
  %165 = vmatpush.bf16.msra.mxu0 %v132
  %166 = vmatpush.bf16.msra.mxu0 %v131
  %167 = vmatpush.bf16.msra.mxu0 %v130
  %168 = vmatpush.bf16.msra.mxu0 %v129
  %169 = vmatmul.bf16.gmra.mxu0 %v61
  %v170 = vpop.f32.mrf.mxu0
  %v171 = vadd.f32 %v53, %v170
  %v172 = vpop.f32.mrf.mxu0
  %v173 = vadd.f32 %v53, %v172
  %174 = vdwg.mxu0
  %175 = vmatpush.bf16.msra.mxu0 %v144
  %176 = vmatpush.bf16.msra.mxu0 %v143
  %177 = vmatpush.bf16.msra.mxu0 %v142
  %178 = vmatpush.bf16.msra.mxu0 %v141
  %179 = vmatpush.bf16.msra.mxu0 %v140
  %180 = vmatpush.bf16.msra.mxu0 %v139
  %181 = vmatpush.bf16.msra.mxu0 %v138
  %182 = vmatpush.bf16.msra.mxu0 %v137
  %183 = vmatmul.bf16.gmra.mxu0 %v62
  %v184 = vpop.f32.mrf.mxu0
  %v185 = vadd.f32 %v171, %v184
  %v186 = vpop.f32.mrf.mxu0
  %v187 = vadd.f32 %v173, %v186
  %188 = vdwg.mxu0
  %v189 = vld [vmem:[%s3] sm:$0xff]
  %v190 = vld [vmem:[%s3 + $0x8] sm:$0xff]
  %v191 = vadd.f32 %v185, %v189
  %v192 = vadd.f32 %v187, %v190
  %193 = vst [vmem:[%s4] sm:$0xff] %v191
  %194 = vst [vmem:[%s4 + $0x8] sm:$0xff] %v192
  // Predicated region
  $region18: #{fcn_forward.34} parent=0 // pred_check
    _
  $region19: #{fcn_forward.34} parent=0 // pred_check_branch
    %196 = sbr.rel (0) target = $region21
  $region20: #{fcn_forward.34} parent=0 // pred_region
    _
  $region21: #{fcn_forward.34} parent=0 // pred_fallthru
    _
  // Predicated region
  $region22: #{fcn_forward.34} parent=0 // pred_check
    _
  $region23: #{fcn_forward.34} parent=0 // pred_check_branch
    %198 = sbr.rel (0) target = $region25
  $region24: #{fcn_forward.34} parent=0 // pred_region
    _
  $region25: #{fcn_forward.34} parent=0 // pred_fallthru
    _

// kernel: fcn_forward.32
$region0: #{fcn_forward.32}
  #allocation0 [shape = 'u32[]', space=smem, size = 0x4, offset = 0x4, fixed_abs, tag = 'smem constant byte address 0x4 - core index']
  #allocation1 [shape = 'u32[72,128]{1,0:T(1,128)}', space=vmem, size = 0x9000, scoped, tag = 'internal scratch']
  %s0 = inlined_call_operand.vmem [shape: bf16[16,2304], index: 0, kind: input, shape index: {}]
  %s1 = inlined_call_operand.vmem [shape: bf16[2304,256], index: 1, kind: input, shape index: {}]
  %s2 = inlined_call_operand.vmem [shape: f32[1,256], index: 2, kind: input, shape index: {}]
  %s3 = inlined_call_operand.vmem [shape: f32[16,256], index: 3, kind: output, shape index: {}]
  %s4 = sld [smem:[#allocation0]]
  $region22: #{fcn_forward.32} parent=0
    _
  %s6 = ssub.s32 1, %s4
  %s7 = scalar_select 0, %s6, %s4
  // Predicated region
  $region2: #{fcn_forward.32} parent=0 // pred_check
    _
  $region3: #{fcn_forward.32} parent=0 // pred_check_branch
    %9 = sbr.rel (0) target = $region5
  $region4: #{fcn_forward.32} parent=0 // pred_region
    _
  $region5: #{fcn_forward.32} parent=0 // pred_fallthru
    _
  // Predicated region
  $region6: #{fcn_forward.32} parent=0 // pred_check
    _
  $region7: #{fcn_forward.32} parent=0 // pred_check_branch
    %11 = sbr.rel (0) target = $region9
  $region8: #{fcn_forward.32} parent=0 // pred_region
    _
  $region9: #{fcn_forward.32} parent=0 // pred_fallthru
    _
  // Predicated region
  $region10: #{fcn_forward.32} parent=0 // pred_check
    _
  $region11: #{fcn_forward.32} parent=0 // pred_check_branch
    %13 = sbr.rel (0) target = $region13
  $region12: #{fcn_forward.32} parent=0 // pred_region
    _
  $region13: #{fcn_forward.32} parent=0 // pred_fallthru
    _
  %v14 = vld [vmem:[%s0] sm:$0xff]
  %v15 = vld [vmem:[%s0 + $0x8] sm:$0xff]
  %v16 = vld [vmem:[%s0 + $0x10] sm:$0xff]
  %v17 = vld [vmem:[%s0 + $0x18] sm:$0xff]
  %v18 = vld [vmem:[%s0 + $0x20] sm:$0xff]
  %v19 = vld [vmem:[%s0 + $0x28] sm:$0xff]
  %v20 = vld [vmem:[%s0 + $0x30] sm:$0xff]
  %v21 = vld [vmem:[%s0 + $0x38] sm:$0xff]
  %v22 = vld [vmem:[%s0 + $0x40] sm:$0xff]
  %v23 = vld [vmem:[%s0 + $0x48] sm:$0xff]
  %v24 = vld [vmem:[%s0 + $0x50] sm:$0xff]
  %v25 = vld [vmem:[%s0 + $0x58] sm:$0xff]
  %v26 = vld [vmem:[%s0 + $0x60] sm:$0xff]
  %v27 = vld [vmem:[%s0 + $0x68] sm:$0xff]
  %v28 = vld [vmem:[%s0 + $0x70] sm:$0xff]
  %v29 = vld [vmem:[%s0 + $0x78] sm:$0xff]
  %v30 = vld [vmem:[%s0 + $0x80] sm:$0xff]
  %v31 = vld [vmem:[%s0 + $0x88] sm:$0xff]
  %v32 = vld [vmem:[%s1] sm:$0xff]
  %v33 = vld [vmem:[%s1 + $0x8] sm:$0xff]
  %v34 = vld [vmem:[%s1 + $0x10] sm:$0xff]
  %v35 = vld [vmem:[%s1 + $0x18] sm:$0xff]
  %v36 = vld [vmem:[%s1 + $0x20] sm:$0xff]
  %v37 = vld [vmem:[%s1 + $0x28] sm:$0xff]
  %v38 = vld [vmem:[%s1 + $0x30] sm:$0xff]
  %v39 = vld [vmem:[%s1 + $0x38] sm:$0xff]
  %v40 = vld [vmem:[%s1 + $0x40] sm:$0xff]
  %v41 = vld [vmem:[%s1 + $0x48] sm:$0xff]
  %v42 = vld [vmem:[%s1 + $0x50] sm:$0xff]
  %v43 = vld [vmem:[%s1 + $0x58] sm:$0xff]
  %v44 = vld [vmem:[%s1 + $0x60] sm:$0xff]
  %v45 = vld [vmem:[%s1 + $0x68] sm:$0xff]
  %v46 = vld [vmem:[%s1 + $0x70] sm:$0xff]
  %v47 = vld [vmem:[%s1 + $0x78] sm:$0xff]
  %v48 = vld [vmem:[%s1 + $0x80] sm:$0xff]
  %v49 = vld [vmem:[%s1 + $0x88] sm:$0xff]
  %v50 = vld [vmem:[%s1 + $0x90] sm:$0xff]
  %v51 = vld [vmem:[%s1 + $0x98] sm:$0xff]
  %v52 = vld [vmem:[%s1 + $0xa0] sm:$0xff]
  %v53 = vld [vmem:[%s1 + $0xa8] sm:$0xff]
  %v54 = vld [vmem:[%s1 + $0xb0] sm:$0xff]
  %v55 = vld [vmem:[%s1 + $0xb8] sm:$0xff]
  %v56 = vld [vmem:[%s1 + $0xc0] sm:$0xff]
  %v57 = vld [vmem:[%s1 + $0xc8] sm:$0xff]
  %v58 = vld [vmem:[%s1 + $0xd0] sm:$0xff]
  %v59 = vld [vmem:[%s1 + $0xd8] sm:$0xff]
  %v60 = vld [vmem:[%s1 + $0xe0] sm:$0xff]
  %v61 = vld [vmem:[%s1 + $0xe8] sm:$0xff]
  %v62 = vld [vmem:[%s1 + $0xf0] sm:$0xff]
  %v63 = vld [vmem:[%s1 + $0xf8] sm:$0xff]
  %v64 = vld [vmem:[%s1 + $0x100] sm:$0xff]
  %v65 = vld [vmem:[%s1 + $0x108] sm:$0xff]
  %v66 = vld [vmem:[%s1 + $0x110] sm:$0xff]
  %v67 = vld [vmem:[%s1 + $0x118] sm:$0xff]
  %v68 = vld [vmem:[%s1 + $0x120] sm:$0xff]
  %v69 = vld [vmem:[%s1 + $0x128] sm:$0xff]
  %v70 = vld [vmem:[%s1 + $0x130] sm:$0xff]
  %v71 = vld [vmem:[%s1 + $0x138] sm:$0xff]
  %v72 = vld [vmem:[%s1 + $0x140] sm:$0xff]
  %v73 = vld [vmem:[%s1 + $0x148] sm:$0xff]
  %v74 = vld [vmem:[%s1 + $0x150] sm:$0xff]
  %v75 = vld [vmem:[%s1 + $0x158] sm:$0xff]
  %v76 = vld [vmem:[%s1 + $0x160] sm:$0xff]
  %v77 = vld [vmem:[%s1 + $0x168] sm:$0xff]
  %v78 = vld [vmem:[%s1 + $0x170] sm:$0xff]
  %v79 = vld [vmem:[%s1 + $0x178] sm:$0xff]
  %v80 = vld [vmem:[%s1 + $0x180] sm:$0xff]
  %v81 = vld [vmem:[%s1 + $0x188] sm:$0xff]
  %v82 = vld [vmem:[%s1 + $0x190] sm:$0xff]
  %v83 = vld [vmem:[%s1 + $0x198] sm:$0xff]
  %v84 = vld [vmem:[%s1 + $0x1a0] sm:$0xff]
  %v85 = vld [vmem:[%s1 + $0x1a8] sm:$0xff]
  %v86 = vld [vmem:[%s1 + $0x1b0] sm:$0xff]
  %v87 = vld [vmem:[%s1 + $0x1b8] sm:$0xff]
  %v88 = vld [vmem:[%s1 + $0x1c0] sm:$0xff]
  %v89 = vld [vmem:[%s1 + $0x1c8] sm:$0xff]
  %v90 = vld [vmem:[%s1 + $0x1d0] sm:$0xff]
  %v91 = vld [vmem:[%s1 + $0x1d8] sm:$0xff]
  %v92 = vld [vmem:[%s1 + $0x1e0] sm:$0xff]
  %v93 = vld [vmem:[%s1 + $0x1e8] sm:$0xff]
  %v94 = vld [vmem:[%s1 + $0x1f0] sm:$0xff]
  %v95 = vld [vmem:[%s1 + $0x1f8] sm:$0xff]
  %v96 = vld [vmem:[%s1 + $0x200] sm:$0xff]
  %v97 = vld [vmem:[%s1 + $0x208] sm:$0xff]
  %v98 = vld [vmem:[%s1 + $0x210] sm:$0xff]
  %v99 = vld [vmem:[%s1 + $0x218] sm:$0xff]
  %v100 = vld [vmem:[%s1 + $0x220] sm:$0xff]
  %v101 = vld [vmem:[%s1 + $0x228] sm:$0xff]
  %v102 = vld [vmem:[%s1 + $0x230] sm:$0xff]
  %v103 = vld [vmem:[%s1 + $0x238] sm:$0xff]
  %v104 = vld [vmem:[%s1 + $0x240] sm:$0xff]
  %v105 = vld [vmem:[%s1 + $0x248] sm:$0xff]
  %v106 = vld [vmem:[%s1 + $0x250] sm:$0xff]
  %v107 = vld [vmem:[%s1 + $0x258] sm:$0xff]
  %v108 = vld [vmem:[%s1 + $0x260] sm:$0xff]
  %v109 = vld [vmem:[%s1 + $0x268] sm:$0xff]
  %v110 = vld [vmem:[%s1 + $0x270] sm:$0xff]
  %v111 = vld [vmem:[%s1 + $0x278] sm:$0xff]
  %v112 = vld [vmem:[%s1 + $0x280] sm:$0xff]
  %v113 = vld [vmem:[%s1 + $0x288] sm:$0xff]
  %v114 = vld [vmem:[%s1 + $0x290] sm:$0xff]
  %v115 = vld [vmem:[%s1 + $0x298] sm:$0xff]
  %v116 = vld [vmem:[%s1 + $0x2a0] sm:$0xff]
  %v117 = vld [vmem:[%s1 + $0x2a8] sm:$0xff]
  %v118 = vld [vmem:[%s1 + $0x2b0] sm:$0xff]
  %v119 = vld [vmem:[%s1 + $0x2b8] sm:$0xff]
  %v120 = vld [vmem:[%s1 + $0x2c0] sm:$0xff]
  %v121 = vld [vmem:[%s1 + $0x2c8] sm:$0xff]
  %v122 = vld [vmem:[%s1 + $0x2d0] sm:$0xff]
  %v123 = vld [vmem:[%s1 + $0x2d8] sm:$0xff]
  %v124 = vld [vmem:[%s1 + $0x2e0] sm:$0xff]
  %v125 = vld [vmem:[%s1 + $0x2e8] sm:$0xff]
  %v126 = vld [vmem:[%s1 + $0x2f0] sm:$0xff]
  %v127 = vld [vmem:[%s1 + $0x2f8] sm:$0xff]
  %v128 = vld [vmem:[%s1 + $0x300] sm:$0xff]
  %v129 = vld [vmem:[%s1 + $0x308] sm:$0xff]
  %v130 = vld [vmem:[%s1 + $0x310] sm:$0xff]
  %v131 = vld [vmem:[%s1 + $0x318] sm:$0xff]
  %v132 = vld [vmem:[%s1 + $0x320] sm:$0xff]
  %v133 = vld [vmem:[%s1 + $0x328] sm:$0xff]
  %v134 = vld [vmem:[%s1 + $0x330] sm:$0xff]
  %v135 = vld [vmem:[%s1 + $0x338] sm:$0xff]
  %v136 = vld [vmem:[%s1 + $0x340] sm:$0xff]
  %v137 = vld [vmem:[%s1 + $0x348] sm:$0xff]
  %v138 = vld [vmem:[%s1 + $0x350] sm:$0xff]
  %v139 = vld [vmem:[%s1 + $0x358] sm:$0xff]
  %v140 = vld [vmem:[%s1 + $0x360] sm:$0xff]
  %v141 = vld [vmem:[%s1 + $0x368] sm:$0xff]
  %v142 = vld [vmem:[%s1 + $0x370] sm:$0xff]
  %v143 = vld [vmem:[%s1 + $0x378] sm:$0xff]
  %v144 = vld [vmem:[%s1 + $0x380] sm:$0xff]
  %v145 = vld [vmem:[%s1 + $0x388] sm:$0xff]
  %v146 = vld [vmem:[%s1 + $0x390] sm:$0xff]
  %v147 = vld [vmem:[%s1 + $0x398] sm:$0xff]
  %v148 = vld [vmem:[%s1 + $0x3a0] sm:$0xff]
  %v149 = vld [vmem:[%s1 + $0x3a8] sm:$0xff]
  %v150 = vld [vmem:[%s1 + $0x3b0] sm:$0xff]
  %v151 = vld [vmem:[%s1 + $0x3b8] sm:$0xff]
  %v152 = vld [vmem:[%s1 + $0x3c0] sm:$0xff]
  %v153 = vld [vmem:[%s1 + $0x3c8] sm:$0xff]
  %v154 = vld [vmem:[%s1 + $0x3d0] sm:$0xff]
  %v155 = vld [vmem:[%s1 + $0x3d8] sm:$0xff]
  %v156 = vld [vmem:[%s1 + $0x3e0] sm:$0xff]
  %v157 = vld [vmem:[%s1 + $0x3e8] sm:$0xff]
  %v158 = vld [vmem:[%s1 + $0x3f0] sm:$0xff]
  %v159 = vld [vmem:[%s1 + $0x3f8] sm:$0xff]
  %v160 = vld [vmem:[%s1 + $0x400] sm:$0xff]
  %v161 = vld [vmem:[%s1 + $0x408] sm:$0xff]
  %v162 = vld [vmem:[%s1 + $0x410] sm:$0xff]
  %v163 = vld [vmem:[%s1 + $0x418] sm:$0xff]
  %v164 = vld [vmem:[%s1 + $0x420] sm:$0xff]
  %v165 = vld [vmem:[%s1 + $0x428] sm:$0xff]
  %v166 = vld [vmem:[%s1 + $0x430] sm:$0xff]
  %v167 = vld [vmem:[%s1 + $0x438] sm:$0xff]
  %v168 = vld [vmem:[%s1 + $0x440] sm:$0xff]
  %v169 = vld [vmem:[%s1 + $0x448] sm:$0xff]
  %v170 = vld [vmem:[%s1 + $0x450] sm:$0xff]
  %v171 = vld [vmem:[%s1 + $0x458] sm:$0xff]
  %v172 = vld [vmem:[%s1 + $0x460] sm:$0xff]
  %v173 = vld [vmem:[%s1 + $0x468] sm:$0xff]
  %v174 = vld [vmem:[%s1 + $0x470] sm:$0xff]
  %v175 = vld [vmem:[%s1 + $0x478] sm:$0xff]
  %v176 = vld [vmem:[%s1 + $0x480] sm:$0xff]
  %v177 = vld [vmem:[%s1 + $0x488] sm:$0xff]
  %v178 = vld [vmem:[%s1 + $0x490] sm:$0xff]
  %v179 = vld [vmem:[%s1 + $0x498] sm:$0xff]
  %v180 = vld [vmem:[%s1 + $0x4a0] sm:$0xff]
  %v181 = vld [vmem:[%s1 + $0x4a8] sm:$0xff]
  %v182 = vld [vmem:[%s1 + $0x4b0] sm:$0xff]
  %v183 = vld [vmem:[%s1 + $0x4b8] sm:$0xff]
  %v184 = vld [vmem:[%s1 + $0x4c0] sm:$0xff]
  %v185 = vld [vmem:[%s1 + $0x4c8] sm:$0xff]
  %v186 = vld [vmem:[%s1 + $0x4d0] sm:$0xff]
  %v187 = vld [vmem:[%s1 + $0x4d8] sm:$0xff]
  %v188 = vld [vmem:[%s1 + $0x4e0] sm:$0xff]
  %v189 = vld [vmem:[%s1 + $0x4e8] sm:$0xff]
  %v190 = vld [vmem:[%s1 + $0x4f0] sm:$0xff]
  %v191 = vld [vmem:[%s1 + $0x4f8] sm:$0xff]
  %v192 = vld [vmem:[%s1 + $0x500] sm:$0xff]
  %v193 = vld [vmem:[%s1 + $0x508] sm:$0xff]
  %v194 = vld [vmem:[%s1 + $0x510] sm:$0xff]
  %v195 = vld [vmem:[%s1 + $0x518] sm:$0xff]
  %v196 = vld [vmem:[%s1 + $0x520] sm:$0xff]
  %v197 = vld [vmem:[%s1 + $0x528] sm:$0xff]
  %v198 = vld [vmem:[%s1 + $0x530] sm:$0xff]
  %v199 = vld [vmem:[%s1 + $0x538] sm:$0xff]
  %v200 = vld [vmem:[%s1 + $0x540] sm:$0xff]
  %v201 = vld [vmem:[%s1 + $0x548] sm:$0xff]
  %v202 = vld [vmem:[%s1 + $0x550] sm:$0xff]
  %v203 = vld [vmem:[%s1 + $0x558] sm:$0xff]
  %v204 = vld [vmem:[%s1 + $0x560] sm:$0xff]
  %v205 = vld [vmem:[%s1 + $0x568] sm:$0xff]
  %v206 = vld [vmem:[%s1 + $0x570] sm:$0xff]
  %v207 = vld [vmem:[%s1 + $0x578] sm:$0xff]
  %v208 = vld [vmem:[%s1 + $0x580] sm:$0xff]
  %v209 = vld [vmem:[%s1 + $0x588] sm:$0xff]
  %v210 = vld [vmem:[%s1 + $0x590] sm:$0xff]
  %v211 = vld [vmem:[%s1 + $0x598] sm:$0xff]
  %v212 = vld [vmem:[%s1 + $0x5a0] sm:$0xff]
  %v213 = vld [vmem:[%s1 + $0x5a8] sm:$0xff]
  %v214 = vld [vmem:[%s1 + $0x5b0] sm:$0xff]
  %v215 = vld [vmem:[%s1 + $0x5b8] sm:$0xff]
  %v216 = vld [vmem:[%s1 + $0x5c0] sm:$0xff]
  %v217 = vld [vmem:[%s1 + $0x5c8] sm:$0xff]
  %v218 = vld [vmem:[%s1 + $0x5d0] sm:$0xff]
  %v219 = vld [vmem:[%s1 + $0x5d8] sm:$0xff]
  %v220 = vld [vmem:[%s1 + $0x5e0] sm:$0xff]
  %v221 = vld [vmem:[%s1 + $0x5e8] sm:$0xff]
  %v222 = vld [vmem:[%s1 + $0x5f0] sm:$0xff]
  %v223 = vld [vmem:[%s1 + $0x5f8] sm:$0xff]
  %v224 = vld [vmem:[%s1 + $0x600] sm:$0xff]
  %v225 = vld [vmem:[%s1 + $0x608] sm:$0xff]
  %v226 = vld [vmem:[%s1 + $0x610] sm:$0xff]
  %v227 = vld [vmem:[%s1 + $0x618] sm:$0xff]
  %v228 = vld [vmem:[%s1 + $0x620] sm:$0xff]
  %v229 = vld [vmem:[%s1 + $0x628] sm:$0xff]
  %v230 = vld [vmem:[%s1 + $0x630] sm:$0xff]
  %v231 = vld [vmem:[%s1 + $0x638] sm:$0xff]
  %v232 = vld [vmem:[%s1 + $0x640] sm:$0xff]
  %v233 = vld [vmem:[%s1 + $0x648] sm:$0xff]
  %v234 = vld [vmem:[%s1 + $0x650] sm:$0xff]
  %v235 = vld [vmem:[%s1 + $0x658] sm:$0xff]
  %v236 = vld [vmem:[%s1 + $0x660] sm:$0xff]
  %v237 = vld [vmem:[%s1 + $0x668] sm:$0xff]
  %v238 = vld [vmem:[%s1 + $0x670] sm:$0xff]
  %v239 = vld [vmem:[%s1 + $0x678] sm:$0xff]
  %v240 = vld [vmem:[%s1 + $0x680] sm:$0xff]
  %v241 = vld [vmem:[%s1 + $0x688] sm:$0xff]
  %v242 = vld [vmem:[%s1 + $0x690] sm:$0xff]
  %v243 = vld [vmem:[%s1 + $0x698] sm:$0xff]
  %v244 = vld [vmem:[%s1 + $0x6a0] sm:$0xff]
  %v245 = vld [vmem:[%s1 + $0x6a8] sm:$0xff]
  %v246 = vld [vmem:[%s1 + $0x6b0] sm:$0xff]
  %v247 = vld [vmem:[%s1 + $0x6b8] sm:$0xff]
  %v248 = vld [vmem:[%s1 + $0x6c0] sm:$0xff]
  %v249 = vld [vmem:[%s1 + $0x6c8] sm:$0xff]
  %v250 = vld [vmem:[%s1 + $0x6d0] sm:$0xff]
  %v251 = vld [vmem:[%s1 + $0x6d8] sm:$0xff]
  %v252 = vld [vmem:[%s1 + $0x6e0] sm:$0xff]
  %v253 = vld [vmem:[%s1 + $0x6e8] sm:$0xff]
  %v254 = vld [vmem:[%s1 + $0x6f0] sm:$0xff]
  %v255 = vld [vmem:[%s1 + $0x6f8] sm:$0xff]
  %v256 = vld [vmem:[%s1 + $0x700] sm:$0xff]
  %v257 = vld [vmem:[%s1 + $0x708] sm:$0xff]
  %v258 = vld [vmem:[%s1 + $0x710] sm:$0xff]
  %v259 = vld [vmem:[%s1 + $0x718] sm:$0xff]
  %v260 = vld [vmem:[%s1 + $0x720] sm:$0xff]
  %v261 = vld [vmem:[%s1 + $0x728] sm:$0xff]
  %v262 = vld [vmem:[%s1 + $0x730] sm:$0xff]
  %v263 = vld [vmem:[%s1 + $0x738] sm:$0xff]
  %v264 = vld [vmem:[%s1 + $0x740] sm:$0xff]
  %v265 = vld [vmem:[%s1 + $0x748] sm:$0xff]
  %v266 = vld [vmem:[%s1 + $0x750] sm:$0xff]
  %v267 = vld [vmem:[%s1 + $0x758] sm:$0xff]
  %v268 = vld [vmem:[%s1 + $0x760] sm:$0xff]
  %v269 = vld [vmem:[%s1 + $0x768] sm:$0xff]
  %v270 = vld [vmem:[%s1 + $0x770] sm:$0xff]
  %v271 = vld [vmem:[%s1 + $0x778] sm:$0xff]
  %v272 = vld [vmem:[%s1 + $0x780] sm:$0xff]
  %v273 = vld [vmem:[%s1 + $0x788] sm:$0xff]
  %v274 = vld [vmem:[%s1 + $0x790] sm:$0xff]
  %v275 = vld [vmem:[%s1 + $0x798] sm:$0xff]
  %v276 = vld [vmem:[%s1 + $0x7a0] sm:$0xff]
  %v277 = vld [vmem:[%s1 + $0x7a8] sm:$0xff]
  %v278 = vld [vmem:[%s1 + $0x7b0] sm:$0xff]
  %v279 = vld [vmem:[%s1 + $0x7b8] sm:$0xff]
  %v280 = vld [vmem:[%s1 + $0x7c0] sm:$0xff]
  %v281 = vld [vmem:[%s1 + $0x7c8] sm:$0xff]
  %v282 = vld [vmem:[%s1 + $0x7d0] sm:$0xff]
  %v283 = vld [vmem:[%s1 + $0x7d8] sm:$0xff]
  %v284 = vld [vmem:[%s1 + $0x7e0] sm:$0xff]
  %v285 = vld [vmem:[%s1 + $0x7e8] sm:$0xff]
  %v286 = vld [vmem:[%s1 + $0x7f0] sm:$0xff]
  %v287 = vld [vmem:[%s1 + $0x7f8] sm:$0xff]
  %v288 = vld [vmem:[%s1 + $0x800] sm:$0xff]
  %v289 = vld [vmem:[%s1 + $0x808] sm:$0xff]
  %v290 = vld [vmem:[%s1 + $0x810] sm:$0xff]
  %v291 = vld [vmem:[%s1 + $0x818] sm:$0xff]
  %v292 = vld [vmem:[%s1 + $0x820] sm:$0xff]
  %v293 = vld [vmem:[%s1 + $0x828] sm:$0xff]
  %v294 = vld [vmem:[%s1 + $0x830] sm:$0xff]
  %v295 = vld [vmem:[%s1 + $0x838] sm:$0xff]
  %v296 = vld [vmem:[%s1 + $0x840] sm:$0xff]
  %v297 = vld [vmem:[%s1 + $0x848] sm:$0xff]
  %v298 = vld [vmem:[%s1 + $0x850] sm:$0xff]
  %v299 = vld [vmem:[%s1 + $0x858] sm:$0xff]
  %v300 = vld [vmem:[%s1 + $0x860] sm:$0xff]
  %v301 = vld [vmem:[%s1 + $0x868] sm:$0xff]
  %v302 = vld [vmem:[%s1 + $0x870] sm:$0xff]
  %v303 = vld [vmem:[%s1 + $0x878] sm:$0xff]
  %v304 = vld [vmem:[%s1 + $0x880] sm:$0xff]
  %v305 = vld [vmem:[%s1 + $0x888] sm:$0xff]
  %v306 = vld [vmem:[%s1 + $0x890] sm:$0xff]
  %v307 = vld [vmem:[%s1 + $0x898] sm:$0xff]
  %v308 = vld [vmem:[%s1 + $0x8a0] sm:$0xff]
  %v309 = vld [vmem:[%s1 + $0x8a8] sm:$0xff]
  %v310 = vld [vmem:[%s1 + $0x8b0] sm:$0xff]
  %v311 = vld [vmem:[%s1 + $0x8b8] sm:$0xff]
  %v312 = vld [vmem:[%s1 + $0x8c0] sm:$0xff]
  %v313 = vld [vmem:[%s1 + $0x8c8] sm:$0xff]
  %v314 = vld [vmem:[%s1 + $0x8d0] sm:$0xff]
  %v315 = vld [vmem:[%s1 + $0x8d8] sm:$0xff]
  %v316 = vld [vmem:[%s1 + $0x8e0] sm:$0xff]
  %v317 = vld [vmem:[%s1 + $0x8e8] sm:$0xff]
  %v318 = vld [vmem:[%s1 + $0x8f0] sm:$0xff]
  %v319 = vld [vmem:[%s1 + $0x8f8] sm:$0xff]
  %v320 = vld [vmem:[%s2] sm:$0x3]
  %v322 = vperm.slane %v320, 0
  %v323 = vperm.slane %v320, 1
  %v344 = vunpack.c.l.b16 %v14
  %v345 = vunpack.c.h.b16 %v14
  %v346 = vunpack.c.l.b16 %v15
  %v347 = vunpack.c.h.b16 %v15
  %v348 = vunpack.c.l.b16 %v16
  %v349 = vunpack.c.h.b16 %v16
  %v350 = vunpack.c.l.b16 %v17
  %v351 = vunpack.c.h.b16 %v17
  %v352 = vunpack.c.l.b16 %v18
  %v353 = vunpack.c.h.b16 %v18
  %v354 = vunpack.c.l.b16 %v19
  %v355 = vunpack.c.h.b16 %v19
  %v356 = vunpack.c.l.b16 %v20
  %v357 = vunpack.c.h.b16 %v20
  %v358 = vunpack.c.l.b16 %v21
  %v359 = vunpack.c.h.b16 %v21
  %v360 = vunpack.c.l.b16 %v22
  %v361 = vunpack.c.h.b16 %v22
  %v362 = vunpack.c.l.b16 %v23
  %v363 = vunpack.c.h.b16 %v23
  %v364 = vunpack.c.l.b16 %v24
  %v365 = vunpack.c.h.b16 %v24
  %v366 = vunpack.c.l.b16 %v25
  %v367 = vunpack.c.h.b16 %v25
  %v368 = vunpack.c.l.b16 %v26
  %v369 = vunpack.c.h.b16 %v26
  %v370 = vunpack.c.l.b16 %v27
  %v371 = vunpack.c.h.b16 %v27
  %v372 = vunpack.c.l.b16 %v28
  %v373 = vunpack.c.h.b16 %v28
  %v374 = vunpack.c.l.b16 %v29
  %v375 = vunpack.c.h.b16 %v29
  %v376 = vunpack.c.l.b16 %v30
  %v377 = vunpack.c.h.b16 %v30
  %v378 = vunpack.c.l.b16 %v31
  %v379 = vunpack.c.h.b16 %v31
  %v380 = vpack.c.b16 %v362, %v344
  %v381 = vpack.c.b16 %v363, %v345
  %v382 = vpack.c.b16 %v364, %v346
  %v383 = vpack.c.b16 %v365, %v347
  %v384 = vpack.c.b16 %v366, %v348
  %v385 = vpack.c.b16 %v367, %v349
  %v386 = vpack.c.b16 %v368, %v350
  %v387 = vpack.c.b16 %v369, %v351
  %v388 = vpack.c.b16 %v370, %v352
  %v389 = vpack.c.b16 %v371, %v353
  %v390 = vpack.c.b16 %v372, %v354
  %v391 = vpack.c.b16 %v373, %v355
  %v392 = vpack.c.b16 %v374, %v356
  %v393 = vpack.c.b16 %v375, %v357
  %v394 = vpack.c.b16 %v376, %v358
  %v395 = vpack.c.b16 %v377, %v359
  %v396 = vpack.c.b16 %v378, %v360
  %v397 = vpack.c.b16 %v379, %v361
  %v704 = vunpack.c.l.b16 %v32
  %v705 = vunpack.c.h.b16 %v32
  %v706 = vunpack.c.l.b16 %v33
  %v707 = vunpack.c.h.b16 %v33
  %v708 = vunpack.c.l.b16 %v34
  %v709 = vunpack.c.h.b16 %v34
  %v710 = vunpack.c.l.b16 %v35
  %v711 = vunpack.c.h.b16 %v35
  %v712 = vunpack.c.l.b16 %v36
  %v713 = vunpack.c.h.b16 %v36
  %v714 = vunpack.c.l.b16 %v37
  %v715 = vunpack.c.h.b16 %v37
  %v716 = vunpack.c.l.b16 %v38
  %v717 = vunpack.c.h.b16 %v38
  %v718 = vunpack.c.l.b16 %v39
  %v719 = vunpack.c.h.b16 %v39
  %v720 = vunpack.c.l.b16 %v40
  %v721 = vunpack.c.h.b16 %v40
  %v722 = vunpack.c.l.b16 %v41
  %v723 = vunpack.c.h.b16 %v41
  %v724 = vunpack.c.l.b16 %v42
  %v725 = vunpack.c.h.b16 %v42
  %v726 = vunpack.c.l.b16 %v43
  %v727 = vunpack.c.h.b16 %v43
  %v728 = vunpack.c.l.b16 %v44
  %v729 = vunpack.c.h.b16 %v44
  %v730 = vunpack.c.l.b16 %v45
  %v731 = vunpack.c.h.b16 %v45
  %v732 = vunpack.c.l.b16 %v46
  %v733 = vunpack.c.h.b16 %v46
  %v734 = vunpack.c.l.b16 %v47
  %v735 = vunpack.c.h.b16 %v47
  %v736 = vunpack.c.l.b16 %v48
  %v737 = vunpack.c.h.b16 %v48
  %v738 = vunpack.c.l.b16 %v49
  %v739 = vunpack.c.h.b16 %v49
  %v740 = vunpack.c.l.b16 %v50
  %v741 = vunpack.c.h.b16 %v50
  %v742 = vunpack.c.l.b16 %v51
  %v743 = vunpack.c.h.b16 %v51
  %v744 = vunpack.c.l.b16 %v52
  %v745 = vunpack.c.h.b16 %v52
  %v746 = vunpack.c.l.b16 %v53
  %v747 = vunpack.c.h.b16 %v53
  %v748 = vunpack.c.l.b16 %v54
  %v749 = vunpack.c.h.b16 %v54
  %v750 = vunpack.c.l.b16 %v55
  %v751 = vunpack.c.h.b16 %v55
  %v752 = vunpack.c.l.b16 %v56
  %v753 = vunpack.c.h.b16 %v56
  %v754 = vunpack.c.l.b16 %v57
  %v755 = vunpack.c.h.b16 %v57
  %v756 = vunpack.c.l.b16 %v58
  %v757 = vunpack.c.h.b16 %v58
  %v758 = vunpack.c.l.b16 %v59
  %v759 = vunpack.c.h.b16 %v59
  %v760 = vunpack.c.l.b16 %v60
  %v761 = vunpack.c.h.b16 %v60
  %v762 = vunpack.c.l.b16 %v61
  %v763 = vunpack.c.h.b16 %v61
  %v764 = vunpack.c.l.b16 %v62
  %v765 = vunpack.c.h.b16 %v62
  %v766 = vunpack.c.l.b16 %v63
  %v767 = vunpack.c.h.b16 %v63
  %v768 = vunpack.c.l.b16 %v64
  %v769 = vunpack.c.h.b16 %v64
  %v770 = vunpack.c.l.b16 %v65
  %v771 = vunpack.c.h.b16 %v65
  %v772 = vunpack.c.l.b16 %v66
  %v773 = vunpack.c.h.b16 %v66
  %v774 = vunpack.c.l.b16 %v67
  %v775 = vunpack.c.h.b16 %v67
  %v776 = vunpack.c.l.b16 %v68
  %v777 = vunpack.c.h.b16 %v68
  %v778 = vunpack.c.l.b16 %v69
  %v779 = vunpack.c.h.b16 %v69
  %v780 = vunpack.c.l.b16 %v70
  %v781 = vunpack.c.h.b16 %v70
  %v782 = vunpack.c.l.b16 %v71
  %v783 = vunpack.c.h.b16 %v71
  %v784 = vunpack.c.l.b16 %v72
  %v785 = vunpack.c.h.b16 %v72
  %v786 = vunpack.c.l.b16 %v73
  %v787 = vunpack.c.h.b16 %v73
  %v788 = vunpack.c.l.b16 %v74
  %v789 = vunpack.c.h.b16 %v74
  %v790 = vunpack.c.l.b16 %v75
  %v791 = vunpack.c.h.b16 %v75
  %v792 = vunpack.c.l.b16 %v76
  %v793 = vunpack.c.h.b16 %v76
  %v794 = vunpack.c.l.b16 %v77
  %v795 = vunpack.c.h.b16 %v77
  %v796 = vunpack.c.l.b16 %v78
  %v797 = vunpack.c.h.b16 %v78
  %v798 = vunpack.c.l.b16 %v79
  %v799 = vunpack.c.h.b16 %v79
  %v800 = vunpack.c.l.b16 %v80
  %v801 = vunpack.c.h.b16 %v80
  %v802 = vunpack.c.l.b16 %v81
  %v803 = vunpack.c.h.b16 %v81
  %v804 = vunpack.c.l.b16 %v82
  %v805 = vunpack.c.h.b16 %v82
  %v806 = vunpack.c.l.b16 %v83
  %v807 = vunpack.c.h.b16 %v83
  %v808 = vunpack.c.l.b16 %v84
  %v809 = vunpack.c.h.b16 %v84
  %v810 = vunpack.c.l.b16 %v85
  %v811 = vunpack.c.h.b16 %v85
  %v812 = vunpack.c.l.b16 %v86
  %v813 = vunpack.c.h.b16 %v86
  %v814 = vunpack.c.l.b16 %v87
  %v815 = vunpack.c.h.b16 %v87
  %v816 = vunpack.c.l.b16 %v88
  %v817 = vunpack.c.h.b16 %v88
  %v818 = vunpack.c.l.b16 %v89
  %v819 = vunpack.c.h.b16 %v89
  %v820 = vunpack.c.l.b16 %v90
  %v821 = vunpack.c.h.b16 %v90
  %v822 = vunpack.c.l.b16 %v91
  %v823 = vunpack.c.h.b16 %v91
  %v824 = vunpack.c.l.b16 %v92
  %v825 = vunpack.c.h.b16 %v92
  %v826 = vunpack.c.l.b16 %v93
  %v827 = vunpack.c.h.b16 %v93
  %v828 = vunpack.c.l.b16 %v94
  %v829 = vunpack.c.h.b16 %v94
  %v830 = vunpack.c.l.b16 %v95
  %v831 = vunpack.c.h.b16 %v95
  %v832 = vunpack.c.l.b16 %v96
  %v833 = vunpack.c.h.b16 %v96
  %v834 = vunpack.c.l.b16 %v97
  %v835 = vunpack.c.h.b16 %v97
  %v836 = vunpack.c.l.b16 %v98
  %v837 = vunpack.c.h.b16 %v98
  %v838 = vunpack.c.l.b16 %v99
  %v839 = vunpack.c.h.b16 %v99
  %v840 = vunpack.c.l.b16 %v100
  %v841 = vunpack.c.h.b16 %v100
  %v842 = vunpack.c.l.b16 %v101
  %v843 = vunpack.c.h.b16 %v101
  %v844 = vunpack.c.l.b16 %v102
  %v845 = vunpack.c.h.b16 %v102
  %v846 = vunpack.c.l.b16 %v103
  %v847 = vunpack.c.h.b16 %v103
  %v848 = vunpack.c.l.b16 %v104
  %v849 = vunpack.c.h.b16 %v104
  %v850 = vunpack.c.l.b16 %v105
  %v851 = vunpack.c.h.b16 %v105
  %v852 = vunpack.c.l.b16 %v106
  %v853 = vunpack.c.h.b16 %v106
  %v854 = vunpack.c.l.b16 %v107
  %v855 = vunpack.c.h.b16 %v107
  %v856 = vunpack.c.l.b16 %v108
  %v857 = vunpack.c.h.b16 %v108
  %v858 = vunpack.c.l.b16 %v109
  %v859 = vunpack.c.h.b16 %v109
  %v860 = vunpack.c.l.b16 %v110
  %v861 = vunpack.c.h.b16 %v110
  %v862 = vunpack.c.l.b16 %v111
  %v863 = vunpack.c.h.b16 %v111
  %v864 = vunpack.c.l.b16 %v112
  %v865 = vunpack.c.h.b16 %v112
  %v866 = vunpack.c.l.b16 %v113
  %v867 = vunpack.c.h.b16 %v113
  %v868 = vunpack.c.l.b16 %v114
  %v869 = vunpack.c.h.b16 %v114
  %v870 = vunpack.c.l.b16 %v115
  %v871 = vunpack.c.h.b16 %v115
  %v872 = vunpack.c.l.b16 %v116
  %v873 = vunpack.c.h.b16 %v116
  %v874 = vunpack.c.l.b16 %v117
  %v875 = vunpack.c.h.b16 %v117
  %v876 = vunpack.c.l.b16 %v118
  %v877 = vunpack.c.h.b16 %v118
  %v878 = vunpack.c.l.b16 %v119
  %v879 = vunpack.c.h.b16 %v119
  %v880 = vunpack.c.l.b16 %v120
  %v881 = vunpack.c.h.b16 %v120
  %v882 = vunpack.c.l.b16 %v121
  %v883 = vunpack.c.h.b16 %v121
  %v884 = vunpack.c.l.b16 %v122
  %v885 = vunpack.c.h.b16 %v122
  %v886 = vunpack.c.l.b16 %v123
  %v887 = vunpack.c.h.b16 %v123
  %v888 = vunpack.c.l.b16 %v124
  %v889 = vunpack.c.h.b16 %v124
  %v890 = vunpack.c.l.b16 %v125
  %v891 = vunpack.c.h.b16 %v125
  %v892 = vunpack.c.l.b16 %v126
  %v893 = vunpack.c.h.b16 %v126
  %v894 = vunpack.c.l.b16 %v127
  %v895 = vunpack.c.h.b16 %v127
  %v896 = vunpack.c.l.b16 %v128
  %v897 = vunpack.c.h.b16 %v128
  %v898 = vunpack.c.l.b16 %v129
  %v899 = vunpack.c.h.b16 %v129
  %v900 = vunpack.c.l.b16 %v130
  %v901 = vunpack.c.h.b16 %v130
  %v902 = vunpack.c.l.b16 %v131
  %v903 = vunpack.c.h.b16 %v131
  %v904 = vunpack.c.l.b16 %v132
  %v905 = vunpack.c.h.b16 %v132
  %v906 = vunpack.c.l.b16 %v133
  %v907 = vunpack.c.h.b16 %v133
  %v908 = vunpack.c.l.b16 %v134
  %v909 = vunpack.c.h.b16 %v134
  %v910 = vunpack.c.l.b16 %v135
  %v911 = vunpack.c.h.b16 %v135
  %v912 = vunpack.c.l.b16 %v136
  %v913 = vunpack.c.h.b16 %v136
  %v914 = vunpack.c.l.b16 %v137
  %v915 = vunpack.c.h.b16 %v137
  %v916 = vunpack.c.l.b16 %v138
  %v917 = vunpack.c.h.b16 %v138
  %v918 = vunpack.c.l.b16 %v139
  %v919 = vunpack.c.h.b16 %v139
  %v920 = vunpack.c.l.b16 %v140
  %v921 = vunpack.c.h.b16 %v140
  %v922 = vunpack.c.l.b16 %v141
  %v923 = vunpack.c.h.b16 %v141
  %v924 = vunpack.c.l.b16 %v142
  %v925 = vunpack.c.h.b16 %v142
  %v926 = vunpack.c.l.b16 %v143
  %v927 = vunpack.c.h.b16 %v143
  %v928 = vunpack.c.l.b16 %v144
  %v929 = vunpack.c.h.b16 %v144
  %v930 = vunpack.c.l.b16 %v145
  %v931 = vunpack.c.h.b16 %v145
  %v932 = vunpack.c.l.b16 %v146
  %v933 = vunpack.c.h.b16 %v146
  %v934 = vunpack.c.l.b16 %v147
  %v935 = vunpack.c.h.b16 %v147
  %v936 = vunpack.c.l.b16 %v148
  %v937 = vunpack.c.h.b16 %v148
  %v938 = vunpack.c.l.b16 %v149
  %v939 = vunpack.c.h.b16 %v149
  %v940 = vunpack.c.l.b16 %v150
  %v941 = vunpack.c.h.b16 %v150
  %v942 = vunpack.c.l.b16 %v151
  %v943 = vunpack.c.h.b16 %v151
  %v944 = vunpack.c.l.b16 %v152
  %v945 = vunpack.c.h.b16 %v152
  %v946 = vunpack.c.l.b16 %v153
  %v947 = vunpack.c.h.b16 %v153
  %v948 = vunpack.c.l.b16 %v154
  %v949 = vunpack.c.h.b16 %v154
  %v950 = vunpack.c.l.b16 %v155
  %v951 = vunpack.c.h.b16 %v155
  %v952 = vunpack.c.l.b16 %v156
  %v953 = vunpack.c.h.b16 %v156
  %v954 = vunpack.c.l.b16 %v157
  %v955 = vunpack.c.h.b16 %v157
  %v956 = vunpack.c.l.b16 %v158
  %v957 = vunpack.c.h.b16 %v158
  %v958 = vunpack.c.l.b16 %v159
  %v959 = vunpack.c.h.b16 %v159
  %v960 = vunpack.c.l.b16 %v160
  %v961 = vunpack.c.h.b16 %v160
  %v962 = vunpack.c.l.b16 %v161
  %v963 = vunpack.c.h.b16 %v161
  %v964 = vunpack.c.l.b16 %v162
  %v965 = vunpack.c.h.b16 %v162
  %v966 = vunpack.c.l.b16 %v163
  %v967 = vunpack.c.h.b16 %v163
  %v968 = vunpack.c.l.b16 %v164
  %v969 = vunpack.c.h.b16 %v164
  %v970 = vunpack.c.l.b16 %v165
  %v971 = vunpack.c.h.b16 %v165
  %v972 = vunpack.c.l.b16 %v166
  %v973 = vunpack.c.h.b16 %v166
  %v974 = vunpack.c.l.b16 %v167
  %v975 = vunpack.c.h.b16 %v167
  %v976 = vunpack.c.l.b16 %v168
  %v977 = vunpack.c.h.b16 %v168
  %v978 = vunpack.c.l.b16 %v169
  %v979 = vunpack.c.h.b16 %v169
  %v980 = vunpack.c.l.b16 %v170
  %v981 = vunpack.c.h.b16 %v170
  %v982 = vunpack.c.l.b16 %v171
  %v983 = vunpack.c.h.b16 %v171
  %v984 = vunpack.c.l.b16 %v172
  %v985 = vunpack.c.h.b16 %v172
  %v986 = vunpack.c.l.b16 %v173
  %v987 = vunpack.c.h.b16 %v173
  %v988 = vunpack.c.l.b16 %v174
  %v989 = vunpack.c.h.b16 %v174
  %v990 = vunpack.c.l.b16 %v175
  %v991 = vunpack.c.h.b16 %v175
  %v992 = vunpack.c.l.b16 %v176
  %v993 = vunpack.c.h.b16 %v176
  %v994 = vunpack.c.l.b16 %v177
  %v995 = vunpack.c.h.b16 %v177
  %v996 = vunpack.c.l.b16 %v178
  %v997 = vunpack.c.h.b16 %v178
  %v998 = vunpack.c.l.b16 %v179
  %v999 = vunpack.c.h.b16 %v179
  %v1000 = vunpack.c.l.b16 %v180
  %v1001 = vunpack.c.h.b16 %v180
  %v1002 = vunpack.c.l.b16 %v181
  %v1003 = vunpack.c.h.b16 %v181
  %v1004 = vunpack.c.l.b16 %v182
  %v1005 = vunpack.c.h.b16 %v182
  %v1006 = vunpack.c.l.b16 %v183
  %v1007 = vunpack.c.h.b16 %v183
  %v1008 = vunpack.c.l.b16 %v184
  %v1009 = vunpack.c.h.b16 %v184
  %v1010 = vunpack.c.l.b16 %v185
  %v1011 = vunpack.c.h.b16 %v185
  %v1012 = vunpack.c.l.b16 %v186
  %v1013 = vunpack.c.h.b16 %v186
  %v1014 = vunpack.c.l.b16 %v187
  %v1015 = vunpack.c.h.b16 %v187
  %v1016 = vunpack.c.l.b16 %v188
  %v1017 = vunpack.c.h.b16 %v188
  %v1018 = vunpack.c.l.b16 %v189
  %v1019 = vunpack.c.h.b16 %v189
  %v1020 = vunpack.c.l.b16 %v190
  %v1021 = vunpack.c.h.b16 %v190
  %v1022 = vunpack.c.l.b16 %v191
  %v1023 = vunpack.c.h.b16 %v191
  %v1024 = vunpack.c.l.b16 %v192
  %v1025 = vunpack.c.h.b16 %v192
  %v1026 = vunpack.c.l.b16 %v193
  %v1027 = vunpack.c.h.b16 %v193
  %v1028 = vunpack.c.l.b16 %v194
  %v1029 = vunpack.c.h.b16 %v194
  %v1030 = vunpack.c.l.b16 %v195
  %v1031 = vunpack.c.h.b16 %v195
  %v1032 = vunpack.c.l.b16 %v196
  %v1033 = vunpack.c.h.b16 %v196
  %v1034 = vunpack.c.l.b16 %v197
  %v1035 = vunpack.c.h.b16 %v197
  %v1036 = vunpack.c.l.b16 %v198
  %v1037 = vunpack.c.h.b16 %v198
  %v1038 = vunpack.c.l.b16 %v199
  %v1039 = vunpack.c.h.b16 %v199
  %v1040 = vunpack.c.l.b16 %v200
  %v1041 = vunpack.c.h.b16 %v200
  %v1042 = vunpack.c.l.b16 %v201
  %v1043 = vunpack.c.h.b16 %v201
  %v1044 = vunpack.c.l.b16 %v202
  %v1045 = vunpack.c.h.b16 %v202
  %v1046 = vunpack.c.l.b16 %v203
  %v1047 = vunpack.c.h.b16 %v203
  %v1048 = vunpack.c.l.b16 %v204
  %v1049 = vunpack.c.h.b16 %v204
  %v1050 = vunpack.c.l.b16 %v205
  %v1051 = vunpack.c.h.b16 %v205
  %v1052 = vunpack.c.l.b16 %v206
  %v1053 = vunpack.c.h.b16 %v206
  %v1054 = vunpack.c.l.b16 %v207
  %v1055 = vunpack.c.h.b16 %v207
  %v1056 = vunpack.c.l.b16 %v208
  %v1057 = vunpack.c.h.b16 %v208
  %v1058 = vunpack.c.l.b16 %v209
  %v1059 = vunpack.c.h.b16 %v209
  %v1060 = vunpack.c.l.b16 %v210
  %v1061 = vunpack.c.h.b16 %v210
  %v1062 = vunpack.c.l.b16 %v211
  %v1063 = vunpack.c.h.b16 %v211
  %v1064 = vunpack.c.l.b16 %v212
  %v1065 = vunpack.c.h.b16 %v212
  %v1066 = vunpack.c.l.b16 %v213
  %v1067 = vunpack.c.h.b16 %v213
  %v1068 = vunpack.c.l.b16 %v214
  %v1069 = vunpack.c.h.b16 %v214
  %v1070 = vunpack.c.l.b16 %v215
  %v1071 = vunpack.c.h.b16 %v215
  %v1072 = vunpack.c.l.b16 %v216
  %v1073 = vunpack.c.h.b16 %v216
  %v1074 = vunpack.c.l.b16 %v217
  %v1075 = vunpack.c.h.b16 %v217
  %v1076 = vunpack.c.l.b16 %v218
  %v1077 = vunpack.c.h.b16 %v218
  %v1078 = vunpack.c.l.b16 %v219
  %v1079 = vunpack.c.h.b16 %v219
  %v1080 = vunpack.c.l.b16 %v220
  %v1081 = vunpack.c.h.b16 %v220
  %v1082 = vunpack.c.l.b16 %v221
  %v1083 = vunpack.c.h.b16 %v221
  %v1084 = vunpack.c.l.b16 %v222
  %v1085 = vunpack.c.h.b16 %v222
  %v1086 = vunpack.c.l.b16 %v223
  %v1087 = vunpack.c.h.b16 %v223
  %v1088 = vunpack.c.l.b16 %v224
  %v1089 = vunpack.c.h.b16 %v224
  %v1090 = vunpack.c.l.b16 %v225
  %v1091 = vunpack.c.h.b16 %v225
  %v1092 = vunpack.c.l.b16 %v226
  %v1093 = vunpack.c.h.b16 %v226
  %v1094 = vunpack.c.l.b16 %v227
  %v1095 = vunpack.c.h.b16 %v227
  %v1096 = vunpack.c.l.b16 %v228
  %v1097 = vunpack.c.h.b16 %v228
  %v1098 = vunpack.c.l.b16 %v229
  %v1099 = vunpack.c.h.b16 %v229
  %v1100 = vunpack.c.l.b16 %v230
  %v1101 = vunpack.c.h.b16 %v230
  %v1102 = vunpack.c.l.b16 %v231
  %v1103 = vunpack.c.h.b16 %v231
  %v1104 = vunpack.c.l.b16 %v232
  %v1105 = vunpack.c.h.b16 %v232
  %v1106 = vunpack.c.l.b16 %v233
  %v1107 = vunpack.c.h.b16 %v233
  %v1108 = vunpack.c.l.b16 %v234
  %v1109 = vunpack.c.h.b16 %v234
  %v1110 = vunpack.c.l.b16 %v235
  %v1111 = vunpack.c.h.b16 %v235
  %v1112 = vunpack.c.l.b16 %v236
  %v1113 = vunpack.c.h.b16 %v236
  %v1114 = vunpack.c.l.b16 %v237
  %v1115 = vunpack.c.h.b16 %v237
  %v1116 = vunpack.c.l.b16 %v238
  %v1117 = vunpack.c.h.b16 %v238
  %v1118 = vunpack.c.l.b16 %v239
  %v1119 = vunpack.c.h.b16 %v239
  %v1120 = vunpack.c.l.b16 %v240
  %v1121 = vunpack.c.h.b16 %v240
  %v1122 = vunpack.c.l.b16 %v241
  %v1123 = vunpack.c.h.b16 %v241
  %v1124 = vunpack.c.l.b16 %v242
  %v1125 = vunpack.c.h.b16 %v242
  %v1126 = vunpack.c.l.b16 %v243
  %v1127 = vunpack.c.h.b16 %v243
  %v1128 = vunpack.c.l.b16 %v244
  %v1129 = vunpack.c.h.b16 %v244
  %v1130 = vunpack.c.l.b16 %v245
  %v1131 = vunpack.c.h.b16 %v245
  %v1132 = vunpack.c.l.b16 %v246
  %v1133 = vunpack.c.h.b16 %v246
  %v1134 = vunpack.c.l.b16 %v247
  %v1135 = vunpack.c.h.b16 %v247
  %v1136 = vunpack.c.l.b16 %v248
  %v1137 = vunpack.c.h.b16 %v248
  %v1138 = vunpack.c.l.b16 %v249
  %v1139 = vunpack.c.h.b16 %v249
  %v1140 = vunpack.c.l.b16 %v250
  %v1141 = vunpack.c.h.b16 %v250
  %v1142 = vunpack.c.l.b16 %v251
  %v1143 = vunpack.c.h.b16 %v251
  %v1144 = vunpack.c.l.b16 %v252
  %v1145 = vunpack.c.h.b16 %v252
  %v1146 = vunpack.c.l.b16 %v253
  %v1147 = vunpack.c.h.b16 %v253
  %v1148 = vunpack.c.l.b16 %v254
  %v1149 = vunpack.c.h.b16 %v254
  %v1150 = vunpack.c.l.b16 %v255
  %v1151 = vunpack.c.h.b16 %v255
  %v1152 = vunpack.c.l.b16 %v256
  %v1153 = vunpack.c.h.b16 %v256
  %v1154 = vunpack.c.l.b16 %v257
  %v1155 = vunpack.c.h.b16 %v257
  %v1156 = vunpack.c.l.b16 %v258
  %v1157 = vunpack.c.h.b16 %v258
  %v1158 = vunpack.c.l.b16 %v259
  %v1159 = vunpack.c.h.b16 %v259
  %v1160 = vunpack.c.l.b16 %v260
  %v1161 = vunpack.c.h.b16 %v260
  %v1162 = vunpack.c.l.b16 %v261
  %v1163 = vunpack.c.h.b16 %v261
  %v1164 = vunpack.c.l.b16 %v262
  %v1165 = vunpack.c.h.b16 %v262
  %v1166 = vunpack.c.l.b16 %v263
  %v1167 = vunpack.c.h.b16 %v263
  %v1168 = vunpack.c.l.b16 %v264
  %v1169 = vunpack.c.h.b16 %v264
  %v1170 = vunpack.c.l.b16 %v265
  %v1171 = vunpack.c.h.b16 %v265
  %v1172 = vunpack.c.l.b16 %v266
  %v1173 = vunpack.c.h.b16 %v266
  %v1174 = vunpack.c.l.b16 %v267
  %v1175 = vunpack.c.h.b16 %v267
  %v1176 = vunpack.c.l.b16 %v268
  %v1177 = vunpack.c.h.b16 %v268
  %v1178 = vunpack.c.l.b16 %v269
  %v1179 = vunpack.c.h.b16 %v269
  %v1180 = vunpack.c.l.b16 %v270
  %v1181 = vunpack.c.h.b16 %v270
  %v1182 = vunpack.c.l.b16 %v271
  %v1183 = vunpack.c.h.b16 %v271
  %v1184 = vunpack.c.l.b16 %v272
  %v1185 = vunpack.c.h.b16 %v272
  %v1186 = vunpack.c.l.b16 %v273
  %v1187 = vunpack.c.h.b16 %v273
  %v1188 = vunpack.c.l.b16 %v274
  %v1189 = vunpack.c.h.b16 %v274
  %v1190 = vunpack.c.l.b16 %v275
  %v1191 = vunpack.c.h.b16 %v275
  %v1192 = vunpack.c.l.b16 %v276
  %v1193 = vunpack.c.h.b16 %v276
  %v1194 = vunpack.c.l.b16 %v277
  %v1195 = vunpack.c.h.b16 %v277
  %v1196 = vunpack.c.l.b16 %v278
  %v1197 = vunpack.c.h.b16 %v278
  %v1198 = vunpack.c.l.b16 %v279
  %v1199 = vunpack.c.h.b16 %v279
  %v1200 = vunpack.c.l.b16 %v280
  %v1201 = vunpack.c.h.b16 %v280
  %v1202 = vunpack.c.l.b16 %v281
  %v1203 = vunpack.c.h.b16 %v281
  %v1204 = vunpack.c.l.b16 %v282
  %v1205 = vunpack.c.h.b16 %v282
  %v1206 = vunpack.c.l.b16 %v283
  %v1207 = vunpack.c.h.b16 %v283
  %v1208 = vunpack.c.l.b16 %v284
  %v1209 = vunpack.c.h.b16 %v284
  %v1210 = vunpack.c.l.b16 %v285
  %v1211 = vunpack.c.h.b16 %v285
  %v1212 = vunpack.c.l.b16 %v286
  %v1213 = vunpack.c.h.b16 %v286
  %v1214 = vunpack.c.l.b16 %v287
  %v1215 = vunpack.c.h.b16 %v287
  %v1216 = vunpack.c.l.b16 %v288
  %v1217 = vunpack.c.h.b16 %v288
  %v1218 = vunpack.c.l.b16 %v289
  %v1219 = vunpack.c.h.b16 %v289
  %v1220 = vunpack.c.l.b16 %v290
  %v1221 = vunpack.c.h.b16 %v290
  %v1222 = vunpack.c.l.b16 %v291
  %v1223 = vunpack.c.h.b16 %v291
  %v1224 = vunpack.c.l.b16 %v292
  %v1225 = vunpack.c.h.b16 %v292
  %v1226 = vunpack.c.l.b16 %v293
  %v1227 = vunpack.c.h.b16 %v293
  %v1228 = vunpack.c.l.b16 %v294
  %v1229 = vunpack.c.h.b16 %v294
  %v1230 = vunpack.c.l.b16 %v295
  %v1231 = vunpack.c.h.b16 %v295
  %v1232 = vunpack.c.l.b16 %v296
  %v1233 = vunpack.c.h.b16 %v296
  %v1234 = vunpack.c.l.b16 %v297
  %v1235 = vunpack.c.h.b16 %v297
  %v1236 = vunpack.c.l.b16 %v298
  %v1237 = vunpack.c.h.b16 %v298
  %v1238 = vunpack.c.l.b16 %v299
  %v1239 = vunpack.c.h.b16 %v299
  %v1240 = vunpack.c.l.b16 %v300
  %v1241 = vunpack.c.h.b16 %v300
  %v1242 = vunpack.c.l.b16 %v301
  %v1243 = vunpack.c.h.b16 %v301
  %v1244 = vunpack.c.l.b16 %v302
  %v1245 = vunpack.c.h.b16 %v302
  %v1246 = vunpack.c.l.b16 %v303
  %v1247 = vunpack.c.h.b16 %v303
  %v1248 = vunpack.c.l.b16 %v304
  %v1249 = vunpack.c.h.b16 %v304
  %v1250 = vunpack.c.l.b16 %v305
  %v1251 = vunpack.c.h.b16 %v305
  %v1252 = vunpack.c.l.b16 %v306
  %v1253 = vunpack.c.h.b16 %v306
  %v1254 = vunpack.c.l.b16 %v307
  %v1255 = vunpack.c.h.b16 %v307
  %v1256 = vunpack.c.l.b16 %v308
  %v1257 = vunpack.c.h.b16 %v308
  %v1258 = vunpack.c.l.b16 %v309
  %v1259 = vunpack.c.h.b16 %v309
  %v1260 = vunpack.c.l.b16 %v310
  %v1261 = vunpack.c.h.b16 %v310
  %v1262 = vunpack.c.l.b16 %v311
  %v1263 = vunpack.c.h.b16 %v311
  %v1264 = vunpack.c.l.b16 %v312
  %v1265 = vunpack.c.h.b16 %v312
  %v1266 = vunpack.c.l.b16 %v313
  %v1267 = vunpack.c.h.b16 %v313
  %v1268 = vunpack.c.l.b16 %v314
  %v1269 = vunpack.c.h.b16 %v314
  %v1270 = vunpack.c.l.b16 %v315
  %v1271 = vunpack.c.h.b16 %v315
  %v1272 = vunpack.c.l.b16 %v316
  %v1273 = vunpack.c.h.b16 %v316
  %v1274 = vunpack.c.l.b16 %v317
  %v1275 = vunpack.c.h.b16 %v317
  %v1276 = vunpack.c.l.b16 %v318
  %v1277 = vunpack.c.h.b16 %v318
  %v1278 = vunpack.c.l.b16 %v319
  %v1279 = vunpack.c.h.b16 %v319
  %v1280 = vpack.c.b16 %v706, %v704
  %v1281 = vpack.c.b16 %v707, %v705
  %v1282 = vpack.c.b16 %v710, %v708
  %v1283 = vpack.c.b16 %v711, %v709
  %v1284 = vpack.c.b16 %v714, %v712
  %v1285 = vpack.c.b16 %v715, %v713
  %v1286 = vpack.c.b16 %v718, %v716
  %v1287 = vpack.c.b16 %v719, %v717
  %v1288 = vpack.c.b16 %v722, %v720
  %v1289 = vpack.c.b16 %v723, %v721
  %v1290 = vpack.c.b16 %v726, %v724
  %v1291 = vpack.c.b16 %v727, %v725
  %v1292 = vpack.c.b16 %v730, %v728
  %v1293 = vpack.c.b16 %v731, %v729
  %v1294 = vpack.c.b16 %v734, %v732
  %v1295 = vpack.c.b16 %v735, %v733
  %v1296 = vpack.c.b16 %v738, %v736
  %v1297 = vpack.c.b16 %v739, %v737
  %v1298 = vpack.c.b16 %v742, %v740
  %v1299 = vpack.c.b16 %v743, %v741
  %v1300 = vpack.c.b16 %v746, %v744
  %v1301 = vpack.c.b16 %v747, %v745
  %v1302 = vpack.c.b16 %v750, %v748
  %v1303 = vpack.c.b16 %v751, %v749
  %v1304 = vpack.c.b16 %v754, %v752
  %v1305 = vpack.c.b16 %v755, %v753
  %v1306 = vpack.c.b16 %v758, %v756
  %v1307 = vpack.c.b16 %v759, %v757
  %v1308 = vpack.c.b16 %v762, %v760
  %v1309 = vpack.c.b16 %v763, %v761
  %v1310 = vpack.c.b16 %v766, %v764
  %v1311 = vpack.c.b16 %v767, %v765
  %v1312 = vpack.c.b16 %v770, %v768
  %v1313 = vpack.c.b16 %v771, %v769
  %v1314 = vpack.c.b16 %v774, %v772
  %v1315 = vpack.c.b16 %v775, %v773
  %v1316 = vpack.c.b16 %v778, %v776
  %v1317 = vpack.c.b16 %v779, %v777
  %v1318 = vpack.c.b16 %v782, %v780
  %v1319 = vpack.c.b16 %v783, %v781
  %v1320 = vpack.c.b16 %v786, %v784
  %v1321 = vpack.c.b16 %v787, %v785
  %v1322 = vpack.c.b16 %v790, %v788
  %v1323 = vpack.c.b16 %v791, %v789
  %v1324 = vpack.c.b16 %v794, %v792
  %v1325 = vpack.c.b16 %v795, %v793
  %v1326 = vpack.c.b16 %v798, %v796
  %v1327 = vpack.c.b16 %v799, %v797
  %v1328 = vpack.c.b16 %v802, %v800
  %v1329 = vpack.c.b16 %v803, %v801
  %v1330 = vpack.c.b16 %v806, %v804
  %v1331 = vpack.c.b16 %v807, %v805
  %v1332 = vpack.c.b16 %v810, %v808
  %v1333 = vpack.c.b16 %v811, %v809
  %v1334 = vpack.c.b16 %v814, %v812
  %v1335 = vpack.c.b16 %v815, %v813
  %v1336 = vpack.c.b16 %v818, %v816
  %v1337 = vpack.c.b16 %v819, %v817
  %v1338 = vpack.c.b16 %v822, %v820
  %v1339 = vpack.c.b16 %v823, %v821
  %v1340 = vpack.c.b16 %v826, %v824
  %v1341 = vpack.c.b16 %v827, %v825
  %v1342 = vpack.c.b16 %v830, %v828
  %v1343 = vpack.c.b16 %v831, %v829
  %v1344 = vpack.c.b16 %v834, %v832
  %v1345 = vpack.c.b16 %v835, %v833
  %v1346 = vpack.c.b16 %v838, %v836
  %v1347 = vpack.c.b16 %v839, %v837
  %v1348 = vpack.c.b16 %v842, %v840
  %v1349 = vpack.c.b16 %v843, %v841
  %v1350 = vpack.c.b16 %v846, %v844
  %v1351 = vpack.c.b16 %v847, %v845
  %v1352 = vpack.c.b16 %v850, %v848
  %v1353 = vpack.c.b16 %v851, %v849
  %v1354 = vpack.c.b16 %v854, %v852
  %v1355 = vpack.c.b16 %v855, %v853
  %v1356 = vpack.c.b16 %v858, %v856
  %v1357 = vpack.c.b16 %v859, %v857
  %v1358 = vpack.c.b16 %v862, %v860
  %v1359 = vpack.c.b16 %v863, %v861
  %v1360 = vpack.c.b16 %v866, %v864
  %v1361 = vpack.c.b16 %v867, %v865
  %v1362 = vpack.c.b16 %v870, %v868
  %v1363 = vpack.c.b16 %v871, %v869
  %v1364 = vpack.c.b16 %v874, %v872
  %v1365 = vpack.c.b16 %v875, %v873
  %v1366 = vpack.c.b16 %v878, %v876
  %v1367 = vpack.c.b16 %v879, %v877
  %v1368 = vpack.c.b16 %v882, %v880
  %v1369 = vpack.c.b16 %v883, %v881
  %v1370 = vpack.c.b16 %v886, %v884
  %v1371 = vpack.c.b16 %v887, %v885
  %v1372 = vpack.c.b16 %v890, %v888
  %v1373 = vpack.c.b16 %v891, %v889
  %v1374 = vpack.c.b16 %v894, %v892
  %v1375 = vpack.c.b16 %v895, %v893
  %v1376 = vpack.c.b16 %v898, %v896
  %v1377 = vpack.c.b16 %v899, %v897
  %v1378 = vpack.c.b16 %v902, %v900
  %v1379 = vpack.c.b16 %v903, %v901
  %v1380 = vpack.c.b16 %v906, %v904
  %v1381 = vpack.c.b16 %v907, %v905
  %v1382 = vpack.c.b16 %v910, %v908
  %v1383 = vpack.c.b16 %v911, %v909
  %v1384 = vpack.c.b16 %v914, %v912
  %v1385 = vpack.c.b16 %v915, %v913
  %v1386 = vpack.c.b16 %v918, %v916
  %v1387 = vpack.c.b16 %v919, %v917
  %v1388 = vpack.c.b16 %v922, %v920
  %v1389 = vpack.c.b16 %v923, %v921
  %v1390 = vpack.c.b16 %v926, %v924
  %v1391 = vpack.c.b16 %v927, %v925
  %v1392 = vpack.c.b16 %v930, %v928
  %v1393 = vpack.c.b16 %v931, %v929
  %v1394 = vpack.c.b16 %v934, %v932
  %v1395 = vpack.c.b16 %v935, %v933
  %v1396 = vpack.c.b16 %v938, %v936
  %v1397 = vpack.c.b16 %v939, %v937
  %v1398 = vpack.c.b16 %v942, %v940
  %v1399 = vpack.c.b16 %v943, %v941
  %v1400 = vpack.c.b16 %v946, %v944
  %v1401 = vpack.c.b16 %v947, %v945
  %v1402 = vpack.c.b16 %v950, %v948
  %v1403 = vpack.c.b16 %v951, %v949
  %v1404 = vpack.c.b16 %v954, %v952
  %v1405 = vpack.c.b16 %v955, %v953
  %v1406 = vpack.c.b16 %v958, %v956
  %v1407 = vpack.c.b16 %v959, %v957
  %v1408 = vpack.c.b16 %v962, %v960
  %v1409 = vpack.c.b16 %v963, %v961
  %v1410 = vpack.c.b16 %v966, %v964
  %v1411 = vpack.c.b16 %v967, %v965
  %v1412 = vpack.c.b16 %v970, %v968
  %v1413 = vpack.c.b16 %v971, %v969
  %v1414 = vpack.c.b16 %v974, %v972
  %v1415 = vpack.c.b16 %v975, %v973
  %v1416 = vpack.c.b16 %v978, %v976
  %v1417 = vpack.c.b16 %v979, %v977
  %v1418 = vpack.c.b16 %v982, %v980
  %v1419 = vpack.c.b16 %v983, %v981
  %v1420 = vpack.c.b16 %v986, %v984
  %v1421 = vpack.c.b16 %v987, %v985
  %v1422 = vpack.c.b16 %v990, %v988
  %v1423 = vpack.c.b16 %v991, %v989
  %v1424 = vpack.c.b16 %v994, %v992
  %v1425 = vpack.c.b16 %v995, %v993
  %v1426 = vpack.c.b16 %v998, %v996
  %v1427 = vpack.c.b16 %v999, %v997
  %v1428 = vpack.c.b16 %v1002, %v1000
  %v1429 = vpack.c.b16 %v1003, %v1001
  %v1430 = vpack.c.b16 %v1006, %v1004
  %v1431 = vpack.c.b16 %v1007, %v1005
  %v1432 = vpack.c.b16 %v1010, %v1008
  %v1433 = vpack.c.b16 %v1011, %v1009
  %v1434 = vpack.c.b16 %v1014, %v1012
  %v1435 = vpack.c.b16 %v1015, %v1013
  %v1436 = vpack.c.b16 %v1018, %v1016
  %v1437 = vpack.c.b16 %v1019, %v1017
  %v1438 = vpack.c.b16 %v1022, %v1020
  %v1439 = vpack.c.b16 %v1023, %v1021
  %v1440 = vpack.c.b16 %v1026, %v1024
  %v1441 = vpack.c.b16 %v1027, %v1025
  %v1442 = vpack.c.b16 %v1030, %v1028
  %v1443 = vpack.c.b16 %v1031, %v1029
  %v1444 = vpack.c.b16 %v1034, %v1032
  %v1445 = vpack.c.b16 %v1035, %v1033
  %v1446 = vpack.c.b16 %v1038, %v1036
  %v1447 = vpack.c.b16 %v1039, %v1037
  %v1448 = vpack.c.b16 %v1042, %v1040
  %v1449 = vpack.c.b16 %v1043, %v1041
  %v1450 = vpack.c.b16 %v1046, %v1044
  %v1451 = vpack.c.b16 %v1047, %v1045
  %v1452 = vpack.c.b16 %v1050, %v1048
  %v1453 = vpack.c.b16 %v1051, %v1049
  %v1454 = vpack.c.b16 %v1054, %v1052
  %v1455 = vpack.c.b16 %v1055, %v1053
  %v1456 = vpack.c.b16 %v1058, %v1056
  %v1457 = vpack.c.b16 %v1059, %v1057
  %v1458 = vpack.c.b16 %v1062, %v1060
  %v1459 = vpack.c.b16 %v1063, %v1061
  %v1460 = vpack.c.b16 %v1066, %v1064
  %v1461 = vpack.c.b16 %v1067, %v1065
  %v1462 = vpack.c.b16 %v1070, %v1068
  %v1463 = vpack.c.b16 %v1071, %v1069
  %v1464 = vpack.c.b16 %v1074, %v1072
  %v1465 = vpack.c.b16 %v1075, %v1073
  %v1466 = vpack.c.b16 %v1078, %v1076
  %v1467 = vpack.c.b16 %v1079, %v1077
  %v1468 = vpack.c.b16 %v1082, %v1080
  %v1469 = vpack.c.b16 %v1083, %v1081
  %v1470 = vpack.c.b16 %v1086, %v1084
  %v1471 = vpack.c.b16 %v1087, %v1085
  %v1472 = vpack.c.b16 %v1090, %v1088
  %v1473 = vpack.c.b16 %v1091, %v1089
  %v1474 = vpack.c.b16 %v1094, %v1092
  %v1475 = vpack.c.b16 %v1095, %v1093
  %v1476 = vpack.c.b16 %v1098, %v1096
  %v1477 = vpack.c.b16 %v1099, %v1097
  %v1478 = vpack.c.b16 %v1102, %v1100
  %v1479 = vpack.c.b16 %v1103, %v1101
  %v1480 = vpack.c.b16 %v1106, %v1104
  %v1481 = vpack.c.b16 %v1107, %v1105
  %v1482 = vpack.c.b16 %v1110, %v1108
  %v1483 = vpack.c.b16 %v1111, %v1109
  %v1484 = vpack.c.b16 %v1114, %v1112
  %v1485 = vpack.c.b16 %v1115, %v1113
  %v1486 = vpack.c.b16 %v1118, %v1116
  %v1487 = vpack.c.b16 %v1119, %v1117
  %v1488 = vpack.c.b16 %v1122, %v1120
  %v1489 = vpack.c.b16 %v1123, %v1121
  %v1490 = vpack.c.b16 %v1126, %v1124
  %v1491 = vpack.c.b16 %v1127, %v1125
  %v1492 = vpack.c.b16 %v1130, %v1128
  %v1493 = vpack.c.b16 %v1131, %v1129
  %v1494 = vpack.c.b16 %v1134, %v1132
  %v1495 = vpack.c.b16 %v1135, %v1133
  %v1496 = vpack.c.b16 %v1138, %v1136
  %v1497 = vpack.c.b16 %v1139, %v1137
  %v1498 = vpack.c.b16 %v1142, %v1140
  %v1499 = vpack.c.b16 %v1143, %v1141
  %v1500 = vpack.c.b16 %v1146, %v1144
  %v1501 = vpack.c.b16 %v1147, %v1145
  %v1502 = vpack.c.b16 %v1150, %v1148
  %v1503 = vpack.c.b16 %v1151, %v1149
  %v1504 = vpack.c.b16 %v1154, %v1152
  %v1505 = vpack.c.b16 %v1155, %v1153
  %v1506 = vpack.c.b16 %v1158, %v1156
  %v1507 = vpack.c.b16 %v1159, %v1157
  %v1508 = vpack.c.b16 %v1162, %v1160
  %v1509 = vpack.c.b16 %v1163, %v1161
  %v1510 = vpack.c.b16 %v1166, %v1164
  %v1511 = vpack.c.b16 %v1167, %v1165
  %v1512 = vpack.c.b16 %v1170, %v1168
  %v1513 = vpack.c.b16 %v1171, %v1169
  %v1514 = vpack.c.b16 %v1174, %v1172
  %v1515 = vpack.c.b16 %v1175, %v1173
  %v1516 = vpack.c.b16 %v1178, %v1176
  %v1517 = vpack.c.b16 %v1179, %v1177
  %v1518 = vpack.c.b16 %v1182, %v1180
  %v1519 = vpack.c.b16 %v1183, %v1181
  %v1520 = vpack.c.b16 %v1186, %v1184
  %v1521 = vpack.c.b16 %v1187, %v1185
  %v1522 = vpack.c.b16 %v1190, %v1188
  %v1523 = vpack.c.b16 %v1191, %v1189
  %v1524 = vpack.c.b16 %v1194, %v1192
  %v1525 = vpack.c.b16 %v1195, %v1193
  %v1526 = vpack.c.b16 %v1198, %v1196
  %v1527 = vpack.c.b16 %v1199, %v1197
  %v1528 = vpack.c.b16 %v1202, %v1200
  %v1529 = vpack.c.b16 %v1203, %v1201
  %v1530 = vpack.c.b16 %v1206, %v1204
  %v1531 = vpack.c.b16 %v1207, %v1205
  %v1532 = vpack.c.b16 %v1210, %v1208
  %v1533 = vpack.c.b16 %v1211, %v1209
  %v1534 = vpack.c.b16 %v1214, %v1212
  %v1535 = vpack.c.b16 %v1215, %v1213
  %v1536 = vpack.c.b16 %v1218, %v1216
  %v1537 = vpack.c.b16 %v1219, %v1217
  %v1538 = vpack.c.b16 %v1222, %v1220
  %v1539 = vpack.c.b16 %v1223, %v1221
  %v1540 = vpack.c.b16 %v1226, %v1224
  %v1541 = vpack.c.b16 %v1227, %v1225
  %v1542 = vpack.c.b16 %v1230, %v1228
  %v1543 = vpack.c.b16 %v1231, %v1229
  %v1544 = vpack.c.b16 %v1234, %v1232
  %v1545 = vpack.c.b16 %v1235, %v1233
  %v1546 = vpack.c.b16 %v1238, %v1236
  %v1547 = vpack.c.b16 %v1239, %v1237
  %v1548 = vpack.c.b16 %v1242, %v1240
  %v1549 = vpack.c.b16 %v1243, %v1241
  %v1550 = vpack.c.b16 %v1246, %v1244
  %v1551 = vpack.c.b16 %v1247, %v1245
  %v1552 = vpack.c.b16 %v1250, %v1248
  %v1553 = vpack.c.b16 %v1251, %v1249
  %v1554 = vpack.c.b16 %v1254, %v1252
  %v1555 = vpack.c.b16 %v1255, %v1253
  %v1556 = vpack.c.b16 %v1258, %v1256
  %v1557 = vpack.c.b16 %v1259, %v1257
  %v1558 = vpack.c.b16 %v1262, %v1260
  %v1559 = vpack.c.b16 %v1263, %v1261
  %v1560 = vpack.c.b16 %v1266, %v1264
  %v1561 = vpack.c.b16 %v1267, %v1265
  %v1562 = vpack.c.b16 %v1270, %v1268
  %v1563 = vpack.c.b16 %v1271, %v1269
  %v1564 = vpack.c.b16 %v1274, %v1272
  %v1565 = vpack.c.b16 %v1275, %v1273
  %v1566 = vpack.c.b16 %v1278, %v1276
  %v1567 = vpack.c.b16 %v1279, %v1277
  %1856 = vmatpush.bf16.msra.mxu0 %v1294
  %1857 = vmatpush.bf16.msra.mxu0 %v1292
  %1858 = vmatpush.bf16.msra.mxu0 %v1290
  %1859 = vmatpush.bf16.msra.mxu0 %v1288
  %1860 = vmatpush.bf16.msra.mxu0 %v1286
  %1861 = vmatpush.bf16.msra.mxu0 %v1284
  %1862 = vmatpush.bf16.msra.mxu0 %v1282
  %1863 = vmatpush.bf16.msra.mxu0 %v1280
  %1864 = vmatmul.bf16.gmra.mxu0 %v380
  %v1865 = vpop.f32.mrf.mxu0
  %v1866 = vadd.f32 %v322, %v1865
  %v1867 = vpop.f32.mrf.mxu0
  %v1868 = vadd.f32 %v322, %v1867
  %1869 = vdwg.mxu0
  %1870 = vmatpush.bf16.msra.mxu0 %v1310
  %1871 = vmatpush.bf16.msra.mxu0 %v1308
  %1872 = vmatpush.bf16.msra.mxu0 %v1306
  %1873 = vmatpush.bf16.msra.mxu0 %v1304
  %1874 = vmatpush.bf16.msra.mxu0 %v1302
  %1875 = vmatpush.bf16.msra.mxu0 %v1300
  %1876 = vmatpush.bf16.msra.mxu0 %v1298
  %1877 = vmatpush.bf16.msra.mxu0 %v1296
  %1878 = vmatmul.bf16.gmra.mxu0 %v381
  %v1879 = vpop.f32.mrf.mxu0
  %v1880 = vadd.f32 %v1866, %v1879
  %v1881 = vpop.f32.mrf.mxu0
  %v1882 = vadd.f32 %v1868, %v1881
  %1883 = vdwg.mxu0
  %1884 = vmatpush.bf16.msra.mxu0 %v1326
  %1885 = vmatpush.bf16.msra.mxu0 %v1324
  %1886 = vmatpush.bf16.msra.mxu0 %v1322
  %1887 = vmatpush.bf16.msra.mxu0 %v1320
  %1888 = vmatpush.bf16.msra.mxu0 %v1318
  %1889 = vmatpush.bf16.msra.mxu0 %v1316
  %1890 = vmatpush.bf16.msra.mxu0 %v1314
  %1891 = vmatpush.bf16.msra.mxu0 %v1312
  %1892 = vmatmul.bf16.gmra.mxu0 %v382
  %v1893 = vpop.f32.mrf.mxu0
  %v1894 = vadd.f32 %v1880, %v1893
  %v1895 = vpop.f32.mrf.mxu0
  %v1896 = vadd.f32 %v1882, %v1895
  %1897 = vdwg.mxu0
  %1898 = vmatpush.bf16.msra.mxu0 %v1342
  %1899 = vmatpush.bf16.msra.mxu0 %v1340
  %1900 = vmatpush.bf16.msra.mxu0 %v1338
  %1901 = vmatpush.bf16.msra.mxu0 %v1336
  %1902 = vmatpush.bf16.msra.mxu0 %v1334
  %1903 = vmatpush.bf16.msra.mxu0 %v1332
  %1904 = vmatpush.bf16.msra.mxu0 %v1330
  %1905 = vmatpush.bf16.msra.mxu0 %v1328
  %1906 = vmatmul.bf16.gmra.mxu0 %v383
  %v1907 = vpop.f32.mrf.mxu0
  %v1908 = vadd.f32 %v1894, %v1907
  %v1909 = vpop.f32.mrf.mxu0
  %v1910 = vadd.f32 %v1896, %v1909
  %1911 = vdwg.mxu0
  %1912 = vmatpush.bf16.msra.mxu0 %v1358
  %1913 = vmatpush.bf16.msra.mxu0 %v1356
  %1914 = vmatpush.bf16.msra.mxu0 %v1354
  %1915 = vmatpush.bf16.msra.mxu0 %v1352
  %1916 = vmatpush.bf16.msra.mxu0 %v1350
  %1917 = vmatpush.bf16.msra.mxu0 %v1348
  %1918 = vmatpush.bf16.msra.mxu0 %v1346
  %1919 = vmatpush.bf16.msra.mxu0 %v1344
  %1920 = vmatmul.bf16.gmra.mxu0 %v384
  %v1921 = vpop.f32.mrf.mxu0
  %v1922 = vadd.f32 %v1908, %v1921
  %v1923 = vpop.f32.mrf.mxu0
  %v1924 = vadd.f32 %v1910, %v1923
  %1925 = vdwg.mxu0
  %1926 = vmatpush.bf16.msra.mxu0 %v1374
  %1927 = vmatpush.bf16.msra.mxu0 %v1372
  %1928 = vmatpush.bf16.msra.mxu0 %v1370
  %1929 = vmatpush.bf16.msra.mxu0 %v1368
  %1930 = vmatpush.bf16.msra.mxu0 %v1366
  %1931 = vmatpush.bf16.msra.mxu0 %v1364
  %1932 = vmatpush.bf16.msra.mxu0 %v1362
  %1933 = vmatpush.bf16.msra.mxu0 %v1360
  %1934 = vmatmul.bf16.gmra.mxu0 %v385
  %v1935 = vpop.f32.mrf.mxu0
  %v1936 = vadd.f32 %v1922, %v1935
  %v1937 = vpop.f32.mrf.mxu0
  %v1938 = vadd.f32 %v1924, %v1937
  %1939 = vdwg.mxu0
  %1940 = vmatpush.bf16.msra.mxu0 %v1390
  %1941 = vmatpush.bf16.msra.mxu0 %v1388
  %1942 = vmatpush.bf16.msra.mxu0 %v1386
  %1943 = vmatpush.bf16.msra.mxu0 %v1384
  %1944 = vmatpush.bf16.msra.mxu0 %v1382
  %1945 = vmatpush.bf16.msra.mxu0 %v1380
  %1946 = vmatpush.bf16.msra.mxu0 %v1378
  %1947 = vmatpush.bf16.msra.mxu0 %v1376
  %1948 = vmatmul.bf16.gmra.mxu0 %v386
  %v1949 = vpop.f32.mrf.mxu0
  %v1950 = vadd.f32 %v1936, %v1949
  %v1951 = vpop.f32.mrf.mxu0
  %v1952 = vadd.f32 %v1938, %v1951
  %1953 = vdwg.mxu0
  %1954 = vmatpush.bf16.msra.mxu0 %v1406
  %1955 = vmatpush.bf16.msra.mxu0 %v1404
  %1956 = vmatpush.bf16.msra.mxu0 %v1402
  %1957 = vmatpush.bf16.msra.mxu0 %v1400
  %1958 = vmatpush.bf16.msra.mxu0 %v1398
  %1959 = vmatpush.bf16.msra.mxu0 %v1396
  %1960 = vmatpush.bf16.msra.mxu0 %v1394
  %1961 = vmatpush.bf16.msra.mxu0 %v1392
  %1962 = vmatmul.bf16.gmra.mxu0 %v387
  %v1963 = vpop.f32.mrf.mxu0
  %v1964 = vadd.f32 %v1950, %v1963
  %v1965 = vpop.f32.mrf.mxu0
  %v1966 = vadd.f32 %v1952, %v1965
  %1967 = vdwg.mxu0
  %1968 = vmatpush.bf16.msra.mxu0 %v1422
  %1969 = vmatpush.bf16.msra.mxu0 %v1420
  %1970 = vmatpush.bf16.msra.mxu0 %v1418
  %1971 = vmatpush.bf16.msra.mxu0 %v1416
  %1972 = vmatpush.bf16.msra.mxu0 %v1414
  %1973 = vmatpush.bf16.msra.mxu0 %v1412
  %1974 = vmatpush.bf16.msra.mxu0 %v1410
  %1975 = vmatpush.bf16.msra.mxu0 %v1408
  %1976 = vmatmul.bf16.gmra.mxu0 %v388
  %v1977 = vpop.f32.mrf.mxu0
  %v1978 = vadd.f32 %v1964, %v1977
  %v1979 = vpop.f32.mrf.mxu0
  %v1980 = vadd.f32 %v1966, %v1979
  %1981 = vdwg.mxu0
  %1982 = vmatpush.bf16.msra.mxu0 %v1438
  %1983 = vmatpush.bf16.msra.mxu0 %v1436
  %1984 = vmatpush.bf16.msra.mxu0 %v1434
  %1985 = vmatpush.bf16.msra.mxu0 %v1432
  %1986 = vmatpush.bf16.msra.mxu0 %v1430
  %1987 = vmatpush.bf16.msra.mxu0 %v1428
  %1988 = vmatpush.bf16.msra.mxu0 %v1426
  %1989 = vmatpush.bf16.msra.mxu0 %v1424
  %1990 = vmatmul.bf16.gmra.mxu0 %v389
  %v1991 = vpop.f32.mrf.mxu0
  %v1992 = vadd.f32 %v1978, %v1991
  %v1993 = vpop.f32.mrf.mxu0
  %v1994 = vadd.f32 %v1980, %v1993
  %1995 = vdwg.mxu0
  %1996 = vmatpush.bf16.msra.mxu0 %v1454
  %1997 = vmatpush.bf16.msra.mxu0 %v1452
  %1998 = vmatpush.bf16.msra.mxu0 %v1450
  %1999 = vmatpush.bf16.msra.mxu0 %v1448
  %2000 = vmatpush.bf16.msra.mxu0 %v1446
  %2001 = vmatpush.bf16.msra.mxu0 %v1444
  %2002 = vmatpush.bf16.msra.mxu0 %v1442
  %2003 = vmatpush.bf16.msra.mxu0 %v1440
  %2004 = vmatmul.bf16.gmra.mxu0 %v390
  %v2005 = vpop.f32.mrf.mxu0
  %v2006 = vadd.f32 %v1992, %v2005
  %v2007 = vpop.f32.mrf.mxu0
  %v2008 = vadd.f32 %v1994, %v2007
  %2009 = vdwg.mxu0
  %2010 = vmatpush.bf16.msra.mxu0 %v1470
  %2011 = vmatpush.bf16.msra.mxu0 %v1468
  %2012 = vmatpush.bf16.msra.mxu0 %v1466
  %2013 = vmatpush.bf16.msra.mxu0 %v1464
  %2014 = vmatpush.bf16.msra.mxu0 %v1462
  %2015 = vmatpush.bf16.msra.mxu0 %v1460
  %2016 = vmatpush.bf16.msra.mxu0 %v1458
  %2017 = vmatpush.bf16.msra.mxu0 %v1456
  %2018 = vmatmul.bf16.gmra.mxu0 %v391
  %v2019 = vpop.f32.mrf.mxu0
  %v2020 = vadd.f32 %v2006, %v2019
  %v2021 = vpop.f32.mrf.mxu0
  %v2022 = vadd.f32 %v2008, %v2021
  %2023 = vdwg.mxu0
  %2024 = vmatpush.bf16.msra.mxu0 %v1486
  %2025 = vmatpush.bf16.msra.mxu0 %v1484
  %2026 = vmatpush.bf16.msra.mxu0 %v1482
  %2027 = vmatpush.bf16.msra.mxu0 %v1480
  %2028 = vmatpush.bf16.msra.mxu0 %v1478
  %2029 = vmatpush.bf16.msra.mxu0 %v1476
  %2030 = vmatpush.bf16.msra.mxu0 %v1474
  %2031 = vmatpush.bf16.msra.mxu0 %v1472
  %2032 = vmatmul.bf16.gmra.mxu0 %v392
  %v2033 = vpop.f32.mrf.mxu0
  %v2034 = vadd.f32 %v2020, %v2033
  %v2035 = vpop.f32.mrf.mxu0
  %v2036 = vadd.f32 %v2022, %v2035
  %2037 = vdwg.mxu0
  %2038 = vmatpush.bf16.msra.mxu0 %v1502
  %2039 = vmatpush.bf16.msra.mxu0 %v1500
  %2040 = vmatpush.bf16.msra.mxu0 %v1498
  %2041 = vmatpush.bf16.msra.mxu0 %v1496
  %2042 = vmatpush.bf16.msra.mxu0 %v1494
  %2043 = vmatpush.bf16.msra.mxu0 %v1492
  %2044 = vmatpush.bf16.msra.mxu0 %v1490
  %2045 = vmatpush.bf16.msra.mxu0 %v1488
  %2046 = vmatmul.bf16.gmra.mxu0 %v393
  %v2047 = vpop.f32.mrf.mxu0
  %v2048 = vadd.f32 %v2034, %v2047
  %v2049 = vpop.f32.mrf.mxu0
  %v2050 = vadd.f32 %v2036, %v2049
  %2051 = vdwg.mxu0
  %2052 = vmatpush.bf16.msra.mxu0 %v1518
  %2053 = vmatpush.bf16.msra.mxu0 %v1516
  %2054 = vmatpush.bf16.msra.mxu0 %v1514
  %2055 = vmatpush.bf16.msra.mxu0 %v1512
  %2056 = vmatpush.bf16.msra.mxu0 %v1510
  %2057 = vmatpush.bf16.msra.mxu0 %v1508
  %2058 = vmatpush.bf16.msra.mxu0 %v1506
  %2059 = vmatpush.bf16.msra.mxu0 %v1504
  %2060 = vmatmul.bf16.gmra.mxu0 %v394
  %v2061 = vpop.f32.mrf.mxu0
  %v2062 = vadd.f32 %v2048, %v2061
  %v2063 = vpop.f32.mrf.mxu0
  %v2064 = vadd.f32 %v2050, %v2063
  %2065 = vdwg.mxu0
  %2066 = vmatpush.bf16.msra.mxu0 %v1534
  %2067 = vmatpush.bf16.msra.mxu0 %v1532
  %2068 = vmatpush.bf16.msra.mxu0 %v1530
  %2069 = vmatpush.bf16.msra.mxu0 %v1528
  %2070 = vmatpush.bf16.msra.mxu0 %v1526
  %2071 = vmatpush.bf16.msra.mxu0 %v1524
  %2072 = vmatpush.bf16.msra.mxu0 %v1522
  %2073 = vmatpush.bf16.msra.mxu0 %v1520
  %2074 = vmatmul.bf16.gmra.mxu0 %v395
  %v2075 = vpop.f32.mrf.mxu0
  %v2076 = vadd.f32 %v2062, %v2075
  %v2077 = vpop.f32.mrf.mxu0
  %v2078 = vadd.f32 %v2064, %v2077
  %2079 = vdwg.mxu0
  %2080 = vmatpush.bf16.msra.mxu0 %v1550
  %2081 = vmatpush.bf16.msra.mxu0 %v1548
  %2082 = vmatpush.bf16.msra.mxu0 %v1546
  %2083 = vmatpush.bf16.msra.mxu0 %v1544
  %2084 = vmatpush.bf16.msra.mxu0 %v1542
  %2085 = vmatpush.bf16.msra.mxu0 %v1540
  %2086 = vmatpush.bf16.msra.mxu0 %v1538
  %2087 = vmatpush.bf16.msra.mxu0 %v1536
  %2088 = vmatmul.bf16.gmra.mxu0 %v396
  %v2089 = vpop.f32.mrf.mxu0
  %v2090 = vadd.f32 %v2076, %v2089
  %v2091 = vpop.f32.mrf.mxu0
  %v2092 = vadd.f32 %v2078, %v2091
  %2093 = vdwg.mxu0
  %2094 = vmatpush.bf16.msra.mxu0 %v1566
  %2095 = vmatpush.bf16.msra.mxu0 %v1564
  %2096 = vmatpush.bf16.msra.mxu0 %v1562
  %2097 = vmatpush.bf16.msra.mxu0 %v1560
  %2098 = vmatpush.bf16.msra.mxu0 %v1558
  %2099 = vmatpush.bf16.msra.mxu0 %v1556
  %2100 = vmatpush.bf16.msra.mxu0 %v1554
  %2101 = vmatpush.bf16.msra.mxu0 %v1552
  %2102 = vmatmul.bf16.gmra.mxu0 %v397
  %v2103 = vpop.f32.mrf.mxu0
  %v2104 = vadd.f32 %v2090, %v2103
  %v2105 = vpop.f32.mrf.mxu0
  %v2106 = vadd.f32 %v2092, %v2105
  %2107 = vdwg.mxu0
  %2108 = vmatpush.bf16.msra.mxu0 %v1295
  %2109 = vmatpush.bf16.msra.mxu0 %v1293
  %2110 = vmatpush.bf16.msra.mxu0 %v1291
  %2111 = vmatpush.bf16.msra.mxu0 %v1289
  %2112 = vmatpush.bf16.msra.mxu0 %v1287
  %2113 = vmatpush.bf16.msra.mxu0 %v1285
  %2114 = vmatpush.bf16.msra.mxu0 %v1283
  %2115 = vmatpush.bf16.msra.mxu0 %v1281
  %2116 = vmatmul.bf16.gmra.mxu0 %v380
  %v2117 = vpop.f32.mrf.mxu0
  %v2118 = vadd.f32 %v323, %v2117
  %v2119 = vpop.f32.mrf.mxu0
  %v2120 = vadd.f32 %v323, %v2119
  %2121 = vdwg.mxu0
  %2122 = vmatpush.bf16.msra.mxu0 %v1311
  %2123 = vmatpush.bf16.msra.mxu0 %v1309
  %2124 = vmatpush.bf16.msra.mxu0 %v1307
  %2125 = vmatpush.bf16.msra.mxu0 %v1305
  %2126 = vmatpush.bf16.msra.mxu0 %v1303
  %2127 = vmatpush.bf16.msra.mxu0 %v1301
  %2128 = vmatpush.bf16.msra.mxu0 %v1299
  %2129 = vmatpush.bf16.msra.mxu0 %v1297
  %2130 = vmatmul.bf16.gmra.mxu0 %v381
  %v2131 = vpop.f32.mrf.mxu0
  %v2132 = vadd.f32 %v2118, %v2131
  %v2133 = vpop.f32.mrf.mxu0
  %v2134 = vadd.f32 %v2120, %v2133
  %2135 = vdwg.mxu0
  %2136 = vmatpush.bf16.msra.mxu0 %v1327
  %2137 = vmatpush.bf16.msra.mxu0 %v1325
  %2138 = vmatpush.bf16.msra.mxu0 %v1323
  %2139 = vmatpush.bf16.msra.mxu0 %v1321
  %2140 = vmatpush.bf16.msra.mxu0 %v1319
  %2141 = vmatpush.bf16.msra.mxu0 %v1317
  %2142 = vmatpush.bf16.msra.mxu0 %v1315
  %2143 = vmatpush.bf16.msra.mxu0 %v1313
  %2144 = vmatmul.bf16.gmra.mxu0 %v382
  %v2145 = vpop.f32.mrf.mxu0
  %v2146 = vadd.f32 %v2132, %v2145
  %v2147 = vpop.f32.mrf.mxu0
  %v2148 = vadd.f32 %v2134, %v2147
  %2149 = vdwg.mxu0
  %2150 = vmatpush.bf16.msra.mxu0 %v1343
  %2151 = vmatpush.bf16.msra.mxu0 %v1341
  %2152 = vmatpush.bf16.msra.mxu0 %v1339
  %2153 = vmatpush.bf16.msra.mxu0 %v1337
  %2154 = vmatpush.bf16.msra.mxu0 %v1335
  %2155 = vmatpush.bf16.msra.mxu0 %v1333
  %2156 = vmatpush.bf16.msra.mxu0 %v1331
  %2157 = vmatpush.bf16.msra.mxu0 %v1329
  %2158 = vmatmul.bf16.gmra.mxu0 %v383
  %v2159 = vpop.f32.mrf.mxu0
  %v2160 = vadd.f32 %v2146, %v2159
  %v2161 = vpop.f32.mrf.mxu0
  %v2162 = vadd.f32 %v2148, %v2161
  %2163 = vdwg.mxu0
  %2164 = vmatpush.bf16.msra.mxu0 %v1359
  %2165 = vmatpush.bf16.msra.mxu0 %v1357
  %2166 = vmatpush.bf16.msra.mxu0 %v1355
  %2167 = vmatpush.bf16.msra.mxu0 %v1353
  %2168 = vmatpush.bf16.msra.mxu0 %v1351
  %2169 = vmatpush.bf16.msra.mxu0 %v1349
  %2170 = vmatpush.bf16.msra.mxu0 %v1347
  %2171 = vmatpush.bf16.msra.mxu0 %v1345
  %2172 = vmatmul.bf16.gmra.mxu0 %v384
  %v2173 = vpop.f32.mrf.mxu0
  %v2174 = vadd.f32 %v2160, %v2173
  %v2175 = vpop.f32.mrf.mxu0
  %v2176 = vadd.f32 %v2162, %v2175
  %2177 = vdwg.mxu0
  %2178 = vmatpush.bf16.msra.mxu0 %v1375
  %2179 = vmatpush.bf16.msra.mxu0 %v1373
  %2180 = vmatpush.bf16.msra.mxu0 %v1371
  %2181 = vmatpush.bf16.msra.mxu0 %v1369
  %2182 = vmatpush.bf16.msra.mxu0 %v1367
  %2183 = vmatpush.bf16.msra.mxu0 %v1365
  %2184 = vmatpush.bf16.msra.mxu0 %v1363
  %2185 = vmatpush.bf16.msra.mxu0 %v1361
  %2186 = vmatmul.bf16.gmra.mxu0 %v385
  %v2187 = vpop.f32.mrf.mxu0
  %v2188 = vadd.f32 %v2174, %v2187
  %v2189 = vpop.f32.mrf.mxu0
  %v2190 = vadd.f32 %v2176, %v2189
  %2191 = vdwg.mxu0
  %2192 = vmatpush.bf16.msra.mxu0 %v1391
  %2193 = vmatpush.bf16.msra.mxu0 %v1389
  %2194 = vmatpush.bf16.msra.mxu0 %v1387
  %2195 = vmatpush.bf16.msra.mxu0 %v1385
  %2196 = vmatpush.bf16.msra.mxu0 %v1383
  %2197 = vmatpush.bf16.msra.mxu0 %v1381
  %2198 = vmatpush.bf16.msra.mxu0 %v1379
  %2199 = vmatpush.bf16.msra.mxu0 %v1377
  %2200 = vmatmul.bf16.gmra.mxu0 %v386
  %v2201 = vpop.f32.mrf.mxu0
  %v2202 = vadd.f32 %v2188, %v2201
  %v2203 = vpop.f32.mrf.mxu0
  %v2204 = vadd.f32 %v2190, %v2203
  %2205 = vdwg.mxu0
  %2206 = vmatpush.bf16.msra.mxu0 %v1407
  %2207 = vmatpush.bf16.msra.mxu0 %v1405
  %2208 = vmatpush.bf16.msra.mxu0 %v1403
  %2209 = vmatpush.bf16.msra.mxu0 %v1401
  %2210 = vmatpush.bf16.msra.mxu0 %v1399
  %2211 = vmatpush.bf16.msra.mxu0 %v1397
  %2212 = vmatpush.bf16.msra.mxu0 %v1395
  %2213 = vmatpush.bf16.msra.mxu0 %v1393
  %2214 = vmatmul.bf16.gmra.mxu0 %v387
  %v2215 = vpop.f32.mrf.mxu0
  %v2216 = vadd.f32 %v2202, %v2215
  %v2217 = vpop.f32.mrf.mxu0
  %v2218 = vadd.f32 %v2204, %v2217
  %2219 = vdwg.mxu0
  %2220 = vmatpush.bf16.msra.mxu0 %v1423
  %2221 = vmatpush.bf16.msra.mxu0 %v1421
  %2222 = vmatpush.bf16.msra.mxu0 %v1419
  %2223 = vmatpush.bf16.msra.mxu0 %v1417
  %2224 = vmatpush.bf16.msra.mxu0 %v1415
  %2225 = vmatpush.bf16.msra.mxu0 %v1413
  %2226 = vmatpush.bf16.msra.mxu0 %v1411
  %2227 = vmatpush.bf16.msra.mxu0 %v1409
  %2228 = vmatmul.bf16.gmra.mxu0 %v388
  %v2229 = vpop.f32.mrf.mxu0
  %v2230 = vadd.f32 %v2216, %v2229
  %v2231 = vpop.f32.mrf.mxu0
  %v2232 = vadd.f32 %v2218, %v2231
  %2233 = vdwg.mxu0
  %2234 = vmatpush.bf16.msra.mxu0 %v1439
  %2235 = vmatpush.bf16.msra.mxu0 %v1437
  %2236 = vmatpush.bf16.msra.mxu0 %v1435
  %2237 = vmatpush.bf16.msra.mxu0 %v1433
  %2238 = vmatpush.bf16.msra.mxu0 %v1431
  %2239 = vmatpush.bf16.msra.mxu0 %v1429
  %2240 = vmatpush.bf16.msra.mxu0 %v1427
  %2241 = vmatpush.bf16.msra.mxu0 %v1425
  %2242 = vmatmul.bf16.gmra.mxu0 %v389
  %v2243 = vpop.f32.mrf.mxu0
  %v2244 = vadd.f32 %v2230, %v2243
  %v2245 = vpop.f32.mrf.mxu0
  %v2246 = vadd.f32 %v2232, %v2245
  %2247 = vdwg.mxu0
  %2248 = vmatpush.bf16.msra.mxu0 %v1455
  %2249 = vmatpush.bf16.msra.mxu0 %v1453
  %2250 = vmatpush.bf16.msra.mxu0 %v1451
  %2251 = vmatpush.bf16.msra.mxu0 %v1449
  %2252 = vmatpush.bf16.msra.mxu0 %v1447
  %2253 = vmatpush.bf16.msra.mxu0 %v1445
  %2254 = vmatpush.bf16.msra.mxu0 %v1443
  %2255 = vmatpush.bf16.msra.mxu0 %v1441
  %2256 = vmatmul.bf16.gmra.mxu0 %v390
  %v2257 = vpop.f32.mrf.mxu0
  %v2258 = vadd.f32 %v2244, %v2257
  %v2259 = vpop.f32.mrf.mxu0
  %v2260 = vadd.f32 %v2246, %v2259
  %2261 = vdwg.mxu0
  %2262 = vmatpush.bf16.msra.mxu0 %v1471
  %2263 = vmatpush.bf16.msra.mxu0 %v1469
  %2264 = vmatpush.bf16.msra.mxu0 %v1467
  %2265 = vmatpush.bf16.msra.mxu0 %v1465
  %2266 = vmatpush.bf16.msra.mxu0 %v1463
  %2267 = vmatpush.bf16.msra.mxu0 %v1461
  %2268 = vmatpush.bf16.msra.mxu0 %v1459
  %2269 = vmatpush.bf16.msra.mxu0 %v1457
  %2270 = vmatmul.bf16.gmra.mxu0 %v391
  %v2271 = vpop.f32.mrf.mxu0
  %v2272 = vadd.f32 %v2258, %v2271
  %v2273 = vpop.f32.mrf.mxu0
  %v2274 = vadd.f32 %v2260, %v2273
  %2275 = vdwg.mxu0
  %2276 = vmatpush.bf16.msra.mxu0 %v1487
  %2277 = vmatpush.bf16.msra.mxu0 %v1485
  %2278 = vmatpush.bf16.msra.mxu0 %v1483
  %2279 = vmatpush.bf16.msra.mxu0 %v1481
  %2280 = vmatpush.bf16.msra.mxu0 %v1479
  %2281 = vmatpush.bf16.msra.mxu0 %v1477
  %2282 = vmatpush.bf16.msra.mxu0 %v1475
  %2283 = vmatpush.bf16.msra.mxu0 %v1473
  %2284 = vmatmul.bf16.gmra.mxu0 %v392
  %v2285 = vpop.f32.mrf.mxu0
  %v2286 = vadd.f32 %v2272, %v2285
  %v2287 = vpop.f32.mrf.mxu0
  %v2288 = vadd.f32 %v2274, %v2287
  %2289 = vdwg.mxu0
  %2290 = vmatpush.bf16.msra.mxu0 %v1503
  %2291 = vmatpush.bf16.msra.mxu0 %v1501
  %2292 = vmatpush.bf16.msra.mxu0 %v1499
  %2293 = vmatpush.bf16.msra.mxu0 %v1497
  %2294 = vmatpush.bf16.msra.mxu0 %v1495
  %2295 = vmatpush.bf16.msra.mxu0 %v1493
  %2296 = vmatpush.bf16.msra.mxu0 %v1491
  %2297 = vmatpush.bf16.msra.mxu0 %v1489
  %2298 = vmatmul.bf16.gmra.mxu0 %v393
  %v2299 = vpop.f32.mrf.mxu0
  %v2300 = vadd.f32 %v2286, %v2299
  %v2301 = vpop.f32.mrf.mxu0
  %v2302 = vadd.f32 %v2288, %v2301
  %2303 = vdwg.mxu0
  %2304 = vmatpush.bf16.msra.mxu0 %v1519
  %2305 = vmatpush.bf16.msra.mxu0 %v1517
  %2306 = vmatpush.bf16.msra.mxu0 %v1515
  %2307 = vmatpush.bf16.msra.mxu0 %v1513
  %2308 = vmatpush.bf16.msra.mxu0 %v1511
  %2309 = vmatpush.bf16.msra.mxu0 %v1509
  %2310 = vmatpush.bf16.msra.mxu0 %v1507
  %2311 = vmatpush.bf16.msra.mxu0 %v1505
  %2312 = vmatmul.bf16.gmra.mxu0 %v394
  %v2313 = vpop.f32.mrf.mxu0
  %v2314 = vadd.f32 %v2300, %v2313
  %v2315 = vpop.f32.mrf.mxu0
  %v2316 = vadd.f32 %v2302, %v2315
  %2317 = vdwg.mxu0
  %2318 = vmatpush.bf16.msra.mxu0 %v1535
  %2319 = vmatpush.bf16.msra.mxu0 %v1533
  %2320 = vmatpush.bf16.msra.mxu0 %v1531
  %2321 = vmatpush.bf16.msra.mxu0 %v1529
  %2322 = vmatpush.bf16.msra.mxu0 %v1527
  %2323 = vmatpush.bf16.msra.mxu0 %v1525
  %2324 = vmatpush.bf16.msra.mxu0 %v1523
  %2325 = vmatpush.bf16.msra.mxu0 %v1521
  %2326 = vmatmul.bf16.gmra.mxu0 %v395
  %v2327 = vpop.f32.mrf.mxu0
  %v2328 = vadd.f32 %v2314, %v2327
  %v2329 = vpop.f32.mrf.mxu0
  %v2330 = vadd.f32 %v2316, %v2329
  %2331 = vdwg.mxu0
  %2332 = vmatpush.bf16.msra.mxu0 %v1551
  %2333 = vmatpush.bf16.msra.mxu0 %v1549
  %2334 = vmatpush.bf16.msra.mxu0 %v1547
  %2335 = vmatpush.bf16.msra.mxu0 %v1545
  %2336 = vmatpush.bf16.msra.mxu0 %v1543
  %2337 = vmatpush.bf16.msra.mxu0 %v1541
  %2338 = vmatpush.bf16.msra.mxu0 %v1539
  %2339 = vmatpush.bf16.msra.mxu0 %v1537
  %2340 = vmatmul.bf16.gmra.mxu0 %v396
  %v2341 = vpop.f32.mrf.mxu0
  %v2342 = vadd.f32 %v2328, %v2341
  %v2343 = vpop.f32.mrf.mxu0
  %v2344 = vadd.f32 %v2330, %v2343
  %2345 = vdwg.mxu0
  %2346 = vmatpush.bf16.msra.mxu0 %v1567
  %2347 = vmatpush.bf16.msra.mxu0 %v1565
  %2348 = vmatpush.bf16.msra.mxu0 %v1563
  %2349 = vmatpush.bf16.msra.mxu0 %v1561
  %2350 = vmatpush.bf16.msra.mxu0 %v1559
  %2351 = vmatpush.bf16.msra.mxu0 %v1557
  %2352 = vmatpush.bf16.msra.mxu0 %v1555
  %2353 = vmatpush.bf16.msra.mxu0 %v1553
  %2354 = vmatmul.bf16.gmra.mxu0 %v397
  %v2355 = vpop.f32.mrf.mxu0
  %v2356 = vadd.f32 %v2342, %v2355
  %v2357 = vpop.f32.mrf.mxu0
  %v2358 = vadd.f32 %v2344, %v2357
  %2359 = vdwg.mxu0
  %v2360 = vmax.f32 %v2104, 0.0
  %v2361 = vmax.f32 %v2356, 0.0
  %v2362 = vmax.f32 %v2106, 0.0
  %v2363 = vmax.f32 %v2358, 0.0
  %2364 = vst [vmem:[%s3] sm:$0xff] %v2360
  %2365 = vst [vmem:[%s3 + $0x8] sm:$0xff] %v2361
  %2366 = vst [vmem:[%s3 + $0x10] sm:$0xff] %v2362
  %2367 = vst [vmem:[%s3 + $0x18] sm:$0xff] %v2363
  // Predicated region
  $region14: #{fcn_forward.32} parent=0 // pred_check
    _
  $region15: #{fcn_forward.32} parent=0 // pred_check_branch
    %2369 = sbr.rel (0) target = $region17
  $region16: #{fcn_forward.32} parent=0 // pred_region
    _
  $region17: #{fcn_forward.32} parent=0 // pred_fallthru
    _
  // Predicated region
  $region18: #{fcn_forward.32} parent=0 // pred_check
    _
  $region19: #{fcn_forward.32} parent=0 // pred_check_branch
    %2371 = sbr.rel (0) target = $region21
  $region20: #{fcn_forward.32} parent=0 // pred_region
    _
  $region21: #{fcn_forward.32} parent=0 // pred_fallthru
    _

// kernel: fcn_forward.35
$region0: #{fcn_forward.35}
  #allocation0 [shape = 'u32[]', space=smem, size = 0x4, offset = 0x4, fixed_abs, tag = 'smem constant byte address 0x4 - core index']
  #allocation1 [shape = 'u32[72,128]{1,0:T(1,128)}', space=vmem, size = 0x9000, scoped, tag = 'internal scratch']
  %s0 = inlined_call_operand.vmem [shape: bf16[32,128], index: 0, kind: input, shape index: {}]
  %s1 = inlined_call_operand.vmem [shape: bf16[128,1024], index: 1, kind: input, shape index: {}]
  %s2 = inlined_call_operand.vmem [shape: f32[1,1024], index: 2, kind: input, shape index: {}]
  %s3 = inlined_call_operand.vmem [shape: f32[32,1024], index: 3, kind: output, shape index: {}]
  %s4 = sld [smem:[#allocation0]]
  $region102: #{fcn_forward.35} parent=0
    _
  %s6 = ssub.s32 1, %s4
  %s7 = scalar_select 0, %s6, %s4
  $region1: #{fcn_forward.35} parent=0
    #allocation2 [shape = 'u8[131072]{0}', space=vmem, size = 0x20000, scoped, tag = 'input window, operand 1']
    #allocation3 [shape = 'u8[65536]{0}', space=vmem, size = 0x10000, scoped, tag = 'output window, operand 0']
    loop: start=0, step=1, limit=6
    $region2: #{fcn_forward.35} parent=1 // loop_pre_header
      _
    $region3: #{fcn_forward.35} parent=1 // loop_header
      %s9 = sphi 0, %s13
      %p10 = scmp.ge.s32.totalorder %s9, 6
      %s16 = sphi 0, %s28
      %s17 = sphi 0, %s24
      %s18 = sphi 0, %s16
      %s19 = sphi 0, %s17
      %s20 = sphi 0, %s18
      %s21 = sphi 0, %s19
      %s31 = sphi 0, %s33
      %s34 = sphi 0, %s31
      %s35 = sphi 0, %s34
      %s51 = sphi 0, %s35
      %s57 = sphi 0, %s59
      %s60 = sphi 0, %s57
      %s61 = sphi 0, %s60
      %s77 = sphi 0, %s61
      %s83 = sphi 0, %s85
      %s86 = sphi 0, %s83
      %s87 = sphi 0, %s86
      %s103 = sphi 0, %s87
      %s111 = sphi 0, %s113
      %s114 = sphi 0, %s111
      %s115 = sphi 0, %s114
      %s131 = sphi 0, %s115
    $region4: #{fcn_forward.35} parent=1 // loop_header_branch
      %12 = sbr.rel (%p10) target = $region8
    $region5: #{fcn_forward.35} parent=1 // loop_body
      %s14 = ssub.s32 %s9, 1
      %s15 = ssub.s32 %s9, 2
      %s22 = sadd.s32 1, %s17
      %p23 = scmp.ge.s32.totalorder %s22, 4
      %s24 = scalar_select %p23, 0, %s22
      %s25 = sadd.s32 1, %s16
      %s26 = scalar_select %p23, %s25, %s16
      %p27 = scmp.ge.s32.totalorder %s26, 1
      %s28 = scalar_select %p27, 0, %s26
      %s29 = ssub.s32 %s16, %s28
      %p30 = scmp.eq.s32.totalorder %s29, 0
      %s32 = sadd.s32 %s31, 1
      %s33 = scalar_select %p30, %s31, %s32
      %p36 = pneg %p30
      %p37 = scmp.eq.s32.totalorder %s9, 3
      %p38 = por %p36, %p37
      %p39 = scmp.ne.s32.totalorder %s31, %s34
      %p40 = scmp.eq.s32.totalorder %s9, 0
      %p41 = por %p39, %p40
      %p42 = scmp.ne.s32.totalorder %s31, %s34
      %p43 = scmp.eq.s32.totalorder %s14, 3
      %p44 = por %p42, %p43
      %p45 = scmp.ne.s32.totalorder %s34, %s35
      %p46 = scmp.eq.s32.totalorder %s14, 0
      %p47 = por %p45, %p46
      %p48 = scmp.ne.s32.totalorder %s34, %s35
      %p49 = scmp.eq.s32.totalorder %s15, 3
      %p50 = por %p48, %p49
      %p52 = scmp.ne.s32.totalorder %s35, %s51
      %p53 = scmp.eq.s32.totalorder %s15, 0
      %p54 = por %p52, %p53
      %s55 = ssub.s32 %s17, %s24
      %p56 = scmp.eq.s32.totalorder %s55, 0
      %s58 = sadd.s32 %s57, 1
      %s59 = scalar_select %p56, %s57, %s58
      %p62 = pneg %p56
      %p63 = scmp.eq.s32.totalorder %s9, 3
      %p64 = por %p62, %p63
      %p65 = scmp.ne.s32.totalorder %s57, %s60
      %p66 = scmp.eq.s32.totalorder %s9, 0
      %p67 = por %p65, %p66
      %p68 = scmp.ne.s32.totalorder %s57, %s60
      %p69 = scmp.eq.s32.totalorder %s14, 3
      %p70 = por %p68, %p69
      %p71 = scmp.ne.s32.totalorder %s60, %s61
      %p72 = scmp.eq.s32.totalorder %s14, 0
      %p73 = por %p71, %p72
      %p74 = scmp.ne.s32.totalorder %s60, %s61
      %p75 = scmp.eq.s32.totalorder %s15, 3
      %p76 = por %p74, %p75
      %p78 = scmp.ne.s32.totalorder %s61, %s77
      %p79 = scmp.eq.s32.totalorder %s15, 0
      %p80 = por %p78, %p79
      %s81 = ssub.s32 %s17, %s24
      %p82 = scmp.eq.s32.totalorder %s81, 0
      %s84 = sadd.s32 %s83, 1
      %s85 = scalar_select %p82, %s83, %s84
      %p88 = pneg %p82
      %p89 = scmp.eq.s32.totalorder %s9, 3
      %p90 = por %p88, %p89
      %p91 = scmp.ne.s32.totalorder %s83, %s86
      %p92 = scmp.eq.s32.totalorder %s9, 0
      %p93 = por %p91, %p92
      %p94 = scmp.ne.s32.totalorder %s83, %s86
      %p95 = scmp.eq.s32.totalorder %s14, 3
      %p96 = por %p94, %p95
      %p97 = scmp.ne.s32.totalorder %s86, %s87
      %p98 = scmp.eq.s32.totalorder %s14, 0
      %p99 = por %p97, %p98
      %p100 = scmp.ne.s32.totalorder %s86, %s87
      %p101 = scmp.eq.s32.totalorder %s15, 3
      %p102 = por %p100, %p101
      %p104 = scmp.ne.s32.totalorder %s87, %s103
      %p105 = scmp.eq.s32.totalorder %s15, 0
      %p106 = por %p104, %p105
      %s107 = ssub.s32 %s16, %s28
      %s108 = ssub.s32 %s17, %s24
      %s109 = sor.u32 %s107, %s108
      %p110 = scmp.eq.s32.totalorder %s109, 0
      %s112 = sadd.s32 %s111, 1
      %s113 = scalar_select %p110, %s111, %s112
      %p116 = pneg %p110
      %p117 = scmp.eq.s32.totalorder %s9, 3
      %p118 = por %p116, %p117
      %p119 = scmp.ne.s32.totalorder %s111, %s114
      %p120 = scmp.eq.s32.totalorder %s9, 0
      %p121 = por %p119, %p120
      %p122 = scmp.ne.s32.totalorder %s111, %s114
      %p123 = scmp.eq.s32.totalorder %s14, 3
      %p124 = por %p122, %p123
      %p125 = scmp.ne.s32.totalorder %s114, %s115
      %p126 = scmp.eq.s32.totalorder %s14, 0
      %p127 = por %p125, %p126
      %p128 = scmp.ne.s32.totalorder %s114, %s115
      %p129 = scmp.eq.s32.totalorder %s15, 3
      %p130 = por %p128, %p129
      %p132 = scmp.ne.s32.totalorder %s115, %s131
      %p133 = scmp.eq.s32.totalorder %s15, 0
      %p134 = por %p132, %p133
      %p135 = scmp.le.s32.totalorder 1, %s9
      %p136 = scmp.lt.s32.totalorder %s9, 5
      %p137 = pnand %p135, %p136
      %p138 = pneg %p137
      // Predicated region
      $region9: #{fcn_forward.35} parent=5 // pred_check
        _
      $region10: #{fcn_forward.35} parent=5 // pred_check_branch
        %140 = sbr.rel (%p137) target = $region12
      $region11: #{fcn_forward.35} parent=5 // pred_region
        %s141 = ssub.s32 %s9, 1
        // Predicated region
        $region13: #{fcn_forward.35} parent=11 // pred_check
          %p142 = pneg %p47
        $region14: #{fcn_forward.35} parent=11 // pred_check_branch
          %144 = sbr.rel (%p142) target = $region16
        $region15: #{fcn_forward.35} parent=11 // pred_region
          %s145 = smul.u32 4, %s18
          %p146 = scmp.lt.s32.totalorder %s145, 3
          %s147 = scalar_select %p146, %s145, 3
          %s148 = smul.addr %s147, 4
          %s149 = scalar_lea.vmem %s0, %s148
          %s150 = smul.u32 4, %s18
        $region16: #{fcn_forward.35} parent=11 // pred_fallthru
          _
      $region12: #{fcn_forward.35} parent=5 // pred_fallthru
        _
      %p151 = scmp.lt.s32.totalorder %s9, 4
      // Predicated region
      $region17: #{fcn_forward.35} parent=5 // pred_check
        %p152 = pneg %p151
      $region18: #{fcn_forward.35} parent=5 // pred_check_branch
        %154 = sbr.rel (%p152) target = $region20
      $region19: #{fcn_forward.35} parent=5 // pred_region
        // Predicated region
        $region21: #{fcn_forward.35} parent=19 // pred_check
          %p155 = pneg %p67
        $region22: #{fcn_forward.35} parent=19 // pred_check_branch
          %157 = sbr.rel (%p155) target = $region24
        $region23: #{fcn_forward.35} parent=19 // pred_region
          %s158 = sand.u32 %s57, 1
          %s159 = sand.u32 %s57, 1
          %s160 = smul.addr %s159, 128
          %s161 = scalar_lea.vmem [#allocation2], %s160
          %s162 = smul.u32 2, %s17
          %s163 = smul.addr %s162, 4
          %s164 = scalar_lea.vmem %s1, %s163
          // Predicated region
          $region25: #{fcn_forward.35} parent=23 // pred_check
            _
          $region26: #{fcn_forward.35} parent=23 // pred_check_branch
            %166 = sbr.rel (0) target = $region28
          $region27: #{fcn_forward.35} parent=23 // pred_region
            // Predicated region
            $region29: #{fcn_forward.35} parent=27 // pred_check
              _
            $region30: #{fcn_forward.35} parent=27 // pred_check_branch
              %168 = sbr.rel (0) target = $region32
            $region31: #{fcn_forward.35} parent=27 // pred_region
              // Predicated region
              $region44: #{fcn_forward.35} parent=31 // pred_check
                _
              $region45: #{fcn_forward.35} parent=31 // pred_check_branch
                %214 = sbr.rel (0) target = $region47
              $region46: #{fcn_forward.35} parent=31 // pred_region
                loop: start=0, step=1, limit=1
                $region48: #{fcn_forward.35} parent=46 // loop_pre_header
                  _
                $region49: #{fcn_forward.35} parent=46 // loop_header
                  %s216 = sphi 0, %s220
                  %p217 = scmp.ge.s32.totalorder %s216, 1
                  %s221 = sphi %s164, %s164
                  %s222 = sphi %s161, %s161
                $region50: #{fcn_forward.35} parent=46 // loop_header_branch
                  %219 = sbr.rel (%p217) target = $region54
                $region51: #{fcn_forward.35} parent=46 // loop_body
                  %v223 = vld [vmem:[%s221] sm:$0xff]
                  %224 = vst [vmem:[%s222] sm:$0xff] %v223
                  %v225 = vld [vmem:[%s221 + $0x20] sm:$0xff]
                  %226 = vst [vmem:[%s222 + $0x8] sm:$0xff] %v225
                  %v227 = vld [vmem:[%s221 + $0x40] sm:$0xff]
                  %228 = vst [vmem:[%s222 + $0x10] sm:$0xff] %v227
                  %v229 = vld [vmem:[%s221 + $0x60] sm:$0xff]
                  %230 = vst [vmem:[%s222 + $0x18] sm:$0xff] %v229
                  %v231 = vld [vmem:[%s221 + $0x80] sm:$0xff]
                  %232 = vst [vmem:[%s222 + $0x20] sm:$0xff] %v231
                  %v233 = vld [vmem:[%s221 + $0xa0] sm:$0xff]
                  %234 = vst [vmem:[%s222 + $0x28] sm:$0xff] %v233
                  %v235 = vld [vmem:[%s221 + $0xc0] sm:$0xff]
                  %236 = vst [vmem:[%s222 + $0x30] sm:$0xff] %v235
                  %v237 = vld [vmem:[%s221 + $0xe0] sm:$0xff]
                  %238 = vst [vmem:[%s222 + $0x38] sm:$0xff] %v237
                  %v239 = vld [vmem:[%s221 + $0x100] sm:$0xff]
                  %240 = vst [vmem:[%s222 + $0x40] sm:$0xff] %v239
                  %v241 = vld [vmem:[%s221 + $0x120] sm:$0xff]
                  %242 = vst [vmem:[%s222 + $0x48] sm:$0xff] %v241
                  %v243 = vld [vmem:[%s221 + $0x140] sm:$0xff]
                  %244 = vst [vmem:[%s222 + $0x50] sm:$0xff] %v243
                  %v245 = vld [vmem:[%s221 + $0x160] sm:$0xff]
                  %246 = vst [vmem:[%s222 + $0x58] sm:$0xff] %v245
                  %v247 = vld [vmem:[%s221 + $0x180] sm:$0xff]
                  %248 = vst [vmem:[%s222 + $0x60] sm:$0xff] %v247
                  %v249 = vld [vmem:[%s221 + $0x1a0] sm:$0xff]
                  %250 = vst [vmem:[%s222 + $0x68] sm:$0xff] %v249
                  %v251 = vld [vmem:[%s221 + $0x1c0] sm:$0xff]
                  %252 = vst [vmem:[%s222 + $0x70] sm:$0xff] %v251
                  %v253 = vld [vmem:[%s221 + $0x1e0] sm:$0xff]
                  %254 = vst [vmem:[%s222 + $0x78] sm:$0xff] %v253
                $region52: #{fcn_forward.35} parent=46 // loop_footer
                  %s220 = sadd.s32 1, %s216
                $region53: #{fcn_forward.35} parent=46 // loop_footer_branch
                  %215 = sbr.rel target = $region49
                $region54: #{fcn_forward.35} parent=46 // loop_exit
                  _
              $region47: #{fcn_forward.35} parent=31 // pred_fallthru
                _
              // Predicated region
              $region55: #{fcn_forward.35} parent=31 // pred_check
                _
              $region56: #{fcn_forward.35} parent=31 // pred_check_branch
                %256 = sbr.rel target = $region58
              $region57: #{fcn_forward.35} parent=31 // pred_region
                _
              $region58: #{fcn_forward.35} parent=31 // pred_fallthru
                _
            $region32: #{fcn_forward.35} parent=27 // pred_fallthru
              _
            // Predicated region
            $region33: #{fcn_forward.35} parent=27 // pred_check
              _
            $region34: #{fcn_forward.35} parent=27 // pred_check_branch
              %170 = sbr.rel target = $region36
            $region35: #{fcn_forward.35} parent=27 // pred_region
              %s172 = ssub.s32 256, 1
              loop: start=0, step=1, limit=1
              $region37: #{fcn_forward.35} parent=35 // loop_pre_header
                _
              $region38: #{fcn_forward.35} parent=35 // loop_header
                %s174 = sphi 0, %s178
                %p175 = scmp.ge.s32.totalorder %s174, 1
                %s179 = sphi %s164, %s164
                %s180 = sphi %s161, %s161
              $region39: #{fcn_forward.35} parent=35 // loop_header_branch
                %177 = sbr.rel (%p175) target = $region43
              $region40: #{fcn_forward.35} parent=35 // loop_body
                %v181 = vld [vmem:[%s179] sm:%s172]
                %182 = vst [vmem:[%s180] sm:%s172] %v181
                %v183 = vld [vmem:[%s179 + $0x20] sm:%s172]
                %184 = vst [vmem:[%s180 + $0x8] sm:%s172] %v183
                %v185 = vld [vmem:[%s179 + $0x40] sm:%s172]
                %186 = vst [vmem:[%s180 + $0x10] sm:%s172] %v185
                %v187 = vld [vmem:[%s179 + $0x60] sm:%s172]
                %188 = vst [vmem:[%s180 + $0x18] sm:%s172] %v187
                %v189 = vld [vmem:[%s179 + $0x80] sm:%s172]
                %190 = vst [vmem:[%s180 + $0x20] sm:%s172] %v189
                %v191 = vld [vmem:[%s179 + $0xa0] sm:%s172]
                %192 = vst [vmem:[%s180 + $0x28] sm:%s172] %v191
                %v193 = vld [vmem:[%s179 + $0xc0] sm:%s172]
                %194 = vst [vmem:[%s180 + $0x30] sm:%s172] %v193
                %v195 = vld [vmem:[%s179 + $0xe0] sm:%s172]
                %196 = vst [vmem:[%s180 + $0x38] sm:%s172] %v195
                %v197 = vld [vmem:[%s179 + $0x100] sm:%s172]
                %198 = vst [vmem:[%s180 + $0x40] sm:%s172] %v197
                %v199 = vld [vmem:[%s179 + $0x120] sm:%s172]
                %200 = vst [vmem:[%s180 + $0x48] sm:%s172] %v199
                %v201 = vld [vmem:[%s179 + $0x140] sm:%s172]
                %202 = vst [vmem:[%s180 + $0x50] sm:%s172] %v201
                %v203 = vld [vmem:[%s179 + $0x160] sm:%s172]
                %204 = vst [vmem:[%s180 + $0x58] sm:%s172] %v203
                %v205 = vld [vmem:[%s179 + $0x180] sm:%s172]
                %206 = vst [vmem:[%s180 + $0x60] sm:%s172] %v205
                %v207 = vld [vmem:[%s179 + $0x1a0] sm:%s172]
                %208 = vst [vmem:[%s180 + $0x68] sm:%s172] %v207
                %v209 = vld [vmem:[%s179 + $0x1c0] sm:%s172]
                %210 = vst [vmem:[%s180 + $0x70] sm:%s172] %v209
                %v211 = vld [vmem:[%s179 + $0x1e0] sm:%s172]
                %212 = vst [vmem:[%s180 + $0x78] sm:%s172] %v211
              $region41: #{fcn_forward.35} parent=35 // loop_footer
                %s178 = sadd.s32 1, %s174
              $region42: #{fcn_forward.35} parent=35 // loop_footer_branch
                %173 = sbr.rel target = $region38
              $region43: #{fcn_forward.35} parent=35 // loop_exit
                _
            $region36: #{fcn_forward.35} parent=27 // pred_fallthru
              _
          $region28: #{fcn_forward.35} parent=23 // pred_fallthru
            _
          %257 = vnop
        $region24: #{fcn_forward.35} parent=19 // pred_fallthru
          _
        // Predicated region
        $region59: #{fcn_forward.35} parent=19 // pred_check
          %p258 = pneg %p93
        $region60: #{fcn_forward.35} parent=19 // pred_check_branch
          %260 = sbr.rel (%p258) target = $region62
        $region61: #{fcn_forward.35} parent=19 // pred_region
          %s261 = smul.u32 2, %s17
          %p262 = scmp.lt.s32.totalorder %s261, 7
          %s263 = scalar_select %p262, %s261, 7
          %s264 = scalar_lea.vmem %s2, %s263
          %s265 = smul.u32 2, %s17
        $region62: #{fcn_forward.35} parent=19 // pred_fallthru
          _
      $region20: #{fcn_forward.35} parent=5 // pred_fallthru
        _
      %p266 = scmp.le.s32.totalorder 1, %s9
      %p267 = scmp.lt.s32.totalorder %s9, 5
      %p268 = pnand %p266, %p267
      %p269 = pneg %p268
      // Predicated region
      $region63: #{fcn_forward.35} parent=5 // pred_check
        _
      $region64: #{fcn_forward.35} parent=5 // pred_check_branch
        %271 = sbr.rel (%p268) target = $region66
      $region65: #{fcn_forward.35} parent=5 // pred_region
        %s272 = ssub.s32 %s9, 1
        %s273 = sand.u32 %s60, 1
        %s274 = sand.u32 %s60, 1
        %s275 = smul.addr %s274, 128
        %s276 = scalar_lea.vmem [#allocation2], %s275
        // Predicated region
        $region67: #{fcn_forward.35} parent=65 // pred_check
          %p277 = pneg %p73
        $region68: #{fcn_forward.35} parent=65 // pred_check_branch
          %279 = sbr.rel (%p277) target = $region70
        $region69: #{fcn_forward.35} parent=65 // pred_region
          _
        $region70: #{fcn_forward.35} parent=65 // pred_fallthru
          _
        %s280 = smul.u32 4, %s18
        %p281 = scmp.lt.s32.totalorder %s280, 3
        %s282 = scalar_select %p281, %s280, 3
        %s283 = smul.addr %s282, 4
        %s284 = scalar_lea.vmem %s0, %s283
        %p285 = pneg %p47
        %p286 = pneg %p44
        %s287 = sand.u32 %s60, 1
        %s288 = sand.u32 %s60, 1
        %s289 = smul.addr %s288, 128
        %s290 = scalar_lea.vmem [#allocation2], %s289
        %p291 = pneg %p73
        %p292 = pneg %p70
        %s293 = smul.u32 2, %s19
        %p294 = scmp.lt.s32.totalorder %s293, 7
        %s295 = scalar_select %p294, %s293, 7
        %s296 = scalar_lea.vmem %s2, %s295
        %p297 = pneg %p99
        %p298 = pneg %p96
        %p299 = pneg %p127
        %p300 = pneg %p124
        %s301 = sand.u32 %s114, 1
        %s302 = sand.u32 %s114, 1
        %s303 = smul.addr %s302, 64
        %s304 = scalar_lea.vmem [#allocation3], %s303
        %s305 = smul.u32 4, %s18
        %p306 = scmp.lt.s32.totalorder %s305, 3
        %s307 = scalar_select %p306, %s305, 3
        %s308 = smul.addr %s307, 4
        %s309 = scalar_lea.vmem %s0, %s308
        %s310 = smul.u32 4, %s18
        %s311 = smul.u32 2, %s19
        %s312 = smul.u32 2, %s19
        %p313 = scmp.lt.s32.totalorder %s312, 7
        %s314 = scalar_select %p313, %s312, 7
        %s315 = scalar_lea.vmem %s2, %s314
        %s316 = smul.u32 2, %s19
        %s317 = smul.u32 4, %s18
        %s318 = smul.u32 2, %s19
        %v319 = vld [vmem:[%s309] sm:$0xf]
        %v320 = vld [vmem:[%s309 + $0x4] sm:$0xf]
        %v321 = vld [vmem:[%s309 + $0x8] sm:$0xf]
        %v322 = vld [vmem:[%s309 + $0xc] sm:$0xf]
        %v323 = vld [vmem:[%s276] sm:$0xff]
        %v324 = vld [vmem:[%s276 + $0x8] sm:$0xff]
        %v325 = vld [vmem:[%s276 + $0x10] sm:$0xff]
        %v326 = vld [vmem:[%s276 + $0x18] sm:$0xff]
        %v327 = vld [vmem:[%s276 + $0x20] sm:$0xff]
        %v328 = vld [vmem:[%s276 + $0x28] sm:$0xff]
        %v329 = vld [vmem:[%s276 + $0x30] sm:$0xff]
        %v330 = vld [vmem:[%s276 + $0x38] sm:$0xff]
        %v331 = vld [vmem:[%s276 + $0x40] sm:$0xff]
        %v332 = vld [vmem:[%s276 + $0x48] sm:$0xff]
        %v333 = vld [vmem:[%s276 + $0x50] sm:$0xff]
        %v334 = vld [vmem:[%s276 + $0x58] sm:$0xff]
        %v335 = vld [vmem:[%s276 + $0x60] sm:$0xff]
        %v336 = vld [vmem:[%s276 + $0x68] sm:$0xff]
        %v337 = vld [vmem:[%s276 + $0x70] sm:$0xff]
        %v338 = vld [vmem:[%s276 + $0x78] sm:$0xff]
        %v339 = vld [vmem:[%s315] sm:$0x3]
        %v341 = vperm.slane %v339, 0
        %v342 = vperm.slane %v339, 1
        %v349 = vunpack.c.l.b16 %v319
        %v350 = vunpack.c.l.b16 %v320
        %v351 = vunpack.c.l.b16 %v321
        %v352 = vunpack.c.l.b16 %v322
        %v353 = vpack.c.b16 %v350, %v349
        %v354 = vpack.c.b16 %v352, %v351
        %v373 = vunpack.c.l.b16 %v323
        %v374 = vunpack.c.h.b16 %v323
        %v375 = vunpack.c.l.b16 %v324
        %v376 = vunpack.c.h.b16 %v324
        %v377 = vunpack.c.l.b16 %v325
        %v378 = vunpack.c.h.b16 %v325
        %v379 = vunpack.c.l.b16 %v326
        %v380 = vunpack.c.h.b16 %v326
        %v381 = vunpack.c.l.b16 %v327
        %v382 = vunpack.c.h.b16 %v327
        %v383 = vunpack.c.l.b16 %v328
        %v384 = vunpack.c.h.b16 %v328
        %v385 = vunpack.c.l.b16 %v329
        %v386 = vunpack.c.h.b16 %v329
        %v387 = vunpack.c.l.b16 %v330
        %v388 = vunpack.c.h.b16 %v330
        %v389 = vunpack.c.l.b16 %v331
        %v390 = vunpack.c.h.b16 %v331
        %v391 = vunpack.c.l.b16 %v332
        %v392 = vunpack.c.h.b16 %v332
        %v393 = vunpack.c.l.b16 %v333
        %v394 = vunpack.c.h.b16 %v333
        %v395 = vunpack.c.l.b16 %v334
        %v396 = vunpack.c.h.b16 %v334
        %v397 = vunpack.c.l.b16 %v335
        %v398 = vunpack.c.h.b16 %v335
        %v399 = vunpack.c.l.b16 %v336
        %v400 = vunpack.c.h.b16 %v336
        %v401 = vunpack.c.l.b16 %v337
        %v402 = vunpack.c.h.b16 %v337
        %v403 = vunpack.c.l.b16 %v338
        %v404 = vunpack.c.h.b16 %v338
        %v405 = vpack.c.b16 %v375, %v373
        %v406 = vpack.c.b16 %v376, %v374
        %v407 = vpack.c.b16 %v379, %v377
        %v408 = vpack.c.b16 %v380, %v378
        %v409 = vpack.c.b16 %v383, %v381
        %v410 = vpack.c.b16 %v384, %v382
        %v411 = vpack.c.b16 %v387, %v385
        %v412 = vpack.c.b16 %v388, %v386
        %v413 = vpack.c.b16 %v391, %v389
        %v414 = vpack.c.b16 %v392, %v390
        %v415 = vpack.c.b16 %v395, %v393
        %v416 = vpack.c.b16 %v396, %v394
        %v417 = vpack.c.b16 %v399, %v397
        %v418 = vpack.c.b16 %v400, %v398
        %v419 = vpack.c.b16 %v403, %v401
        %v420 = vpack.c.b16 %v404, %v402
        %437 = vmatpush.bf16.msra.mxu0 %v419
        %438 = vmatpush.bf16.msra.mxu0 %v417
        %439 = vmatpush.bf16.msra.mxu0 %v415
        %440 = vmatpush.bf16.msra.mxu0 %v413
        %441 = vmatpush.bf16.msra.mxu0 %v411
        %442 = vmatpush.bf16.msra.mxu0 %v409
        %443 = vmatpush.bf16.msra.mxu0 %v407
        %444 = vmatpush.bf16.msra.mxu0 %v405
        %445 = vmatmul.bf16.gmra.mxu0 %v353
        %v446 = vpop.f32.mrf.mxu0
        %v447 = vadd.f32 %v341, %v446
        %v448 = vpop.f32.mrf.mxu0
        %v449 = vadd.f32 %v341, %v448
        %450 = vmatmul.bf16.gmra.mxu0 %v354
        %v451 = vpop.f32.mrf.mxu0
        %v452 = vadd.f32 %v341, %v451
        %v453 = vpop.f32.mrf.mxu0
        %v454 = vadd.f32 %v341, %v453
        %455 = vdwg.mxu0
        %456 = vmatpush.bf16.msra.mxu0 %v420
        %457 = vmatpush.bf16.msra.mxu0 %v418
        %458 = vmatpush.bf16.msra.mxu0 %v416
        %459 = vmatpush.bf16.msra.mxu0 %v414
        %460 = vmatpush.bf16.msra.mxu0 %v412
        %461 = vmatpush.bf16.msra.mxu0 %v410
        %462 = vmatpush.bf16.msra.mxu0 %v408
        %463 = vmatpush.bf16.msra.mxu0 %v406
        %464 = vmatmul.bf16.gmra.mxu0 %v353
        %v465 = vpop.f32.mrf.mxu0
        %v466 = vadd.f32 %v342, %v465
        %v467 = vpop.f32.mrf.mxu0
        %v468 = vadd.f32 %v342, %v467
        %469 = vmatmul.bf16.gmra.mxu0 %v354
        %v470 = vpop.f32.mrf.mxu0
        %v471 = vadd.f32 %v342, %v470
        %v472 = vpop.f32.mrf.mxu0
        %v473 = vadd.f32 %v342, %v472
        %474 = vdwg.mxu0
        %475 = vst [vmem:[%s304] sm:$0xff] %v447
        %476 = vst [vmem:[%s304 + $0x8] sm:$0xff] %v466
        %477 = vst [vmem:[%s304 + $0x10] sm:$0xff] %v449
        %478 = vst [vmem:[%s304 + $0x18] sm:$0xff] %v468
        %479 = vst [vmem:[%s304 + $0x20] sm:$0xff] %v452
        %480 = vst [vmem:[%s304 + $0x28] sm:$0xff] %v471
        %481 = vst [vmem:[%s304 + $0x30] sm:$0xff] %v454
        %482 = vst [vmem:[%s304 + $0x38] sm:$0xff] %v473
        %s483 = sand.u32 %s114, 1
        %s484 = sand.u32 %s114, 1
        %s485 = smul.addr %s484, 64
        %s486 = scalar_lea.vmem [#allocation3], %s485
        // Predicated region
        $region71: #{fcn_forward.35} parent=65 // pred_check
          %p487 = pneg %p124
        $region72: #{fcn_forward.35} parent=65 // pred_check_branch
          %489 = sbr.rel (%p487) target = $region74
        $region73: #{fcn_forward.35} parent=65 // pred_region
          %s490 = smul.u32 4, %s18
          %s491 = smul.u32 2, %s19
          %s492 = smul.addr %s490, 8
          %s493 = sadd.s32 %s491, %s492
          %s494 = smul.addr %s493, 8
          %s495 = scalar_lea.vmem %s3, %s494
          // Predicated region
          $region75: #{fcn_forward.35} parent=73 // pred_check
            _
          $region76: #{fcn_forward.35} parent=73 // pred_check_branch
            %497 = sbr.rel (0) target = $region78
          $region77: #{fcn_forward.35} parent=73 // pred_region
            // Predicated region
            $region79: #{fcn_forward.35} parent=77 // pred_check
              _
            $region80: #{fcn_forward.35} parent=77 // pred_check_branch
              %499 = sbr.rel (0) target = $region82
            $region81: #{fcn_forward.35} parent=77 // pred_region
              loop: start=0, step=1, limit=1
              $region83: #{fcn_forward.35} parent=81 // loop_pre_header
                _
              $region84: #{fcn_forward.35} parent=81 // loop_header
                %s501 = sphi 0, %s505
                %p502 = scmp.ge.s32.totalorder %s501, 1
                %s506 = sphi %s486, %s486
                %s507 = sphi %s495, %s495
              $region85: #{fcn_forward.35} parent=81 // loop_header_branch
                %504 = sbr.rel (%p502) target = $region89
              $region86: #{fcn_forward.35} parent=81 // loop_body
                %v508 = vld [vmem:[%s506] sm:$0xff]
                %509 = vst [vmem:[%s507] sm:$0xff] %v508
                %v510 = vld [vmem:[%s506 + $0x8] sm:$0xff]
                %511 = vst [vmem:[%s507 + $0x8] sm:$0xff] %v510
                %v512 = vld [vmem:[%s506 + $0x10] sm:$0xff]
                %513 = vst [vmem:[%s507 + $0x40] sm:$0xff] %v512
                %v514 = vld [vmem:[%s506 + $0x18] sm:$0xff]
                %515 = vst [vmem:[%s507 + $0x48] sm:$0xff] %v514
                %v516 = vld [vmem:[%s506 + $0x20] sm:$0xff]
                %517 = vst [vmem:[%s507 + $0x80] sm:$0xff] %v516
                %v518 = vld [vmem:[%s506 + $0x28] sm:$0xff]
                %519 = vst [vmem:[%s507 + $0x88] sm:$0xff] %v518
                %v520 = vld [vmem:[%s506 + $0x30] sm:$0xff]
                %521 = vst [vmem:[%s507 + $0xc0] sm:$0xff] %v520
                %v522 = vld [vmem:[%s506 + $0x38] sm:$0xff]
                %523 = vst [vmem:[%s507 + $0xc8] sm:$0xff] %v522
              $region87: #{fcn_forward.35} parent=81 // loop_footer
                %s505 = sadd.s32 1, %s501
              $region88: #{fcn_forward.35} parent=81 // loop_footer_branch
                %500 = sbr.rel target = $region84
              $region89: #{fcn_forward.35} parent=81 // loop_exit
                _
            $region82: #{fcn_forward.35} parent=77 // pred_fallthru
              _
            // Predicated region
            $region90: #{fcn_forward.35} parent=77 // pred_check
              _
            $region91: #{fcn_forward.35} parent=77 // pred_check_branch
              %525 = sbr.rel target = $region93
            $region92: #{fcn_forward.35} parent=77 // pred_region
              _
            $region93: #{fcn_forward.35} parent=77 // pred_fallthru
              _
          $region78: #{fcn_forward.35} parent=73 // pred_fallthru
            _
          %526 = vnop
        $region74: #{fcn_forward.35} parent=65 // pred_fallthru
          _
      $region66: #{fcn_forward.35} parent=5 // pred_fallthru
        _
      %p527 = scmp.le.s32.totalorder 2, %s9
      // Predicated region
      $region94: #{fcn_forward.35} parent=5 // pred_check
        %p528 = pneg %p527
      $region95: #{fcn_forward.35} parent=5 // pred_check_branch
        %530 = sbr.rel (%p528) target = $region97
      $region96: #{fcn_forward.35} parent=5 // pred_region
        %s531 = ssub.s32 %s9, 2
        // Predicated region
        $region98: #{fcn_forward.35} parent=96 // pred_check
          %p532 = pneg %p130
        $region99: #{fcn_forward.35} parent=96 // pred_check_branch
          %534 = sbr.rel (%p532) target = $region101
        $region100: #{fcn_forward.35} parent=96 // pred_region
          %s535 = sand.u32 %s115, 1
          %s536 = sand.u32 %s115, 1
          %s537 = smul.addr %s536, 64
          %s538 = scalar_lea.vmem [#allocation3], %s537
        $region101: #{fcn_forward.35} parent=96 // pred_fallthru
          _
      $region97: #{fcn_forward.35} parent=5 // pred_fallthru
        _
    $region6: #{fcn_forward.35} parent=1 // loop_footer
      %s13 = sadd.s32 1, %s9
    $region7: #{fcn_forward.35} parent=1 // loop_footer_branch
      %8 = sbr.rel target = $region3
    $region8: #{fcn_forward.35} parent=1 // loop_exit
      _

</llo_original>
